<compile_context>
chip_gen: v7x
topology: tpu7x:2x2x1
jax: 0.10.0
libtpu: 0.0.40
codegen_flags: <defaults>
</compile_context>

<pallas_src>
import math
import numpy as np
import jax
import jax.numpy as jnp
from jax.experimental import pallas as pl
from jax.experimental.pallas import tpu as pltpu

HIDDEN_SIZE = 128
INPUT_SIZE = 241
INPUT_PAD = 256           # 241 -> 256 (multiple of 128) for lane-dense tiles
NUM_LAYERS = 2
NUM_CLASSES = 10
NUM_CLASSES_PAD = 128     # lane-dense head output, sliced to 10 in the wrapper
FC_BRANCH_OUT = 64


# ----------------------------------------------------------------------------
# Shared gate math (PyTorch gate order [i, f, g, o], bias = b_ih + b_hh).
# Used verbatim by both the Pallas kernel and the pure-JAX reference.
# ----------------------------------------------------------------------------
def _lstm_gates(gates, c_prev):
    H = HIDDEN_SIZE
    i_g = jax.nn.sigmoid(gates[:, 0 * H:1 * H])
    f_g = jax.nn.sigmoid(gates[:, 1 * H:2 * H])
    g_g = jnp.tanh(gates[:, 2 * H:3 * H])
    o_g = jax.nn.sigmoid(gates[:, 3 * H:4 * H])
    c_new = f_g * c_prev + i_g * g_g
    h_new = o_g * jnp.tanh(c_new)
    return h_new, c_new


# ----------------------------------------------------------------------------
# Single fused kernel: both branches, both LSTM layers, full time loop, head.
# Inputs are already time-major-flattened (T*B, INPUT_PAD); weights are in
# "right-multiply" layout (D_in, 4H) with layer-1 weights stacked [W_ih; W_hh].
# ----------------------------------------------------------------------------
def fused_dual_lstm_kernel(
        x1_ref, x2_ref,
        w1_ih0_ref, w1_hh0_ref, b1_l0_ref, w1_l1_ref, b1_l1_ref,
        w1_fc_ref, b1_fc_ref,
        w2_ih0_ref, w2_hh0_ref, b2_l0_ref, w2_l1_ref, b2_l1_ref,
        w2_fc_ref, b2_fc_ref,
        wf1_ref, wf2_ref, bf_ref,
        out_ref,
        gin1_sc, gin2_sc):
    f32 = jnp.float32
    B = out_ref.shape[0]
    TB = x1_ref.shape[0]
    T = TB // B
    H = HIDDEN_SIZE

    # ---- hoisted layer-0 input projection: one big matmul per branch -------
    gin1_sc[...] = (jnp.dot(x1_ref[...], w1_ih0_ref[...],
                            preferred_element_type=f32) + b1_l0_ref[...])
    gin2_sc[...] = (jnp.dot(x2_ref[...], w2_ih0_ref[...],
                            preferred_element_type=f32) + b2_l0_ref[...])

    # recurrent weights / biases loaded once (resident for the whole loop)
    w1_hh0 = w1_hh0_ref[...]
    w2_hh0 = w2_hh0_ref[...]
    w1_l1 = w1_l1_ref[...]
    w2_l1 = w2_l1_ref[...]
    b1_l1 = jnp.broadcast_to(b1_l1_ref[...], (B, 4 * H))
    b2_l1 = jnp.broadcast_to(b2_l1_ref[...], (B, 4 * H))

    zeros = jnp.zeros((B, H), f32)
    h1_0, c1_0, h1_1, c1_1 = zeros, zeros, zeros, zeros
    h2_0, c2_0, h2_1, c2_1 = zeros, zeros, zeros, zeros

    # ---- fully unrolled time loop (T is small & static) ---------------------
    for t in range(T):
        lo, hi = t * B, (t + 1) * B
        # layer 0, both branches: only the h @ W_hh matmul is on the serial path
        g1 = gin1_sc[lo:hi, :] + jnp.dot(h1_0, w1_hh0, preferred_element_type=f32)
        g2 = gin2_sc[lo:hi, :] + jnp.dot(h2_0, w2_hh0, preferred_element_type=f32)
        h1_0, c1_0 = _lstm_gates(g1, c1_0)
        h2_0, c2_0 = _lstm_gates(g2, c2_0)
        # layer 1: single MXU push per branch via stacked [W_ih; W_hh]
        g1 = jnp.dot(jnp.concatenate([h1_0, h1_1], axis=-1), w1_l1,
                     preferred_element_type=f32) + b1_l1
        g2 = jnp.dot(jnp.concatenate([h2_0, h2_1], axis=-1), w2_l1,
                     preferred_element_type=f32) + b2_l1
        h1_1, c1_1 = _lstm_gates(g1, c1_1)
        h2_1, c2_1 = _lstm_gates(g2, c2_1)

    # ---- fused head: per-branch FC + ReLU, final FC (128-lane padded) -------
    o1 = jnp.maximum(
        jnp.dot(h1_1, w1_fc_ref[...], preferred_element_type=f32)
        + b1_fc_ref[...], 0.0)
    o2 = jnp.maximum(
        jnp.dot(h2_1, w2_fc_ref[...], preferred_element_type=f32)
        + b2_fc_ref[...], 0.0)
    # concat([o1, o2]) @ Wf == o1 @ Wf[:64] + o2 @ Wf[64:]
    out_ref[...] = (jnp.dot(o1, wf1_ref[...], preferred_element_type=f32)
                    + jnp.dot(o2, wf2_ref[...], preferred_element_type=f32)
                    + bf_ref[...])


def model_forward_pallas(params, x1, x2):
    B, T, D = x1.shape
    assert D == INPUT_SIZE

    def prep(x):
        xp = jnp.pad(x, ((0, 0), (0, 0), (0, INPUT_PAD - D)))
        return jnp.swapaxes(xp, 0, 1).reshape(T * B, INPUT_PAD)  # time-major flat

    x1f, x2f = prep(x1), prep(x2)
    b1, b2, fin = params["branch1"], params["branch2"], params["final"]

    out_pad = pl.pallas_call(
        fused_dual_lstm_kernel,
        out_shape=jax.ShapeDtypeStruct((B, NUM_CLASSES_PAD), jnp.float32),
        scratch_shapes=[
            pltpu.VMEM((T * B, 4 * HIDDEN_SIZE), jnp.float32),
            pltpu.VMEM((T * B, 4 * HIDDEN_SIZE), jnp.float32),
        ],
    )(x1f, x2f,
      b1["w_ih0"], b1["w_hh0"], b1["b_l0"], b1["w_l1"], b1["b_l1"],
      b1["w_fc"], b1["b_fc"],
      b2["w_ih0"], b2["w_hh0"], b2["b_l0"], b2["w_l1"], b2["b_l1"],
      b2["w_fc"], b2["b_fc"],
      fin["wf1"], fin["wf2"], fin["bf"])
    return out_pad[:, :NUM_CLASSES]


# ----------------------------------------------------------------------------
# Parameter init (deterministic, PyTorch-style uniform ranges), pre-transposed
# to right-multiply layout; layer-0 W_ih zero-padded 241 -> 256 rows; layer-1
# [W_ih; W_hh] stacked; final FC split + lane-padded to 128.
# ----------------------------------------------------------------------------
def init_branch_params(key):
    H = HIDDEN_SIZE
    k = 1.0 / math.sqrt(H)
    u = lambda kk, shape: jax.random.uniform(kk, shape, jnp.float32, -k, k)

    key, k1, k2, k3, k4 = jax.random.split(key, 5)
    w_ih0 = u(k1, (4 * H, INPUT_SIZE)).T                              # (241, 512)
    w_ih0 = jnp.pad(w_ih0, ((0, INPUT_PAD - INPUT_SIZE), (0, 0)))     # (256, 512)
    w_hh0 = u(k2, (4 * H, H)).T                                       # (128, 512)
    b_l0 = (u(k3, (4 * H,)) + u(k4, (4 * H,))).reshape(1, -1)

    key, k5, k6, k7, k8 = jax.random.split(key, 5)
    w_ih1 = u(k5, (4 * H, H)).T
    w_hh1 = u(k6, (4 * H, H)).T
    w_l1 = jnp.concatenate([w_ih1, w_hh1], axis=0)                    # (256, 512)
    b_l1 = (u(k7, (4 * H,)) + u(k8, (4 * H,))).reshape(1, -1)

    key, kf1, kf2 = jax.random.split(key, 3)
    w_fc = u(kf1, (FC_BRANCH_OUT, H)).T                               # (128, 64)
    b_fc = u(kf2, (FC_BRANCH_OUT,)).reshape(1, -1)

    return dict(w_ih0=w_ih0, w_hh0=w_hh0, b_l0=b_l0, w_l1=w_l1, b_l1=b_l1,
                w_fc=w_fc, b_fc=b_fc), key


def init_model_params(seed=0):
    key = jax.random.PRNGKey(seed)
    key, kb1, kb2, kf = jax.random.split(key, 4)
    branch1, _ = init_branch_params(kb1)
    branch2, _ = init_branch_params(kb2)
    kf1, kf2 = jax.random.split(kf)
    kfin = 1.0 / math.sqrt(2 * FC_BRANCH_OUT)
    w_final = jax.random.uniform(kf1, (NUM_CLASSES, 2 * FC_BRANCH_OUT),
                                 jnp.float32, -kfin, kfin)
    b_final = jax.random.uniform(kf2, (NUM_CLASSES,), jnp.float32, -kfin, kfin)
    wfT = w_final.T                                                   # (128, 10)
    pad = ((0, 0), (0, NUM_CLASSES_PAD - NUM_CLASSES))
    final = dict(
        wf1=jnp.pad(wfT[:FC_BRANCH_OUT], pad),                        # (64, 128)
        wf2=jnp.pad(wfT[FC_BRANCH_OUT:], pad),                        # (64, 128)
        bf=jnp.pad(b_final.reshape(1, -1), pad),                      # (1, 128)
    )
    return dict(branch1=branch1, branch2=branch2, final=final)


# ----------------------------------------------------------------------------
# Pure-JAX reference (same math, same params) for correctness checking.
# ----------------------------------------------------------------------------
def branch_forward_ref(x, p):
    B, T, D = x.shape
    xp = jnp.pad(x, ((0, 0), (0, 0), (0, INPUT_PAD - D)))
    x_tm = jnp.swapaxes(xp, 0, 1)                                     # (T, B, 256)
    H = HIDDEN_SIZE

    def step(carry, x_t):
        h0, c0, h1, c1 = carry
        g0 = x_t @ p["w_ih0"] + h0 @ p["w_hh0"] + p["b_l0"]
        h0, c0 = _lstm_gates(g0, c0)
        g1 = jnp.concatenate([h0, h1], axis=-1) @ p["w_l1"] + p["b_l1"]
        h1, c1 = _lstm_gates(g1, c1)
        return (h0, c0, h1, c1), None

    init = tuple(jnp.zeros((B, H), jnp.float32) for _ in range(4))
    (_, _, h1, _), _ = jax.lax.scan(step, init, x_tm)
    return jnp.maximum(h1 @ p["w_fc"] + p["b_fc"], 0.0)


def model_forward_ref(params, x1, x2):
    o1 = branch_forward_ref(x1, params["branch1"])
    o2 = branch_forward_ref(x2, params["branch2"])
    fin = params["final"]
    out = o1 @ fin["wf1"] + o2 @ fin["wf2"] + fin["bf"]
    return out[:, :NUM_CLASSES]


if __name__ == "__main__":
    B, T = 2, 8
    key = jax.random.PRNGKey(0)
    k1, k2 = jax.random.split(key)
    x1 = jax.random.normal(k1, (B, T, INPUT_SIZE), jnp.float32)
    x2 = jax.random.normal(k2, (B, T, INPUT_SIZE), jnp.float32)

    params = init_model_params(seed=0)

    out = jax.block_until_ready(model_forward_pallas(params, x1, x2))
    ref = jax.block_until_ready(model_forward_ref(params, x1, x2))

    assert out.shape == (B, NUM_CLASSES), out.shape
    np.testing.assert_allclose(np.asarray(out), np.asarray(ref),
                               rtol=1e-3, atol=1e-3)
    print("KERNEL_OK")
</pallas_src>

<mosaic_0001>
module attributes {stable_mosaic.version = 11 : i64} {
  func.func @fused_dual_lstm_kernel(%arg0: memref<16x256xf32, #tpu.memory_space<vmem>>, %arg1: memref<16x256xf32, #tpu.memory_space<vmem>>, %arg2: memref<256x512xf32, #tpu.memory_space<vmem>>, %arg3: memref<128x512xf32, #tpu.memory_space<vmem>>, %arg4: memref<1x512xf32, #tpu.memory_space<vmem>>, %arg5: memref<256x512xf32, #tpu.memory_space<vmem>>, %arg6: memref<1x512xf32, #tpu.memory_space<vmem>>, %arg7: memref<128x64xf32, #tpu.memory_space<vmem>>, %arg8: memref<1x64xf32, #tpu.memory_space<vmem>>, %arg9: memref<256x512xf32, #tpu.memory_space<vmem>>, %arg10: memref<128x512xf32, #tpu.memory_space<vmem>>, %arg11: memref<1x512xf32, #tpu.memory_space<vmem>>, %arg12: memref<256x512xf32, #tpu.memory_space<vmem>>, %arg13: memref<1x512xf32, #tpu.memory_space<vmem>>, %arg14: memref<128x64xf32, #tpu.memory_space<vmem>>, %arg15: memref<1x64xf32, #tpu.memory_space<vmem>>, %arg16: memref<64x128xf32, #tpu.memory_space<vmem>>, %arg17: memref<64x128xf32, #tpu.memory_space<vmem>>, %arg18: memref<1x128xf32, #tpu.memory_space<vmem>>, %arg19: memref<2x128xf32, #tpu.memory_space<vmem>>, %arg20: memref<16x512xf32, #tpu.memory_space<vmem>>, %arg21: memref<16x512xf32, #tpu.memory_space<vmem>>) attributes {dimension_semantics = [], scalar_prefetch = 0 : i64, scratch_operands = 2 : i64, tpu.core_type = #tpu.core_type<tc>} {
    %c0 = arith.constant 0 : index
    %c0_0 = arith.constant 0 : index
    %0 = vector.load %arg0[%c0, %c0_0] : memref<16x256xf32, #tpu.memory_space<vmem>>, vector<16x256xf32>
    %c0_1 = arith.constant 0 : index
    %c0_2 = arith.constant 0 : index
    %1 = vector.load %arg2[%c0_1, %c0_2] : memref<256x512xf32, #tpu.memory_space<vmem>>, vector<256x512xf32>
    %cst = arith.constant dense<0.000000e+00> : vector<16x512xf32>
    %2 = tpu.matmul %0, %1, %cst {dimension_numbers = #tpu.dot_dimension_numbers<[1], [0], [0], [1], [0, 0, 1, 1], [], []>} : vector<16x256xf32>, vector<256x512xf32>, vector<16x512xf32> -> vector<16x512xf32>
    %c0_3 = arith.constant 0 : index
    %c0_4 = arith.constant 0 : index
    %3 = vector.load %arg4[%c0_3, %c0_4] : memref<1x512xf32, #tpu.memory_space<vmem>>, vector<1x512xf32>
    %4 = vector.broadcast %3 : vector<1x512xf32> to vector<16x512xf32>
    %5 = arith.addf %2, %4 : vector<16x512xf32>
    %c0_5 = arith.constant 0 : index
    %c0_6 = arith.constant 0 : index
    %6 = vector.load %arg20[%c0_5, %c0_6] : memref<16x512xf32, #tpu.memory_space<vmem>>, vector<16x512xf32>
    tpu.vector_store %arg20[%c0_5, %c0_6], %5 {strides = array<i32>} : memref<16x512xf32, #tpu.memory_space<vmem>>, vector<16x512xf32>,
    %c0_7 = arith.constant 0 : index
    %c0_8 = arith.constant 0 : index
    %7 = vector.load %arg1[%c0_7, %c0_8] : memref<16x256xf32, #tpu.memory_space<vmem>>, vector<16x256xf32>
    %c0_9 = arith.constant 0 : index
    %c0_10 = arith.constant 0 : index
    %8 = vector.load %arg9[%c0_9, %c0_10] : memref<256x512xf32, #tpu.memory_space<vmem>>, vector<256x512xf32>
    %cst_11 = arith.constant dense<0.000000e+00> : vector<16x512xf32>
    %9 = tpu.matmul %7, %8, %cst_11 {dimension_numbers = #tpu.dot_dimension_numbers<[1], [0], [0], [1], [0, 0, 1, 1], [], []>} : vector<16x256xf32>, vector<256x512xf32>, vector<16x512xf32> -> vector<16x512xf32>
    %c0_12 = arith.constant 0 : index
    %c0_13 = arith.constant 0 : index
    %10 = vector.load %arg11[%c0_12, %c0_13] : memref<1x512xf32, #tpu.memory_space<vmem>>, vector<1x512xf32>
    %11 = vector.broadcast %10 : vector<1x512xf32> to vector<16x512xf32>
    %12 = arith.addf %9, %11 : vector<16x512xf32>
    %c0_14 = arith.constant 0 : index
    %c0_15 = arith.constant 0 : index
    %13 = vector.load %arg21[%c0_14, %c0_15] : memref<16x512xf32, #tpu.memory_space<vmem>>, vector<16x512xf32>
    tpu.vector_store %arg21[%c0_14, %c0_15], %12 {strides = array<i32>} : memref<16x512xf32, #tpu.memory_space<vmem>>, vector<16x512xf32>,
    %c0_16 = arith.constant 0 : index
    %c0_17 = arith.constant 0 : index
    %14 = vector.load %arg3[%c0_16, %c0_17] : memref<128x512xf32, #tpu.memory_space<vmem>>, vector<128x512xf32>
    %c0_18 = arith.constant 0 : index
    %c0_19 = arith.constant 0 : index
    %15 = vector.load %arg10[%c0_18, %c0_19] : memref<128x512xf32, #tpu.memory_space<vmem>>, vector<128x512xf32>
    %c0_20 = arith.constant 0 : index
    %c0_21 = arith.constant 0 : index
    %16 = vector.load %arg5[%c0_20, %c0_21] : memref<256x512xf32, #tpu.memory_space<vmem>>, vector<256x512xf32>
    %c0_22 = arith.constant 0 : index
    %c0_23 = arith.constant 0 : index
    %17 = vector.load %arg12[%c0_22, %c0_23] : memref<256x512xf32, #tpu.memory_space<vmem>>, vector<256x512xf32>
    %c0_24 = arith.constant 0 : index
    %c0_25 = arith.constant 0 : index
    %18 = vector.load %arg6[%c0_24, %c0_25] : memref<1x512xf32, #tpu.memory_space<vmem>>, vector<1x512xf32>
    %19 = vector.shape_cast %18 : vector<1x512xf32> to vector<1x512xf32>
    %20 = vector.broadcast %19 : vector<1x512xf32> to vector<2x512xf32>
    %c0_26 = arith.constant 0 : index
    %c0_27 = arith.constant 0 : index
    %21 = vector.load %arg13[%c0_26, %c0_27] : memref<1x512xf32, #tpu.memory_space<vmem>>, vector<1x512xf32>
    %22 = vector.shape_cast %21 : vector<1x512xf32> to vector<1x512xf32>
    %23 = vector.broadcast %22 : vector<1x512xf32> to vector<2x512xf32>
    %cst_28 = arith.constant 0.000000e+00 : f32
    %24 = vector.broadcast %cst_28 : f32 to vector<2x128xf32>
    %c0_29 = arith.constant 0 : index
    %c0_30 = arith.constant 0 : index
    %25 = vector.load %arg20[%c0_29, %c0_30] : memref<16x512xf32, #tpu.memory_space<vmem>>, vector<2x512xf32>
    %cst_31 = arith.constant dense<0.000000e+00> : vector<2x512xf32>
    %26 = tpu.matmul %24, %14, %cst_31 {dimension_numbers = #tpu.dot_dimension_numbers<[1], [0], [0], [1], [0, 0, 1, 1], [], []>} : vector<2x128xf32>, vector<128x512xf32>, vector<2x512xf32> -> vector<2x512xf32>
    %27 = arith.addf %25, %26 : vector<2x512xf32>
    %c0_32 = arith.constant 0 : index
    %c0_33 = arith.constant 0 : index
    %28 = vector.load %arg21[%c0_32, %c0_33] : memref<16x512xf32, #tpu.memory_space<vmem>>, vector<2x512xf32>
    %cst_34 = arith.constant dense<0.000000e+00> : vector<2x512xf32>
    %29 = tpu.matmul %24, %15, %cst_34 {dimension_numbers = #tpu.dot_dimension_numbers<[1], [0], [0], [1], [0, 0, 1, 1], [], []>} : vector<2x128xf32>, vector<128x512xf32>, vector<2x512xf32> -> vector<2x512xf32>
    %30 = arith.addf %28, %29 : vector<2x512xf32>
    %31 = vector.extract_strided_slice %27 {offsets = [0, 0], sizes = [2, 128], strides = [1, 1]} : vector<2x512xf32> to vector<2x128xf32>
    %32 = arith.negf %31 : vector<2x128xf32>
    %33 = math.exp %32 : vector<2x128xf32>
    %cst_35 = arith.constant 1.000000e+00 : f32
    %34 = vector.broadcast %cst_35 : f32 to vector<2x128xf32>
    %35 = arith.addf %34, %33 : vector<2x128xf32>
    %36 = arith.divf %34, %35 : vector<2x128xf32>
    %37 = vector.extract_strided_slice %27 {offsets = [0, 128], sizes = [2, 128], strides = [1, 1]} : vector<2x512xf32> to vector<2x128xf32>
    %38 = arith.negf %37 : vector<2x128xf32>
    %39 = math.exp %38 : vector<2x128xf32>
    %cst_36 = arith.constant 1.000000e+00 : f32
    %40 = vector.broadcast %cst_36 : f32 to vector<2x128xf32>
    %41 = arith.addf %40, %39 : vector<2x128xf32>
    %42 = arith.divf %40, %41 : vector<2x128xf32>
    %43 = vector.extract_strided_slice %27 {offsets = [0, 256], sizes = [2, 128], strides = [1, 1]} : vector<2x512xf32> to vector<2x128xf32>
    %44 = math.tanh %43 : vector<2x128xf32>
    %45 = vector.extract_strided_slice %27 {offsets = [0, 384], sizes = [2, 128], strides = [1, 1]} : vector<2x512xf32> to vector<2x128xf32>
    %46 = arith.negf %45 : vector<2x128xf32>
    %47 = math.exp %46 : vector<2x128xf32>
    %cst_37 = arith.constant 1.000000e+00 : f32
    %48 = vector.broadcast %cst_37 : f32 to vector<2x128xf32>
    %49 = arith.addf %48, %47 : vector<2x128xf32>
    %50 = arith.divf %48, %49 : vector<2x128xf32>
    %51 = arith.mulf %42, %24 : vector<2x128xf32>
    %52 = arith.mulf %36, %44 : vector<2x128xf32>
    %53 = arith.addf %51, %52 : vector<2x128xf32>
    %54 = math.tanh %53 : vector<2x128xf32>
    %55 = arith.mulf %50, %54 : vector<2x128xf32>
    %56 = vector.extract_strided_slice %30 {offsets = [0, 0], sizes = [2, 128], strides = [1, 1]} : vector<2x512xf32> to vector<2x128xf32>
    %57 = arith.negf %56 : vector<2x128xf32>
    %58 = math.exp %57 : vector<2x128xf32>
    %cst_38 = arith.constant 1.000000e+00 : f32
    %59 = vector.broadcast %cst_38 : f32 to vector<2x128xf32>
    %60 = arith.addf %59, %58 : vector<2x128xf32>
    %61 = arith.divf %59, %60 : vector<2x128xf32>
    %62 = vector.extract_strided_slice %30 {offsets = [0, 128], sizes = [2, 128], strides = [1, 1]} : vector<2x512xf32> to vector<2x128xf32>
    %63 = arith.negf %62 : vector<2x128xf32>
    %64 = math.exp %63 : vector<2x128xf32>
    %cst_39 = arith.constant 1.000000e+00 : f32
    %65 = vector.broadcast %cst_39 : f32 to vector<2x128xf32>
    %66 = arith.addf %65, %64 : vector<2x128xf32>
    %67 = arith.divf %65, %66 : vector<2x128xf32>
    %68 = vector.extract_strided_slice %30 {offsets = [0, 256], sizes = [2, 128], strides = [1, 1]} : vector<2x512xf32> to vector<2x128xf32>
    %69 = math.tanh %68 : vector<2x128xf32>
    %70 = vector.extract_strided_slice %30 {offsets = [0, 384], sizes = [2, 128], strides = [1, 1]} : vector<2x512xf32> to vector<2x128xf32>
    %71 = arith.negf %70 : vector<2x128xf32>
    %72 = math.exp %71 : vector<2x128xf32>
    %cst_40 = arith.constant 1.000000e+00 : f32
    %73 = vector.broadcast %cst_40 : f32 to vector<2x128xf32>
    %74 = arith.addf %73, %72 : vector<2x128xf32>
    %75 = arith.divf %73, %74 : vector<2x128xf32>
    %76 = arith.mulf %67, %24 : vector<2x128xf32>
    %77 = arith.mulf %61, %69 : vector<2x128xf32>
    %78 = arith.addf %76, %77 : vector<2x128xf32>
    %79 = math.tanh %78 : vector<2x128xf32>
    %80 = arith.mulf %75, %79 : vector<2x128xf32>
    %81 = tpu.concatenate %55, %24 in 1 : vector<2x128xf32>, vector<2x128xf32> -> vector<2x256xf32>
    %cst_41 = arith.constant dense<0.000000e+00> : vector<2x512xf32>
    %82 = tpu.matmul %81, %16, %cst_41 {dimension_numbers = #tpu.dot_dimension_numbers<[1], [0], [0], [1], [0, 0, 1, 1], [], []>} : vector<2x256xf32>, vector<256x512xf32>, vector<2x512xf32> -> vector<2x512xf32>
    %83 = arith.addf %82, %20 : vector<2x512xf32>
    %84 = tpu.concatenate %80, %24 in 1 : vector<2x128xf32>, vector<2x128xf32> -> vector<2x256xf32>
    %cst_42 = arith.constant dense<0.000000e+00> : vector<2x512xf32>
    %85 = tpu.matmul %84, %17, %cst_42 {dimension_numbers = #tpu.dot_dimension_numbers<[1], [0], [0], [1], [0, 0, 1, 1], [], []>} : vector<2x256xf32>, vector<256x512xf32>, vector<2x512xf32> -> vector<2x512xf32>
    %86 = arith.addf %85, %23 : vector<2x512xf32>
    %87 = vector.extract_strided_slice %83 {offsets = [0, 0], sizes = [2, 128], strides = [1, 1]} : vector<2x512xf32> to vector<2x128xf32>
    %88 = arith.negf %87 : vector<2x128xf32>
    %89 = math.exp %88 : vector<2x128xf32>
    %cst_43 = arith.constant 1.000000e+00 : f32
    %90 = vector.broadcast %cst_43 : f32 to vector<2x128xf32>
    %91 = arith.addf %90, %89 : vector<2x128xf32>
    %92 = arith.divf %90, %91 : vector<2x128xf32>
    %93 = vector.extract_strided_slice %83 {offsets = [0, 128], sizes = [2, 128], strides = [1, 1]} : vector<2x512xf32> to vector<2x128xf32>
    %94 = arith.negf %93 : vector<2x128xf32>
    %95 = math.exp %94 : vector<2x128xf32>
    %cst_44 = arith.constant 1.000000e+00 : f32
    %96 = vector.broadcast %cst_44 : f32 to vector<2x128xf32>
    %97 = arith.addf %96, %95 : vector<2x128xf32>
    %98 = arith.divf %96, %97 : vector<2x128xf32>
    %99 = vector.extract_strided_slice %83 {offsets = [0, 256], sizes = [2, 128], strides = [1, 1]} : vector<2x512xf32> to vector<2x128xf32>
    %100 = math.tanh %99 : vector<2x128xf32>
    %101 = vector.extract_strided_slice %83 {offsets = [0, 384], sizes = [2, 128], strides = [1, 1]} : vector<2x512xf32> to vector<2x128xf32>
    %102 = arith.negf %101 : vector<2x128xf32>
    %103 = math.exp %102 : vector<2x128xf32>
    %cst_45 = arith.constant 1.000000e+00 : f32
    %104 = vector.broadcast %cst_45 : f32 to vector<2x128xf32>
    %105 = arith.addf %104, %103 : vector<2x128xf32>
    %106 = arith.divf %104, %105 : vector<2x128xf32>
    %107 = arith.mulf %98, %24 : vector<2x128xf32>
    %108 = arith.mulf %92, %100 : vector<2x128xf32>
    %109 = arith.addf %107, %108 : vector<2x128xf32>
    %110 = math.tanh %109 : vector<2x128xf32>
    %111 = arith.mulf %106, %110 : vector<2x128xf32>
    %112 = vector.extract_strided_slice %86 {offsets = [0, 0], sizes = [2, 128], strides = [1, 1]} : vector<2x512xf32> to vector<2x128xf32>
    %113 = arith.negf %112 : vector<2x128xf32>
    %114 = math.exp %113 : vector<2x128xf32>
    %cst_46 = arith.constant 1.000000e+00 : f32
    %115 = vector.broadcast %cst_46 : f32 to vector<2x128xf32>
    %116 = arith.addf %115, %114 : vector<2x128xf32>
    %117 = arith.divf %115, %116 : vector<2x128xf32>
    %118 = vector.extract_strided_slice %86 {offsets = [0, 128], sizes = [2, 128], strides = [1, 1]} : vector<2x512xf32> to vector<2x128xf32>
    %119 = arith.negf %118 : vector<2x128xf32>
    %120 = math.exp %119 : vector<2x128xf32>
    %cst_47 = arith.constant 1.000000e+00 : f32
    %121 = vector.broadcast %cst_47 : f32 to vector<2x128xf32>
    %122 = arith.addf %121, %120 : vector<2x128xf32>
    %123 = arith.divf %121, %122 : vector<2x128xf32>
    %124 = vector.extract_strided_slice %86 {offsets = [0, 256], sizes = [2, 128], strides = [1, 1]} : vector<2x512xf32> to vector<2x128xf32>
    %125 = math.tanh %124 : vector<2x128xf32>
    %126 = vector.extract_strided_slice %86 {offsets = [0, 384], sizes = [2, 128], strides = [1, 1]} : vector<2x512xf32> to vector<2x128xf32>
    %127 = arith.negf %126 : vector<2x128xf32>
    %128 = math.exp %127 : vector<2x128xf32>
    %cst_48 = arith.constant 1.000000e+00 : f32
    %129 = vector.broadcast %cst_48 : f32 to vector<2x128xf32>
    %130 = arith.addf %129, %128 : vector<2x128xf32>
    %131 = arith.divf %129, %130 : vector<2x128xf32>
    %132 = arith.mulf %123, %24 : vector<2x128xf32>
    %133 = arith.mulf %117, %125 : vector<2x128xf32>
    %134 = arith.addf %132, %133 : vector<2x128xf32>
    %135 = math.tanh %134 : vector<2x128xf32>
    %136 = arith.mulf %131, %135 : vector<2x128xf32>
    %c2 = arith.constant 2 : index
    %c0_49 = arith.constant 0 : index
    %137 = vector.load %arg20[%c2, %c0_49] : memref<16x512xf32, #tpu.memory_space<vmem>>, vector<2x512xf32>
    %cst_50 = arith.constant dense<0.000000e+00> : vector<2x512xf32>
    %138 = tpu.matmul %55, %14, %cst_50 {dimension_numbers = #tpu.dot_dimension_numbers<[1], [0], [0], [1], [0, 0, 1, 1], [], []>} : vector<2x128xf32>, vector<128x512xf32>, vector<2x512xf32> -> vector<2x512xf32>
    %139 = arith.addf %137, %138 : vector<2x512xf32>
    %c2_51 = arith.constant 2 : index
    %c0_52 = arith.constant 0 : index
    %140 = vector.load %arg21[%c2_51, %c0_52] : memref<16x512xf32, #tpu.memory_space<vmem>>, vector<2x512xf32>
    %cst_53 = arith.constant dense<0.000000e+00> : vector<2x512xf32>
    %141 = tpu.matmul %80, %15, %cst_53 {dimension_numbers = #tpu.dot_dimension_numbers<[1], [0], [0], [1], [0, 0, 1, 1], [], []>} : vector<2x128xf32>, vector<128x512xf32>, vector<2x512xf32> -> vector<2x512xf32>
    %142 = arith.addf %140, %141 : vector<2x512xf32>
    %143 = vector.extract_strided_slice %139 {offsets = [0, 0], sizes = [2, 128], strides = [1, 1]} : vector<2x512xf32> to vector<2x128xf32>
    %144 = arith.negf %143 : vector<2x128xf32>
    %145 = math.exp %144 : vector<2x128xf32>
    %cst_54 = arith.constant 1.000000e+00 : f32
    %146 = vector.broadcast %cst_54 : f32 to vector<2x128xf32>
    %147 = arith.addf %146, %145 : vector<2x128xf32>
    %148 = arith.divf %146, %147 : vector<2x128xf32>
    %149 = vector.extract_strided_slice %139 {offsets = [0, 128], sizes = [2, 128], strides = [1, 1]} : vector<2x512xf32> to vector<2x128xf32>
    %150 = arith.negf %149 : vector<2x128xf32>
    %151 = math.exp %150 : vector<2x128xf32>
    %cst_55 = arith.constant 1.000000e+00 : f32
    %152 = vector.broadcast %cst_55 : f32 to vector<2x128xf32>
    %153 = arith.addf %152, %151 : vector<2x128xf32>
    %154 = arith.divf %152, %153 : vector<2x128xf32>
    %155 = vector.extract_strided_slice %139 {offsets = [0, 256], sizes = [2, 128], strides = [1, 1]} : vector<2x512xf32> to vector<2x128xf32>
    %156 = math.tanh %155 : vector<2x128xf32>
    %157 = vector.extract_strided_slice %139 {offsets = [0, 384], sizes = [2, 128], strides = [1, 1]} : vector<2x512xf32> to vector<2x128xf32>
    %158 = arith.negf %157 : vector<2x128xf32>
    %159 = math.exp %158 : vector<2x128xf32>
    %cst_56 = arith.constant 1.000000e+00 : f32
    %160 = vector.broadcast %cst_56 : f32 to vector<2x128xf32>
    %161 = arith.addf %160, %159 : vector<2x128xf32>
    %162 = arith.divf %160, %161 : vector<2x128xf32>
    %163 = arith.mulf %154, %53 : vector<2x128xf32>
    %164 = arith.mulf %148, %156 : vector<2x128xf32>
    %165 = arith.addf %163, %164 : vector<2x128xf32>
    %166 = math.tanh %165 : vector<2x128xf32>
    %167 = arith.mulf %162, %166 : vector<2x128xf32>
    %168 = vector.extract_strided_slice %142 {offsets = [0, 0], sizes = [2, 128], strides = [1, 1]} : vector<2x512xf32> to vector<2x128xf32>
    %169 = arith.negf %168 : vector<2x128xf32>
    %170 = math.exp %169 : vector<2x128xf32>
    %cst_57 = arith.constant 1.000000e+00 : f32
    %171 = vector.broadcast %cst_57 : f32 to vector<2x128xf32>
    %172 = arith.addf %171, %170 : vector<2x128xf32>
    %173 = arith.divf %171, %172 : vector<2x128xf32>
    %174 = vector.extract_strided_slice %142 {offsets = [0, 128], sizes = [2, 128], strides = [1, 1]} : vector<2x512xf32> to vector<2x128xf32>
    %175 = arith.negf %174 : vector<2x128xf32>
    %176 = math.exp %175 : vector<2x128xf32>
    %cst_58 = arith.constant 1.000000e+00 : f32
    %177 = vector.broadcast %cst_58 : f32 to vector<2x128xf32>
    %178 = arith.addf %177, %176 : vector<2x128xf32>
    %179 = arith.divf %177, %178 : vector<2x128xf32>
    %180 = vector.extract_strided_slice %142 {offsets = [0, 256], sizes = [2, 128], strides = [1, 1]} : vector<2x512xf32> to vector<2x128xf32>
    %181 = math.tanh %180 : vector<2x128xf32>
    %182 = vector.extract_strided_slice %142 {offsets = [0, 384], sizes = [2, 128], strides = [1, 1]} : vector<2x512xf32> to vector<2x128xf32>
    %183 = arith.negf %182 : vector<2x128xf32>
    %184 = math.exp %183 : vector<2x128xf32>
    %cst_59 = arith.constant 1.000000e+00 : f32
    %185 = vector.broadcast %cst_59 : f32 to vector<2x128xf32>
    %186 = arith.addf %185, %184 : vector<2x128xf32>
    %187 = arith.divf %185, %186 : vector<2x128xf32>
    %188 = arith.mulf %179, %78 : vector<2x128xf32>
    %189 = arith.mulf %173, %181 : vector<2x128xf32>
    %190 = arith.addf %188, %189 : vector<2x128xf32>
    %191 = math.tanh %190 : vector<2x128xf32>
    %192 = arith.mulf %187, %191 : vector<2x128xf32>
    %193 = tpu.concatenate %167, %111 in 1 : vector<2x128xf32>, vector<2x128xf32> -> vector<2x256xf32>
    %cst_60 = arith.constant dense<0.000000e+00> : vector<2x512xf32>
    %194 = tpu.matmul %193, %16, %cst_60 {dimension_numbers = #tpu.dot_dimension_numbers<[1], [0], [0], [1], [0, 0, 1, 1], [], []>} : vector<2x256xf32>, vector<256x512xf32>, vector<2x512xf32> -> vector<2x512xf32>
    %195 = arith.addf %194, %20 : vector<2x512xf32>
    %196 = tpu.concatenate %192, %136 in 1 : vector<2x128xf32>, vector<2x128xf32> -> vector<2x256xf32>
    %cst_61 = arith.constant dense<0.000000e+00> : vector<2x512xf32>
    %197 = tpu.matmul %196, %17, %cst_61 {dimension_numbers = #tpu.dot_dimension_numbers<[1], [0], [0], [1], [0, 0, 1, 1], [], []>} : vector<2x256xf32>, vector<256x512xf32>, vector<2x512xf32> -> vector<2x512xf32>
    %198 = arith.addf %197, %23 : vector<2x512xf32>
    %199 = vector.extract_strided_slice %195 {offsets = [0, 0], sizes = [2, 128], strides = [1, 1]} : vector<2x512xf32> to vector<2x128xf32>
    %200 = arith.negf %199 : vector<2x128xf32>
    %201 = math.exp %200 : vector<2x128xf32>
    %cst_62 = arith.constant 1.000000e+00 : f32
    %202 = vector.broadcast %cst_62 : f32 to vector<2x128xf32>
    %203 = arith.addf %202, %201 : vector<2x128xf32>
    %204 = arith.divf %202, %203 : vector<2x128xf32>
    %205 = vector.extract_strided_slice %195 {offsets = [0, 128], sizes = [2, 128], strides = [1, 1]} : vector<2x512xf32> to vector<2x128xf32>
    %206 = arith.negf %205 : vector<2x128xf32>
    %207 = math.exp %206 : vector<2x128xf32>
    %cst_63 = arith.constant 1.000000e+00 : f32
    %208 = vector.broadcast %cst_63 : f32 to vector<2x128xf32>
    %209 = arith.addf %208, %207 : vector<2x128xf32>
    %210 = arith.divf %208, %209 : vector<2x128xf32>
    %211 = vector.extract_strided_slice %195 {offsets = [0, 256], sizes = [2, 128], strides = [1, 1]} : vector<2x512xf32> to vector<2x128xf32>
    %212 = math.tanh %211 : vector<2x128xf32>
    %213 = vector.extract_strided_slice %195 {offsets = [0, 384], sizes = [2, 128], strides = [1, 1]} : vector<2x512xf32> to vector<2x128xf32>
    %214 = arith.negf %213 : vector<2x128xf32>
    %215 = math.exp %214 : vector<2x128xf32>
    %cst_64 = arith.constant 1.000000e+00 : f32
    %216 = vector.broadcast %cst_64 : f32 to vector<2x128xf32>
    %217 = arith.addf %216, %215 : vector<2x128xf32>
    %218 = arith.divf %216, %217 : vector<2x128xf32>
    %219 = arith.mulf %210, %109 : vector<2x128xf32>
    %220 = arith.mulf %204, %212 : vector<2x128xf32>
    %221 = arith.addf %219, %220 : vector<2x128xf32>
    %222 = math.tanh %221 : vector<2x128xf32>
    %223 = arith.mulf %218, %222 : vector<2x128xf32>
    %224 = vector.extract_strided_slice %198 {offsets = [0, 0], sizes = [2, 128], strides = [1, 1]} : vector<2x512xf32> to vector<2x128xf32>
    %225 = arith.negf %224 : vector<2x128xf32>
    %226 = math.exp %225 : vector<2x128xf32>
    %cst_65 = arith.constant 1.000000e+00 : f32
    %227 = vector.broadcast %cst_65 : f32 to vector<2x128xf32>
    %228 = arith.addf %227, %226 : vector<2x128xf32>
    %229 = arith.divf %227, %228 : vector<2x128xf32>
    %230 = vector.extract_strided_slice %198 {offsets = [0, 128], sizes = [2, 128], strides = [1, 1]} : vector<2x512xf32> to vector<2x128xf32>
    %231 = arith.negf %230 : vector<2x128xf32>
    %232 = math.exp %231 : vector<2x128xf32>
    %cst_66 = arith.constant 1.000000e+00 : f32
    %233 = vector.broadcast %cst_66 : f32 to vector<2x128xf32>
    %234 = arith.addf %233, %232 : vector<2x128xf32>
    %235 = arith.divf %233, %234 : vector<2x128xf32>
    %236 = vector.extract_strided_slice %198 {offsets = [0, 256], sizes = [2, 128], strides = [1, 1]} : vector<2x512xf32> to vector<2x128xf32>
    %237 = math.tanh %236 : vector<2x128xf32>
    %238 = vector.extract_strided_slice %198 {offsets = [0, 384], sizes = [2, 128], strides = [1, 1]} : vector<2x512xf32> to vector<2x128xf32>
    %239 = arith.negf %238 : vector<2x128xf32>
    %240 = math.exp %239 : vector<2x128xf32>
    %cst_67 = arith.constant 1.000000e+00 : f32
    %241 = vector.broadcast %cst_67 : f32 to vector<2x128xf32>
    %242 = arith.addf %241, %240 : vector<2x128xf32>
    %243 = arith.divf %241, %242 : vector<2x128xf32>
    %244 = arith.mulf %235, %134 : vector<2x128xf32>
    %245 = arith.mulf %229, %237 : vector<2x128xf32>
    %246 = arith.addf %244, %245 : vector<2x128xf32>
    %247 = math.tanh %246 : vector<2x128xf32>
    %248 = arith.mulf %243, %247 : vector<2x128xf32>
    %c4 = arith.constant 4 : index
    %c0_68 = arith.constant 0 : index
    %249 = vector.load %arg20[%c4, %c0_68] : memref<16x512xf32, #tpu.memory_space<vmem>>, vector<2x512xf32>
    %cst_69 = arith.constant dense<0.000000e+00> : vector<2x512xf32>
    %250 = tpu.matmul %167, %14, %cst_69 {dimension_numbers = #tpu.dot_dimension_numbers<[1], [0], [0], [1], [0, 0, 1, 1], [], []>} : vector<2x128xf32>, vector<128x512xf32>, vector<2x512xf32> -> vector<2x512xf32>
    %251 = arith.addf %249, %250 : vector<2x512xf32>
    %c4_70 = arith.constant 4 : index
    %c0_71 = arith.constant 0 : index
    %252 = vector.load %arg21[%c4_70, %c0_71] : memref<16x512xf32, #tpu.memory_space<vmem>>, vector<2x512xf32>
    %cst_72 = arith.constant dense<0.000000e+00> : vector<2x512xf32>
    %253 = tpu.matmul %192, %15, %cst_72 {dimension_numbers = #tpu.dot_dimension_numbers<[1], [0], [0], [1], [0, 0, 1, 1], [], []>} : vector<2x128xf32>, vector<128x512xf32>, vector<2x512xf32> -> vector<2x512xf32>
    %254 = arith.addf %252, %253 : vector<2x512xf32>
    %255 = vector.extract_strided_slice %251 {offsets = [0, 0], sizes = [2, 128], strides = [1, 1]} : vector<2x512xf32> to vector<2x128xf32>
    %256 = arith.negf %255 : vector<2x128xf32>
    %257 = math.exp %256 : vector<2x128xf32>
    %cst_73 = arith.constant 1.000000e+00 : f32
    %258 = vector.broadcast %cst_73 : f32 to vector<2x128xf32>
    %259 = arith.addf %258, %257 : vector<2x128xf32>
    %260 = arith.divf %258, %259 : vector<2x128xf32>
    %261 = vector.extract_strided_slice %251 {offsets = [0, 128], sizes = [2, 128], strides = [1, 1]} : vector<2x512xf32> to vector<2x128xf32>
    %262 = arith.negf %261 : vector<2x128xf32>
    %263 = math.exp %262 : vector<2x128xf32>
    %cst_74 = arith.constant 1.000000e+00 : f32
    %264 = vector.broadcast %cst_74 : f32 to vector<2x128xf32>
    %265 = arith.addf %264, %263 : vector<2x128xf32>
    %266 = arith.divf %264, %265 : vector<2x128xf32>
    %267 = vector.extract_strided_slice %251 {offsets = [0, 256], sizes = [2, 128], strides = [1, 1]} : vector<2x512xf32> to vector<2x128xf32>
    %268 = math.tanh %267 : vector<2x128xf32>
    %269 = vector.extract_strided_slice %251 {offsets = [0, 384], sizes = [2, 128], strides = [1, 1]} : vector<2x512xf32> to vector<2x128xf32>
    %270 = arith.negf %269 : vector<2x128xf32>
    %271 = math.exp %270 : vector<2x128xf32>
    %cst_75 = arith.constant 1.000000e+00 : f32
    %272 = vector.broadcast %cst_75 : f32 to vector<2x128xf32>
    %273 = arith.addf %272, %271 : vector<2x128xf32>
    %274 = arith.divf %272, %273 : vector<2x128xf32>
    %275 = arith.mulf %266, %165 : vector<2x128xf32>
    %276 = arith.mulf %260, %268 : vector<2x128xf32>
    %277 = arith.addf %275, %276 : vector<2x128xf32>
    %278 = math.tanh %277 : vector<2x128xf32>
    %279 = arith.mulf %274, %278 : vector<2x128xf32>
    %280 = vector.extract_strided_slice %254 {offsets = [0, 0], sizes = [2, 128], strides = [1, 1]} : vector<2x512xf32> to vector<2x128xf32>
    %281 = arith.negf %280 : vector<2x128xf32>
    %282 = math.exp %281 : vector<2x128xf32>
    %cst_76 = arith.constant 1.000000e+00 : f32
    %283 = vector.broadcast %cst_76 : f32 to vector<2x128xf32>
    %284 = arith.addf %283, %282 : vector<2x128xf32>
    %285 = arith.divf %283, %284 : vector<2x128xf32>
    %286 = vector.extract_strided_slice %254 {offsets = [0, 128], sizes = [2, 128], strides = [1, 1]} : vector<2x512xf32> to vector<2x128xf32>
    %287 = arith.negf %286 : vector<2x128xf32>
    %288 = math.exp %287 : vector<2x128xf32>
    %cst_77 = arith.constant 1.000000e+00 : f32
    %289 = vector.broadcast %cst_77 : f32 to vector<2x128xf32>
    %290 = arith.addf %289, %288 : vector<2x128xf32>
    %291 = arith.divf %289, %290 : vector<2x128xf32>
    %292 = vector.extract_strided_slice %254 {offsets = [0, 256], sizes = [2, 128], strides = [1, 1]} : vector<2x512xf32> to vector<2x128xf32>
    %293 = math.tanh %292 : vector<2x128xf32>
    %294 = vector.extract_strided_slice %254 {offsets = [0, 384], sizes = [2, 128], strides = [1, 1]} : vector<2x512xf32> to vector<2x128xf32>
    %295 = arith.negf %294 : vector<2x128xf32>
    %296 = math.exp %295 : vector<2x128xf32>
    %cst_78 = arith.constant 1.000000e+00 : f32
    %297 = vector.broadcast %cst_78 : f32 to vector<2x128xf32>
    %298 = arith.addf %297, %296 : vector<2x128xf32>
    %299 = arith.divf %297, %298 : vector<2x128xf32>
    %300 = arith.mulf %291, %190 : vector<2x128xf32>
    %301 = arith.mulf %285, %293 : vector<2x128xf32>
    %302 = arith.addf %300, %301 : vector<2x128xf32>
    %303 = math.tanh %302 : vector<2x128xf32>
    %304 = arith.mulf %299, %303 : vector<2x128xf32>
    %305 = tpu.concatenate %279, %223 in 1 : vector<2x128xf32>, vector<2x128xf32> -> vector<2x256xf32>
    %cst_79 = arith.constant dense<0.000000e+00> : vector<2x512xf32>
    %306 = tpu.matmul %305, %16, %cst_79 {dimension_numbers = #tpu.dot_dimension_numbers<[1], [0], [0], [1], [0, 0, 1, 1], [], []>} : vector<2x256xf32>, vector<256x512xf32>, vector<2x512xf32> -> vector<2x512xf32>
    %307 = arith.addf %306, %20 : vector<2x512xf32>
    %308 = tpu.concatenate %304, %248 in 1 : vector<2x128xf32>, vector<2x128xf32> -> vector<2x256xf32>
    %cst_80 = arith.constant dense<0.000000e+00> : vector<2x512xf32>
    %309 = tpu.matmul %308, %17, %cst_80 {dimension_numbers = #tpu.dot_dimension_numbers<[1], [0], [0], [1], [0, 0, 1, 1], [], []>} : vector<2x256xf32>, vector<256x512xf32>, vector<2x512xf32> -> vector<2x512xf32>
    %310 = arith.addf %309, %23 : vector<2x512xf32>
    %311 = vector.extract_strided_slice %307 {offsets = [0, 0], sizes = [2, 128], strides = [1, 1]} : vector<2x512xf32> to vector<2x128xf32>
    %312 = arith.negf %311 : vector<2x128xf32>
    %313 = math.exp %312 : vector<2x128xf32>
    %cst_81 = arith.constant 1.000000e+00 : f32
    %314 = vector.broadcast %cst_81 : f32 to vector<2x128xf32>
    %315 = arith.addf %314, %313 : vector<2x128xf32>
    %316 = arith.divf %314, %315 : vector<2x128xf32>
    %317 = vector.extract_strided_slice %307 {offsets = [0, 128], sizes = [2, 128], strides = [1, 1]} : vector<2x512xf32> to vector<2x128xf32>
    %318 = arith.negf %317 : vector<2x128xf32>
    %319 = math.exp %318 : vector<2x128xf32>
    %cst_82 = arith.constant 1.000000e+00 : f32
    %320 = vector.broadcast %cst_82 : f32 to vector<2x128xf32>
    %321 = arith.addf %320, %319 : vector<2x128xf32>
    %322 = arith.divf %320, %321 : vector<2x128xf32>
    %323 = vector.extract_strided_slice %307 {offsets = [0, 256], sizes = [2, 128], strides = [1, 1]} : vector<2x512xf32> to vector<2x128xf32>
    %324 = math.tanh %323 : vector<2x128xf32>
    %325 = vector.extract_strided_slice %307 {offsets = [0, 384], sizes = [2, 128], strides = [1, 1]} : vector<2x512xf32> to vector<2x128xf32>
    %326 = arith.negf %325 : vector<2x128xf32>
    %327 = math.exp %326 : vector<2x128xf32>
    %cst_83 = arith.constant 1.000000e+00 : f32
    %328 = vector.broadcast %cst_83 : f32 to vector<2x128xf32>
    %329 = arith.addf %328, %327 : vector<2x128xf32>
    %330 = arith.divf %328, %329 : vector<2x128xf32>
    %331 = arith.mulf %322, %221 : vector<2x128xf32>
    %332 = arith.mulf %316, %324 : vector<2x128xf32>
    %333 = arith.addf %331, %332 : vector<2x128xf32>
    %334 = math.tanh %333 : vector<2x128xf32>
    %335 = arith.mulf %330, %334 : vector<2x128xf32>
    %336 = vector.extract_strided_slice %310 {offsets = [0, 0], sizes = [2, 128], strides = [1, 1]} : vector<2x512xf32> to vector<2x128xf32>
    %337 = arith.negf %336 : vector<2x128xf32>
    %338 = math.exp %337 : vector<2x128xf32>
    %cst_84 = arith.constant 1.000000e+00 : f32
    %339 = vector.broadcast %cst_84 : f32 to vector<2x128xf32>
    %340 = arith.addf %339, %338 : vector<2x128xf32>
    %341 = arith.divf %339, %340 : vector<2x128xf32>
    %342 = vector.extract_strided_slice %310 {offsets = [0, 128], sizes = [2, 128], strides = [1, 1]} : vector<2x512xf32> to vector<2x128xf32>
    %343 = arith.negf %342 : vector<2x128xf32>
    %344 = math.exp %343 : vector<2x128xf32>
    %cst_85 = arith.constant 1.000000e+00 : f32
    %345 = vector.broadcast %cst_85 : f32 to vector<2x128xf32>
    %346 = arith.addf %345, %344 : vector<2x128xf32>
    %347 = arith.divf %345, %346 : vector<2x128xf32>
    %348 = vector.extract_strided_slice %310 {offsets = [0, 256], sizes = [2, 128], strides = [1, 1]} : vector<2x512xf32> to vector<2x128xf32>
    %349 = math.tanh %348 : vector<2x128xf32>
    %350 = vector.extract_strided_slice %310 {offsets = [0, 384], sizes = [2, 128], strides = [1, 1]} : vector<2x512xf32> to vector<2x128xf32>
    %351 = arith.negf %350 : vector<2x128xf32>
    %352 = math.exp %351 : vector<2x128xf32>
    %cst_86 = arith.constant 1.000000e+00 : f32
    %353 = vector.broadcast %cst_86 : f32 to vector<2x128xf32>
    %354 = arith.addf %353, %352 : vector<2x128xf32>
    %355 = arith.divf %353, %354 : vector<2x128xf32>
    %356 = arith.mulf %347, %246 : vector<2x128xf32>
    %357 = arith.mulf %341, %349 : vector<2x128xf32>
    %358 = arith.addf %356, %357 : vector<2x128xf32>
    %359 = math.tanh %358 : vector<2x128xf32>
    %360 = arith.mulf %355, %359 : vector<2x128xf32>
    %c6 = arith.constant 6 : index
    %c0_87 = arith.constant 0 : index
    %361 = vector.load %arg20[%c6, %c0_87] : memref<16x512xf32, #tpu.memory_space<vmem>>, vector<2x512xf32>
    %cst_88 = arith.constant dense<0.000000e+00> : vector<2x512xf32>
    %362 = tpu.matmul %279, %14, %cst_88 {dimension_numbers = #tpu.dot_dimension_numbers<[1], [0], [0], [1], [0, 0, 1, 1], [], []>} : vector<2x128xf32>, vector<128x512xf32>, vector<2x512xf32> -> vector<2x512xf32>
    %363 = arith.addf %361, %362 : vector<2x512xf32>
    %c6_89 = arith.constant 6 : index
    %c0_90 = arith.constant 0 : index
    %364 = vector.load %arg21[%c6_89, %c0_90] : memref<16x512xf32, #tpu.memory_space<vmem>>, vector<2x512xf32>
    %cst_91 = arith.constant dense<0.000000e+00> : vector<2x512xf32>
    %365 = tpu.matmul %304, %15, %cst_91 {dimension_numbers = #tpu.dot_dimension_numbers<[1], [0], [0], [1], [0, 0, 1, 1], [], []>} : vector<2x128xf32>, vector<128x512xf32>, vector<2x512xf32> -> vector<2x512xf32>
    %366 = arith.addf %364, %365 : vector<2x512xf32>
    %367 = vector.extract_strided_slice %363 {offsets = [0, 0], sizes = [2, 128], strides = [1, 1]} : vector<2x512xf32> to vector<2x128xf32>
    %368 = arith.negf %367 : vector<2x128xf32>
    %369 = math.exp %368 : vector<2x128xf32>
    %cst_92 = arith.constant 1.000000e+00 : f32
    %370 = vector.broadcast %cst_92 : f32 to vector<2x128xf32>
    %371 = arith.addf %370, %369 : vector<2x128xf32>
    %372 = arith.divf %370, %371 : vector<2x128xf32>
    %373 = vector.extract_strided_slice %363 {offsets = [0, 128], sizes = [2, 128], strides = [1, 1]} : vector<2x512xf32> to vector<2x128xf32>
    %374 = arith.negf %373 : vector<2x128xf32>
    %375 = math.exp %374 : vector<2x128xf32>
    %cst_93 = arith.constant 1.000000e+00 : f32
    %376 = vector.broadcast %cst_93 : f32 to vector<2x128xf32>
    %377 = arith.addf %376, %375 : vector<2x128xf32>
    %378 = arith.divf %376, %377 : vector<2x128xf32>
    %379 = vector.extract_strided_slice %363 {offsets = [0, 256], sizes = [2, 128], strides = [1, 1]} : vector<2x512xf32> to vector<2x128xf32>
    %380 = math.tanh %379 : vector<2x128xf32>
    %381 = vector.extract_strided_slice %363 {offsets = [0, 384], sizes = [2, 128], strides = [1, 1]} : vector<2x512xf32> to vector<2x128xf32>
    %382 = arith.negf %381 : vector<2x128xf32>
    %383 = math.exp %382 : vector<2x128xf32>
    %cst_94 = arith.constant 1.000000e+00 : f32
    %384 = vector.broadcast %cst_94 : f32 to vector<2x128xf32>
    %385 = arith.addf %384, %383 : vector<2x128xf32>
    %386 = arith.divf %384, %385 : vector<2x128xf32>
    %387 = arith.mulf %378, %277 : vector<2x128xf32>
    %388 = arith.mulf %372, %380 : vector<2x128xf32>
    %389 = arith.addf %387, %388 : vector<2x128xf32>
    %390 = math.tanh %389 : vector<2x128xf32>
    %391 = arith.mulf %386, %390 : vector<2x128xf32>
    %392 = vector.extract_strided_slice %366 {offsets = [0, 0], sizes = [2, 128], strides = [1, 1]} : vector<2x512xf32> to vector<2x128xf32>
    %393 = arith.negf %392 : vector<2x128xf32>
    %394 = math.exp %393 : vector<2x128xf32>
    %cst_95 = arith.constant 1.000000e+00 : f32
    %395 = vector.broadcast %cst_95 : f32 to vector<2x128xf32>
    %396 = arith.addf %395, %394 : vector<2x128xf32>
    %397 = arith.divf %395, %396 : vector<2x128xf32>
    %398 = vector.extract_strided_slice %366 {offsets = [0, 128], sizes = [2, 128], strides = [1, 1]} : vector<2x512xf32> to vector<2x128xf32>
    %399 = arith.negf %398 : vector<2x128xf32>
    %400 = math.exp %399 : vector<2x128xf32>
    %cst_96 = arith.constant 1.000000e+00 : f32
    %401 = vector.broadcast %cst_96 : f32 to vector<2x128xf32>
    %402 = arith.addf %401, %400 : vector<2x128xf32>
    %403 = arith.divf %401, %402 : vector<2x128xf32>
    %404 = vector.extract_strided_slice %366 {offsets = [0, 256], sizes = [2, 128], strides = [1, 1]} : vector<2x512xf32> to vector<2x128xf32>
    %405 = math.tanh %404 : vector<2x128xf32>
    %406 = vector.extract_strided_slice %366 {offsets = [0, 384], sizes = [2, 128], strides = [1, 1]} : vector<2x512xf32> to vector<2x128xf32>
    %407 = arith.negf %406 : vector<2x128xf32>
    %408 = math.exp %407 : vector<2x128xf32>
    %cst_97 = arith.constant 1.000000e+00 : f32
    %409 = vector.broadcast %cst_97 : f32 to vector<2x128xf32>
    %410 = arith.addf %409, %408 : vector<2x128xf32>
    %411 = arith.divf %409, %410 : vector<2x128xf32>
    %412 = arith.mulf %403, %302 : vector<2x128xf32>
    %413 = arith.mulf %397, %405 : vector<2x128xf32>
    %414 = arith.addf %412, %413 : vector<2x128xf32>
    %415 = math.tanh %414 : vector<2x128xf32>
    %416 = arith.mulf %411, %415 : vector<2x128xf32>
    %417 = tpu.concatenate %391, %335 in 1 : vector<2x128xf32>, vector<2x128xf32> -> vector<2x256xf32>
    %cst_98 = arith.constant dense<0.000000e+00> : vector<2x512xf32>
    %418 = tpu.matmul %417, %16, %cst_98 {dimension_numbers = #tpu.dot_dimension_numbers<[1], [0], [0], [1], [0, 0, 1, 1], [], []>} : vector<2x256xf32>, vector<256x512xf32>, vector<2x512xf32> -> vector<2x512xf32>
    %419 = arith.addf %418, %20 : vector<2x512xf32>
    %420 = tpu.concatenate %416, %360 in 1 : vector<2x128xf32>, vector<2x128xf32> -> vector<2x256xf32>
    %cst_99 = arith.constant dense<0.000000e+00> : vector<2x512xf32>
    %421 = tpu.matmul %420, %17, %cst_99 {dimension_numbers = #tpu.dot_dimension_numbers<[1], [0], [0], [1], [0, 0, 1, 1], [], []>} : vector<2x256xf32>, vector<256x512xf32>, vector<2x512xf32> -> vector<2x512xf32>
    %422 = arith.addf %421, %23 : vector<2x512xf32>
    %423 = vector.extract_strided_slice %419 {offsets = [0, 0], sizes = [2, 128], strides = [1, 1]} : vector<2x512xf32> to vector<2x128xf32>
    %424 = arith.negf %423 : vector<2x128xf32>
    %425 = math.exp %424 : vector<2x128xf32>
    %cst_100 = arith.constant 1.000000e+00 : f32
    %426 = vector.broadcast %cst_100 : f32 to vector<2x128xf32>
    %427 = arith.addf %426, %425 : vector<2x128xf32>
    %428 = arith.divf %426, %427 : vector<2x128xf32>
    %429 = vector.extract_strided_slice %419 {offsets = [0, 128], sizes = [2, 128], strides = [1, 1]} : vector<2x512xf32> to vector<2x128xf32>
    %430 = arith.negf %429 : vector<2x128xf32>
    %431 = math.exp %430 : vector<2x128xf32>
    %cst_101 = arith.constant 1.000000e+00 : f32
    %432 = vector.broadcast %cst_101 : f32 to vector<2x128xf32>
    %433 = arith.addf %432, %431 : vector<2x128xf32>
    %434 = arith.divf %432, %433 : vector<2x128xf32>
    %435 = vector.extract_strided_slice %419 {offsets = [0, 256], sizes = [2, 128], strides = [1, 1]} : vector<2x512xf32> to vector<2x128xf32>
    %436 = math.tanh %435 : vector<2x128xf32>
    %437 = vector.extract_strided_slice %419 {offsets = [0, 384], sizes = [2, 128], strides = [1, 1]} : vector<2x512xf32> to vector<2x128xf32>
    %438 = arith.negf %437 : vector<2x128xf32>
    %439 = math.exp %438 : vector<2x128xf32>
    %cst_102 = arith.constant 1.000000e+00 : f32
    %440 = vector.broadcast %cst_102 : f32 to vector<2x128xf32>
    %441 = arith.addf %440, %439 : vector<2x128xf32>
    %442 = arith.divf %440, %441 : vector<2x128xf32>
    %443 = arith.mulf %434, %333 : vector<2x128xf32>
    %444 = arith.mulf %428, %436 : vector<2x128xf32>
    %445 = arith.addf %443, %444 : vector<2x128xf32>
    %446 = math.tanh %445 : vector<2x128xf32>
    %447 = arith.mulf %442, %446 : vector<2x128xf32>
    %448 = vector.extract_strided_slice %422 {offsets = [0, 0], sizes = [2, 128], strides = [1, 1]} : vector<2x512xf32> to vector<2x128xf32>
    %449 = arith.negf %448 : vector<2x128xf32>
    %450 = math.exp %449 : vector<2x128xf32>
    %cst_103 = arith.constant 1.000000e+00 : f32
    %451 = vector.broadcast %cst_103 : f32 to vector<2x128xf32>
    %452 = arith.addf %451, %450 : vector<2x128xf32>
    %453 = arith.divf %451, %452 : vector<2x128xf32>
    %454 = vector.extract_strided_slice %422 {offsets = [0, 128], sizes = [2, 128], strides = [1, 1]} : vector<2x512xf32> to vector<2x128xf32>
    %455 = arith.negf %454 : vector<2x128xf32>
    %456 = math.exp %455 : vector<2x128xf32>
    %cst_104 = arith.constant 1.000000e+00 : f32
    %457 = vector.broadcast %cst_104 : f32 to vector<2x128xf32>
    %458 = arith.addf %457, %456 : vector<2x128xf32>
    %459 = arith.divf %457, %458 : vector<2x128xf32>
    %460 = vector.extract_strided_slice %422 {offsets = [0, 256], sizes = [2, 128], strides = [1, 1]} : vector<2x512xf32> to vector<2x128xf32>
    %461 = math.tanh %460 : vector<2x128xf32>
    %462 = vector.extract_strided_slice %422 {offsets = [0, 384], sizes = [2, 128], strides = [1, 1]} : vector<2x512xf32> to vector<2x128xf32>
    %463 = arith.negf %462 : vector<2x128xf32>
    %464 = math.exp %463 : vector<2x128xf32>
    %cst_105 = arith.constant 1.000000e+00 : f32
    %465 = vector.broadcast %cst_105 : f32 to vector<2x128xf32>
    %466 = arith.addf %465, %464 : vector<2x128xf32>
    %467 = arith.divf %465, %466 : vector<2x128xf32>
    %468 = arith.mulf %459, %358 : vector<2x128xf32>
    %469 = arith.mulf %453, %461 : vector<2x128xf32>
    %470 = arith.addf %468, %469 : vector<2x128xf32>
    %471 = math.tanh %470 : vector<2x128xf32>
    %472 = arith.mulf %467, %471 : vector<2x128xf32>
    %c8 = arith.constant 8 : index
    %c0_106 = arith.constant 0 : index
    %473 = vector.load %arg20[%c8, %c0_106] : memref<16x512xf32, #tpu.memory_space<vmem>>, vector<2x512xf32>
    %cst_107 = arith.constant dense<0.000000e+00> : vector<2x512xf32>
    %474 = tpu.matmul %391, %14, %cst_107 {dimension_numbers = #tpu.dot_dimension_numbers<[1], [0], [0], [1], [0, 0, 1, 1], [], []>} : vector<2x128xf32>, vector<128x512xf32>, vector<2x512xf32> -> vector<2x512xf32>
    %475 = arith.addf %473, %474 : vector<2x512xf32>
    %c8_108 = arith.constant 8 : index
    %c0_109 = arith.constant 0 : index
    %476 = vector.load %arg21[%c8_108, %c0_109] : memref<16x512xf32, #tpu.memory_space<vmem>>, vector<2x512xf32>
    %cst_110 = arith.constant dense<0.000000e+00> : vector<2x512xf32>
    %477 = tpu.matmul %416, %15, %cst_110 {dimension_numbers = #tpu.dot_dimension_numbers<[1], [0], [0], [1], [0, 0, 1, 1], [], []>} : vector<2x128xf32>, vector<128x512xf32>, vector<2x512xf32> -> vector<2x512xf32>
    %478 = arith.addf %476, %477 : vector<2x512xf32>
    %479 = vector.extract_strided_slice %475 {offsets = [0, 0], sizes = [2, 128], strides = [1, 1]} : vector<2x512xf32> to vector<2x128xf32>
    %480 = arith.negf %479 : vector<2x128xf32>
    %481 = math.exp %480 : vector<2x128xf32>
    %cst_111 = arith.constant 1.000000e+00 : f32
    %482 = vector.broadcast %cst_111 : f32 to vector<2x128xf32>
    %483 = arith.addf %482, %481 : vector<2x128xf32>
    %484 = arith.divf %482, %483 : vector<2x128xf32>
    %485 = vector.extract_strided_slice %475 {offsets = [0, 128], sizes = [2, 128], strides = [1, 1]} : vector<2x512xf32> to vector<2x128xf32>
    %486 = arith.negf %485 : vector<2x128xf32>
    %487 = math.exp %486 : vector<2x128xf32>
    %cst_112 = arith.constant 1.000000e+00 : f32
    %488 = vector.broadcast %cst_112 : f32 to vector<2x128xf32>
    %489 = arith.addf %488, %487 : vector<2x128xf32>
    %490 = arith.divf %488, %489 : vector<2x128xf32>
    %491 = vector.extract_strided_slice %475 {offsets = [0, 256], sizes = [2, 128], strides = [1, 1]} : vector<2x512xf32> to vector<2x128xf32>
    %492 = math.tanh %491 : vector<2x128xf32>
    %493 = vector.extract_strided_slice %475 {offsets = [0, 384], sizes = [2, 128], strides = [1, 1]} : vector<2x512xf32> to vector<2x128xf32>
    %494 = arith.negf %493 : vector<2x128xf32>
    %495 = math.exp %494 : vector<2x128xf32>
    %cst_113 = arith.constant 1.000000e+00 : f32
    %496 = vector.broadcast %cst_113 : f32 to vector<2x128xf32>
    %497 = arith.addf %496, %495 : vector<2x128xf32>
    %498 = arith.divf %496, %497 : vector<2x128xf32>
    %499 = arith.mulf %490, %389 : vector<2x128xf32>
    %500 = arith.mulf %484, %492 : vector<2x128xf32>
    %501 = arith.addf %499, %500 : vector<2x128xf32>
    %502 = math.tanh %501 : vector<2x128xf32>
    %503 = arith.mulf %498, %502 : vector<2x128xf32>
    %504 = vector.extract_strided_slice %478 {offsets = [0, 0], sizes = [2, 128], strides = [1, 1]} : vector<2x512xf32> to vector<2x128xf32>
    %505 = arith.negf %504 : vector<2x128xf32>
    %506 = math.exp %505 : vector<2x128xf32>
    %cst_114 = arith.constant 1.000000e+00 : f32
    %507 = vector.broadcast %cst_114 : f32 to vector<2x128xf32>
    %508 = arith.addf %507, %506 : vector<2x128xf32>
    %509 = arith.divf %507, %508 : vector<2x128xf32>
    %510 = vector.extract_strided_slice %478 {offsets = [0, 128], sizes = [2, 128], strides = [1, 1]} : vector<2x512xf32> to vector<2x128xf32>
    %511 = arith.negf %510 : vector<2x128xf32>
    %512 = math.exp %511 : vector<2x128xf32>
    %cst_115 = arith.constant 1.000000e+00 : f32
    %513 = vector.broadcast %cst_115 : f32 to vector<2x128xf32>
    %514 = arith.addf %513, %512 : vector<2x128xf32>
    %515 = arith.divf %513, %514 : vector<2x128xf32>
    %516 = vector.extract_strided_slice %478 {offsets = [0, 256], sizes = [2, 128], strides = [1, 1]} : vector<2x512xf32> to vector<2x128xf32>
    %517 = math.tanh %516 : vector<2x128xf32>
    %518 = vector.extract_strided_slice %478 {offsets = [0, 384], sizes = [2, 128], strides = [1, 1]} : vector<2x512xf32> to vector<2x128xf32>
    %519 = arith.negf %518 : vector<2x128xf32>
    %520 = math.exp %519 : vector<2x128xf32>
    %cst_116 = arith.constant 1.000000e+00 : f32
    %521 = vector.broadcast %cst_116 : f32 to vector<2x128xf32>
    %522 = arith.addf %521, %520 : vector<2x128xf32>
    %523 = arith.divf %521, %522 : vector<2x128xf32>
    %524 = arith.mulf %515, %414 : vector<2x128xf32>
    %525 = arith.mulf %509, %517 : vector<2x128xf32>
    %526 = arith.addf %524, %525 : vector<2x128xf32>
    %527 = math.tanh %526 : vector<2x128xf32>
    %528 = arith.mulf %523, %527 : vector<2x128xf32>
    %529 = tpu.concatenate %503, %447 in 1 : vector<2x128xf32>, vector<2x128xf32> -> vector<2x256xf32>
    %cst_117 = arith.constant dense<0.000000e+00> : vector<2x512xf32>
    %530 = tpu.matmul %529, %16, %cst_117 {dimension_numbers = #tpu.dot_dimension_numbers<[1], [0], [0], [1], [0, 0, 1, 1], [], []>} : vector<2x256xf32>, vector<256x512xf32>, vector<2x512xf32> -> vector<2x512xf32>
    %531 = arith.addf %530, %20 : vector<2x512xf32>
    %532 = tpu.concatenate %528, %472 in 1 : vector<2x128xf32>, vector<2x128xf32> -> vector<2x256xf32>
    %cst_118 = arith.constant dense<0.000000e+00> : vector<2x512xf32>
    %533 = tpu.matmul %532, %17, %cst_118 {dimension_numbers = #tpu.dot_dimension_numbers<[1], [0], [0], [1], [0, 0, 1, 1], [], []>} : vector<2x256xf32>, vector<256x512xf32>, vector<2x512xf32> -> vector<2x512xf32>
    %534 = arith.addf %533, %23 : vector<2x512xf32>
    %535 = vector.extract_strided_slice %531 {offsets = [0, 0], sizes = [2, 128], strides = [1, 1]} : vector<2x512xf32> to vector<2x128xf32>
    %536 = arith.negf %535 : vector<2x128xf32>
    %537 = math.exp %536 : vector<2x128xf32>
    %cst_119 = arith.constant 1.000000e+00 : f32
    %538 = vector.broadcast %cst_119 : f32 to vector<2x128xf32>
    %539 = arith.addf %538, %537 : vector<2x128xf32>
    %540 = arith.divf %538, %539 : vector<2x128xf32>
    %541 = vector.extract_strided_slice %531 {offsets = [0, 128], sizes = [2, 128], strides = [1, 1]} : vector<2x512xf32> to vector<2x128xf32>
    %542 = arith.negf %541 : vector<2x128xf32>
    %543 = math.exp %542 : vector<2x128xf32>
    %cst_120 = arith.constant 1.000000e+00 : f32
    %544 = vector.broadcast %cst_120 : f32 to vector<2x128xf32>
    %545 = arith.addf %544, %543 : vector<2x128xf32>
    %546 = arith.divf %544, %545 : vector<2x128xf32>
    %547 = vector.extract_strided_slice %531 {offsets = [0, 256], sizes = [2, 128], strides = [1, 1]} : vector<2x512xf32> to vector<2x128xf32>
    %548 = math.tanh %547 : vector<2x128xf32>
    %549 = vector.extract_strided_slice %531 {offsets = [0, 384], sizes = [2, 128], strides = [1, 1]} : vector<2x512xf32> to vector<2x128xf32>
    %550 = arith.negf %549 : vector<2x128xf32>
    %551 = math.exp %550 : vector<2x128xf32>
    %cst_121 = arith.constant 1.000000e+00 : f32
    %552 = vector.broadcast %cst_121 : f32 to vector<2x128xf32>
    %553 = arith.addf %552, %551 : vector<2x128xf32>
    %554 = arith.divf %552, %553 : vector<2x128xf32>
    %555 = arith.mulf %546, %445 : vector<2x128xf32>
    %556 = arith.mulf %540, %548 : vector<2x128xf32>
    %557 = arith.addf %555, %556 : vector<2x128xf32>
    %558 = math.tanh %557 : vector<2x128xf32>
    %559 = arith.mulf %554, %558 : vector<2x128xf32>
    %560 = vector.extract_strided_slice %534 {offsets = [0, 0], sizes = [2, 128], strides = [1, 1]} : vector<2x512xf32> to vector<2x128xf32>
    %561 = arith.negf %560 : vector<2x128xf32>
    %562 = math.exp %561 : vector<2x128xf32>
    %cst_122 = arith.constant 1.000000e+00 : f32
    %563 = vector.broadcast %cst_122 : f32 to vector<2x128xf32>
    %564 = arith.addf %563, %562 : vector<2x128xf32>
    %565 = arith.divf %563, %564 : vector<2x128xf32>
    %566 = vector.extract_strided_slice %534 {offsets = [0, 128], sizes = [2, 128], strides = [1, 1]} : vector<2x512xf32> to vector<2x128xf32>
    %567 = arith.negf %566 : vector<2x128xf32>
    %568 = math.exp %567 : vector<2x128xf32>
    %cst_123 = arith.constant 1.000000e+00 : f32
    %569 = vector.broadcast %cst_123 : f32 to vector<2x128xf32>
    %570 = arith.addf %569, %568 : vector<2x128xf32>
    %571 = arith.divf %569, %570 : vector<2x128xf32>
    %572 = vector.extract_strided_slice %534 {offsets = [0, 256], sizes = [2, 128], strides = [1, 1]} : vector<2x512xf32> to vector<2x128xf32>
    %573 = math.tanh %572 : vector<2x128xf32>
    %574 = vector.extract_strided_slice %534 {offsets = [0, 384], sizes = [2, 128], strides = [1, 1]} : vector<2x512xf32> to vector<2x128xf32>
    %575 = arith.negf %574 : vector<2x128xf32>
    %576 = math.exp %575 : vector<2x128xf32>
    %cst_124 = arith.constant 1.000000e+00 : f32
    %577 = vector.broadcast %cst_124 : f32 to vector<2x128xf32>
    %578 = arith.addf %577, %576 : vector<2x128xf32>
    %579 = arith.divf %577, %578 : vector<2x128xf32>
    %580 = arith.mulf %571, %470 : vector<2x128xf32>
    %581 = arith.mulf %565, %573 : vector<2x128xf32>
    %582 = arith.addf %580, %581 : vector<2x128xf32>
    %583 = math.tanh %582 : vector<2x128xf32>
    %584 = arith.mulf %579, %583 : vector<2x128xf32>
    %c10 = arith.constant 10 : index
    %c0_125 = arith.constant 0 : index
    %585 = vector.load %arg20[%c10, %c0_125] : memref<16x512xf32, #tpu.memory_space<vmem>>, vector<2x512xf32>
    %cst_126 = arith.constant dense<0.000000e+00> : vector<2x512xf32>
    %586 = tpu.matmul %503, %14, %cst_126 {dimension_numbers = #tpu.dot_dimension_numbers<[1], [0], [0], [1], [0, 0, 1, 1], [], []>} : vector<2x128xf32>, vector<128x512xf32>, vector<2x512xf32> -> vector<2x512xf32>
    %587 = arith.addf %585, %586 : vector<2x512xf32>
    %c10_127 = arith.constant 10 : index
    %c0_128 = arith.constant 0 : index
    %588 = vector.load %arg21[%c10_127, %c0_128] : memref<16x512xf32, #tpu.memory_space<vmem>>, vector<2x512xf32>
    %cst_129 = arith.constant dense<0.000000e+00> : vector<2x512xf32>
    %589 = tpu.matmul %528, %15, %cst_129 {dimension_numbers = #tpu.dot_dimension_numbers<[1], [0], [0], [1], [0, 0, 1, 1], [], []>} : vector<2x128xf32>, vector<128x512xf32>, vector<2x512xf32> -> vector<2x512xf32>
    %590 = arith.addf %588, %589 : vector<2x512xf32>
    %591 = vector.extract_strided_slice %587 {offsets = [0, 0], sizes = [2, 128], strides = [1, 1]} : vector<2x512xf32> to vector<2x128xf32>
    %592 = arith.negf %591 : vector<2x128xf32>
    %593 = math.exp %592 : vector<2x128xf32>
    %cst_130 = arith.constant 1.000000e+00 : f32
    %594 = vector.broadcast %cst_130 : f32 to vector<2x128xf32>
    %595 = arith.addf %594, %593 : vector<2x128xf32>
    %596 = arith.divf %594, %595 : vector<2x128xf32>
    %597 = vector.extract_strided_slice %587 {offsets = [0, 128], sizes = [2, 128], strides = [1, 1]} : vector<2x512xf32> to vector<2x128xf32>
    %598 = arith.negf %597 : vector<2x128xf32>
    %599 = math.exp %598 : vector<2x128xf32>
    %cst_131 = arith.constant 1.000000e+00 : f32
    %600 = vector.broadcast %cst_131 : f32 to vector<2x128xf32>
    %601 = arith.addf %600, %599 : vector<2x128xf32>
    %602 = arith.divf %600, %601 : vector<2x128xf32>
    %603 = vector.extract_strided_slice %587 {offsets = [0, 256], sizes = [2, 128], strides = [1, 1]} : vector<2x512xf32> to vector<2x128xf32>
    %604 = math.tanh %603 : vector<2x128xf32>
    %605 = vector.extract_strided_slice %587 {offsets = [0, 384], sizes = [2, 128], strides = [1, 1]} : vector<2x512xf32> to vector<2x128xf32>
    %606 = arith.negf %605 : vector<2x128xf32>
    %607 = math.exp %606 : vector<2x128xf32>
    %cst_132 = arith.constant 1.000000e+00 : f32
    %608 = vector.broadcast %cst_132 : f32 to vector<2x128xf32>
    %609 = arith.addf %608, %607 : vector<2x128xf32>
    %610 = arith.divf %608, %609 : vector<2x128xf32>
    %611 = arith.mulf %602, %501 : vector<2x128xf32>
    %612 = arith.mulf %596, %604 : vector<2x128xf32>
    %613 = arith.addf %611, %612 : vector<2x128xf32>
    %614 = math.tanh %613 : vector<2x128xf32>
    %615 = arith.mulf %610, %614 : vector<2x128xf32>
    %616 = vector.extract_strided_slice %590 {offsets = [0, 0], sizes = [2, 128], strides = [1, 1]} : vector<2x512xf32> to vector<2x128xf32>
    %617 = arith.negf %616 : vector<2x128xf32>
    %618 = math.exp %617 : vector<2x128xf32>
    %cst_133 = arith.constant 1.000000e+00 : f32
    %619 = vector.broadcast %cst_133 : f32 to vector<2x128xf32>
    %620 = arith.addf %619, %618 : vector<2x128xf32>
    %621 = arith.divf %619, %620 : vector<2x128xf32>
    %622 = vector.extract_strided_slice %590 {offsets = [0, 128], sizes = [2, 128], strides = [1, 1]} : vector<2x512xf32> to vector<2x128xf32>
    %623 = arith.negf %622 : vector<2x128xf32>
    %624 = math.exp %623 : vector<2x128xf32>
    %cst_134 = arith.constant 1.000000e+00 : f32
    %625 = vector.broadcast %cst_134 : f32 to vector<2x128xf32>
    %626 = arith.addf %625, %624 : vector<2x128xf32>
    %627 = arith.divf %625, %626 : vector<2x128xf32>
    %628 = vector.extract_strided_slice %590 {offsets = [0, 256], sizes = [2, 128], strides = [1, 1]} : vector<2x512xf32> to vector<2x128xf32>
    %629 = math.tanh %628 : vector<2x128xf32>
    %630 = vector.extract_strided_slice %590 {offsets = [0, 384], sizes = [2, 128], strides = [1, 1]} : vector<2x512xf32> to vector<2x128xf32>
    %631 = arith.negf %630 : vector<2x128xf32>
    %632 = math.exp %631 : vector<2x128xf32>
    %cst_135 = arith.constant 1.000000e+00 : f32
    %633 = vector.broadcast %cst_135 : f32 to vector<2x128xf32>
    %634 = arith.addf %633, %632 : vector<2x128xf32>
    %635 = arith.divf %633, %634 : vector<2x128xf32>
    %636 = arith.mulf %627, %526 : vector<2x128xf32>
    %637 = arith.mulf %621, %629 : vector<2x128xf32>
    %638 = arith.addf %636, %637 : vector<2x128xf32>
    %639 = math.tanh %638 : vector<2x128xf32>
    %640 = arith.mulf %635, %639 : vector<2x128xf32>
    %641 = tpu.concatenate %615, %559 in 1 : vector<2x128xf32>, vector<2x128xf32> -> vector<2x256xf32>
    %cst_136 = arith.constant dense<0.000000e+00> : vector<2x512xf32>
    %642 = tpu.matmul %641, %16, %cst_136 {dimension_numbers = #tpu.dot_dimension_numbers<[1], [0], [0], [1], [0, 0, 1, 1], [], []>} : vector<2x256xf32>, vector<256x512xf32>, vector<2x512xf32> -> vector<2x512xf32>
    %643 = arith.addf %642, %20 : vector<2x512xf32>
    %644 = tpu.concatenate %640, %584 in 1 : vector<2x128xf32>, vector<2x128xf32> -> vector<2x256xf32>
    %cst_137 = arith.constant dense<0.000000e+00> : vector<2x512xf32>
    %645 = tpu.matmul %644, %17, %cst_137 {dimension_numbers = #tpu.dot_dimension_numbers<[1], [0], [0], [1], [0, 0, 1, 1], [], []>} : vector<2x256xf32>, vector<256x512xf32>, vector<2x512xf32> -> vector<2x512xf32>
    %646 = arith.addf %645, %23 : vector<2x512xf32>
    %647 = vector.extract_strided_slice %643 {offsets = [0, 0], sizes = [2, 128], strides = [1, 1]} : vector<2x512xf32> to vector<2x128xf32>
    %648 = arith.negf %647 : vector<2x128xf32>
    %649 = math.exp %648 : vector<2x128xf32>
    %cst_138 = arith.constant 1.000000e+00 : f32
    %650 = vector.broadcast %cst_138 : f32 to vector<2x128xf32>
    %651 = arith.addf %650, %649 : vector<2x128xf32>
    %652 = arith.divf %650, %651 : vector<2x128xf32>
    %653 = vector.extract_strided_slice %643 {offsets = [0, 128], sizes = [2, 128], strides = [1, 1]} : vector<2x512xf32> to vector<2x128xf32>
    %654 = arith.negf %653 : vector<2x128xf32>
    %655 = math.exp %654 : vector<2x128xf32>
    %cst_139 = arith.constant 1.000000e+00 : f32
    %656 = vector.broadcast %cst_139 : f32 to vector<2x128xf32>
    %657 = arith.addf %656, %655 : vector<2x128xf32>
    %658 = arith.divf %656, %657 : vector<2x128xf32>
    %659 = vector.extract_strided_slice %643 {offsets = [0, 256], sizes = [2, 128], strides = [1, 1]} : vector<2x512xf32> to vector<2x128xf32>
    %660 = math.tanh %659 : vector<2x128xf32>
    %661 = vector.extract_strided_slice %643 {offsets = [0, 384], sizes = [2, 128], strides = [1, 1]} : vector<2x512xf32> to vector<2x128xf32>
    %662 = arith.negf %661 : vector<2x128xf32>
    %663 = math.exp %662 : vector<2x128xf32>
    %cst_140 = arith.constant 1.000000e+00 : f32
    %664 = vector.broadcast %cst_140 : f32 to vector<2x128xf32>
    %665 = arith.addf %664, %663 : vector<2x128xf32>
    %666 = arith.divf %664, %665 : vector<2x128xf32>
    %667 = arith.mulf %658, %557 : vector<2x128xf32>
    %668 = arith.mulf %652, %660 : vector<2x128xf32>
    %669 = arith.addf %667, %668 : vector<2x128xf32>
    %670 = math.tanh %669 : vector<2x128xf32>
    %671 = arith.mulf %666, %670 : vector<2x128xf32>
    %672 = vector.extract_strided_slice %646 {offsets = [0, 0], sizes = [2, 128], strides = [1, 1]} : vector<2x512xf32> to vector<2x128xf32>
    %673 = arith.negf %672 : vector<2x128xf32>
    %674 = math.exp %673 : vector<2x128xf32>
    %cst_141 = arith.constant 1.000000e+00 : f32
    %675 = vector.broadcast %cst_141 : f32 to vector<2x128xf32>
    %676 = arith.addf %675, %674 : vector<2x128xf32>
    %677 = arith.divf %675, %676 : vector<2x128xf32>
    %678 = vector.extract_strided_slice %646 {offsets = [0, 128], sizes = [2, 128], strides = [1, 1]} : vector<2x512xf32> to vector<2x128xf32>
    %679 = arith.negf %678 : vector<2x128xf32>
    %680 = math.exp %679 : vector<2x128xf32>
    %cst_142 = arith.constant 1.000000e+00 : f32
    %681 = vector.broadcast %cst_142 : f32 to vector<2x128xf32>
    %682 = arith.addf %681, %680 : vector<2x128xf32>
    %683 = arith.divf %681, %682 : vector<2x128xf32>
    %684 = vector.extract_strided_slice %646 {offsets = [0, 256], sizes = [2, 128], strides = [1, 1]} : vector<2x512xf32> to vector<2x128xf32>
    %685 = math.tanh %684 : vector<2x128xf32>
    %686 = vector.extract_strided_slice %646 {offsets = [0, 384], sizes = [2, 128], strides = [1, 1]} : vector<2x512xf32> to vector<2x128xf32>
    %687 = arith.negf %686 : vector<2x128xf32>
    %688 = math.exp %687 : vector<2x128xf32>
    %cst_143 = arith.constant 1.000000e+00 : f32
    %689 = vector.broadcast %cst_143 : f32 to vector<2x128xf32>
    %690 = arith.addf %689, %688 : vector<2x128xf32>
    %691 = arith.divf %689, %690 : vector<2x128xf32>
    %692 = arith.mulf %683, %582 : vector<2x128xf32>
    %693 = arith.mulf %677, %685 : vector<2x128xf32>
    %694 = arith.addf %692, %693 : vector<2x128xf32>
    %695 = math.tanh %694 : vector<2x128xf32>
    %696 = arith.mulf %691, %695 : vector<2x128xf32>
    %c12 = arith.constant 12 : index
    %c0_144 = arith.constant 0 : index
    %697 = vector.load %arg20[%c12, %c0_144] : memref<16x512xf32, #tpu.memory_space<vmem>>, vector<2x512xf32>
    %cst_145 = arith.constant dense<0.000000e+00> : vector<2x512xf32>
    %698 = tpu.matmul %615, %14, %cst_145 {dimension_numbers = #tpu.dot_dimension_numbers<[1], [0], [0], [1], [0, 0, 1, 1], [], []>} : vector<2x128xf32>, vector<128x512xf32>, vector<2x512xf32> -> vector<2x512xf32>
    %699 = arith.addf %697, %698 : vector<2x512xf32>
    %c12_146 = arith.constant 12 : index
    %c0_147 = arith.constant 0 : index
    %700 = vector.load %arg21[%c12_146, %c0_147] : memref<16x512xf32, #tpu.memory_space<vmem>>, vector<2x512xf32>
    %cst_148 = arith.constant dense<0.000000e+00> : vector<2x512xf32>
    %701 = tpu.matmul %640, %15, %cst_148 {dimension_numbers = #tpu.dot_dimension_numbers<[1], [0], [0], [1], [0, 0, 1, 1], [], []>} : vector<2x128xf32>, vector<128x512xf32>, vector<2x512xf32> -> vector<2x512xf32>
    %702 = arith.addf %700, %701 : vector<2x512xf32>
    %703 = vector.extract_strided_slice %699 {offsets = [0, 0], sizes = [2, 128], strides = [1, 1]} : vector<2x512xf32> to vector<2x128xf32>
    %704 = arith.negf %703 : vector<2x128xf32>
    %705 = math.exp %704 : vector<2x128xf32>
    %cst_149 = arith.constant 1.000000e+00 : f32
    %706 = vector.broadcast %cst_149 : f32 to vector<2x128xf32>
    %707 = arith.addf %706, %705 : vector<2x128xf32>
    %708 = arith.divf %706, %707 : vector<2x128xf32>
    %709 = vector.extract_strided_slice %699 {offsets = [0, 128], sizes = [2, 128], strides = [1, 1]} : vector<2x512xf32> to vector<2x128xf32>
    %710 = arith.negf %709 : vector<2x128xf32>
    %711 = math.exp %710 : vector<2x128xf32>
    %cst_150 = arith.constant 1.000000e+00 : f32
    %712 = vector.broadcast %cst_150 : f32 to vector<2x128xf32>
    %713 = arith.addf %712, %711 : vector<2x128xf32>
    %714 = arith.divf %712, %713 : vector<2x128xf32>
    %715 = vector.extract_strided_slice %699 {offsets = [0, 256], sizes = [2, 128], strides = [1, 1]} : vector<2x512xf32> to vector<2x128xf32>
    %716 = math.tanh %715 : vector<2x128xf32>
    %717 = vector.extract_strided_slice %699 {offsets = [0, 384], sizes = [2, 128], strides = [1, 1]} : vector<2x512xf32> to vector<2x128xf32>
    %718 = arith.negf %717 : vector<2x128xf32>
    %719 = math.exp %718 : vector<2x128xf32>
    %cst_151 = arith.constant 1.000000e+00 : f32
    %720 = vector.broadcast %cst_151 : f32 to vector<2x128xf32>
    %721 = arith.addf %720, %719 : vector<2x128xf32>
    %722 = arith.divf %720, %721 : vector<2x128xf32>
    %723 = arith.mulf %714, %613 : vector<2x128xf32>
    %724 = arith.mulf %708, %716 : vector<2x128xf32>
    %725 = arith.addf %723, %724 : vector<2x128xf32>
    %726 = math.tanh %725 : vector<2x128xf32>
    %727 = arith.mulf %722, %726 : vector<2x128xf32>
    %728 = vector.extract_strided_slice %702 {offsets = [0, 0], sizes = [2, 128], strides = [1, 1]} : vector<2x512xf32> to vector<2x128xf32>
    %729 = arith.negf %728 : vector<2x128xf32>
    %730 = math.exp %729 : vector<2x128xf32>
    %cst_152 = arith.constant 1.000000e+00 : f32
    %731 = vector.broadcast %cst_152 : f32 to vector<2x128xf32>
    %732 = arith.addf %731, %730 : vector<2x128xf32>
    %733 = arith.divf %731, %732 : vector<2x128xf32>
    %734 = vector.extract_strided_slice %702 {offsets = [0, 128], sizes = [2, 128], strides = [1, 1]} : vector<2x512xf32> to vector<2x128xf32>
    %735 = arith.negf %734 : vector<2x128xf32>
    %736 = math.exp %735 : vector<2x128xf32>
    %cst_153 = arith.constant 1.000000e+00 : f32
    %737 = vector.broadcast %cst_153 : f32 to vector<2x128xf32>
    %738 = arith.addf %737, %736 : vector<2x128xf32>
    %739 = arith.divf %737, %738 : vector<2x128xf32>
    %740 = vector.extract_strided_slice %702 {offsets = [0, 256], sizes = [2, 128], strides = [1, 1]} : vector<2x512xf32> to vector<2x128xf32>
    %741 = math.tanh %740 : vector<2x128xf32>
    %742 = vector.extract_strided_slice %702 {offsets = [0, 384], sizes = [2, 128], strides = [1, 1]} : vector<2x512xf32> to vector<2x128xf32>
    %743 = arith.negf %742 : vector<2x128xf32>
    %744 = math.exp %743 : vector<2x128xf32>
    %cst_154 = arith.constant 1.000000e+00 : f32
    %745 = vector.broadcast %cst_154 : f32 to vector<2x128xf32>
    %746 = arith.addf %745, %744 : vector<2x128xf32>
    %747 = arith.divf %745, %746 : vector<2x128xf32>
    %748 = arith.mulf %739, %638 : vector<2x128xf32>
    %749 = arith.mulf %733, %741 : vector<2x128xf32>
    %750 = arith.addf %748, %749 : vector<2x128xf32>
    %751 = math.tanh %750 : vector<2x128xf32>
    %752 = arith.mulf %747, %751 : vector<2x128xf32>
    %753 = tpu.concatenate %727, %671 in 1 : vector<2x128xf32>, vector<2x128xf32> -> vector<2x256xf32>
    %cst_155 = arith.constant dense<0.000000e+00> : vector<2x512xf32>
    %754 = tpu.matmul %753, %16, %cst_155 {dimension_numbers = #tpu.dot_dimension_numbers<[1], [0], [0], [1], [0, 0, 1, 1], [], []>} : vector<2x256xf32>, vector<256x512xf32>, vector<2x512xf32> -> vector<2x512xf32>
    %755 = arith.addf %754, %20 : vector<2x512xf32>
    %756 = tpu.concatenate %752, %696 in 1 : vector<2x128xf32>, vector<2x128xf32> -> vector<2x256xf32>
    %cst_156 = arith.constant dense<0.000000e+00> : vector<2x512xf32>
    %757 = tpu.matmul %756, %17, %cst_156 {dimension_numbers = #tpu.dot_dimension_numbers<[1], [0], [0], [1], [0, 0, 1, 1], [], []>} : vector<2x256xf32>, vector<256x512xf32>, vector<2x512xf32> -> vector<2x512xf32>
    %758 = arith.addf %757, %23 : vector<2x512xf32>
    %759 = vector.extract_strided_slice %755 {offsets = [0, 0], sizes = [2, 128], strides = [1, 1]} : vector<2x512xf32> to vector<2x128xf32>
    %760 = arith.negf %759 : vector<2x128xf32>
    %761 = math.exp %760 : vector<2x128xf32>
    %cst_157 = arith.constant 1.000000e+00 : f32
    %762 = vector.broadcast %cst_157 : f32 to vector<2x128xf32>
    %763 = arith.addf %762, %761 : vector<2x128xf32>
    %764 = arith.divf %762, %763 : vector<2x128xf32>
    %765 = vector.extract_strided_slice %755 {offsets = [0, 128], sizes = [2, 128], strides = [1, 1]} : vector<2x512xf32> to vector<2x128xf32>
    %766 = arith.negf %765 : vector<2x128xf32>
    %767 = math.exp %766 : vector<2x128xf32>
    %cst_158 = arith.constant 1.000000e+00 : f32
    %768 = vector.broadcast %cst_158 : f32 to vector<2x128xf32>
    %769 = arith.addf %768, %767 : vector<2x128xf32>
    %770 = arith.divf %768, %769 : vector<2x128xf32>
    %771 = vector.extract_strided_slice %755 {offsets = [0, 256], sizes = [2, 128], strides = [1, 1]} : vector<2x512xf32> to vector<2x128xf32>
    %772 = math.tanh %771 : vector<2x128xf32>
    %773 = vector.extract_strided_slice %755 {offsets = [0, 384], sizes = [2, 128], strides = [1, 1]} : vector<2x512xf32> to vector<2x128xf32>
    %774 = arith.negf %773 : vector<2x128xf32>
    %775 = math.exp %774 : vector<2x128xf32>
    %cst_159 = arith.constant 1.000000e+00 : f32
    %776 = vector.broadcast %cst_159 : f32 to vector<2x128xf32>
    %777 = arith.addf %776, %775 : vector<2x128xf32>
    %778 = arith.divf %776, %777 : vector<2x128xf32>
    %779 = arith.mulf %770, %669 : vector<2x128xf32>
    %780 = arith.mulf %764, %772 : vector<2x128xf32>
    %781 = arith.addf %779, %780 : vector<2x128xf32>
    %782 = math.tanh %781 : vector<2x128xf32>
    %783 = arith.mulf %778, %782 : vector<2x128xf32>
    %784 = vector.extract_strided_slice %758 {offsets = [0, 0], sizes = [2, 128], strides = [1, 1]} : vector<2x512xf32> to vector<2x128xf32>
    %785 = arith.negf %784 : vector<2x128xf32>
    %786 = math.exp %785 : vector<2x128xf32>
    %cst_160 = arith.constant 1.000000e+00 : f32
    %787 = vector.broadcast %cst_160 : f32 to vector<2x128xf32>
    %788 = arith.addf %787, %786 : vector<2x128xf32>
    %789 = arith.divf %787, %788 : vector<2x128xf32>
    %790 = vector.extract_strided_slice %758 {offsets = [0, 128], sizes = [2, 128], strides = [1, 1]} : vector<2x512xf32> to vector<2x128xf32>
    %791 = arith.negf %790 : vector<2x128xf32>
    %792 = math.exp %791 : vector<2x128xf32>
    %cst_161 = arith.constant 1.000000e+00 : f32
    %793 = vector.broadcast %cst_161 : f32 to vector<2x128xf32>
    %794 = arith.addf %793, %792 : vector<2x128xf32>
    %795 = arith.divf %793, %794 : vector<2x128xf32>
    %796 = vector.extract_strided_slice %758 {offsets = [0, 256], sizes = [2, 128], strides = [1, 1]} : vector<2x512xf32> to vector<2x128xf32>
    %797 = math.tanh %796 : vector<2x128xf32>
    %798 = vector.extract_strided_slice %758 {offsets = [0, 384], sizes = [2, 128], strides = [1, 1]} : vector<2x512xf32> to vector<2x128xf32>
    %799 = arith.negf %798 : vector<2x128xf32>
    %800 = math.exp %799 : vector<2x128xf32>
    %cst_162 = arith.constant 1.000000e+00 : f32
    %801 = vector.broadcast %cst_162 : f32 to vector<2x128xf32>
    %802 = arith.addf %801, %800 : vector<2x128xf32>
    %803 = arith.divf %801, %802 : vector<2x128xf32>
    %804 = arith.mulf %795, %694 : vector<2x128xf32>
    %805 = arith.mulf %789, %797 : vector<2x128xf32>
    %806 = arith.addf %804, %805 : vector<2x128xf32>
    %807 = math.tanh %806 : vector<2x128xf32>
    %808 = arith.mulf %803, %807 : vector<2x128xf32>
    %c14 = arith.constant 14 : index
    %c0_163 = arith.constant 0 : index
    %809 = vector.load %arg20[%c14, %c0_163] : memref<16x512xf32, #tpu.memory_space<vmem>>, vector<2x512xf32>
    %cst_164 = arith.constant dense<0.000000e+00> : vector<2x512xf32>
    %810 = tpu.matmul %727, %14, %cst_164 {dimension_numbers = #tpu.dot_dimension_numbers<[1], [0], [0], [1], [0, 0, 1, 1], [], []>} : vector<2x128xf32>, vector<128x512xf32>, vector<2x512xf32> -> vector<2x512xf32>
    %811 = arith.addf %809, %810 : vector<2x512xf32>
    %c14_165 = arith.constant 14 : index
    %c0_166 = arith.constant 0 : index
    %812 = vector.load %arg21[%c14_165, %c0_166] : memref<16x512xf32, #tpu.memory_space<vmem>>, vector<2x512xf32>
    %cst_167 = arith.constant dense<0.000000e+00> : vector<2x512xf32>
    %813 = tpu.matmul %752, %15, %cst_167 {dimension_numbers = #tpu.dot_dimension_numbers<[1], [0], [0], [1], [0, 0, 1, 1], [], []>} : vector<2x128xf32>, vector<128x512xf32>, vector<2x512xf32> -> vector<2x512xf32>
    %814 = arith.addf %812, %813 : vector<2x512xf32>
    %815 = vector.extract_strided_slice %811 {offsets = [0, 0], sizes = [2, 128], strides = [1, 1]} : vector<2x512xf32> to vector<2x128xf32>
    %816 = arith.negf %815 : vector<2x128xf32>
    %817 = math.exp %816 : vector<2x128xf32>
    %cst_168 = arith.constant 1.000000e+00 : f32
    %818 = vector.broadcast %cst_168 : f32 to vector<2x128xf32>
    %819 = arith.addf %818, %817 : vector<2x128xf32>
    %820 = arith.divf %818, %819 : vector<2x128xf32>
    %821 = vector.extract_strided_slice %811 {offsets = [0, 128], sizes = [2, 128], strides = [1, 1]} : vector<2x512xf32> to vector<2x128xf32>
    %822 = arith.negf %821 : vector<2x128xf32>
    %823 = math.exp %822 : vector<2x128xf32>
    %cst_169 = arith.constant 1.000000e+00 : f32
    %824 = vector.broadcast %cst_169 : f32 to vector<2x128xf32>
    %825 = arith.addf %824, %823 : vector<2x128xf32>
    %826 = arith.divf %824, %825 : vector<2x128xf32>
    %827 = vector.extract_strided_slice %811 {offsets = [0, 256], sizes = [2, 128], strides = [1, 1]} : vector<2x512xf32> to vector<2x128xf32>
    %828 = math.tanh %827 : vector<2x128xf32>
    %829 = vector.extract_strided_slice %811 {offsets = [0, 384], sizes = [2, 128], strides = [1, 1]} : vector<2x512xf32> to vector<2x128xf32>
    %830 = arith.negf %829 : vector<2x128xf32>
    %831 = math.exp %830 : vector<2x128xf32>
    %cst_170 = arith.constant 1.000000e+00 : f32
    %832 = vector.broadcast %cst_170 : f32 to vector<2x128xf32>
    %833 = arith.addf %832, %831 : vector<2x128xf32>
    %834 = arith.divf %832, %833 : vector<2x128xf32>
    %835 = arith.mulf %826, %725 : vector<2x128xf32>
    %836 = arith.mulf %820, %828 : vector<2x128xf32>
    %837 = arith.addf %835, %836 : vector<2x128xf32>
    %838 = math.tanh %837 : vector<2x128xf32>
    %839 = arith.mulf %834, %838 : vector<2x128xf32>
    %840 = vector.extract_strided_slice %814 {offsets = [0, 0], sizes = [2, 128], strides = [1, 1]} : vector<2x512xf32> to vector<2x128xf32>
    %841 = arith.negf %840 : vector<2x128xf32>
    %842 = math.exp %841 : vector<2x128xf32>
    %cst_171 = arith.constant 1.000000e+00 : f32
    %843 = vector.broadcast %cst_171 : f32 to vector<2x128xf32>
    %844 = arith.addf %843, %842 : vector<2x128xf32>
    %845 = arith.divf %843, %844 : vector<2x128xf32>
    %846 = vector.extract_strided_slice %814 {offsets = [0, 128], sizes = [2, 128], strides = [1, 1]} : vector<2x512xf32> to vector<2x128xf32>
    %847 = arith.negf %846 : vector<2x128xf32>
    %848 = math.exp %847 : vector<2x128xf32>
    %cst_172 = arith.constant 1.000000e+00 : f32
    %849 = vector.broadcast %cst_172 : f32 to vector<2x128xf32>
    %850 = arith.addf %849, %848 : vector<2x128xf32>
    %851 = arith.divf %849, %850 : vector<2x128xf32>
    %852 = vector.extract_strided_slice %814 {offsets = [0, 256], sizes = [2, 128], strides = [1, 1]} : vector<2x512xf32> to vector<2x128xf32>
    %853 = math.tanh %852 : vector<2x128xf32>
    %854 = vector.extract_strided_slice %814 {offsets = [0, 384], sizes = [2, 128], strides = [1, 1]} : vector<2x512xf32> to vector<2x128xf32>
    %855 = arith.negf %854 : vector<2x128xf32>
    %856 = math.exp %855 : vector<2x128xf32>
    %cst_173 = arith.constant 1.000000e+00 : f32
    %857 = vector.broadcast %cst_173 : f32 to vector<2x128xf32>
    %858 = arith.addf %857, %856 : vector<2x128xf32>
    %859 = arith.divf %857, %858 : vector<2x128xf32>
    %860 = arith.mulf %851, %750 : vector<2x128xf32>
    %861 = arith.mulf %845, %853 : vector<2x128xf32>
    %862 = arith.addf %860, %861 : vector<2x128xf32>
    %863 = math.tanh %862 : vector<2x128xf32>
    %864 = arith.mulf %859, %863 : vector<2x128xf32>
    %865 = tpu.concatenate %839, %783 in 1 : vector<2x128xf32>, vector<2x128xf32> -> vector<2x256xf32>
    %cst_174 = arith.constant dense<0.000000e+00> : vector<2x512xf32>
    %866 = tpu.matmul %865, %16, %cst_174 {dimension_numbers = #tpu.dot_dimension_numbers<[1], [0], [0], [1], [0, 0, 1, 1], [], []>} : vector<2x256xf32>, vector<256x512xf32>, vector<2x512xf32> -> vector<2x512xf32>
    %867 = arith.addf %866, %20 : vector<2x512xf32>
    %868 = tpu.concatenate %864, %808 in 1 : vector<2x128xf32>, vector<2x128xf32> -> vector<2x256xf32>
    %cst_175 = arith.constant dense<0.000000e+00> : vector<2x512xf32>
    %869 = tpu.matmul %868, %17, %cst_175 {dimension_numbers = #tpu.dot_dimension_numbers<[1], [0], [0], [1], [0, 0, 1, 1], [], []>} : vector<2x256xf32>, vector<256x512xf32>, vector<2x512xf32> -> vector<2x512xf32>
    %870 = arith.addf %869, %23 : vector<2x512xf32>
    %871 = vector.extract_strided_slice %867 {offsets = [0, 0], sizes = [2, 128], strides = [1, 1]} : vector<2x512xf32> to vector<2x128xf32>
    %872 = arith.negf %871 : vector<2x128xf32>
    %873 = math.exp %872 : vector<2x128xf32>
    %cst_176 = arith.constant 1.000000e+00 : f32
    %874 = vector.broadcast %cst_176 : f32 to vector<2x128xf32>
    %875 = arith.addf %874, %873 : vector<2x128xf32>
    %876 = arith.divf %874, %875 : vector<2x128xf32>
    %877 = vector.extract_strided_slice %867 {offsets = [0, 128], sizes = [2, 128], strides = [1, 1]} : vector<2x512xf32> to vector<2x128xf32>
    %878 = arith.negf %877 : vector<2x128xf32>
    %879 = math.exp %878 : vector<2x128xf32>
    %cst_177 = arith.constant 1.000000e+00 : f32
    %880 = vector.broadcast %cst_177 : f32 to vector<2x128xf32>
    %881 = arith.addf %880, %879 : vector<2x128xf32>
    %882 = arith.divf %880, %881 : vector<2x128xf32>
    %883 = vector.extract_strided_slice %867 {offsets = [0, 256], sizes = [2, 128], strides = [1, 1]} : vector<2x512xf32> to vector<2x128xf32>
    %884 = math.tanh %883 : vector<2x128xf32>
    %885 = vector.extract_strided_slice %867 {offsets = [0, 384], sizes = [2, 128], strides = [1, 1]} : vector<2x512xf32> to vector<2x128xf32>
    %886 = arith.negf %885 : vector<2x128xf32>
    %887 = math.exp %886 : vector<2x128xf32>
    %cst_178 = arith.constant 1.000000e+00 : f32
    %888 = vector.broadcast %cst_178 : f32 to vector<2x128xf32>
    %889 = arith.addf %888, %887 : vector<2x128xf32>
    %890 = arith.divf %888, %889 : vector<2x128xf32>
    %891 = arith.mulf %882, %781 : vector<2x128xf32>
    %892 = arith.mulf %876, %884 : vector<2x128xf32>
    %893 = arith.addf %891, %892 : vector<2x128xf32>
    %894 = math.tanh %893 : vector<2x128xf32>
    %895 = arith.mulf %890, %894 : vector<2x128xf32>
    %896 = vector.extract_strided_slice %870 {offsets = [0, 0], sizes = [2, 128], strides = [1, 1]} : vector<2x512xf32> to vector<2x128xf32>
    %897 = arith.negf %896 : vector<2x128xf32>
    %898 = math.exp %897 : vector<2x128xf32>
    %cst_179 = arith.constant 1.000000e+00 : f32
    %899 = vector.broadcast %cst_179 : f32 to vector<2x128xf32>
    %900 = arith.addf %899, %898 : vector<2x128xf32>
    %901 = arith.divf %899, %900 : vector<2x128xf32>
    %902 = vector.extract_strided_slice %870 {offsets = [0, 128], sizes = [2, 128], strides = [1, 1]} : vector<2x512xf32> to vector<2x128xf32>
    %903 = arith.negf %902 : vector<2x128xf32>
    %904 = math.exp %903 : vector<2x128xf32>
    %cst_180 = arith.constant 1.000000e+00 : f32
    %905 = vector.broadcast %cst_180 : f32 to vector<2x128xf32>
    %906 = arith.addf %905, %904 : vector<2x128xf32>
    %907 = arith.divf %905, %906 : vector<2x128xf32>
    %908 = vector.extract_strided_slice %870 {offsets = [0, 256], sizes = [2, 128], strides = [1, 1]} : vector<2x512xf32> to vector<2x128xf32>
    %909 = math.tanh %908 : vector<2x128xf32>
    %910 = vector.extract_strided_slice %870 {offsets = [0, 384], sizes = [2, 128], strides = [1, 1]} : vector<2x512xf32> to vector<2x128xf32>
    %911 = arith.negf %910 : vector<2x128xf32>
    %912 = math.exp %911 : vector<2x128xf32>
    %cst_181 = arith.constant 1.000000e+00 : f32
    %913 = vector.broadcast %cst_181 : f32 to vector<2x128xf32>
    %914 = arith.addf %913, %912 : vector<2x128xf32>
    %915 = arith.divf %913, %914 : vector<2x128xf32>
    %916 = arith.mulf %907, %806 : vector<2x128xf32>
    %917 = arith.mulf %901, %909 : vector<2x128xf32>
    %918 = arith.addf %916, %917 : vector<2x128xf32>
    %919 = math.tanh %918 : vector<2x128xf32>
    %920 = arith.mulf %915, %919 : vector<2x128xf32>
    %c0_182 = arith.constant 0 : index
    %c0_183 = arith.constant 0 : index
    %921 = vector.load %arg7[%c0_182, %c0_183] : memref<128x64xf32, #tpu.memory_space<vmem>>, vector<128x64xf32>
    %cst_184 = arith.constant dense<0.000000e+00> : vector<2x64xf32>
    %922 = tpu.matmul %895, %921, %cst_184 {dimension_numbers = #tpu.dot_dimension_numbers<[1], [0], [0], [1], [0, 0, 1, 1], [], []>} : vector<2x128xf32>, vector<128x64xf32>, vector<2x64xf32> -> vector<2x64xf32>
    %c0_185 = arith.constant 0 : index
    %c0_186 = arith.constant 0 : index
    %923 = vector.load %arg8[%c0_185, %c0_186] : memref<1x64xf32, #tpu.memory_space<vmem>>, vector<1x64xf32>
    %924 = vector.broadcast %923 : vector<1x64xf32> to vector<2x64xf32>
    %925 = arith.addf %922, %924 : vector<2x64xf32>
    %cst_187 = arith.constant 0.000000e+00 : f32
    %926 = vector.broadcast %cst_187 : f32 to vector<2x64xf32>
    %927 = arith.maximumf %925, %926 : vector<2x64xf32>
    %c0_188 = arith.constant 0 : index
    %c0_189 = arith.constant 0 : index
    %928 = vector.load %arg14[%c0_188, %c0_189] : memref<128x64xf32, #tpu.memory_space<vmem>>, vector<128x64xf32>
    %cst_190 = arith.constant dense<0.000000e+00> : vector<2x64xf32>
    %929 = tpu.matmul %920, %928, %cst_190 {dimension_numbers = #tpu.dot_dimension_numbers<[1], [0], [0], [1], [0, 0, 1, 1], [], []>} : vector<2x128xf32>, vector<128x64xf32>, vector<2x64xf32> -> vector<2x64xf32>
    %c0_191 = arith.constant 0 : index
    %c0_192 = arith.constant 0 : index
    %930 = vector.load %arg15[%c0_191, %c0_192] : memref<1x64xf32, #tpu.memory_space<vmem>>, vector<1x64xf32>
    %931 = vector.broadcast %930 : vector<1x64xf32> to vector<2x64xf32>
    %932 = arith.addf %929, %931 : vector<2x64xf32>
    %cst_193 = arith.constant 0.000000e+00 : f32
    %933 = vector.broadcast %cst_193 : f32 to vector<2x64xf32>
    %934 = arith.maximumf %932, %933 : vector<2x64xf32>
    %c0_194 = arith.constant 0 : index
    %c0_195 = arith.constant 0 : index
    %935 = vector.load %arg16[%c0_194, %c0_195] : memref<64x128xf32, #tpu.memory_space<vmem>>, vector<64x128xf32>
    %cst_196 = arith.constant dense<0.000000e+00> : vector<2x128xf32>
    %936 = tpu.matmul %927, %935, %cst_196 {dimension_numbers = #tpu.dot_dimension_numbers<[1], [0], [0], [1], [0, 0, 1, 1], [], []>} : vector<2x64xf32>, vector<64x128xf32>, vector<2x128xf32> -> vector<2x128xf32>
    %c0_197 = arith.constant 0 : index
    %c0_198 = arith.constant 0 : index
    %937 = vector.load %arg17[%c0_197, %c0_198] : memref<64x128xf32, #tpu.memory_space<vmem>>, vector<64x128xf32>
    %cst_199 = arith.constant dense<0.000000e+00> : vector<2x128xf32>
    %938 = tpu.matmul %934, %937, %cst_199 {dimension_numbers = #tpu.dot_dimension_numbers<[1], [0], [0], [1], [0, 0, 1, 1], [], []>} : vector<2x64xf32>, vector<64x128xf32>, vector<2x128xf32> -> vector<2x128xf32>
    %939 = arith.addf %936, %938 : vector<2x128xf32>
    %c0_200 = arith.constant 0 : index
    %c0_201 = arith.constant 0 : index
    %940 = vector.load %arg18[%c0_200, %c0_201] : memref<1x128xf32, #tpu.memory_space<vmem>>, vector<1x128xf32>
    %941 = vector.broadcast %940 : vector<1x128xf32> to vector<2x128xf32>
    %942 = arith.addf %939, %941 : vector<2x128xf32>
    %c0_202 = arith.constant 0 : index
    %c0_203 = arith.constant 0 : index
    %943 = vector.load %arg19[%c0_202, %c0_203] : memref<2x128xf32, #tpu.memory_space<vmem>>, vector<2x128xf32>
    tpu.vector_store %arg19[%c0_202, %c0_203], %942 {strides = array<i32>} : memref<2x128xf32, #tpu.memory_space<vmem>>, vector<2x128xf32>,
    return
  }
}

</mosaic_0001>

<llo_original>
// kernel: tpu_custom_call.1
$region0: #{tpu_custom_call.1}
  #allocation0 [shape = 'u32[]', space=smem, size = 0x4, offset = 0x4, fixed_abs, tag = 'smem constant byte address 0x4 - core index']
  #allocation1 [shape = 'u32[144,128]{1,0:T(1,128)}', space=vmem, size = 0x12000, scoped, tag = 'internal scratch']
  #allocation2 [shape = 'f32[16,512]{1,0:T(8,128)}', space=vmem, size = 0x8000, scoped, tag = 'scratch operand']
  #allocation3 [shape = 'f32[16,512]{1,0:T(8,128)}', space=vmem, size = 0x8000, scoped, tag = 'scratch operand']
  %s0 = inlined_call_operand.vmem [shape: f32[16,256], index: 0, kind: input, shape index: {}]
  %s1 = inlined_call_operand.vmem [shape: f32[16,256], index: 1, kind: input, shape index: {}]
  %s2 = inlined_call_operand.hbm [shape: f32[256,512], index: 2, kind: input, shape index: {}]
  %s3 = inlined_call_operand.hbm [shape: f32[128,512], index: 3, kind: input, shape index: {}]
  %s4 = inlined_call_operand.vmem [shape: f32[1,512], index: 4, kind: input, shape index: {}]
  %s5 = inlined_call_operand.hbm [shape: f32[256,512], index: 5, kind: input, shape index: {}]
  %s6 = inlined_call_operand.vmem [shape: f32[1,512], index: 6, kind: input, shape index: {}]
  %s7 = inlined_call_operand.vmem [shape: f32[128,64], index: 7, kind: input, shape index: {}]
  %s8 = inlined_call_operand.vmem [shape: f32[1,64], index: 8, kind: input, shape index: {}]
  %s9 = inlined_call_operand.hbm [shape: f32[256,512], index: 9, kind: input, shape index: {}]
  %s10 = inlined_call_operand.hbm [shape: f32[128,512], index: 10, kind: input, shape index: {}]
  %s11 = inlined_call_operand.vmem [shape: f32[1,512], index: 11, kind: input, shape index: {}]
  %s12 = inlined_call_operand.hbm [shape: f32[256,512], index: 12, kind: input, shape index: {}]
  %s13 = inlined_call_operand.vmem [shape: f32[1,512], index: 13, kind: input, shape index: {}]
  %s14 = inlined_call_operand.vmem [shape: f32[128,64], index: 14, kind: input, shape index: {}]
  %s15 = inlined_call_operand.vmem [shape: f32[1,64], index: 15, kind: input, shape index: {}]
  %s16 = inlined_call_operand.vmem [shape: f32[64,128], index: 16, kind: input, shape index: {}]
  %s17 = inlined_call_operand.vmem [shape: f32[64,128], index: 17, kind: input, shape index: {}]
  %s18 = inlined_call_operand.vmem [shape: f32[1,128], index: 18, kind: input, shape index: {}]
  %s19 = inlined_call_operand.hbm [shape: f32[2,128], index: 19, kind: output, shape index: {}]
  %s20 = sld [smem:[#allocation0]]
  $region110: #{tpu_custom_call.1} parent=0
    _
  %s22 = ssub.s32 1, %s20
  %s23 = scalar_select 0, %s22, %s20
  $region1: #{tpu_custom_call.1} parent=0
    #allocation4 [shape = 'u8[524288]{0}', space=vmem, size = 0x80000, scoped, tag = 'input window, operand 2, single buffered']
    #allocation5 [shape = 's32[1]{0}', space=sflag, size = 0x4, scoped, tag = 'scoped memory for tpu_custom_call.1']
    #allocation6 [shape = 's32[1]{0}', space=sflag, size = 0x4, scoped, tag = 'scoped memory for tpu_custom_call.1']
    #allocation7 [shape = 'u8[262144]{0}', space=vmem, size = 0x40000, scoped, tag = 'input window, operand 3, single buffered']
    #allocation8 [shape = 's32[1]{0}', space=sflag, size = 0x4, scoped, tag = 'scoped memory for tpu_custom_call.1']
    #allocation9 [shape = 'u8[524288]{0}', space=vmem, size = 0x80000, scoped, tag = 'input window, operand 5, single buffered']
    #allocation10 [shape = 'u8[524288]{0}', space=vmem, size = 0x80000, scoped, tag = 'input window, operand 9, single buffered']
    #allocation11 [shape = 's32[1]{0}', space=sflag, size = 0x4, scoped, tag = 'scoped memory for tpu_custom_call.1']
    #allocation12 [shape = 'u8[262144]{0}', space=vmem, size = 0x40000, scoped, tag = 'input window, operand 10, single buffered']
    #allocation13 [shape = 'u8[524288]{0}', space=vmem, size = 0x80000, scoped, tag = 'input window, operand 12, single buffered']
    #allocation14 [shape = 's32[1]{0}', space=sflag, size = 0x4, scoped, tag = 'scoped memory for tpu_custom_call.1']
    #allocation15 [shape = 'u8[1024]{0}', space=vmem, size = 0x400, scoped, tag = 'output window, operand 0, single buffered']
    %24 = vsyncpa [#allocation5], 0
    %25 = vsyncpa [#allocation8], 0
    %26 = vsyncpa [#allocation11], 0
    %27 = vsyncpa [#allocation14], 0
    %28 = vsyncpa [#allocation6], 0
    // Predicated region
    $region2: #{tpu_custom_call.1} parent=1 // pred_check
      _
    $region3: #{tpu_custom_call.1} parent=1 // pred_check_branch
      %30 = sbr.rel (0) target = $region5
    $region4: #{tpu_custom_call.1} parent=1 // pred_region
      _
    $region5: #{tpu_custom_call.1} parent=1 // pred_fallthru
      _
    // Predicated region
    $region6: #{tpu_custom_call.1} parent=1 // pred_check
      _
    $region7: #{tpu_custom_call.1} parent=1 // pred_check_branch
      %32 = sbr.rel (0) target = $region9
    $region8: #{tpu_custom_call.1} parent=1 // pred_region
      _
    $region9: #{tpu_custom_call.1} parent=1 // pred_fallthru
      _
    // Predicated region
    $region10: #{tpu_custom_call.1} parent=1 // pred_check
      _
    $region11: #{tpu_custom_call.1} parent=1 // pred_check_branch
      %34 = sbr.rel (0) target = $region13
    $region12: #{tpu_custom_call.1} parent=1 // pred_region
      %s36 = ssub.s32 16384, 16384
      %37 = vsyncadd [#allocation5], %s36
      %s38 = sshll.u32 [#allocation4], 4
      %s39 = int_to_ptr.vmem [resolvable:$true] %s38
      %44 = dma.hbm_to_vmem [thread:$0]  %s2, 16384, %s39, [#allocation5], 512, 512, 32
    $region13: #{tpu_custom_call.1} parent=1 // pred_fallthru
      _
    // Predicated region
    $region14: #{tpu_custom_call.1} parent=1 // pred_check
      _
    $region15: #{tpu_custom_call.1} parent=1 // pred_check_branch
      %46 = sbr.rel (0) target = $region17
    $region16: #{tpu_custom_call.1} parent=1 // pred_region
      %s48 = ssub.s32 8192, 8192
      %49 = vsyncadd [#allocation8], %s48
      %s50 = sshll.u32 [#allocation7], 4
      %s51 = int_to_ptr.vmem [resolvable:$true] %s50
      %56 = dma.hbm_to_vmem [thread:$0]  %s3, 8192, %s51, [#allocation8], 512, 512, 32
    $region17: #{tpu_custom_call.1} parent=1 // pred_fallthru
      _
    // Predicated region
    $region18: #{tpu_custom_call.1} parent=1 // pred_check
      _
    $region19: #{tpu_custom_call.1} parent=1 // pred_check_branch
      %58 = sbr.rel (0) target = $region21
    $region20: #{tpu_custom_call.1} parent=1 // pred_region
      _
    $region21: #{tpu_custom_call.1} parent=1 // pred_fallthru
      _
    // Predicated region
    $region22: #{tpu_custom_call.1} parent=1 // pred_check
      _
    $region23: #{tpu_custom_call.1} parent=1 // pred_check_branch
      %60 = sbr.rel (0) target = $region25
    $region24: #{tpu_custom_call.1} parent=1 // pred_region
      %s62 = ssub.s32 16384, 16384
      %63 = vsyncadd [#allocation8], %s62
      %s64 = sshll.u32 [#allocation9], 4
      %s65 = int_to_ptr.vmem [resolvable:$true] %s64
      %70 = dma.hbm_to_vmem [thread:$0]  %s5, 16384, %s65, [#allocation8], 512, 512, 32
    $region25: #{tpu_custom_call.1} parent=1 // pred_fallthru
      _
    // Predicated region
    $region26: #{tpu_custom_call.1} parent=1 // pred_check
      _
    $region27: #{tpu_custom_call.1} parent=1 // pred_check_branch
      %72 = sbr.rel (0) target = $region29
    $region28: #{tpu_custom_call.1} parent=1 // pred_region
      _
    $region29: #{tpu_custom_call.1} parent=1 // pred_fallthru
      _
    // Predicated region
    $region30: #{tpu_custom_call.1} parent=1 // pred_check
      _
    $region31: #{tpu_custom_call.1} parent=1 // pred_check_branch
      %74 = sbr.rel (0) target = $region33
    $region32: #{tpu_custom_call.1} parent=1 // pred_region
      _
    $region33: #{tpu_custom_call.1} parent=1 // pred_fallthru
      _
    // Predicated region
    $region34: #{tpu_custom_call.1} parent=1 // pred_check
      _
    $region35: #{tpu_custom_call.1} parent=1 // pred_check_branch
      %76 = sbr.rel (0) target = $region37
    $region36: #{tpu_custom_call.1} parent=1 // pred_region
      _
    $region37: #{tpu_custom_call.1} parent=1 // pred_fallthru
      _
    // Predicated region
    $region38: #{tpu_custom_call.1} parent=1 // pred_check
      _
    $region39: #{tpu_custom_call.1} parent=1 // pred_check_branch
      %78 = sbr.rel (0) target = $region41
    $region40: #{tpu_custom_call.1} parent=1 // pred_region
      %s80 = ssub.s32 16384, 16384
      %81 = vsyncadd [#allocation11], %s80
      %s82 = sshll.u32 [#allocation10], 4
      %s83 = int_to_ptr.vmem [resolvable:$true] %s82
      %88 = dma.hbm_to_vmem [thread:$0]  %s9, 16384, %s83, [#allocation11], 512, 512, 32
    $region41: #{tpu_custom_call.1} parent=1 // pred_fallthru
      _
    // Predicated region
    $region42: #{tpu_custom_call.1} parent=1 // pred_check
      _
    $region43: #{tpu_custom_call.1} parent=1 // pred_check_branch
      %90 = sbr.rel (0) target = $region45
    $region44: #{tpu_custom_call.1} parent=1 // pred_region
      %s92 = ssub.s32 8192, 8192
      %93 = vsyncadd [#allocation11], %s92
      %s94 = sshll.u32 [#allocation12], 4
      %s95 = int_to_ptr.vmem [resolvable:$true] %s94
      %100 = dma.hbm_to_vmem [thread:$0]  %s10, 8192, %s95, [#allocation11], 512, 512, 32
    $region45: #{tpu_custom_call.1} parent=1 // pred_fallthru
      _
    // Predicated region
    $region46: #{tpu_custom_call.1} parent=1 // pred_check
      _
    $region47: #{tpu_custom_call.1} parent=1 // pred_check_branch
      %102 = sbr.rel (0) target = $region49
    $region48: #{tpu_custom_call.1} parent=1 // pred_region
      _
    $region49: #{tpu_custom_call.1} parent=1 // pred_fallthru
      _
    // Predicated region
    $region50: #{tpu_custom_call.1} parent=1 // pred_check
      _
    $region51: #{tpu_custom_call.1} parent=1 // pred_check_branch
      %104 = sbr.rel (0) target = $region53
    $region52: #{tpu_custom_call.1} parent=1 // pred_region
      %s106 = ssub.s32 16384, 16384
      %107 = vsyncadd [#allocation14], %s106
      %s108 = sshll.u32 [#allocation13], 4
      %s109 = int_to_ptr.vmem [resolvable:$true] %s108
      %114 = dma.hbm_to_vmem [thread:$0]  %s12, 16384, %s109, [#allocation14], 512, 512, 32
    $region53: #{tpu_custom_call.1} parent=1 // pred_fallthru
      _
    // Predicated region
    $region54: #{tpu_custom_call.1} parent=1 // pred_check
      _
    $region55: #{tpu_custom_call.1} parent=1 // pred_check_branch
      %116 = sbr.rel (0) target = $region57
    $region56: #{tpu_custom_call.1} parent=1 // pred_region
      _
    $region57: #{tpu_custom_call.1} parent=1 // pred_fallthru
      _
    // Predicated region
    $region58: #{tpu_custom_call.1} parent=1 // pred_check
      _
    $region59: #{tpu_custom_call.1} parent=1 // pred_check_branch
      %118 = sbr.rel (0) target = $region61
    $region60: #{tpu_custom_call.1} parent=1 // pred_region
      _
    $region61: #{tpu_custom_call.1} parent=1 // pred_fallthru
      _
    // Predicated region
    $region62: #{tpu_custom_call.1} parent=1 // pred_check
      _
    $region63: #{tpu_custom_call.1} parent=1 // pred_check_branch
      %120 = sbr.rel (0) target = $region65
    $region64: #{tpu_custom_call.1} parent=1 // pred_region
      _
    $region65: #{tpu_custom_call.1} parent=1 // pred_fallthru
      _
    // Predicated region
    $region66: #{tpu_custom_call.1} parent=1 // pred_check
      _
    $region67: #{tpu_custom_call.1} parent=1 // pred_check_branch
      %122 = sbr.rel (0) target = $region69
    $region68: #{tpu_custom_call.1} parent=1 // pred_region
      _
    $region69: #{tpu_custom_call.1} parent=1 // pred_fallthru
      _
    // Predicated region
    $region70: #{tpu_custom_call.1} parent=1 // pred_check
      _
    $region71: #{tpu_custom_call.1} parent=1 // pred_check_branch
      %124 = sbr.rel (0) target = $region73
    $region72: #{tpu_custom_call.1} parent=1 // pred_region
      _
    $region73: #{tpu_custom_call.1} parent=1 // pred_fallthru
      _
    // Predicated region
    $region74: #{tpu_custom_call.1} parent=1 // pred_check
      _
    $region75: #{tpu_custom_call.1} parent=1 // pred_check_branch
      %126 = sbr.rel (0) target = $region77
    $region76: #{tpu_custom_call.1} parent=1 // pred_region
      _
    $region77: #{tpu_custom_call.1} parent=1 // pred_fallthru
      _
    // Predicated region
    $region78: #{tpu_custom_call.1} parent=1 // pred_check
      _
    $region79: #{tpu_custom_call.1} parent=1 // pred_check_branch
      %128 = sbr.rel (0) target = $region81
    $region80: #{tpu_custom_call.1} parent=1 // pred_region
      %129 = dma.done [#allocation5], 16384
    $region81: #{tpu_custom_call.1} parent=1 // pred_fallthru
      _
    // Predicated region
    $region82: #{tpu_custom_call.1} parent=1 // pred_check
      _
    $region83: #{tpu_custom_call.1} parent=1 // pred_check_branch
      %131 = sbr.rel (0) target = $region85
    $region84: #{tpu_custom_call.1} parent=1 // pred_region
      %132 = dma.done [#allocation8], 8192
    $region85: #{tpu_custom_call.1} parent=1 // pred_fallthru
      _
    // Predicated region
    $region86: #{tpu_custom_call.1} parent=1 // pred_check
      _
    $region87: #{tpu_custom_call.1} parent=1 // pred_check_branch
      %134 = sbr.rel (0) target = $region89
    $region88: #{tpu_custom_call.1} parent=1 // pred_region
      %135 = dma.done [#allocation8], 16384
    $region89: #{tpu_custom_call.1} parent=1 // pred_fallthru
      _
    // Predicated region
    $region90: #{tpu_custom_call.1} parent=1 // pred_check
      _
    $region91: #{tpu_custom_call.1} parent=1 // pred_check_branch
      %137 = sbr.rel (0) target = $region93
    $region92: #{tpu_custom_call.1} parent=1 // pred_region
      %138 = dma.done [#allocation11], 16384
    $region93: #{tpu_custom_call.1} parent=1 // pred_fallthru
      _
    // Predicated region
    $region94: #{tpu_custom_call.1} parent=1 // pred_check
      _
    $region95: #{tpu_custom_call.1} parent=1 // pred_check_branch
      %140 = sbr.rel (0) target = $region97
    $region96: #{tpu_custom_call.1} parent=1 // pred_region
      %141 = dma.done [#allocation11], 8192
    $region97: #{tpu_custom_call.1} parent=1 // pred_fallthru
      _
    // Predicated region
    $region98: #{tpu_custom_call.1} parent=1 // pred_check
      _
    $region99: #{tpu_custom_call.1} parent=1 // pred_check_branch
      %143 = sbr.rel (0) target = $region101
    $region100: #{tpu_custom_call.1} parent=1 // pred_region
      %144 = dma.done [#allocation14], 16384
    $region101: #{tpu_custom_call.1} parent=1 // pred_fallthru
      _
    %v145 = vld [vmem:[%s0] sm:$0xff]
    %v146 = vld [vmem:[%s0 + $0x8] sm:$0xff]
    %v147 = vld [vmem:[%s0 + $0x10] sm:$0xff]
    %v148 = vld [vmem:[%s0 + $0x18] sm:$0xff]
    %v149 = vld [vmem:[#allocation4] sm:$0xff]
    %v150 = vld [vmem:[#allocation4 + $0x8] sm:$0xff]
    %v151 = vld [vmem:[#allocation4 + $0x10] sm:$0xff]
    %v152 = vld [vmem:[#allocation4 + $0x18] sm:$0xff]
    %v153 = vld [vmem:[#allocation4 + $0x20] sm:$0xff]
    %v154 = vld [vmem:[#allocation4 + $0x28] sm:$0xff]
    %v155 = vld [vmem:[#allocation4 + $0x30] sm:$0xff]
    %v156 = vld [vmem:[#allocation4 + $0x38] sm:$0xff]
    %v157 = vld [vmem:[#allocation4 + $0x40] sm:$0xff]
    %v158 = vld [vmem:[#allocation4 + $0x48] sm:$0xff]
    %v159 = vld [vmem:[#allocation4 + $0x50] sm:$0xff]
    %v160 = vld [vmem:[#allocation4 + $0x58] sm:$0xff]
    %v161 = vld [vmem:[#allocation4 + $0x60] sm:$0xff]
    %v162 = vld [vmem:[#allocation4 + $0x68] sm:$0xff]
    %v163 = vld [vmem:[#allocation4 + $0x70] sm:$0xff]
    %v164 = vld [vmem:[#allocation4 + $0x78] sm:$0xff]
    %v165 = vld [vmem:[#allocation4 + $0x80] sm:$0xff]
    %v166 = vld [vmem:[#allocation4 + $0x88] sm:$0xff]
    %v167 = vld [vmem:[#allocation4 + $0x90] sm:$0xff]
    %v168 = vld [vmem:[#allocation4 + $0x98] sm:$0xff]
    %v169 = vld [vmem:[#allocation4 + $0xa0] sm:$0xff]
    %v170 = vld [vmem:[#allocation4 + $0xa8] sm:$0xff]
    %v171 = vld [vmem:[#allocation4 + $0xb0] sm:$0xff]
    %v172 = vld [vmem:[#allocation4 + $0xb8] sm:$0xff]
    %v173 = vld [vmem:[#allocation4 + $0xc0] sm:$0xff]
    %v174 = vld [vmem:[#allocation4 + $0xc8] sm:$0xff]
    %v175 = vld [vmem:[#allocation4 + $0xd0] sm:$0xff]
    %v176 = vld [vmem:[#allocation4 + $0xd8] sm:$0xff]
    %v177 = vld [vmem:[#allocation4 + $0xe0] sm:$0xff]
    %v178 = vld [vmem:[#allocation4 + $0xe8] sm:$0xff]
    %v179 = vld [vmem:[#allocation4 + $0xf0] sm:$0xff]
    %v180 = vld [vmem:[#allocation4 + $0xf8] sm:$0xff]
    %v181 = vld [vmem:[#allocation4 + $0x100] sm:$0xff]
    %v182 = vld [vmem:[#allocation4 + $0x108] sm:$0xff]
    %v183 = vld [vmem:[#allocation4 + $0x110] sm:$0xff]
    %v184 = vld [vmem:[#allocation4 + $0x118] sm:$0xff]
    %v185 = vld [vmem:[#allocation4 + $0x120] sm:$0xff]
    %v186 = vld [vmem:[#allocation4 + $0x128] sm:$0xff]
    %v187 = vld [vmem:[#allocation4 + $0x130] sm:$0xff]
    %v188 = vld [vmem:[#allocation4 + $0x138] sm:$0xff]
    %v189 = vld [vmem:[#allocation4 + $0x140] sm:$0xff]
    %v190 = vld [vmem:[#allocation4 + $0x148] sm:$0xff]
    %v191 = vld [vmem:[#allocation4 + $0x150] sm:$0xff]
    %v192 = vld [vmem:[#allocation4 + $0x158] sm:$0xff]
    %v193 = vld [vmem:[#allocation4 + $0x160] sm:$0xff]
    %v194 = vld [vmem:[#allocation4 + $0x168] sm:$0xff]
    %v195 = vld [vmem:[#allocation4 + $0x170] sm:$0xff]
    %v196 = vld [vmem:[#allocation4 + $0x178] sm:$0xff]
    %v197 = vld [vmem:[#allocation4 + $0x180] sm:$0xff]
    %v198 = vld [vmem:[#allocation4 + $0x188] sm:$0xff]
    %v199 = vld [vmem:[#allocation4 + $0x190] sm:$0xff]
    %v200 = vld [vmem:[#allocation4 + $0x198] sm:$0xff]
    %v201 = vld [vmem:[#allocation4 + $0x1a0] sm:$0xff]
    %v202 = vld [vmem:[#allocation4 + $0x1a8] sm:$0xff]
    %v203 = vld [vmem:[#allocation4 + $0x1b0] sm:$0xff]
    %v204 = vld [vmem:[#allocation4 + $0x1b8] sm:$0xff]
    %v205 = vld [vmem:[#allocation4 + $0x1c0] sm:$0xff]
    %v206 = vld [vmem:[#allocation4 + $0x1c8] sm:$0xff]
    %v207 = vld [vmem:[#allocation4 + $0x1d0] sm:$0xff]
    %v208 = vld [vmem:[#allocation4 + $0x1d8] sm:$0xff]
    %v209 = vld [vmem:[#allocation4 + $0x1e0] sm:$0xff]
    %v210 = vld [vmem:[#allocation4 + $0x1e8] sm:$0xff]
    %v211 = vld [vmem:[#allocation4 + $0x1f0] sm:$0xff]
    %v212 = vld [vmem:[#allocation4 + $0x1f8] sm:$0xff]
    %v213 = vld [vmem:[#allocation4 + $0x200] sm:$0xff]
    %v214 = vld [vmem:[#allocation4 + $0x208] sm:$0xff]
    %v215 = vld [vmem:[#allocation4 + $0x210] sm:$0xff]
    %v216 = vld [vmem:[#allocation4 + $0x218] sm:$0xff]
    %v217 = vld [vmem:[#allocation4 + $0x220] sm:$0xff]
    %v218 = vld [vmem:[#allocation4 + $0x228] sm:$0xff]
    %v219 = vld [vmem:[#allocation4 + $0x230] sm:$0xff]
    %v220 = vld [vmem:[#allocation4 + $0x238] sm:$0xff]
    %v221 = vld [vmem:[#allocation4 + $0x240] sm:$0xff]
    %v222 = vld [vmem:[#allocation4 + $0x248] sm:$0xff]
    %v223 = vld [vmem:[#allocation4 + $0x250] sm:$0xff]
    %v224 = vld [vmem:[#allocation4 + $0x258] sm:$0xff]
    %v225 = vld [vmem:[#allocation4 + $0x260] sm:$0xff]
    %v226 = vld [vmem:[#allocation4 + $0x268] sm:$0xff]
    %v227 = vld [vmem:[#allocation4 + $0x270] sm:$0xff]
    %v228 = vld [vmem:[#allocation4 + $0x278] sm:$0xff]
    %v229 = vld [vmem:[#allocation4 + $0x280] sm:$0xff]
    %v230 = vld [vmem:[#allocation4 + $0x288] sm:$0xff]
    %v231 = vld [vmem:[#allocation4 + $0x290] sm:$0xff]
    %v232 = vld [vmem:[#allocation4 + $0x298] sm:$0xff]
    %v233 = vld [vmem:[#allocation4 + $0x2a0] sm:$0xff]
    %v234 = vld [vmem:[#allocation4 + $0x2a8] sm:$0xff]
    %v235 = vld [vmem:[#allocation4 + $0x2b0] sm:$0xff]
    %v236 = vld [vmem:[#allocation4 + $0x2b8] sm:$0xff]
    %v237 = vld [vmem:[#allocation4 + $0x2c0] sm:$0xff]
    %v238 = vld [vmem:[#allocation4 + $0x2c8] sm:$0xff]
    %v239 = vld [vmem:[#allocation4 + $0x2d0] sm:$0xff]
    %v240 = vld [vmem:[#allocation4 + $0x2d8] sm:$0xff]
    %v241 = vld [vmem:[#allocation4 + $0x2e0] sm:$0xff]
    %v242 = vld [vmem:[#allocation4 + $0x2e8] sm:$0xff]
    %v243 = vld [vmem:[#allocation4 + $0x2f0] sm:$0xff]
    %v244 = vld [vmem:[#allocation4 + $0x2f8] sm:$0xff]
    %v245 = vld [vmem:[#allocation4 + $0x300] sm:$0xff]
    %v246 = vld [vmem:[#allocation4 + $0x308] sm:$0xff]
    %v247 = vld [vmem:[#allocation4 + $0x310] sm:$0xff]
    %v248 = vld [vmem:[#allocation4 + $0x318] sm:$0xff]
    %v249 = vld [vmem:[#allocation4 + $0x320] sm:$0xff]
    %v250 = vld [vmem:[#allocation4 + $0x328] sm:$0xff]
    %v251 = vld [vmem:[#allocation4 + $0x330] sm:$0xff]
    %v252 = vld [vmem:[#allocation4 + $0x338] sm:$0xff]
    %v253 = vld [vmem:[#allocation4 + $0x340] sm:$0xff]
    %v254 = vld [vmem:[#allocation4 + $0x348] sm:$0xff]
    %v255 = vld [vmem:[#allocation4 + $0x350] sm:$0xff]
    %v256 = vld [vmem:[#allocation4 + $0x358] sm:$0xff]
    %v257 = vld [vmem:[#allocation4 + $0x360] sm:$0xff]
    %v258 = vld [vmem:[#allocation4 + $0x368] sm:$0xff]
    %v259 = vld [vmem:[#allocation4 + $0x370] sm:$0xff]
    %v260 = vld [vmem:[#allocation4 + $0x378] sm:$0xff]
    %v261 = vld [vmem:[#allocation4 + $0x380] sm:$0xff]
    %v262 = vld [vmem:[#allocation4 + $0x388] sm:$0xff]
    %v263 = vld [vmem:[#allocation4 + $0x390] sm:$0xff]
    %v264 = vld [vmem:[#allocation4 + $0x398] sm:$0xff]
    %v265 = vld [vmem:[#allocation4 + $0x3a0] sm:$0xff]
    %v266 = vld [vmem:[#allocation4 + $0x3a8] sm:$0xff]
    %v267 = vld [vmem:[#allocation4 + $0x3b0] sm:$0xff]
    %v268 = vld [vmem:[#allocation4 + $0x3b8] sm:$0xff]
    %v269 = vld [vmem:[#allocation4 + $0x3c0] sm:$0xff]
    %v270 = vld [vmem:[#allocation4 + $0x3c8] sm:$0xff]
    %v271 = vld [vmem:[#allocation4 + $0x3d0] sm:$0xff]
    %v272 = vld [vmem:[#allocation4 + $0x3d8] sm:$0xff]
    %v273 = vld [vmem:[#allocation4 + $0x3e0] sm:$0xff]
    %v274 = vld [vmem:[#allocation4 + $0x3e8] sm:$0xff]
    %v275 = vld [vmem:[#allocation4 + $0x3f0] sm:$0xff]
    %v276 = vld [vmem:[#allocation4 + $0x3f8] sm:$0xff]
    %v277 = vld [vmem:[%s4] sm:$0xf]
    %v279 = vlaneseq
    %v280 = vshrl.u32 %v279, 7
    %v281 = vsub.s32 0, %v280
    %v282 = vrot.slane %v277, %v281
    %v283 = vlaneseq
    %v284 = vshrl.u32 %v283, 7
    %v285 = vsub.s32 1, %v284
    %v286 = vrot.slane %v277, %v285
    %v287 = vlaneseq
    %v288 = vshrl.u32 %v287, 7
    %v289 = vsub.s32 2, %v288
    %v290 = vrot.slane %v277, %v289
    %v291 = vlaneseq
    %v292 = vshrl.u32 %v291, 7
    %v293 = vsub.s32 3, %v292
    %v294 = vrot.slane %v277, %v293
    %299 = vmatprep.subr.mxu0 %v150
    %300 = vmatpush1.msra.mxu0 %v149
    %301 = vmatprep.subr.mxu0 %v154
    %302 = vmatpush1.msra.mxu0 %v153
    %303 = vmatprep.subr.mxu0 %v158
    %304 = vmatpush1.msra.mxu0 %v157
    %305 = vmatprep.subr.mxu0 %v162
    %306 = vmatpush1.msra.mxu0 %v161
    %307 = vmatprep.subr.mxu0 %v166
    %308 = vmatpush1.msra.mxu0 %v165
    %309 = vmatprep.subr.mxu0 %v170
    %310 = vmatpush1.msra.mxu0 %v169
    %311 = vmatprep.subr.mxu0 %v174
    %312 = vmatpush1.msra.mxu0 %v173
    %313 = vmatprep.subr.mxu0 %v178
    %314 = vmatpush1.msra.mxu0 %v177
    %315 = vmatprep.subr.mxu0 %v182
    %316 = vmatpush1.msra.mxu0 %v181
    %317 = vmatprep.subr.mxu0 %v186
    %318 = vmatpush1.msra.mxu0 %v185
    %319 = vmatprep.subr.mxu0 %v190
    %320 = vmatpush1.msra.mxu0 %v189
    %321 = vmatprep.subr.mxu0 %v194
    %322 = vmatpush1.msra.mxu0 %v193
    %323 = vmatprep.subr.mxu0 %v198
    %324 = vmatpush1.msra.mxu0 %v197
    %325 = vmatprep.subr.mxu0 %v202
    %326 = vmatpush1.msra.mxu0 %v201
    %327 = vmatprep.subr.mxu0 %v206
    %328 = vmatpush1.msra.mxu0 %v205
    %329 = vmatprep.subr.mxu0 %v210
    %330 = vmatpush1.msra.mxu0 %v209
    %331 = vmatprep.subr.mxu0 %v214
    %332 = vmatpush1.msra.mxu0 %v213
    %333 = vmatprep.subr.mxu0 %v218
    %334 = vmatpush1.msra.mxu0 %v217
    %335 = vmatprep.subr.mxu0 %v222
    %336 = vmatpush1.msra.mxu0 %v221
    %337 = vmatprep.subr.mxu0 %v226
    %338 = vmatpush1.msra.mxu0 %v225
    %339 = vmatprep.subr.mxu0 %v230
    %340 = vmatpush1.msra.mxu0 %v229
    %341 = vmatprep.subr.mxu0 %v234
    %342 = vmatpush1.msra.mxu0 %v233
    %343 = vmatprep.subr.mxu0 %v238
    %344 = vmatpush1.msra.mxu0 %v237
    %345 = vmatprep.subr.mxu0 %v242
    %346 = vmatpush1.msra.mxu0 %v241
    %347 = vmatprep.subr.mxu0 %v246
    %348 = vmatpush1.msra.mxu0 %v245
    %349 = vmatprep.subr.mxu0 %v250
    %350 = vmatpush1.msra.mxu0 %v249
    %351 = vmatprep.subr.mxu0 %v254
    %352 = vmatpush1.msra.mxu0 %v253
    %353 = vmatprep.subr.mxu0 %v258
    %354 = vmatpush1.msra.mxu0 %v257
    %355 = vmatprep.subr.mxu0 %v262
    %356 = vmatpush1.msra.mxu0 %v261
    %357 = vmatprep.subr.mxu0 %v266
    %358 = vmatpush1.msra.mxu0 %v265
    %359 = vmatprep.subr.mxu0 %v270
    %360 = vmatpush1.msra.mxu0 %v269
    %361 = vmatprep.subr.mxu0 %v274
    %362 = vmatpush1.msra.mxu0 %v273
    %363 = vmatprep.mubr.f32.mxu0 %v146
    %364 = vmatmul.mubr.f32.gmra.mrb[0].mxu0 %v145
    %v365 = vpop.f32.mrb[0].mxu0
    %v366 = vadd.f32 %v282, %v365
    %v367 = vpop.f32.mrb[0].mxu0
    %v368 = vadd.f32 %v286, %v367
    %369 = vmatprep.mubr.f32.mxu0 %v148
    %370 = vmatmul.mubr.f32.gmra.mrb[0].mxu0 %v147
    %v371 = vpop.f32.mrb[0].mxu0
    %v372 = vadd.f32 %v282, %v371
    %v373 = vpop.f32.mrb[0].mxu0
    %v374 = vadd.f32 %v286, %v373
    %375 = vdwg.mxu0
    %376 = vmatprep.subr.mxu0 %v152
    %377 = vmatpush1.msra.mxu0 %v151
    %378 = vmatprep.subr.mxu0 %v156
    %379 = vmatpush1.msra.mxu0 %v155
    %380 = vmatprep.subr.mxu0 %v160
    %381 = vmatpush1.msra.mxu0 %v159
    %382 = vmatprep.subr.mxu0 %v164
    %383 = vmatpush1.msra.mxu0 %v163
    %384 = vmatprep.subr.mxu0 %v168
    %385 = vmatpush1.msra.mxu0 %v167
    %386 = vmatprep.subr.mxu0 %v172
    %387 = vmatpush1.msra.mxu0 %v171
    %388 = vmatprep.subr.mxu0 %v176
    %389 = vmatpush1.msra.mxu0 %v175
    %390 = vmatprep.subr.mxu0 %v180
    %391 = vmatpush1.msra.mxu0 %v179
    %392 = vmatprep.subr.mxu0 %v184
    %393 = vmatpush1.msra.mxu0 %v183
    %394 = vmatprep.subr.mxu0 %v188
    %395 = vmatpush1.msra.mxu0 %v187
    %396 = vmatprep.subr.mxu0 %v192
    %397 = vmatpush1.msra.mxu0 %v191
    %398 = vmatprep.subr.mxu0 %v196
    %399 = vmatpush1.msra.mxu0 %v195
    %400 = vmatprep.subr.mxu0 %v200
    %401 = vmatpush1.msra.mxu0 %v199
    %402 = vmatprep.subr.mxu0 %v204
    %403 = vmatpush1.msra.mxu0 %v203
    %404 = vmatprep.subr.mxu0 %v208
    %405 = vmatpush1.msra.mxu0 %v207
    %406 = vmatprep.subr.mxu0 %v212
    %407 = vmatpush1.msra.mxu0 %v211
    %408 = vmatprep.subr.mxu0 %v216
    %409 = vmatpush1.msra.mxu0 %v215
    %410 = vmatprep.subr.mxu0 %v220
    %411 = vmatpush1.msra.mxu0 %v219
    %412 = vmatprep.subr.mxu0 %v224
    %413 = vmatpush1.msra.mxu0 %v223
    %414 = vmatprep.subr.mxu0 %v228
    %415 = vmatpush1.msra.mxu0 %v227
    %416 = vmatprep.subr.mxu0 %v232
    %417 = vmatpush1.msra.mxu0 %v231
    %418 = vmatprep.subr.mxu0 %v236
    %419 = vmatpush1.msra.mxu0 %v235
    %420 = vmatprep.subr.mxu0 %v240
    %421 = vmatpush1.msra.mxu0 %v239
    %422 = vmatprep.subr.mxu0 %v244
    %423 = vmatpush1.msra.mxu0 %v243
    %424 = vmatprep.subr.mxu0 %v248
    %425 = vmatpush1.msra.mxu0 %v247
    %426 = vmatprep.subr.mxu0 %v252
    %427 = vmatpush1.msra.mxu0 %v251
    %428 = vmatprep.subr.mxu0 %v256
    %429 = vmatpush1.msra.mxu0 %v255
    %430 = vmatprep.subr.mxu0 %v260
    %431 = vmatpush1.msra.mxu0 %v259
    %432 = vmatprep.subr.mxu0 %v264
    %433 = vmatpush1.msra.mxu0 %v263
    %434 = vmatprep.subr.mxu0 %v268
    %435 = vmatpush1.msra.mxu0 %v267
    %436 = vmatprep.subr.mxu0 %v272
    %437 = vmatpush1.msra.mxu0 %v271
    %438 = vmatprep.subr.mxu0 %v276
    %439 = vmatpush1.msra.mxu0 %v275
    %440 = vmatprep.mubr.f32.mxu0 %v146
    %441 = vmatmul.mubr.f32.gmra.mrb[0].mxu0 %v145
    %v442 = vpop.f32.mrb[0].mxu0
    %v443 = vadd.f32 %v290, %v442
    %v444 = vpop.f32.mrb[0].mxu0
    %v445 = vadd.f32 %v294, %v444
    %446 = vmatprep.mubr.f32.mxu0 %v148
    %447 = vmatmul.mubr.f32.gmra.mrb[0].mxu0 %v147
    %v448 = vpop.f32.mrb[0].mxu0
    %v449 = vadd.f32 %v290, %v448
    %v450 = vpop.f32.mrb[0].mxu0
    %v451 = vadd.f32 %v294, %v450
    %452 = vdwg.mxu0
    %453 = vst [vmem:[#allocation2] sm:$0xff] %v366
    %454 = vst [vmem:[#allocation2 + $0x8] sm:$0xff] %v368
    %455 = vst [vmem:[#allocation2 + $0x10] sm:$0xff] %v443
    %456 = vst [vmem:[#allocation2 + $0x18] sm:$0xff] %v445
    %457 = vst [vmem:[#allocation2 + $0x20] sm:$0xff] %v372
    %458 = vst [vmem:[#allocation2 + $0x28] sm:$0xff] %v374
    %459 = vst [vmem:[#allocation2 + $0x30] sm:$0xff] %v449
    %460 = vst [vmem:[#allocation2 + $0x38] sm:$0xff] %v451
    %v461 = vld [vmem:[%s1] sm:$0xff]
    %v462 = vld [vmem:[%s1 + $0x8] sm:$0xff]
    %v463 = vld [vmem:[%s1 + $0x10] sm:$0xff]
    %v464 = vld [vmem:[%s1 + $0x18] sm:$0xff]
    %v465 = vld [vmem:[#allocation10] sm:$0xff]
    %v466 = vld [vmem:[#allocation10 + $0x8] sm:$0xff]
    %v467 = vld [vmem:[#allocation10 + $0x10] sm:$0xff]
    %v468 = vld [vmem:[#allocation10 + $0x18] sm:$0xff]
    %v469 = vld [vmem:[#allocation10 + $0x20] sm:$0xff]
    %v470 = vld [vmem:[#allocation10 + $0x28] sm:$0xff]
    %v471 = vld [vmem:[#allocation10 + $0x30] sm:$0xff]
    %v472 = vld [vmem:[#allocation10 + $0x38] sm:$0xff]
    %v473 = vld [vmem:[#allocation10 + $0x40] sm:$0xff]
    %v474 = vld [vmem:[#allocation10 + $0x48] sm:$0xff]
    %v475 = vld [vmem:[#allocation10 + $0x50] sm:$0xff]
    %v476 = vld [vmem:[#allocation10 + $0x58] sm:$0xff]
    %v477 = vld [vmem:[#allocation10 + $0x60] sm:$0xff]
    %v478 = vld [vmem:[#allocation10 + $0x68] sm:$0xff]
    %v479 = vld [vmem:[#allocation10 + $0x70] sm:$0xff]
    %v480 = vld [vmem:[#allocation10 + $0x78] sm:$0xff]
    %v481 = vld [vmem:[#allocation10 + $0x80] sm:$0xff]
    %v482 = vld [vmem:[#allocation10 + $0x88] sm:$0xff]
    %v483 = vld [vmem:[#allocation10 + $0x90] sm:$0xff]
    %v484 = vld [vmem:[#allocation10 + $0x98] sm:$0xff]
    %v485 = vld [vmem:[#allocation10 + $0xa0] sm:$0xff]
    %v486 = vld [vmem:[#allocation10 + $0xa8] sm:$0xff]
    %v487 = vld [vmem:[#allocation10 + $0xb0] sm:$0xff]
    %v488 = vld [vmem:[#allocation10 + $0xb8] sm:$0xff]
    %v489 = vld [vmem:[#allocation10 + $0xc0] sm:$0xff]
    %v490 = vld [vmem:[#allocation10 + $0xc8] sm:$0xff]
    %v491 = vld [vmem:[#allocation10 + $0xd0] sm:$0xff]
    %v492 = vld [vmem:[#allocation10 + $0xd8] sm:$0xff]
    %v493 = vld [vmem:[#allocation10 + $0xe0] sm:$0xff]
    %v494 = vld [vmem:[#allocation10 + $0xe8] sm:$0xff]
    %v495 = vld [vmem:[#allocation10 + $0xf0] sm:$0xff]
    %v496 = vld [vmem:[#allocation10 + $0xf8] sm:$0xff]
    %v497 = vld [vmem:[#allocation10 + $0x100] sm:$0xff]
    %v498 = vld [vmem:[#allocation10 + $0x108] sm:$0xff]
    %v499 = vld [vmem:[#allocation10 + $0x110] sm:$0xff]
    %v500 = vld [vmem:[#allocation10 + $0x118] sm:$0xff]
    %v501 = vld [vmem:[#allocation10 + $0x120] sm:$0xff]
    %v502 = vld [vmem:[#allocation10 + $0x128] sm:$0xff]
    %v503 = vld [vmem:[#allocation10 + $0x130] sm:$0xff]
    %v504 = vld [vmem:[#allocation10 + $0x138] sm:$0xff]
    %v505 = vld [vmem:[#allocation10 + $0x140] sm:$0xff]
    %v506 = vld [vmem:[#allocation10 + $0x148] sm:$0xff]
    %v507 = vld [vmem:[#allocation10 + $0x150] sm:$0xff]
    %v508 = vld [vmem:[#allocation10 + $0x158] sm:$0xff]
    %v509 = vld [vmem:[#allocation10 + $0x160] sm:$0xff]
    %v510 = vld [vmem:[#allocation10 + $0x168] sm:$0xff]
    %v511 = vld [vmem:[#allocation10 + $0x170] sm:$0xff]
    %v512 = vld [vmem:[#allocation10 + $0x178] sm:$0xff]
    %v513 = vld [vmem:[#allocation10 + $0x180] sm:$0xff]
    %v514 = vld [vmem:[#allocation10 + $0x188] sm:$0xff]
    %v515 = vld [vmem:[#allocation10 + $0x190] sm:$0xff]
    %v516 = vld [vmem:[#allocation10 + $0x198] sm:$0xff]
    %v517 = vld [vmem:[#allocation10 + $0x1a0] sm:$0xff]
    %v518 = vld [vmem:[#allocation10 + $0x1a8] sm:$0xff]
    %v519 = vld [vmem:[#allocation10 + $0x1b0] sm:$0xff]
    %v520 = vld [vmem:[#allocation10 + $0x1b8] sm:$0xff]
    %v521 = vld [vmem:[#allocation10 + $0x1c0] sm:$0xff]
    %v522 = vld [vmem:[#allocation10 + $0x1c8] sm:$0xff]
    %v523 = vld [vmem:[#allocation10 + $0x1d0] sm:$0xff]
    %v524 = vld [vmem:[#allocation10 + $0x1d8] sm:$0xff]
    %v525 = vld [vmem:[#allocation10 + $0x1e0] sm:$0xff]
    %v526 = vld [vmem:[#allocation10 + $0x1e8] sm:$0xff]
    %v527 = vld [vmem:[#allocation10 + $0x1f0] sm:$0xff]
    %v528 = vld [vmem:[#allocation10 + $0x1f8] sm:$0xff]
    %v529 = vld [vmem:[#allocation10 + $0x200] sm:$0xff]
    %v530 = vld [vmem:[#allocation10 + $0x208] sm:$0xff]
    %v531 = vld [vmem:[#allocation10 + $0x210] sm:$0xff]
    %v532 = vld [vmem:[#allocation10 + $0x218] sm:$0xff]
    %v533 = vld [vmem:[#allocation10 + $0x220] sm:$0xff]
    %v534 = vld [vmem:[#allocation10 + $0x228] sm:$0xff]
    %v535 = vld [vmem:[#allocation10 + $0x230] sm:$0xff]
    %v536 = vld [vmem:[#allocation10 + $0x238] sm:$0xff]
    %v537 = vld [vmem:[#allocation10 + $0x240] sm:$0xff]
    %v538 = vld [vmem:[#allocation10 + $0x248] sm:$0xff]
    %v539 = vld [vmem:[#allocation10 + $0x250] sm:$0xff]
    %v540 = vld [vmem:[#allocation10 + $0x258] sm:$0xff]
    %v541 = vld [vmem:[#allocation10 + $0x260] sm:$0xff]
    %v542 = vld [vmem:[#allocation10 + $0x268] sm:$0xff]
    %v543 = vld [vmem:[#allocation10 + $0x270] sm:$0xff]
    %v544 = vld [vmem:[#allocation10 + $0x278] sm:$0xff]
    %v545 = vld [vmem:[#allocation10 + $0x280] sm:$0xff]
    %v546 = vld [vmem:[#allocation10 + $0x288] sm:$0xff]
    %v547 = vld [vmem:[#allocation10 + $0x290] sm:$0xff]
    %v548 = vld [vmem:[#allocation10 + $0x298] sm:$0xff]
    %v549 = vld [vmem:[#allocation10 + $0x2a0] sm:$0xff]
    %v550 = vld [vmem:[#allocation10 + $0x2a8] sm:$0xff]
    %v551 = vld [vmem:[#allocation10 + $0x2b0] sm:$0xff]
    %v552 = vld [vmem:[#allocation10 + $0x2b8] sm:$0xff]
    %v553 = vld [vmem:[#allocation10 + $0x2c0] sm:$0xff]
    %v554 = vld [vmem:[#allocation10 + $0x2c8] sm:$0xff]
    %v555 = vld [vmem:[#allocation10 + $0x2d0] sm:$0xff]
    %v556 = vld [vmem:[#allocation10 + $0x2d8] sm:$0xff]
    %v557 = vld [vmem:[#allocation10 + $0x2e0] sm:$0xff]
    %v558 = vld [vmem:[#allocation10 + $0x2e8] sm:$0xff]
    %v559 = vld [vmem:[#allocation10 + $0x2f0] sm:$0xff]
    %v560 = vld [vmem:[#allocation10 + $0x2f8] sm:$0xff]
    %v561 = vld [vmem:[#allocation10 + $0x300] sm:$0xff]
    %v562 = vld [vmem:[#allocation10 + $0x308] sm:$0xff]
    %v563 = vld [vmem:[#allocation10 + $0x310] sm:$0xff]
    %v564 = vld [vmem:[#allocation10 + $0x318] sm:$0xff]
    %v565 = vld [vmem:[#allocation10 + $0x320] sm:$0xff]
    %v566 = vld [vmem:[#allocation10 + $0x328] sm:$0xff]
    %v567 = vld [vmem:[#allocation10 + $0x330] sm:$0xff]
    %v568 = vld [vmem:[#allocation10 + $0x338] sm:$0xff]
    %v569 = vld [vmem:[#allocation10 + $0x340] sm:$0xff]
    %v570 = vld [vmem:[#allocation10 + $0x348] sm:$0xff]
    %v571 = vld [vmem:[#allocation10 + $0x350] sm:$0xff]
    %v572 = vld [vmem:[#allocation10 + $0x358] sm:$0xff]
    %v573 = vld [vmem:[#allocation10 + $0x360] sm:$0xff]
    %v574 = vld [vmem:[#allocation10 + $0x368] sm:$0xff]
    %v575 = vld [vmem:[#allocation10 + $0x370] sm:$0xff]
    %v576 = vld [vmem:[#allocation10 + $0x378] sm:$0xff]
    %v577 = vld [vmem:[#allocation10 + $0x380] sm:$0xff]
    %v578 = vld [vmem:[#allocation10 + $0x388] sm:$0xff]
    %v579 = vld [vmem:[#allocation10 + $0x390] sm:$0xff]
    %v580 = vld [vmem:[#allocation10 + $0x398] sm:$0xff]
    %v581 = vld [vmem:[#allocation10 + $0x3a0] sm:$0xff]
    %v582 = vld [vmem:[#allocation10 + $0x3a8] sm:$0xff]
    %v583 = vld [vmem:[#allocation10 + $0x3b0] sm:$0xff]
    %v584 = vld [vmem:[#allocation10 + $0x3b8] sm:$0xff]
    %v585 = vld [vmem:[#allocation10 + $0x3c0] sm:$0xff]
    %v586 = vld [vmem:[#allocation10 + $0x3c8] sm:$0xff]
    %v587 = vld [vmem:[#allocation10 + $0x3d0] sm:$0xff]
    %v588 = vld [vmem:[#allocation10 + $0x3d8] sm:$0xff]
    %v589 = vld [vmem:[#allocation10 + $0x3e0] sm:$0xff]
    %v590 = vld [vmem:[#allocation10 + $0x3e8] sm:$0xff]
    %v591 = vld [vmem:[#allocation10 + $0x3f0] sm:$0xff]
    %v592 = vld [vmem:[#allocation10 + $0x3f8] sm:$0xff]
    %v593 = vld [vmem:[%s11] sm:$0xf]
    %v595 = vlaneseq
    %v596 = vshrl.u32 %v595, 7
    %v597 = vsub.s32 0, %v596
    %v598 = vrot.slane %v593, %v597
    %v599 = vlaneseq
    %v600 = vshrl.u32 %v599, 7
    %v601 = vsub.s32 1, %v600
    %v602 = vrot.slane %v593, %v601
    %v603 = vlaneseq
    %v604 = vshrl.u32 %v603, 7
    %v605 = vsub.s32 2, %v604
    %v606 = vrot.slane %v593, %v605
    %v607 = vlaneseq
    %v608 = vshrl.u32 %v607, 7
    %v609 = vsub.s32 3, %v608
    %v610 = vrot.slane %v593, %v609
    %615 = vmatprep.subr.mxu0 %v466
    %616 = vmatpush1.msra.mxu0 %v465
    %617 = vmatprep.subr.mxu0 %v470
    %618 = vmatpush1.msra.mxu0 %v469
    %619 = vmatprep.subr.mxu0 %v474
    %620 = vmatpush1.msra.mxu0 %v473
    %621 = vmatprep.subr.mxu0 %v478
    %622 = vmatpush1.msra.mxu0 %v477
    %623 = vmatprep.subr.mxu0 %v482
    %624 = vmatpush1.msra.mxu0 %v481
    %625 = vmatprep.subr.mxu0 %v486
    %626 = vmatpush1.msra.mxu0 %v485
    %627 = vmatprep.subr.mxu0 %v490
    %628 = vmatpush1.msra.mxu0 %v489
    %629 = vmatprep.subr.mxu0 %v494
    %630 = vmatpush1.msra.mxu0 %v493
    %631 = vmatprep.subr.mxu0 %v498
    %632 = vmatpush1.msra.mxu0 %v497
    %633 = vmatprep.subr.mxu0 %v502
    %634 = vmatpush1.msra.mxu0 %v501
    %635 = vmatprep.subr.mxu0 %v506
    %636 = vmatpush1.msra.mxu0 %v505
    %637 = vmatprep.subr.mxu0 %v510
    %638 = vmatpush1.msra.mxu0 %v509
    %639 = vmatprep.subr.mxu0 %v514
    %640 = vmatpush1.msra.mxu0 %v513
    %641 = vmatprep.subr.mxu0 %v518
    %642 = vmatpush1.msra.mxu0 %v517
    %643 = vmatprep.subr.mxu0 %v522
    %644 = vmatpush1.msra.mxu0 %v521
    %645 = vmatprep.subr.mxu0 %v526
    %646 = vmatpush1.msra.mxu0 %v525
    %647 = vmatprep.subr.mxu0 %v530
    %648 = vmatpush1.msra.mxu0 %v529
    %649 = vmatprep.subr.mxu0 %v534
    %650 = vmatpush1.msra.mxu0 %v533
    %651 = vmatprep.subr.mxu0 %v538
    %652 = vmatpush1.msra.mxu0 %v537
    %653 = vmatprep.subr.mxu0 %v542
    %654 = vmatpush1.msra.mxu0 %v541
    %655 = vmatprep.subr.mxu0 %v546
    %656 = vmatpush1.msra.mxu0 %v545
    %657 = vmatprep.subr.mxu0 %v550
    %658 = vmatpush1.msra.mxu0 %v549
    %659 = vmatprep.subr.mxu0 %v554
    %660 = vmatpush1.msra.mxu0 %v553
    %661 = vmatprep.subr.mxu0 %v558
    %662 = vmatpush1.msra.mxu0 %v557
    %663 = vmatprep.subr.mxu0 %v562
    %664 = vmatpush1.msra.mxu0 %v561
    %665 = vmatprep.subr.mxu0 %v566
    %666 = vmatpush1.msra.mxu0 %v565
    %667 = vmatprep.subr.mxu0 %v570
    %668 = vmatpush1.msra.mxu0 %v569
    %669 = vmatprep.subr.mxu0 %v574
    %670 = vmatpush1.msra.mxu0 %v573
    %671 = vmatprep.subr.mxu0 %v578
    %672 = vmatpush1.msra.mxu0 %v577
    %673 = vmatprep.subr.mxu0 %v582
    %674 = vmatpush1.msra.mxu0 %v581
    %675 = vmatprep.subr.mxu0 %v586
    %676 = vmatpush1.msra.mxu0 %v585
    %677 = vmatprep.subr.mxu0 %v590
    %678 = vmatpush1.msra.mxu0 %v589
    %679 = vmatprep.mubr.f32.mxu0 %v462
    %680 = vmatmul.mubr.f32.gmra.mrb[0].mxu0 %v461
    %v681 = vpop.f32.mrb[0].mxu0
    %v682 = vadd.f32 %v598, %v681
    %v683 = vpop.f32.mrb[0].mxu0
    %v684 = vadd.f32 %v602, %v683
    %685 = vmatprep.mubr.f32.mxu0 %v464
    %686 = vmatmul.mubr.f32.gmra.mrb[0].mxu0 %v463
    %v687 = vpop.f32.mrb[0].mxu0
    %v688 = vadd.f32 %v598, %v687
    %v689 = vpop.f32.mrb[0].mxu0
    %v690 = vadd.f32 %v602, %v689
    %691 = vdwg.mxu0
    %692 = vmatprep.subr.mxu0 %v468
    %693 = vmatpush1.msra.mxu0 %v467
    %694 = vmatprep.subr.mxu0 %v472
    %695 = vmatpush1.msra.mxu0 %v471
    %696 = vmatprep.subr.mxu0 %v476
    %697 = vmatpush1.msra.mxu0 %v475
    %698 = vmatprep.subr.mxu0 %v480
    %699 = vmatpush1.msra.mxu0 %v479
    %700 = vmatprep.subr.mxu0 %v484
    %701 = vmatpush1.msra.mxu0 %v483
    %702 = vmatprep.subr.mxu0 %v488
    %703 = vmatpush1.msra.mxu0 %v487
    %704 = vmatprep.subr.mxu0 %v492
    %705 = vmatpush1.msra.mxu0 %v491
    %706 = vmatprep.subr.mxu0 %v496
    %707 = vmatpush1.msra.mxu0 %v495
    %708 = vmatprep.subr.mxu0 %v500
    %709 = vmatpush1.msra.mxu0 %v499
    %710 = vmatprep.subr.mxu0 %v504
    %711 = vmatpush1.msra.mxu0 %v503
    %712 = vmatprep.subr.mxu0 %v508
    %713 = vmatpush1.msra.mxu0 %v507
    %714 = vmatprep.subr.mxu0 %v512
    %715 = vmatpush1.msra.mxu0 %v511
    %716 = vmatprep.subr.mxu0 %v516
    %717 = vmatpush1.msra.mxu0 %v515
    %718 = vmatprep.subr.mxu0 %v520
    %719 = vmatpush1.msra.mxu0 %v519
    %720 = vmatprep.subr.mxu0 %v524
    %721 = vmatpush1.msra.mxu0 %v523
    %722 = vmatprep.subr.mxu0 %v528
    %723 = vmatpush1.msra.mxu0 %v527
    %724 = vmatprep.subr.mxu0 %v532
    %725 = vmatpush1.msra.mxu0 %v531
    %726 = vmatprep.subr.mxu0 %v536
    %727 = vmatpush1.msra.mxu0 %v535
    %728 = vmatprep.subr.mxu0 %v540
    %729 = vmatpush1.msra.mxu0 %v539
    %730 = vmatprep.subr.mxu0 %v544
    %731 = vmatpush1.msra.mxu0 %v543
    %732 = vmatprep.subr.mxu0 %v548
    %733 = vmatpush1.msra.mxu0 %v547
    %734 = vmatprep.subr.mxu0 %v552
    %735 = vmatpush1.msra.mxu0 %v551
    %736 = vmatprep.subr.mxu0 %v556
    %737 = vmatpush1.msra.mxu0 %v555
    %738 = vmatprep.subr.mxu0 %v560
    %739 = vmatpush1.msra.mxu0 %v559
    %740 = vmatprep.subr.mxu0 %v564
    %741 = vmatpush1.msra.mxu0 %v563
    %742 = vmatprep.subr.mxu0 %v568
    %743 = vmatpush1.msra.mxu0 %v567
    %744 = vmatprep.subr.mxu0 %v572
    %745 = vmatpush1.msra.mxu0 %v571
    %746 = vmatprep.subr.mxu0 %v576
    %747 = vmatpush1.msra.mxu0 %v575
    %748 = vmatprep.subr.mxu0 %v580
    %749 = vmatpush1.msra.mxu0 %v579
    %750 = vmatprep.subr.mxu0 %v584
    %751 = vmatpush1.msra.mxu0 %v583
    %752 = vmatprep.subr.mxu0 %v588
    %753 = vmatpush1.msra.mxu0 %v587
    %754 = vmatprep.subr.mxu0 %v592
    %755 = vmatpush1.msra.mxu0 %v591
    %756 = vmatprep.mubr.f32.mxu0 %v462
    %757 = vmatmul.mubr.f32.gmra.mrb[0].mxu0 %v461
    %v758 = vpop.f32.mrb[0].mxu0
    %v759 = vadd.f32 %v606, %v758
    %v760 = vpop.f32.mrb[0].mxu0
    %v761 = vadd.f32 %v610, %v760
    %762 = vmatprep.mubr.f32.mxu0 %v464
    %763 = vmatmul.mubr.f32.gmra.mrb[0].mxu0 %v463
    %v764 = vpop.f32.mrb[0].mxu0
    %v765 = vadd.f32 %v606, %v764
    %v766 = vpop.f32.mrb[0].mxu0
    %v767 = vadd.f32 %v610, %v766
    %768 = vdwg.mxu0
    %769 = vst [vmem:[#allocation3] sm:$0xff] %v682
    %770 = vst [vmem:[#allocation3 + $0x8] sm:$0xff] %v684
    %771 = vst [vmem:[#allocation3 + $0x10] sm:$0xff] %v759
    %772 = vst [vmem:[#allocation3 + $0x18] sm:$0xff] %v761
    %773 = vst [vmem:[#allocation3 + $0x20] sm:$0xff] %v688
    %774 = vst [vmem:[#allocation3 + $0x28] sm:$0xff] %v690
    %775 = vst [vmem:[#allocation3 + $0x30] sm:$0xff] %v765
    %776 = vst [vmem:[#allocation3 + $0x38] sm:$0xff] %v767
    %v777 = vld [vmem:[#allocation7] sm:$0xff]
    %v778 = vld [vmem:[#allocation7 + $0x8] sm:$0xff]
    %v779 = vld [vmem:[#allocation7 + $0x10] sm:$0xff]
    %v780 = vld [vmem:[#allocation7 + $0x18] sm:$0xff]
    %v781 = vld [vmem:[#allocation7 + $0x20] sm:$0xff]
    %v782 = vld [vmem:[#allocation7 + $0x28] sm:$0xff]
    %v783 = vld [vmem:[#allocation7 + $0x30] sm:$0xff]
    %v784 = vld [vmem:[#allocation7 + $0x38] sm:$0xff]
    %v785 = vld [vmem:[#allocation7 + $0x40] sm:$0xff]
    %v786 = vld [vmem:[#allocation7 + $0x48] sm:$0xff]
    %v787 = vld [vmem:[#allocation7 + $0x50] sm:$0xff]
    %v788 = vld [vmem:[#allocation7 + $0x58] sm:$0xff]
    %v789 = vld [vmem:[#allocation7 + $0x60] sm:$0xff]
    %v790 = vld [vmem:[#allocation7 + $0x68] sm:$0xff]
    %v791 = vld [vmem:[#allocation7 + $0x70] sm:$0xff]
    %v792 = vld [vmem:[#allocation7 + $0x78] sm:$0xff]
    %v793 = vld [vmem:[#allocation7 + $0x80] sm:$0xff]
    %v794 = vld [vmem:[#allocation7 + $0x88] sm:$0xff]
    %v795 = vld [vmem:[#allocation7 + $0x90] sm:$0xff]
    %v796 = vld [vmem:[#allocation7 + $0x98] sm:$0xff]
    %v797 = vld [vmem:[#allocation7 + $0xa0] sm:$0xff]
    %v798 = vld [vmem:[#allocation7 + $0xa8] sm:$0xff]
    %v799 = vld [vmem:[#allocation7 + $0xb0] sm:$0xff]
    %v800 = vld [vmem:[#allocation7 + $0xb8] sm:$0xff]
    %v801 = vld [vmem:[#allocation7 + $0xc0] sm:$0xff]
    %v802 = vld [vmem:[#allocation7 + $0xc8] sm:$0xff]
    %v803 = vld [vmem:[#allocation7 + $0xd0] sm:$0xff]
    %v804 = vld [vmem:[#allocation7 + $0xd8] sm:$0xff]
    %v805 = vld [vmem:[#allocation7 + $0xe0] sm:$0xff]
    %v806 = vld [vmem:[#allocation7 + $0xe8] sm:$0xff]
    %v807 = vld [vmem:[#allocation7 + $0xf0] sm:$0xff]
    %v808 = vld [vmem:[#allocation7 + $0xf8] sm:$0xff]
    %v809 = vld [vmem:[#allocation7 + $0x100] sm:$0xff]
    %v810 = vld [vmem:[#allocation7 + $0x108] sm:$0xff]
    %v811 = vld [vmem:[#allocation7 + $0x110] sm:$0xff]
    %v812 = vld [vmem:[#allocation7 + $0x118] sm:$0xff]
    %v813 = vld [vmem:[#allocation7 + $0x120] sm:$0xff]
    %v814 = vld [vmem:[#allocation7 + $0x128] sm:$0xff]
    %v815 = vld [vmem:[#allocation7 + $0x130] sm:$0xff]
    %v816 = vld [vmem:[#allocation7 + $0x138] sm:$0xff]
    %v817 = vld [vmem:[#allocation7 + $0x140] sm:$0xff]
    %v818 = vld [vmem:[#allocation7 + $0x148] sm:$0xff]
    %v819 = vld [vmem:[#allocation7 + $0x150] sm:$0xff]
    %v820 = vld [vmem:[#allocation7 + $0x158] sm:$0xff]
    %v821 = vld [vmem:[#allocation7 + $0x160] sm:$0xff]
    %v822 = vld [vmem:[#allocation7 + $0x168] sm:$0xff]
    %v823 = vld [vmem:[#allocation7 + $0x170] sm:$0xff]
    %v824 = vld [vmem:[#allocation7 + $0x178] sm:$0xff]
    %v825 = vld [vmem:[#allocation7 + $0x180] sm:$0xff]
    %v826 = vld [vmem:[#allocation7 + $0x188] sm:$0xff]
    %v827 = vld [vmem:[#allocation7 + $0x190] sm:$0xff]
    %v828 = vld [vmem:[#allocation7 + $0x198] sm:$0xff]
    %v829 = vld [vmem:[#allocation7 + $0x1a0] sm:$0xff]
    %v830 = vld [vmem:[#allocation7 + $0x1a8] sm:$0xff]
    %v831 = vld [vmem:[#allocation7 + $0x1b0] sm:$0xff]
    %v832 = vld [vmem:[#allocation7 + $0x1b8] sm:$0xff]
    %v833 = vld [vmem:[#allocation7 + $0x1c0] sm:$0xff]
    %v834 = vld [vmem:[#allocation7 + $0x1c8] sm:$0xff]
    %v835 = vld [vmem:[#allocation7 + $0x1d0] sm:$0xff]
    %v836 = vld [vmem:[#allocation7 + $0x1d8] sm:$0xff]
    %v837 = vld [vmem:[#allocation7 + $0x1e0] sm:$0xff]
    %v838 = vld [vmem:[#allocation7 + $0x1e8] sm:$0xff]
    %v839 = vld [vmem:[#allocation7 + $0x1f0] sm:$0xff]
    %v840 = vld [vmem:[#allocation7 + $0x1f8] sm:$0xff]
    %v841 = vld [vmem:[#allocation12] sm:$0xff]
    %v842 = vld [vmem:[#allocation12 + $0x8] sm:$0xff]
    %v843 = vld [vmem:[#allocation12 + $0x10] sm:$0xff]
    %v844 = vld [vmem:[#allocation12 + $0x18] sm:$0xff]
    %v845 = vld [vmem:[#allocation12 + $0x20] sm:$0xff]
    %v846 = vld [vmem:[#allocation12 + $0x28] sm:$0xff]
    %v847 = vld [vmem:[#allocation12 + $0x30] sm:$0xff]
    %v848 = vld [vmem:[#allocation12 + $0x38] sm:$0xff]
    %v849 = vld [vmem:[#allocation12 + $0x40] sm:$0xff]
    %v850 = vld [vmem:[#allocation12 + $0x48] sm:$0xff]
    %v851 = vld [vmem:[#allocation12 + $0x50] sm:$0xff]
    %v852 = vld [vmem:[#allocation12 + $0x58] sm:$0xff]
    %v853 = vld [vmem:[#allocation12 + $0x60] sm:$0xff]
    %v854 = vld [vmem:[#allocation12 + $0x68] sm:$0xff]
    %v855 = vld [vmem:[#allocation12 + $0x70] sm:$0xff]
    %v856 = vld [vmem:[#allocation12 + $0x78] sm:$0xff]
    %v857 = vld [vmem:[#allocation12 + $0x80] sm:$0xff]
    %v858 = vld [vmem:[#allocation12 + $0x88] sm:$0xff]
    %v859 = vld [vmem:[#allocation12 + $0x90] sm:$0xff]
    %v860 = vld [vmem:[#allocation12 + $0x98] sm:$0xff]
    %v861 = vld [vmem:[#allocation12 + $0xa0] sm:$0xff]
    %v862 = vld [vmem:[#allocation12 + $0xa8] sm:$0xff]
    %v863 = vld [vmem:[#allocation12 + $0xb0] sm:$0xff]
    %v864 = vld [vmem:[#allocation12 + $0xb8] sm:$0xff]
    %v865 = vld [vmem:[#allocation12 + $0xc0] sm:$0xff]
    %v866 = vld [vmem:[#allocation12 + $0xc8] sm:$0xff]
    %v867 = vld [vmem:[#allocation12 + $0xd0] sm:$0xff]
    %v868 = vld [vmem:[#allocation12 + $0xd8] sm:$0xff]
    %v869 = vld [vmem:[#allocation12 + $0xe0] sm:$0xff]
    %v870 = vld [vmem:[#allocation12 + $0xe8] sm:$0xff]
    %v871 = vld [vmem:[#allocation12 + $0xf0] sm:$0xff]
    %v872 = vld [vmem:[#allocation12 + $0xf8] sm:$0xff]
    %v873 = vld [vmem:[#allocation12 + $0x100] sm:$0xff]
    %v874 = vld [vmem:[#allocation12 + $0x108] sm:$0xff]
    %v875 = vld [vmem:[#allocation12 + $0x110] sm:$0xff]
    %v876 = vld [vmem:[#allocation12 + $0x118] sm:$0xff]
    %v877 = vld [vmem:[#allocation12 + $0x120] sm:$0xff]
    %v878 = vld [vmem:[#allocation12 + $0x128] sm:$0xff]
    %v879 = vld [vmem:[#allocation12 + $0x130] sm:$0xff]
    %v880 = vld [vmem:[#allocation12 + $0x138] sm:$0xff]
    %v881 = vld [vmem:[#allocation12 + $0x140] sm:$0xff]
    %v882 = vld [vmem:[#allocation12 + $0x148] sm:$0xff]
    %v883 = vld [vmem:[#allocation12 + $0x150] sm:$0xff]
    %v884 = vld [vmem:[#allocation12 + $0x158] sm:$0xff]
    %v885 = vld [vmem:[#allocation12 + $0x160] sm:$0xff]
    %v886 = vld [vmem:[#allocation12 + $0x168] sm:$0xff]
    %v887 = vld [vmem:[#allocation12 + $0x170] sm:$0xff]
    %v888 = vld [vmem:[#allocation12 + $0x178] sm:$0xff]
    %v889 = vld [vmem:[#allocation12 + $0x180] sm:$0xff]
    %v890 = vld [vmem:[#allocation12 + $0x188] sm:$0xff]
    %v891 = vld [vmem:[#allocation12 + $0x190] sm:$0xff]
    %v892 = vld [vmem:[#allocation12 + $0x198] sm:$0xff]
    %v893 = vld [vmem:[#allocation12 + $0x1a0] sm:$0xff]
    %v894 = vld [vmem:[#allocation12 + $0x1a8] sm:$0xff]
    %v895 = vld [vmem:[#allocation12 + $0x1b0] sm:$0xff]
    %v896 = vld [vmem:[#allocation12 + $0x1b8] sm:$0xff]
    %v897 = vld [vmem:[#allocation12 + $0x1c0] sm:$0xff]
    %v898 = vld [vmem:[#allocation12 + $0x1c8] sm:$0xff]
    %v899 = vld [vmem:[#allocation12 + $0x1d0] sm:$0xff]
    %v900 = vld [vmem:[#allocation12 + $0x1d8] sm:$0xff]
    %v901 = vld [vmem:[#allocation12 + $0x1e0] sm:$0xff]
    %v902 = vld [vmem:[#allocation12 + $0x1e8] sm:$0xff]
    %v903 = vld [vmem:[#allocation12 + $0x1f0] sm:$0xff]
    %v904 = vld [vmem:[#allocation12 + $0x1f8] sm:$0xff]
    %v905 = vld [vmem:[#allocation9] sm:$0xff]
    %v906 = vld [vmem:[#allocation9 + $0x8] sm:$0xff]
    %v907 = vld [vmem:[#allocation9 + $0x10] sm:$0xff]
    %v908 = vld [vmem:[#allocation9 + $0x18] sm:$0xff]
    %v909 = vld [vmem:[#allocation9 + $0x20] sm:$0xff]
    %v910 = vld [vmem:[#allocation9 + $0x28] sm:$0xff]
    %v911 = vld [vmem:[#allocation9 + $0x30] sm:$0xff]
    %v912 = vld [vmem:[#allocation9 + $0x38] sm:$0xff]
    %v913 = vld [vmem:[#allocation9 + $0x40] sm:$0xff]
    %v914 = vld [vmem:[#allocation9 + $0x48] sm:$0xff]
    %v915 = vld [vmem:[#allocation9 + $0x50] sm:$0xff]
    %v916 = vld [vmem:[#allocation9 + $0x58] sm:$0xff]
    %v917 = vld [vmem:[#allocation9 + $0x60] sm:$0xff]
    %v918 = vld [vmem:[#allocation9 + $0x68] sm:$0xff]
    %v919 = vld [vmem:[#allocation9 + $0x70] sm:$0xff]
    %v920 = vld [vmem:[#allocation9 + $0x78] sm:$0xff]
    %v921 = vld [vmem:[#allocation9 + $0x80] sm:$0xff]
    %v922 = vld [vmem:[#allocation9 + $0x88] sm:$0xff]
    %v923 = vld [vmem:[#allocation9 + $0x90] sm:$0xff]
    %v924 = vld [vmem:[#allocation9 + $0x98] sm:$0xff]
    %v925 = vld [vmem:[#allocation9 + $0xa0] sm:$0xff]
    %v926 = vld [vmem:[#allocation9 + $0xa8] sm:$0xff]
    %v927 = vld [vmem:[#allocation9 + $0xb0] sm:$0xff]
    %v928 = vld [vmem:[#allocation9 + $0xb8] sm:$0xff]
    %v929 = vld [vmem:[#allocation9 + $0xc0] sm:$0xff]
    %v930 = vld [vmem:[#allocation9 + $0xc8] sm:$0xff]
    %v931 = vld [vmem:[#allocation9 + $0xd0] sm:$0xff]
    %v932 = vld [vmem:[#allocation9 + $0xd8] sm:$0xff]
    %v933 = vld [vmem:[#allocation9 + $0xe0] sm:$0xff]
    %v934 = vld [vmem:[#allocation9 + $0xe8] sm:$0xff]
    %v935 = vld [vmem:[#allocation9 + $0xf0] sm:$0xff]
    %v936 = vld [vmem:[#allocation9 + $0xf8] sm:$0xff]
    %v937 = vld [vmem:[#allocation9 + $0x100] sm:$0xff]
    %v938 = vld [vmem:[#allocation9 + $0x108] sm:$0xff]
    %v939 = vld [vmem:[#allocation9 + $0x110] sm:$0xff]
    %v940 = vld [vmem:[#allocation9 + $0x118] sm:$0xff]
    %v941 = vld [vmem:[#allocation9 + $0x120] sm:$0xff]
    %v942 = vld [vmem:[#allocation9 + $0x128] sm:$0xff]
    %v943 = vld [vmem:[#allocation9 + $0x130] sm:$0xff]
    %v944 = vld [vmem:[#allocation9 + $0x138] sm:$0xff]
    %v945 = vld [vmem:[#allocation9 + $0x140] sm:$0xff]
    %v946 = vld [vmem:[#allocation9 + $0x148] sm:$0xff]
    %v947 = vld [vmem:[#allocation9 + $0x150] sm:$0xff]
    %v948 = vld [vmem:[#allocation9 + $0x158] sm:$0xff]
    %v949 = vld [vmem:[#allocation9 + $0x160] sm:$0xff]
    %v950 = vld [vmem:[#allocation9 + $0x168] sm:$0xff]
    %v951 = vld [vmem:[#allocation9 + $0x170] sm:$0xff]
    %v952 = vld [vmem:[#allocation9 + $0x178] sm:$0xff]
    %v953 = vld [vmem:[#allocation9 + $0x180] sm:$0xff]
    %v954 = vld [vmem:[#allocation9 + $0x188] sm:$0xff]
    %v955 = vld [vmem:[#allocation9 + $0x190] sm:$0xff]
    %v956 = vld [vmem:[#allocation9 + $0x198] sm:$0xff]
    %v957 = vld [vmem:[#allocation9 + $0x1a0] sm:$0xff]
    %v958 = vld [vmem:[#allocation9 + $0x1a8] sm:$0xff]
    %v959 = vld [vmem:[#allocation9 + $0x1b0] sm:$0xff]
    %v960 = vld [vmem:[#allocation9 + $0x1b8] sm:$0xff]
    %v961 = vld [vmem:[#allocation9 + $0x1c0] sm:$0xff]
    %v962 = vld [vmem:[#allocation9 + $0x1c8] sm:$0xff]
    %v963 = vld [vmem:[#allocation9 + $0x1d0] sm:$0xff]
    %v964 = vld [vmem:[#allocation9 + $0x1d8] sm:$0xff]
    %v965 = vld [vmem:[#allocation9 + $0x1e0] sm:$0xff]
    %v966 = vld [vmem:[#allocation9 + $0x1e8] sm:$0xff]
    %v967 = vld [vmem:[#allocation9 + $0x1f0] sm:$0xff]
    %v968 = vld [vmem:[#allocation9 + $0x1f8] sm:$0xff]
    %v969 = vld [vmem:[#allocation9 + $0x200] sm:$0xff]
    %v970 = vld [vmem:[#allocation9 + $0x208] sm:$0xff]
    %v971 = vld [vmem:[#allocation9 + $0x210] sm:$0xff]
    %v972 = vld [vmem:[#allocation9 + $0x218] sm:$0xff]
    %v973 = vld [vmem:[#allocation9 + $0x220] sm:$0xff]
    %v974 = vld [vmem:[#allocation9 + $0x228] sm:$0xff]
    %v975 = vld [vmem:[#allocation9 + $0x230] sm:$0xff]
    %v976 = vld [vmem:[#allocation9 + $0x238] sm:$0xff]
    %v977 = vld [vmem:[#allocation9 + $0x240] sm:$0xff]
    %v978 = vld [vmem:[#allocation9 + $0x248] sm:$0xff]
    %v979 = vld [vmem:[#allocation9 + $0x250] sm:$0xff]
    %v980 = vld [vmem:[#allocation9 + $0x258] sm:$0xff]
    %v981 = vld [vmem:[#allocation9 + $0x260] sm:$0xff]
    %v982 = vld [vmem:[#allocation9 + $0x268] sm:$0xff]
    %v983 = vld [vmem:[#allocation9 + $0x270] sm:$0xff]
    %v984 = vld [vmem:[#allocation9 + $0x278] sm:$0xff]
    %v985 = vld [vmem:[#allocation9 + $0x280] sm:$0xff]
    %v986 = vld [vmem:[#allocation9 + $0x288] sm:$0xff]
    %v987 = vld [vmem:[#allocation9 + $0x290] sm:$0xff]
    %v988 = vld [vmem:[#allocation9 + $0x298] sm:$0xff]
    %v989 = vld [vmem:[#allocation9 + $0x2a0] sm:$0xff]
    %v990 = vld [vmem:[#allocation9 + $0x2a8] sm:$0xff]
    %v991 = vld [vmem:[#allocation9 + $0x2b0] sm:$0xff]
    %v992 = vld [vmem:[#allocation9 + $0x2b8] sm:$0xff]
    %v993 = vld [vmem:[#allocation9 + $0x2c0] sm:$0xff]
    %v994 = vld [vmem:[#allocation9 + $0x2c8] sm:$0xff]
    %v995 = vld [vmem:[#allocation9 + $0x2d0] sm:$0xff]
    %v996 = vld [vmem:[#allocation9 + $0x2d8] sm:$0xff]
    %v997 = vld [vmem:[#allocation9 + $0x2e0] sm:$0xff]
    %v998 = vld [vmem:[#allocation9 + $0x2e8] sm:$0xff]
    %v999 = vld [vmem:[#allocation9 + $0x2f0] sm:$0xff]
    %v1000 = vld [vmem:[#allocation9 + $0x2f8] sm:$0xff]
    %v1001 = vld [vmem:[#allocation9 + $0x300] sm:$0xff]
    %v1002 = vld [vmem:[#allocation9 + $0x308] sm:$0xff]
    %v1003 = vld [vmem:[#allocation9 + $0x310] sm:$0xff]
    %v1004 = vld [vmem:[#allocation9 + $0x318] sm:$0xff]
    %v1005 = vld [vmem:[#allocation9 + $0x320] sm:$0xff]
    %v1006 = vld [vmem:[#allocation9 + $0x328] sm:$0xff]
    %v1007 = vld [vmem:[#allocation9 + $0x330] sm:$0xff]
    %v1008 = vld [vmem:[#allocation9 + $0x338] sm:$0xff]
    %v1009 = vld [vmem:[#allocation9 + $0x340] sm:$0xff]
    %v1010 = vld [vmem:[#allocation9 + $0x348] sm:$0xff]
    %v1011 = vld [vmem:[#allocation9 + $0x350] sm:$0xff]
    %v1012 = vld [vmem:[#allocation9 + $0x358] sm:$0xff]
    %v1013 = vld [vmem:[#allocation9 + $0x360] sm:$0xff]
    %v1014 = vld [vmem:[#allocation9 + $0x368] sm:$0xff]
    %v1015 = vld [vmem:[#allocation9 + $0x370] sm:$0xff]
    %v1016 = vld [vmem:[#allocation9 + $0x378] sm:$0xff]
    %v1017 = vld [vmem:[#allocation9 + $0x380] sm:$0xff]
    %v1018 = vld [vmem:[#allocation9 + $0x388] sm:$0xff]
    %v1019 = vld [vmem:[#allocation9 + $0x390] sm:$0xff]
    %v1020 = vld [vmem:[#allocation9 + $0x398] sm:$0xff]
    %v1021 = vld [vmem:[#allocation9 + $0x3a0] sm:$0xff]
    %v1022 = vld [vmem:[#allocation9 + $0x3a8] sm:$0xff]
    %v1023 = vld [vmem:[#allocation9 + $0x3b0] sm:$0xff]
    %v1024 = vld [vmem:[#allocation9 + $0x3b8] sm:$0xff]
    %v1025 = vld [vmem:[#allocation9 + $0x3c0] sm:$0xff]
    %v1026 = vld [vmem:[#allocation9 + $0x3c8] sm:$0xff]
    %v1027 = vld [vmem:[#allocation9 + $0x3d0] sm:$0xff]
    %v1028 = vld [vmem:[#allocation9 + $0x3d8] sm:$0xff]
    %v1029 = vld [vmem:[#allocation9 + $0x3e0] sm:$0xff]
    %v1030 = vld [vmem:[#allocation9 + $0x3e8] sm:$0xff]
    %v1031 = vld [vmem:[#allocation9 + $0x3f0] sm:$0xff]
    %v1032 = vld [vmem:[#allocation9 + $0x3f8] sm:$0xff]
    %v1033 = vld [vmem:[#allocation13] sm:$0xff]
    %v1034 = vld [vmem:[#allocation13 + $0x8] sm:$0xff]
    %v1035 = vld [vmem:[#allocation13 + $0x10] sm:$0xff]
    %v1036 = vld [vmem:[#allocation13 + $0x18] sm:$0xff]
    %v1037 = vld [vmem:[#allocation13 + $0x20] sm:$0xff]
    %v1038 = vld [vmem:[#allocation13 + $0x28] sm:$0xff]
    %v1039 = vld [vmem:[#allocation13 + $0x30] sm:$0xff]
    %v1040 = vld [vmem:[#allocation13 + $0x38] sm:$0xff]
    %v1041 = vld [vmem:[#allocation13 + $0x40] sm:$0xff]
    %v1042 = vld [vmem:[#allocation13 + $0x48] sm:$0xff]
    %v1043 = vld [vmem:[#allocation13 + $0x50] sm:$0xff]
    %v1044 = vld [vmem:[#allocation13 + $0x58] sm:$0xff]
    %v1045 = vld [vmem:[#allocation13 + $0x60] sm:$0xff]
    %v1046 = vld [vmem:[#allocation13 + $0x68] sm:$0xff]
    %v1047 = vld [vmem:[#allocation13 + $0x70] sm:$0xff]
    %v1048 = vld [vmem:[#allocation13 + $0x78] sm:$0xff]
    %v1049 = vld [vmem:[#allocation13 + $0x80] sm:$0xff]
    %v1050 = vld [vmem:[#allocation13 + $0x88] sm:$0xff]
    %v1051 = vld [vmem:[#allocation13 + $0x90] sm:$0xff]
    %v1052 = vld [vmem:[#allocation13 + $0x98] sm:$0xff]
    %v1053 = vld [vmem:[#allocation13 + $0xa0] sm:$0xff]
    %v1054 = vld [vmem:[#allocation13 + $0xa8] sm:$0xff]
    %v1055 = vld [vmem:[#allocation13 + $0xb0] sm:$0xff]
    %v1056 = vld [vmem:[#allocation13 + $0xb8] sm:$0xff]
    %v1057 = vld [vmem:[#allocation13 + $0xc0] sm:$0xff]
    %v1058 = vld [vmem:[#allocation13 + $0xc8] sm:$0xff]
    %v1059 = vld [vmem:[#allocation13 + $0xd0] sm:$0xff]
    %v1060 = vld [vmem:[#allocation13 + $0xd8] sm:$0xff]
    %v1061 = vld [vmem:[#allocation13 + $0xe0] sm:$0xff]
    %v1062 = vld [vmem:[#allocation13 + $0xe8] sm:$0xff]
    %v1063 = vld [vmem:[#allocation13 + $0xf0] sm:$0xff]
    %v1064 = vld [vmem:[#allocation13 + $0xf8] sm:$0xff]
    %v1065 = vld [vmem:[#allocation13 + $0x100] sm:$0xff]
    %v1066 = vld [vmem:[#allocation13 + $0x108] sm:$0xff]
    %v1067 = vld [vmem:[#allocation13 + $0x110] sm:$0xff]
    %v1068 = vld [vmem:[#allocation13 + $0x118] sm:$0xff]
    %v1069 = vld [vmem:[#allocation13 + $0x120] sm:$0xff]
    %v1070 = vld [vmem:[#allocation13 + $0x128] sm:$0xff]
    %v1071 = vld [vmem:[#allocation13 + $0x130] sm:$0xff]
    %v1072 = vld [vmem:[#allocation13 + $0x138] sm:$0xff]
    %v1073 = vld [vmem:[#allocation13 + $0x140] sm:$0xff]
    %v1074 = vld [vmem:[#allocation13 + $0x148] sm:$0xff]
    %v1075 = vld [vmem:[#allocation13 + $0x150] sm:$0xff]
    %v1076 = vld [vmem:[#allocation13 + $0x158] sm:$0xff]
    %v1077 = vld [vmem:[#allocation13 + $0x160] sm:$0xff]
    %v1078 = vld [vmem:[#allocation13 + $0x168] sm:$0xff]
    %v1079 = vld [vmem:[#allocation13 + $0x170] sm:$0xff]
    %v1080 = vld [vmem:[#allocation13 + $0x178] sm:$0xff]
    %v1081 = vld [vmem:[#allocation13 + $0x180] sm:$0xff]
    %v1082 = vld [vmem:[#allocation13 + $0x188] sm:$0xff]
    %v1083 = vld [vmem:[#allocation13 + $0x190] sm:$0xff]
    %v1084 = vld [vmem:[#allocation13 + $0x198] sm:$0xff]
    %v1085 = vld [vmem:[#allocation13 + $0x1a0] sm:$0xff]
    %v1086 = vld [vmem:[#allocation13 + $0x1a8] sm:$0xff]
    %v1087 = vld [vmem:[#allocation13 + $0x1b0] sm:$0xff]
    %v1088 = vld [vmem:[#allocation13 + $0x1b8] sm:$0xff]
    %v1089 = vld [vmem:[#allocation13 + $0x1c0] sm:$0xff]
    %v1090 = vld [vmem:[#allocation13 + $0x1c8] sm:$0xff]
    %v1091 = vld [vmem:[#allocation13 + $0x1d0] sm:$0xff]
    %v1092 = vld [vmem:[#allocation13 + $0x1d8] sm:$0xff]
    %v1093 = vld [vmem:[#allocation13 + $0x1e0] sm:$0xff]
    %v1094 = vld [vmem:[#allocation13 + $0x1e8] sm:$0xff]
    %v1095 = vld [vmem:[#allocation13 + $0x1f0] sm:$0xff]
    %v1096 = vld [vmem:[#allocation13 + $0x1f8] sm:$0xff]
    %v1097 = vld [vmem:[#allocation13 + $0x200] sm:$0xff]
    %v1098 = vld [vmem:[#allocation13 + $0x208] sm:$0xff]
    %v1099 = vld [vmem:[#allocation13 + $0x210] sm:$0xff]
    %v1100 = vld [vmem:[#allocation13 + $0x218] sm:$0xff]
    %v1101 = vld [vmem:[#allocation13 + $0x220] sm:$0xff]
    %v1102 = vld [vmem:[#allocation13 + $0x228] sm:$0xff]
    %v1103 = vld [vmem:[#allocation13 + $0x230] sm:$0xff]
    %v1104 = vld [vmem:[#allocation13 + $0x238] sm:$0xff]
    %v1105 = vld [vmem:[#allocation13 + $0x240] sm:$0xff]
    %v1106 = vld [vmem:[#allocation13 + $0x248] sm:$0xff]
    %v1107 = vld [vmem:[#allocation13 + $0x250] sm:$0xff]
    %v1108 = vld [vmem:[#allocation13 + $0x258] sm:$0xff]
    %v1109 = vld [vmem:[#allocation13 + $0x260] sm:$0xff]
    %v1110 = vld [vmem:[#allocation13 + $0x268] sm:$0xff]
    %v1111 = vld [vmem:[#allocation13 + $0x270] sm:$0xff]
    %v1112 = vld [vmem:[#allocation13 + $0x278] sm:$0xff]
    %v1113 = vld [vmem:[#allocation13 + $0x280] sm:$0xff]
    %v1114 = vld [vmem:[#allocation13 + $0x288] sm:$0xff]
    %v1115 = vld [vmem:[#allocation13 + $0x290] sm:$0xff]
    %v1116 = vld [vmem:[#allocation13 + $0x298] sm:$0xff]
    %v1117 = vld [vmem:[#allocation13 + $0x2a0] sm:$0xff]
    %v1118 = vld [vmem:[#allocation13 + $0x2a8] sm:$0xff]
    %v1119 = vld [vmem:[#allocation13 + $0x2b0] sm:$0xff]
    %v1120 = vld [vmem:[#allocation13 + $0x2b8] sm:$0xff]
    %v1121 = vld [vmem:[#allocation13 + $0x2c0] sm:$0xff]
    %v1122 = vld [vmem:[#allocation13 + $0x2c8] sm:$0xff]
    %v1123 = vld [vmem:[#allocation13 + $0x2d0] sm:$0xff]
    %v1124 = vld [vmem:[#allocation13 + $0x2d8] sm:$0xff]
    %v1125 = vld [vmem:[#allocation13 + $0x2e0] sm:$0xff]
    %v1126 = vld [vmem:[#allocation13 + $0x2e8] sm:$0xff]
    %v1127 = vld [vmem:[#allocation13 + $0x2f0] sm:$0xff]
    %v1128 = vld [vmem:[#allocation13 + $0x2f8] sm:$0xff]
    %v1129 = vld [vmem:[#allocation13 + $0x300] sm:$0xff]
    %v1130 = vld [vmem:[#allocation13 + $0x308] sm:$0xff]
    %v1131 = vld [vmem:[#allocation13 + $0x310] sm:$0xff]
    %v1132 = vld [vmem:[#allocation13 + $0x318] sm:$0xff]
    %v1133 = vld [vmem:[#allocation13 + $0x320] sm:$0xff]
    %v1134 = vld [vmem:[#allocation13 + $0x328] sm:$0xff]
    %v1135 = vld [vmem:[#allocation13 + $0x330] sm:$0xff]
    %v1136 = vld [vmem:[#allocation13 + $0x338] sm:$0xff]
    %v1137 = vld [vmem:[#allocation13 + $0x340] sm:$0xff]
    %v1138 = vld [vmem:[#allocation13 + $0x348] sm:$0xff]
    %v1139 = vld [vmem:[#allocation13 + $0x350] sm:$0xff]
    %v1140 = vld [vmem:[#allocation13 + $0x358] sm:$0xff]
    %v1141 = vld [vmem:[#allocation13 + $0x360] sm:$0xff]
    %v1142 = vld [vmem:[#allocation13 + $0x368] sm:$0xff]
    %v1143 = vld [vmem:[#allocation13 + $0x370] sm:$0xff]
    %v1144 = vld [vmem:[#allocation13 + $0x378] sm:$0xff]
    %v1145 = vld [vmem:[#allocation13 + $0x380] sm:$0xff]
    %v1146 = vld [vmem:[#allocation13 + $0x388] sm:$0xff]
    %v1147 = vld [vmem:[#allocation13 + $0x390] sm:$0xff]
    %v1148 = vld [vmem:[#allocation13 + $0x398] sm:$0xff]
    %v1149 = vld [vmem:[#allocation13 + $0x3a0] sm:$0xff]
    %v1150 = vld [vmem:[#allocation13 + $0x3a8] sm:$0xff]
    %v1151 = vld [vmem:[#allocation13 + $0x3b0] sm:$0xff]
    %v1152 = vld [vmem:[#allocation13 + $0x3b8] sm:$0xff]
    %v1153 = vld [vmem:[#allocation13 + $0x3c0] sm:$0xff]
    %v1154 = vld [vmem:[#allocation13 + $0x3c8] sm:$0xff]
    %v1155 = vld [vmem:[#allocation13 + $0x3d0] sm:$0xff]
    %v1156 = vld [vmem:[#allocation13 + $0x3d8] sm:$0xff]
    %v1157 = vld [vmem:[#allocation13 + $0x3e0] sm:$0xff]
    %v1158 = vld [vmem:[#allocation13 + $0x3e8] sm:$0xff]
    %v1159 = vld [vmem:[#allocation13 + $0x3f0] sm:$0xff]
    %v1160 = vld [vmem:[#allocation13 + $0x3f8] sm:$0xff]
    %v1161 = vld [vmem:[%s6] sm:$0xf]
    %v1163 = vlaneseq
    %v1164 = vshrl.u32 %v1163, 7
    %v1165 = vsub.s32 0, %v1164
    %v1166 = vrot.slane %v1161, %v1165
    %v1167 = vlaneseq
    %v1168 = vshrl.u32 %v1167, 7
    %v1169 = vsub.s32 1, %v1168
    %v1170 = vrot.slane %v1161, %v1169
    %v1171 = vlaneseq
    %v1172 = vshrl.u32 %v1171, 7
    %v1173 = vsub.s32 2, %v1172
    %v1174 = vrot.slane %v1161, %v1173
    %v1175 = vlaneseq
    %v1176 = vshrl.u32 %v1175, 7
    %v1177 = vsub.s32 3, %v1176
    %v1178 = vrot.slane %v1161, %v1177
    %v1183 = vld [vmem:[%s13] sm:$0xf]
    %v1185 = vlaneseq
    %v1186 = vshrl.u32 %v1185, 7
    %v1187 = vsub.s32 0, %v1186
    %v1188 = vrot.slane %v1183, %v1187
    %v1189 = vlaneseq
    %v1190 = vshrl.u32 %v1189, 7
    %v1191 = vsub.s32 1, %v1190
    %v1192 = vrot.slane %v1183, %v1191
    %v1193 = vlaneseq
    %v1194 = vshrl.u32 %v1193, 7
    %v1195 = vsub.s32 2, %v1194
    %v1196 = vrot.slane %v1183, %v1195
    %v1197 = vlaneseq
    %v1198 = vshrl.u32 %v1197, 7
    %v1199 = vsub.s32 3, %v1198
    %v1200 = vrot.slane %v1183, %v1199
    %v1205 = vld [vmem:[#allocation2] sm:$0x3]
    %v1206 = vld [vmem:[#allocation2 + $0x8] sm:$0x3]
    %v1207 = vld [vmem:[#allocation2 + $0x10] sm:$0x3]
    %v1208 = vld [vmem:[#allocation2 + $0x18] sm:$0x3]
    %1209 = vmatprep.subr.mxu0 %v778
    %1210 = vmatpush1.msra.mxu0 %v777
    %1211 = vmatprep.subr.mxu0 %v782
    %1212 = vmatpush1.msra.mxu0 %v781
    %1213 = vmatprep.subr.mxu0 %v786
    %1214 = vmatpush1.msra.mxu0 %v785
    %1215 = vmatprep.subr.mxu0 %v790
    %1216 = vmatpush1.msra.mxu0 %v789
    %1217 = vmatprep.subr.mxu0 %v794
    %1218 = vmatpush1.msra.mxu0 %v793
    %1219 = vmatprep.subr.mxu0 %v798
    %1220 = vmatpush1.msra.mxu0 %v797
    %1221 = vmatprep.subr.mxu0 %v802
    %1222 = vmatpush1.msra.mxu0 %v801
    %1223 = vmatprep.subr.mxu0 %v806
    %1224 = vmatpush1.msra.mxu0 %v805
    %1225 = vmatprep.subr.mxu0 %v810
    %1226 = vmatpush1.msra.mxu0 %v809
    %1227 = vmatprep.subr.mxu0 %v814
    %1228 = vmatpush1.msra.mxu0 %v813
    %1229 = vmatprep.subr.mxu0 %v818
    %1230 = vmatpush1.msra.mxu0 %v817
    %1231 = vmatprep.subr.mxu0 %v822
    %1232 = vmatpush1.msra.mxu0 %v821
    %1233 = vmatprep.subr.mxu0 %v826
    %1234 = vmatpush1.msra.mxu0 %v825
    %1235 = vmatprep.subr.mxu0 %v830
    %1236 = vmatpush1.msra.mxu0 %v829
    %1237 = vmatprep.subr.mxu0 %v834
    %1238 = vmatpush1.msra.mxu0 %v833
    %1239 = vmatprep.subr.mxu0 %v838
    %1240 = vmatpush1.msra.mxu0 %v837
    %1241 = vmatprep.subr.mxu0 0.0
    %1242 = vmatpush1.msra.mxu0 0.0
    %1243 = vmatprep.subr.mxu0 0.0
    %1244 = vmatpush1.msra.mxu0 0.0
    %1245 = vmatprep.subr.mxu0 0.0
    %1246 = vmatpush1.msra.mxu0 0.0
    %1247 = vmatprep.subr.mxu0 0.0
    %1248 = vmatpush1.msra.mxu0 0.0
    %1249 = vmatprep.subr.mxu0 0.0
    %1250 = vmatpush1.msra.mxu0 0.0
    %1251 = vmatprep.subr.mxu0 0.0
    %1252 = vmatpush1.msra.mxu0 0.0
    %1253 = vmatprep.subr.mxu0 0.0
    %1254 = vmatpush1.msra.mxu0 0.0
    %1255 = vmatprep.subr.mxu0 0.0
    %1256 = vmatpush1.msra.mxu0 0.0
    %1257 = vmatprep.subr.mxu0 0.0
    %1258 = vmatpush1.msra.mxu0 0.0
    %1259 = vmatprep.subr.mxu0 0.0
    %1260 = vmatpush1.msra.mxu0 0.0
    %1261 = vmatprep.subr.mxu0 0.0
    %1262 = vmatpush1.msra.mxu0 0.0
    %1263 = vmatprep.subr.mxu0 0.0
    %1264 = vmatpush1.msra.mxu0 0.0
    %1265 = vmatprep.subr.mxu0 0.0
    %1266 = vmatpush1.msra.mxu0 0.0
    %1267 = vmatprep.subr.mxu0 0.0
    %1268 = vmatpush1.msra.mxu0 0.0
    %1269 = vmatprep.subr.mxu0 0.0
    %1270 = vmatpush1.msra.mxu0 0.0
    %1271 = vmatprep.subr.mxu0 0.0
    %1272 = vmatpush1.msra.mxu0 0.0
    %1273 = vmatprep.mubr.f32.mxu0 0.0
    %1274 = vmatmul.mubr.f32.gmra.mrb[0].mxu0 0.0
    %v1275 = vpop.f32.mrb[0].mxu0
    %v1276 = vadd.f32 0.0, %v1275
    %v1277 = vpop.f32.mrb[0].mxu0
    %v1278 = vadd.f32 0.0, %v1277
    %1279 = vdwg.mxu0
    %1280 = vmatprep.subr.mxu0 %v780
    %1281 = vmatpush1.msra.mxu0 %v779
    %1282 = vmatprep.subr.mxu0 %v784
    %1283 = vmatpush1.msra.mxu0 %v783
    %1284 = vmatprep.subr.mxu0 %v788
    %1285 = vmatpush1.msra.mxu0 %v787
    %1286 = vmatprep.subr.mxu0 %v792
    %1287 = vmatpush1.msra.mxu0 %v791
    %1288 = vmatprep.subr.mxu0 %v796
    %1289 = vmatpush1.msra.mxu0 %v795
    %1290 = vmatprep.subr.mxu0 %v800
    %1291 = vmatpush1.msra.mxu0 %v799
    %1292 = vmatprep.subr.mxu0 %v804
    %1293 = vmatpush1.msra.mxu0 %v803
    %1294 = vmatprep.subr.mxu0 %v808
    %1295 = vmatpush1.msra.mxu0 %v807
    %1296 = vmatprep.subr.mxu0 %v812
    %1297 = vmatpush1.msra.mxu0 %v811
    %1298 = vmatprep.subr.mxu0 %v816
    %1299 = vmatpush1.msra.mxu0 %v815
    %1300 = vmatprep.subr.mxu0 %v820
    %1301 = vmatpush1.msra.mxu0 %v819
    %1302 = vmatprep.subr.mxu0 %v824
    %1303 = vmatpush1.msra.mxu0 %v823
    %1304 = vmatprep.subr.mxu0 %v828
    %1305 = vmatpush1.msra.mxu0 %v827
    %1306 = vmatprep.subr.mxu0 %v832
    %1307 = vmatpush1.msra.mxu0 %v831
    %1308 = vmatprep.subr.mxu0 %v836
    %1309 = vmatpush1.msra.mxu0 %v835
    %1310 = vmatprep.subr.mxu0 %v840
    %1311 = vmatpush1.msra.mxu0 %v839
    %1312 = vmatprep.subr.mxu0 0.0
    %1313 = vmatpush1.msra.mxu0 0.0
    %1314 = vmatprep.subr.mxu0 0.0
    %1315 = vmatpush1.msra.mxu0 0.0
    %1316 = vmatprep.subr.mxu0 0.0
    %1317 = vmatpush1.msra.mxu0 0.0
    %1318 = vmatprep.subr.mxu0 0.0
    %1319 = vmatpush1.msra.mxu0 0.0
    %1320 = vmatprep.subr.mxu0 0.0
    %1321 = vmatpush1.msra.mxu0 0.0
    %1322 = vmatprep.subr.mxu0 0.0
    %1323 = vmatpush1.msra.mxu0 0.0
    %1324 = vmatprep.subr.mxu0 0.0
    %1325 = vmatpush1.msra.mxu0 0.0
    %1326 = vmatprep.subr.mxu0 0.0
    %1327 = vmatpush1.msra.mxu0 0.0
    %1328 = vmatprep.subr.mxu0 0.0
    %1329 = vmatpush1.msra.mxu0 0.0
    %1330 = vmatprep.subr.mxu0 0.0
    %1331 = vmatpush1.msra.mxu0 0.0
    %1332 = vmatprep.subr.mxu0 0.0
    %1333 = vmatpush1.msra.mxu0 0.0
    %1334 = vmatprep.subr.mxu0 0.0
    %1335 = vmatpush1.msra.mxu0 0.0
    %1336 = vmatprep.subr.mxu0 0.0
    %1337 = vmatpush1.msra.mxu0 0.0
    %1338 = vmatprep.subr.mxu0 0.0
    %1339 = vmatpush1.msra.mxu0 0.0
    %1340 = vmatprep.subr.mxu0 0.0
    %1341 = vmatpush1.msra.mxu0 0.0
    %1342 = vmatprep.subr.mxu0 0.0
    %1343 = vmatpush1.msra.mxu0 0.0
    %1344 = vmatprep.mubr.f32.mxu0 0.0
    %1345 = vmatmul.mubr.f32.gmra.mrb[0].mxu0 0.0
    %v1346 = vpop.f32.mrb[0].mxu0
    %v1347 = vadd.f32 0.0, %v1346
    %v1348 = vpop.f32.mrb[0].mxu0
    %v1349 = vadd.f32 0.0, %v1348
    %1350 = vdwg.mxu0
    %v1351 = vadd.f32 %v1205, %v1276
    %v1352 = vadd.f32 %v1206, %v1278
    %v1353 = vadd.f32 %v1207, %v1347
    %v1354 = vadd.f32 %v1208, %v1349
    %v1355 = vld [vmem:[#allocation3] sm:$0x3]
    %v1356 = vld [vmem:[#allocation3 + $0x8] sm:$0x3]
    %v1357 = vld [vmem:[#allocation3 + $0x10] sm:$0x3]
    %v1358 = vld [vmem:[#allocation3 + $0x18] sm:$0x3]
    %1359 = vmatprep.subr.mxu0 %v842
    %1360 = vmatpush1.msra.mxu0 %v841
    %1361 = vmatprep.subr.mxu0 %v846
    %1362 = vmatpush1.msra.mxu0 %v845
    %1363 = vmatprep.subr.mxu0 %v850
    %1364 = vmatpush1.msra.mxu0 %v849
    %1365 = vmatprep.subr.mxu0 %v854
    %1366 = vmatpush1.msra.mxu0 %v853
    %1367 = vmatprep.subr.mxu0 %v858
    %1368 = vmatpush1.msra.mxu0 %v857
    %1369 = vmatprep.subr.mxu0 %v862
    %1370 = vmatpush1.msra.mxu0 %v861
    %1371 = vmatprep.subr.mxu0 %v866
    %1372 = vmatpush1.msra.mxu0 %v865
    %1373 = vmatprep.subr.mxu0 %v870
    %1374 = vmatpush1.msra.mxu0 %v869
    %1375 = vmatprep.subr.mxu0 %v874
    %1376 = vmatpush1.msra.mxu0 %v873
    %1377 = vmatprep.subr.mxu0 %v878
    %1378 = vmatpush1.msra.mxu0 %v877
    %1379 = vmatprep.subr.mxu0 %v882
    %1380 = vmatpush1.msra.mxu0 %v881
    %1381 = vmatprep.subr.mxu0 %v886
    %1382 = vmatpush1.msra.mxu0 %v885
    %1383 = vmatprep.subr.mxu0 %v890
    %1384 = vmatpush1.msra.mxu0 %v889
    %1385 = vmatprep.subr.mxu0 %v894
    %1386 = vmatpush1.msra.mxu0 %v893
    %1387 = vmatprep.subr.mxu0 %v898
    %1388 = vmatpush1.msra.mxu0 %v897
    %1389 = vmatprep.subr.mxu0 %v902
    %1390 = vmatpush1.msra.mxu0 %v901
    %1391 = vmatprep.subr.mxu0 0.0
    %1392 = vmatpush1.msra.mxu0 0.0
    %1393 = vmatprep.subr.mxu0 0.0
    %1394 = vmatpush1.msra.mxu0 0.0
    %1395 = vmatprep.subr.mxu0 0.0
    %1396 = vmatpush1.msra.mxu0 0.0
    %1397 = vmatprep.subr.mxu0 0.0
    %1398 = vmatpush1.msra.mxu0 0.0
    %1399 = vmatprep.subr.mxu0 0.0
    %1400 = vmatpush1.msra.mxu0 0.0
    %1401 = vmatprep.subr.mxu0 0.0
    %1402 = vmatpush1.msra.mxu0 0.0
    %1403 = vmatprep.subr.mxu0 0.0
    %1404 = vmatpush1.msra.mxu0 0.0
    %1405 = vmatprep.subr.mxu0 0.0
    %1406 = vmatpush1.msra.mxu0 0.0
    %1407 = vmatprep.subr.mxu0 0.0
    %1408 = vmatpush1.msra.mxu0 0.0
    %1409 = vmatprep.subr.mxu0 0.0
    %1410 = vmatpush1.msra.mxu0 0.0
    %1411 = vmatprep.subr.mxu0 0.0
    %1412 = vmatpush1.msra.mxu0 0.0
    %1413 = vmatprep.subr.mxu0 0.0
    %1414 = vmatpush1.msra.mxu0 0.0
    %1415 = vmatprep.subr.mxu0 0.0
    %1416 = vmatpush1.msra.mxu0 0.0
    %1417 = vmatprep.subr.mxu0 0.0
    %1418 = vmatpush1.msra.mxu0 0.0
    %1419 = vmatprep.subr.mxu0 0.0
    %1420 = vmatpush1.msra.mxu0 0.0
    %1421 = vmatprep.subr.mxu0 0.0
    %1422 = vmatpush1.msra.mxu0 0.0
    %1423 = vmatprep.mubr.f32.mxu0 0.0
    %1424 = vmatmul.mubr.f32.gmra.mrb[0].mxu0 0.0
    %v1425 = vpop.f32.mrb[0].mxu0
    %v1426 = vadd.f32 0.0, %v1425
    %v1427 = vpop.f32.mrb[0].mxu0
    %v1428 = vadd.f32 0.0, %v1427
    %1429 = vdwg.mxu0
    %1430 = vmatprep.subr.mxu0 %v844
    %1431 = vmatpush1.msra.mxu0 %v843
    %1432 = vmatprep.subr.mxu0 %v848
    %1433 = vmatpush1.msra.mxu0 %v847
    %1434 = vmatprep.subr.mxu0 %v852
    %1435 = vmatpush1.msra.mxu0 %v851
    %1436 = vmatprep.subr.mxu0 %v856
    %1437 = vmatpush1.msra.mxu0 %v855
    %1438 = vmatprep.subr.mxu0 %v860
    %1439 = vmatpush1.msra.mxu0 %v859
    %1440 = vmatprep.subr.mxu0 %v864
    %1441 = vmatpush1.msra.mxu0 %v863
    %1442 = vmatprep.subr.mxu0 %v868
    %1443 = vmatpush1.msra.mxu0 %v867
    %1444 = vmatprep.subr.mxu0 %v872
    %1445 = vmatpush1.msra.mxu0 %v871
    %1446 = vmatprep.subr.mxu0 %v876
    %1447 = vmatpush1.msra.mxu0 %v875
    %1448 = vmatprep.subr.mxu0 %v880
    %1449 = vmatpush1.msra.mxu0 %v879
    %1450 = vmatprep.subr.mxu0 %v884
    %1451 = vmatpush1.msra.mxu0 %v883
    %1452 = vmatprep.subr.mxu0 %v888
    %1453 = vmatpush1.msra.mxu0 %v887
    %1454 = vmatprep.subr.mxu0 %v892
    %1455 = vmatpush1.msra.mxu0 %v891
    %1456 = vmatprep.subr.mxu0 %v896
    %1457 = vmatpush1.msra.mxu0 %v895
    %1458 = vmatprep.subr.mxu0 %v900
    %1459 = vmatpush1.msra.mxu0 %v899
    %1460 = vmatprep.subr.mxu0 %v904
    %1461 = vmatpush1.msra.mxu0 %v903
    %1462 = vmatprep.subr.mxu0 0.0
    %1463 = vmatpush1.msra.mxu0 0.0
    %1464 = vmatprep.subr.mxu0 0.0
    %1465 = vmatpush1.msra.mxu0 0.0
    %1466 = vmatprep.subr.mxu0 0.0
    %1467 = vmatpush1.msra.mxu0 0.0
    %1468 = vmatprep.subr.mxu0 0.0
    %1469 = vmatpush1.msra.mxu0 0.0
    %1470 = vmatprep.subr.mxu0 0.0
    %1471 = vmatpush1.msra.mxu0 0.0
    %1472 = vmatprep.subr.mxu0 0.0
    %1473 = vmatpush1.msra.mxu0 0.0
    %1474 = vmatprep.subr.mxu0 0.0
    %1475 = vmatpush1.msra.mxu0 0.0
    %1476 = vmatprep.subr.mxu0 0.0
    %1477 = vmatpush1.msra.mxu0 0.0
    %1478 = vmatprep.subr.mxu0 0.0
    %1479 = vmatpush1.msra.mxu0 0.0
    %1480 = vmatprep.subr.mxu0 0.0
    %1481 = vmatpush1.msra.mxu0 0.0
    %1482 = vmatprep.subr.mxu0 0.0
    %1483 = vmatpush1.msra.mxu0 0.0
    %1484 = vmatprep.subr.mxu0 0.0
    %1485 = vmatpush1.msra.mxu0 0.0
    %1486 = vmatprep.subr.mxu0 0.0
    %1487 = vmatpush1.msra.mxu0 0.0
    %1488 = vmatprep.subr.mxu0 0.0
    %1489 = vmatpush1.msra.mxu0 0.0
    %1490 = vmatprep.subr.mxu0 0.0
    %1491 = vmatpush1.msra.mxu0 0.0
    %1492 = vmatprep.subr.mxu0 0.0
    %1493 = vmatpush1.msra.mxu0 0.0
    %1494 = vmatprep.mubr.f32.mxu0 0.0
    %1495 = vmatmul.mubr.f32.gmra.mrb[0].mxu0 0.0
    %v1496 = vpop.f32.mrb[0].mxu0
    %v1497 = vadd.f32 0.0, %v1496
    %v1498 = vpop.f32.mrb[0].mxu0
    %v1499 = vadd.f32 0.0, %v1498
    %1500 = vdwg.mxu0
    %v1501 = vadd.f32 %v1355, %v1426
    %v1502 = vadd.f32 %v1356, %v1428
    %v1503 = vadd.f32 %v1357, %v1497
    %v1504 = vadd.f32 %v1358, %v1499
    %v1505 = vxor.u32 %v1351, 2147483648
    %v1506 = vmul.f32 %v1505, 1.442695
    %v1507 = vpow.pop %v1506
    %v1508 = vadd.f32 %v1507, 1.0
    %v1509 = vrcp.pop %v1508
    %v1510 = vmul.f32 1.0, %v1509
    %v1511 = vxor.u32 %v1352, 2147483648
    %v1512 = vmul.f32 %v1511, 1.442695
    %v1513 = vpow.pop %v1512
    %v1514 = vadd.f32 %v1513, 1.0
    %v1515 = vrcp.pop %v1514
    %v1516 = vmul.f32 1.0, %v1515
    %v1517 = vtanh.pop %v1353
    %v1518 = vxor.u32 %v1354, 2147483648
    %v1519 = vmul.f32 %v1518, 1.442695
    %v1520 = vpow.pop %v1519
    %v1521 = vadd.f32 %v1520, 1.0
    %v1522 = vrcp.pop %v1521
    %v1523 = vmul.f32 1.0, %v1522
    %v1524 = vmul.f32 %v1516, 0.0
    %v1525 = vmul.f32 %v1510, %v1517
    %v1526 = vadd.f32 %v1524, %v1525
    %v1527 = vtanh.pop %v1526
    %v1528 = vmul.f32 %v1523, %v1527
    %v1529 = vxor.u32 %v1501, 2147483648
    %v1530 = vmul.f32 %v1529, 1.442695
    %v1531 = vpow.pop %v1530
    %v1532 = vadd.f32 %v1531, 1.0
    %v1533 = vrcp.pop %v1532
    %v1534 = vmul.f32 1.0, %v1533
    %v1535 = vxor.u32 %v1502, 2147483648
    %v1536 = vmul.f32 %v1535, 1.442695
    %v1537 = vpow.pop %v1536
    %v1538 = vadd.f32 %v1537, 1.0
    %v1539 = vrcp.pop %v1538
    %v1540 = vmul.f32 1.0, %v1539
    %v1541 = vtanh.pop %v1503
    %v1542 = vxor.u32 %v1504, 2147483648
    %v1543 = vmul.f32 %v1542, 1.442695
    %v1544 = vpow.pop %v1543
    %v1545 = vadd.f32 %v1544, 1.0
    %v1546 = vrcp.pop %v1545
    %v1547 = vmul.f32 1.0, %v1546
    %v1548 = vmul.f32 %v1540, 0.0
    %v1549 = vmul.f32 %v1534, %v1541
    %v1550 = vadd.f32 %v1548, %v1549
    %v1551 = vtanh.pop %v1550
    %v1552 = vmul.f32 %v1547, %v1551
    %1553 = vmatprep.subr.mxu0 %v906
    %1554 = vmatpush1.msra.mxu0 %v905
    %1555 = vmatprep.subr.mxu0 %v910
    %1556 = vmatpush1.msra.mxu0 %v909
    %1557 = vmatprep.subr.mxu0 %v914
    %1558 = vmatpush1.msra.mxu0 %v913
    %1559 = vmatprep.subr.mxu0 %v918
    %1560 = vmatpush1.msra.mxu0 %v917
    %1561 = vmatprep.subr.mxu0 %v922
    %1562 = vmatpush1.msra.mxu0 %v921
    %1563 = vmatprep.subr.mxu0 %v926
    %1564 = vmatpush1.msra.mxu0 %v925
    %1565 = vmatprep.subr.mxu0 %v930
    %1566 = vmatpush1.msra.mxu0 %v929
    %1567 = vmatprep.subr.mxu0 %v934
    %1568 = vmatpush1.msra.mxu0 %v933
    %1569 = vmatprep.subr.mxu0 %v938
    %1570 = vmatpush1.msra.mxu0 %v937
    %1571 = vmatprep.subr.mxu0 %v942
    %1572 = vmatpush1.msra.mxu0 %v941
    %1573 = vmatprep.subr.mxu0 %v946
    %1574 = vmatpush1.msra.mxu0 %v945
    %1575 = vmatprep.subr.mxu0 %v950
    %1576 = vmatpush1.msra.mxu0 %v949
    %1577 = vmatprep.subr.mxu0 %v954
    %1578 = vmatpush1.msra.mxu0 %v953
    %1579 = vmatprep.subr.mxu0 %v958
    %1580 = vmatpush1.msra.mxu0 %v957
    %1581 = vmatprep.subr.mxu0 %v962
    %1582 = vmatpush1.msra.mxu0 %v961
    %1583 = vmatprep.subr.mxu0 %v966
    %1584 = vmatpush1.msra.mxu0 %v965
    %1585 = vmatprep.subr.mxu0 %v970
    %1586 = vmatpush1.msra.mxu0 %v969
    %1587 = vmatprep.subr.mxu0 %v974
    %1588 = vmatpush1.msra.mxu0 %v973
    %1589 = vmatprep.subr.mxu0 %v978
    %1590 = vmatpush1.msra.mxu0 %v977
    %1591 = vmatprep.subr.mxu0 %v982
    %1592 = vmatpush1.msra.mxu0 %v981
    %1593 = vmatprep.subr.mxu0 %v986
    %1594 = vmatpush1.msra.mxu0 %v985
    %1595 = vmatprep.subr.mxu0 %v990
    %1596 = vmatpush1.msra.mxu0 %v989
    %1597 = vmatprep.subr.mxu0 %v994
    %1598 = vmatpush1.msra.mxu0 %v993
    %1599 = vmatprep.subr.mxu0 %v998
    %1600 = vmatpush1.msra.mxu0 %v997
    %1601 = vmatprep.subr.mxu0 %v1002
    %1602 = vmatpush1.msra.mxu0 %v1001
    %1603 = vmatprep.subr.mxu0 %v1006
    %1604 = vmatpush1.msra.mxu0 %v1005
    %1605 = vmatprep.subr.mxu0 %v1010
    %1606 = vmatpush1.msra.mxu0 %v1009
    %1607 = vmatprep.subr.mxu0 %v1014
    %1608 = vmatpush1.msra.mxu0 %v1013
    %1609 = vmatprep.subr.mxu0 %v1018
    %1610 = vmatpush1.msra.mxu0 %v1017
    %1611 = vmatprep.subr.mxu0 %v1022
    %1612 = vmatpush1.msra.mxu0 %v1021
    %1613 = vmatprep.subr.mxu0 %v1026
    %1614 = vmatpush1.msra.mxu0 %v1025
    %1615 = vmatprep.subr.mxu0 %v1030
    %1616 = vmatpush1.msra.mxu0 %v1029
    %1617 = vmatprep.mubr.f32.mxu0 0.0
    %1618 = vmatmul.mubr.f32.gmra.mrb[0].mxu0 %v1528
    %v1619 = vpop.f32.mrb[0].mxu0
    %v1620 = vadd.f32 %v1166, %v1619
    %v1621 = vpop.f32.mrb[0].mxu0
    %v1622 = vadd.f32 %v1170, %v1621
    %1623 = vdwg.mxu0
    %1624 = vmatprep.subr.mxu0 %v908
    %1625 = vmatpush1.msra.mxu0 %v907
    %1626 = vmatprep.subr.mxu0 %v912
    %1627 = vmatpush1.msra.mxu0 %v911
    %1628 = vmatprep.subr.mxu0 %v916
    %1629 = vmatpush1.msra.mxu0 %v915
    %1630 = vmatprep.subr.mxu0 %v920
    %1631 = vmatpush1.msra.mxu0 %v919
    %1632 = vmatprep.subr.mxu0 %v924
    %1633 = vmatpush1.msra.mxu0 %v923
    %1634 = vmatprep.subr.mxu0 %v928
    %1635 = vmatpush1.msra.mxu0 %v927
    %1636 = vmatprep.subr.mxu0 %v932
    %1637 = vmatpush1.msra.mxu0 %v931
    %1638 = vmatprep.subr.mxu0 %v936
    %1639 = vmatpush1.msra.mxu0 %v935
    %1640 = vmatprep.subr.mxu0 %v940
    %1641 = vmatpush1.msra.mxu0 %v939
    %1642 = vmatprep.subr.mxu0 %v944
    %1643 = vmatpush1.msra.mxu0 %v943
    %1644 = vmatprep.subr.mxu0 %v948
    %1645 = vmatpush1.msra.mxu0 %v947
    %1646 = vmatprep.subr.mxu0 %v952
    %1647 = vmatpush1.msra.mxu0 %v951
    %1648 = vmatprep.subr.mxu0 %v956
    %1649 = vmatpush1.msra.mxu0 %v955
    %1650 = vmatprep.subr.mxu0 %v960
    %1651 = vmatpush1.msra.mxu0 %v959
    %1652 = vmatprep.subr.mxu0 %v964
    %1653 = vmatpush1.msra.mxu0 %v963
    %1654 = vmatprep.subr.mxu0 %v968
    %1655 = vmatpush1.msra.mxu0 %v967
    %1656 = vmatprep.subr.mxu0 %v972
    %1657 = vmatpush1.msra.mxu0 %v971
    %1658 = vmatprep.subr.mxu0 %v976
    %1659 = vmatpush1.msra.mxu0 %v975
    %1660 = vmatprep.subr.mxu0 %v980
    %1661 = vmatpush1.msra.mxu0 %v979
    %1662 = vmatprep.subr.mxu0 %v984
    %1663 = vmatpush1.msra.mxu0 %v983
    %1664 = vmatprep.subr.mxu0 %v988
    %1665 = vmatpush1.msra.mxu0 %v987
    %1666 = vmatprep.subr.mxu0 %v992
    %1667 = vmatpush1.msra.mxu0 %v991
    %1668 = vmatprep.subr.mxu0 %v996
    %1669 = vmatpush1.msra.mxu0 %v995
    %1670 = vmatprep.subr.mxu0 %v1000
    %1671 = vmatpush1.msra.mxu0 %v999
    %1672 = vmatprep.subr.mxu0 %v1004
    %1673 = vmatpush1.msra.mxu0 %v1003
    %1674 = vmatprep.subr.mxu0 %v1008
    %1675 = vmatpush1.msra.mxu0 %v1007
    %1676 = vmatprep.subr.mxu0 %v1012
    %1677 = vmatpush1.msra.mxu0 %v1011
    %1678 = vmatprep.subr.mxu0 %v1016
    %1679 = vmatpush1.msra.mxu0 %v1015
    %1680 = vmatprep.subr.mxu0 %v1020
    %1681 = vmatpush1.msra.mxu0 %v1019
    %1682 = vmatprep.subr.mxu0 %v1024
    %1683 = vmatpush1.msra.mxu0 %v1023
    %1684 = vmatprep.subr.mxu0 %v1028
    %1685 = vmatpush1.msra.mxu0 %v1027
    %1686 = vmatprep.subr.mxu0 %v1032
    %1687 = vmatpush1.msra.mxu0 %v1031
    %1688 = vmatprep.mubr.f32.mxu0 0.0
    %1689 = vmatmul.mubr.f32.gmra.mrb[0].mxu0 %v1528
    %v1690 = vpop.f32.mrb[0].mxu0
    %v1691 = vadd.f32 %v1174, %v1690
    %v1692 = vpop.f32.mrb[0].mxu0
    %v1693 = vadd.f32 %v1178, %v1692
    %1694 = vdwg.mxu0
    %1695 = vmatprep.subr.mxu0 %v1034
    %1696 = vmatpush1.msra.mxu0 %v1033
    %1697 = vmatprep.subr.mxu0 %v1038
    %1698 = vmatpush1.msra.mxu0 %v1037
    %1699 = vmatprep.subr.mxu0 %v1042
    %1700 = vmatpush1.msra.mxu0 %v1041
    %1701 = vmatprep.subr.mxu0 %v1046
    %1702 = vmatpush1.msra.mxu0 %v1045
    %1703 = vmatprep.subr.mxu0 %v1050
    %1704 = vmatpush1.msra.mxu0 %v1049
    %1705 = vmatprep.subr.mxu0 %v1054
    %1706 = vmatpush1.msra.mxu0 %v1053
    %1707 = vmatprep.subr.mxu0 %v1058
    %1708 = vmatpush1.msra.mxu0 %v1057
    %1709 = vmatprep.subr.mxu0 %v1062
    %1710 = vmatpush1.msra.mxu0 %v1061
    %1711 = vmatprep.subr.mxu0 %v1066
    %1712 = vmatpush1.msra.mxu0 %v1065
    %1713 = vmatprep.subr.mxu0 %v1070
    %1714 = vmatpush1.msra.mxu0 %v1069
    %1715 = vmatprep.subr.mxu0 %v1074
    %1716 = vmatpush1.msra.mxu0 %v1073
    %1717 = vmatprep.subr.mxu0 %v1078
    %1718 = vmatpush1.msra.mxu0 %v1077
    %1719 = vmatprep.subr.mxu0 %v1082
    %1720 = vmatpush1.msra.mxu0 %v1081
    %1721 = vmatprep.subr.mxu0 %v1086
    %1722 = vmatpush1.msra.mxu0 %v1085
    %1723 = vmatprep.subr.mxu0 %v1090
    %1724 = vmatpush1.msra.mxu0 %v1089
    %1725 = vmatprep.subr.mxu0 %v1094
    %1726 = vmatpush1.msra.mxu0 %v1093
    %1727 = vmatprep.subr.mxu0 %v1098
    %1728 = vmatpush1.msra.mxu0 %v1097
    %1729 = vmatprep.subr.mxu0 %v1102
    %1730 = vmatpush1.msra.mxu0 %v1101
    %1731 = vmatprep.subr.mxu0 %v1106
    %1732 = vmatpush1.msra.mxu0 %v1105
    %1733 = vmatprep.subr.mxu0 %v1110
    %1734 = vmatpush1.msra.mxu0 %v1109
    %1735 = vmatprep.subr.mxu0 %v1114
    %1736 = vmatpush1.msra.mxu0 %v1113
    %1737 = vmatprep.subr.mxu0 %v1118
    %1738 = vmatpush1.msra.mxu0 %v1117
    %1739 = vmatprep.subr.mxu0 %v1122
    %1740 = vmatpush1.msra.mxu0 %v1121
    %1741 = vmatprep.subr.mxu0 %v1126
    %1742 = vmatpush1.msra.mxu0 %v1125
    %1743 = vmatprep.subr.mxu0 %v1130
    %1744 = vmatpush1.msra.mxu0 %v1129
    %1745 = vmatprep.subr.mxu0 %v1134
    %1746 = vmatpush1.msra.mxu0 %v1133
    %1747 = vmatprep.subr.mxu0 %v1138
    %1748 = vmatpush1.msra.mxu0 %v1137
    %1749 = vmatprep.subr.mxu0 %v1142
    %1750 = vmatpush1.msra.mxu0 %v1141
    %1751 = vmatprep.subr.mxu0 %v1146
    %1752 = vmatpush1.msra.mxu0 %v1145
    %1753 = vmatprep.subr.mxu0 %v1150
    %1754 = vmatpush1.msra.mxu0 %v1149
    %1755 = vmatprep.subr.mxu0 %v1154
    %1756 = vmatpush1.msra.mxu0 %v1153
    %1757 = vmatprep.subr.mxu0 %v1158
    %1758 = vmatpush1.msra.mxu0 %v1157
    %1759 = vmatprep.mubr.f32.mxu0 0.0
    %1760 = vmatmul.mubr.f32.gmra.mrb[0].mxu0 %v1552
    %v1761 = vpop.f32.mrb[0].mxu0
    %v1762 = vadd.f32 %v1188, %v1761
    %v1763 = vpop.f32.mrb[0].mxu0
    %v1764 = vadd.f32 %v1192, %v1763
    %1765 = vdwg.mxu0
    %1766 = vmatprep.subr.mxu0 %v1036
    %1767 = vmatpush1.msra.mxu0 %v1035
    %1768 = vmatprep.subr.mxu0 %v1040
    %1769 = vmatpush1.msra.mxu0 %v1039
    %1770 = vmatprep.subr.mxu0 %v1044
    %1771 = vmatpush1.msra.mxu0 %v1043
    %1772 = vmatprep.subr.mxu0 %v1048
    %1773 = vmatpush1.msra.mxu0 %v1047
    %1774 = vmatprep.subr.mxu0 %v1052
    %1775 = vmatpush1.msra.mxu0 %v1051
    %1776 = vmatprep.subr.mxu0 %v1056
    %1777 = vmatpush1.msra.mxu0 %v1055
    %1778 = vmatprep.subr.mxu0 %v1060
    %1779 = vmatpush1.msra.mxu0 %v1059
    %1780 = vmatprep.subr.mxu0 %v1064
    %1781 = vmatpush1.msra.mxu0 %v1063
    %1782 = vmatprep.subr.mxu0 %v1068
    %1783 = vmatpush1.msra.mxu0 %v1067
    %1784 = vmatprep.subr.mxu0 %v1072
    %1785 = vmatpush1.msra.mxu0 %v1071
    %1786 = vmatprep.subr.mxu0 %v1076
    %1787 = vmatpush1.msra.mxu0 %v1075
    %1788 = vmatprep.subr.mxu0 %v1080
    %1789 = vmatpush1.msra.mxu0 %v1079
    %1790 = vmatprep.subr.mxu0 %v1084
    %1791 = vmatpush1.msra.mxu0 %v1083
    %1792 = vmatprep.subr.mxu0 %v1088
    %1793 = vmatpush1.msra.mxu0 %v1087
    %1794 = vmatprep.subr.mxu0 %v1092
    %1795 = vmatpush1.msra.mxu0 %v1091
    %1796 = vmatprep.subr.mxu0 %v1096
    %1797 = vmatpush1.msra.mxu0 %v1095
    %1798 = vmatprep.subr.mxu0 %v1100
    %1799 = vmatpush1.msra.mxu0 %v1099
    %1800 = vmatprep.subr.mxu0 %v1104
    %1801 = vmatpush1.msra.mxu0 %v1103
    %1802 = vmatprep.subr.mxu0 %v1108
    %1803 = vmatpush1.msra.mxu0 %v1107
    %1804 = vmatprep.subr.mxu0 %v1112
    %1805 = vmatpush1.msra.mxu0 %v1111
    %1806 = vmatprep.subr.mxu0 %v1116
    %1807 = vmatpush1.msra.mxu0 %v1115
    %1808 = vmatprep.subr.mxu0 %v1120
    %1809 = vmatpush1.msra.mxu0 %v1119
    %1810 = vmatprep.subr.mxu0 %v1124
    %1811 = vmatpush1.msra.mxu0 %v1123
    %1812 = vmatprep.subr.mxu0 %v1128
    %1813 = vmatpush1.msra.mxu0 %v1127
    %1814 = vmatprep.subr.mxu0 %v1132
    %1815 = vmatpush1.msra.mxu0 %v1131
    %1816 = vmatprep.subr.mxu0 %v1136
    %1817 = vmatpush1.msra.mxu0 %v1135
    %1818 = vmatprep.subr.mxu0 %v1140
    %1819 = vmatpush1.msra.mxu0 %v1139
    %1820 = vmatprep.subr.mxu0 %v1144
    %1821 = vmatpush1.msra.mxu0 %v1143
    %1822 = vmatprep.subr.mxu0 %v1148
    %1823 = vmatpush1.msra.mxu0 %v1147
    %1824 = vmatprep.subr.mxu0 %v1152
    %1825 = vmatpush1.msra.mxu0 %v1151
    %1826 = vmatprep.subr.mxu0 %v1156
    %1827 = vmatpush1.msra.mxu0 %v1155
    %1828 = vmatprep.subr.mxu0 %v1160
    %1829 = vmatpush1.msra.mxu0 %v1159
    %1830 = vmatprep.mubr.f32.mxu0 0.0
    %1831 = vmatmul.mubr.f32.gmra.mrb[0].mxu0 %v1552
    %v1832 = vpop.f32.mrb[0].mxu0
    %v1833 = vadd.f32 %v1196, %v1832
    %v1834 = vpop.f32.mrb[0].mxu0
    %v1835 = vadd.f32 %v1200, %v1834
    %1836 = vdwg.mxu0
    %v1837 = vxor.u32 %v1620, 2147483648
    %v1838 = vmul.f32 %v1837, 1.442695
    %v1839 = vpow.pop %v1838
    %v1840 = vadd.f32 %v1839, 1.0
    %v1841 = vrcp.pop %v1840
    %v1842 = vmul.f32 1.0, %v1841
    %v1843 = vxor.u32 %v1622, 2147483648
    %v1844 = vmul.f32 %v1843, 1.442695
    %v1845 = vpow.pop %v1844
    %v1846 = vadd.f32 %v1845, 1.0
    %v1847 = vrcp.pop %v1846
    %v1848 = vmul.f32 1.0, %v1847
    %v1849 = vtanh.pop %v1691
    %v1850 = vxor.u32 %v1693, 2147483648
    %v1851 = vmul.f32 %v1850, 1.442695
    %v1852 = vpow.pop %v1851
    %v1853 = vadd.f32 %v1852, 1.0
    %v1854 = vrcp.pop %v1853
    %v1855 = vmul.f32 1.0, %v1854
    %v1856 = vmul.f32 %v1848, 0.0
    %v1857 = vmul.f32 %v1842, %v1849
    %v1858 = vadd.f32 %v1856, %v1857
    %v1859 = vtanh.pop %v1858
    %v1860 = vmul.f32 %v1855, %v1859
    %v1861 = vxor.u32 %v1762, 2147483648
    %v1862 = vmul.f32 %v1861, 1.442695
    %v1863 = vpow.pop %v1862
    %v1864 = vadd.f32 %v1863, 1.0
    %v1865 = vrcp.pop %v1864
    %v1866 = vmul.f32 1.0, %v1865
    %v1867 = vxor.u32 %v1764, 2147483648
    %v1868 = vmul.f32 %v1867, 1.442695
    %v1869 = vpow.pop %v1868
    %v1870 = vadd.f32 %v1869, 1.0
    %v1871 = vrcp.pop %v1870
    %v1872 = vmul.f32 1.0, %v1871
    %v1873 = vtanh.pop %v1833
    %v1874 = vxor.u32 %v1835, 2147483648
    %v1875 = vmul.f32 %v1874, 1.442695
    %v1876 = vpow.pop %v1875
    %v1877 = vadd.f32 %v1876, 1.0
    %v1878 = vrcp.pop %v1877
    %v1879 = vmul.f32 1.0, %v1878
    %v1880 = vmul.f32 %v1872, 0.0
    %v1881 = vmul.f32 %v1866, %v1873
    %v1882 = vadd.f32 %v1880, %v1881
    %v1883 = vtanh.pop %v1882
    %v1884 = vmul.f32 %v1879, %v1883
    %v1885 = vld [vmem:[#allocation2] sm:$0xc]
    %v1886 = vld [vmem:[#allocation2 + $0x8] sm:$0xc]
    %v1887 = vld [vmem:[#allocation2 + $0x10] sm:$0xc]
    %v1888 = vld [vmem:[#allocation2 + $0x18] sm:$0xc]
    %1889 = vmatprep.subr.mxu0 %v778
    %1890 = vmatpush1.msra.mxu0 %v777
    %1891 = vmatprep.subr.mxu0 %v782
    %1892 = vmatpush1.msra.mxu0 %v781
    %1893 = vmatprep.subr.mxu0 %v786
    %1894 = vmatpush1.msra.mxu0 %v785
    %1895 = vmatprep.subr.mxu0 %v790
    %1896 = vmatpush1.msra.mxu0 %v789
    %1897 = vmatprep.subr.mxu0 %v794
    %1898 = vmatpush1.msra.mxu0 %v793
    %1899 = vmatprep.subr.mxu0 %v798
    %1900 = vmatpush1.msra.mxu0 %v797
    %1901 = vmatprep.subr.mxu0 %v802
    %1902 = vmatpush1.msra.mxu0 %v801
    %1903 = vmatprep.subr.mxu0 %v806
    %1904 = vmatpush1.msra.mxu0 %v805
    %1905 = vmatprep.subr.mxu0 %v810
    %1906 = vmatpush1.msra.mxu0 %v809
    %1907 = vmatprep.subr.mxu0 %v814
    %1908 = vmatpush1.msra.mxu0 %v813
    %1909 = vmatprep.subr.mxu0 %v818
    %1910 = vmatpush1.msra.mxu0 %v817
    %1911 = vmatprep.subr.mxu0 %v822
    %1912 = vmatpush1.msra.mxu0 %v821
    %1913 = vmatprep.subr.mxu0 %v826
    %1914 = vmatpush1.msra.mxu0 %v825
    %1915 = vmatprep.subr.mxu0 %v830
    %1916 = vmatpush1.msra.mxu0 %v829
    %1917 = vmatprep.subr.mxu0 %v834
    %1918 = vmatpush1.msra.mxu0 %v833
    %1919 = vmatprep.subr.mxu0 %v838
    %1920 = vmatpush1.msra.mxu0 %v837
    %1921 = vmatprep.subr.mxu0 0.0
    %1922 = vmatpush1.msra.mxu0 0.0
    %1923 = vmatprep.subr.mxu0 0.0
    %1924 = vmatpush1.msra.mxu0 0.0
    %1925 = vmatprep.subr.mxu0 0.0
    %1926 = vmatpush1.msra.mxu0 0.0
    %1927 = vmatprep.subr.mxu0 0.0
    %1928 = vmatpush1.msra.mxu0 0.0
    %1929 = vmatprep.subr.mxu0 0.0
    %1930 = vmatpush1.msra.mxu0 0.0
    %1931 = vmatprep.subr.mxu0 0.0
    %1932 = vmatpush1.msra.mxu0 0.0
    %1933 = vmatprep.subr.mxu0 0.0
    %1934 = vmatpush1.msra.mxu0 0.0
    %1935 = vmatprep.subr.mxu0 0.0
    %1936 = vmatpush1.msra.mxu0 0.0
    %1937 = vmatprep.subr.mxu0 0.0
    %1938 = vmatpush1.msra.mxu0 0.0
    %1939 = vmatprep.subr.mxu0 0.0
    %1940 = vmatpush1.msra.mxu0 0.0
    %1941 = vmatprep.subr.mxu0 0.0
    %1942 = vmatpush1.msra.mxu0 0.0
    %1943 = vmatprep.subr.mxu0 0.0
    %1944 = vmatpush1.msra.mxu0 0.0
    %1945 = vmatprep.subr.mxu0 0.0
    %1946 = vmatpush1.msra.mxu0 0.0
    %1947 = vmatprep.subr.mxu0 0.0
    %1948 = vmatpush1.msra.mxu0 0.0
    %1949 = vmatprep.subr.mxu0 0.0
    %1950 = vmatpush1.msra.mxu0 0.0
    %1951 = vmatprep.subr.mxu0 0.0
    %1952 = vmatpush1.msra.mxu0 0.0
    %1953 = vmatprep.mubr.f32.mxu0 0.0
    %1954 = vmatmul.mubr.f32.gmra.mrb[0].mxu0 %v1528
    %v1955 = vpop.f32.mrb[0].mxu0
    %v1956 = vadd.f32 0.0, %v1955
    %v1957 = vpop.f32.mrb[0].mxu0
    %v1958 = vadd.f32 0.0, %v1957
    %1959 = vdwg.mxu0
    %1960 = vmatprep.subr.mxu0 %v780
    %1961 = vmatpush1.msra.mxu0 %v779
    %1962 = vmatprep.subr.mxu0 %v784
    %1963 = vmatpush1.msra.mxu0 %v783
    %1964 = vmatprep.subr.mxu0 %v788
    %1965 = vmatpush1.msra.mxu0 %v787
    %1966 = vmatprep.subr.mxu0 %v792
    %1967 = vmatpush1.msra.mxu0 %v791
    %1968 = vmatprep.subr.mxu0 %v796
    %1969 = vmatpush1.msra.mxu0 %v795
    %1970 = vmatprep.subr.mxu0 %v800
    %1971 = vmatpush1.msra.mxu0 %v799
    %1972 = vmatprep.subr.mxu0 %v804
    %1973 = vmatpush1.msra.mxu0 %v803
    %1974 = vmatprep.subr.mxu0 %v808
    %1975 = vmatpush1.msra.mxu0 %v807
    %1976 = vmatprep.subr.mxu0 %v812
    %1977 = vmatpush1.msra.mxu0 %v811
    %1978 = vmatprep.subr.mxu0 %v816
    %1979 = vmatpush1.msra.mxu0 %v815
    %1980 = vmatprep.subr.mxu0 %v820
    %1981 = vmatpush1.msra.mxu0 %v819
    %1982 = vmatprep.subr.mxu0 %v824
    %1983 = vmatpush1.msra.mxu0 %v823
    %1984 = vmatprep.subr.mxu0 %v828
    %1985 = vmatpush1.msra.mxu0 %v827
    %1986 = vmatprep.subr.mxu0 %v832
    %1987 = vmatpush1.msra.mxu0 %v831
    %1988 = vmatprep.subr.mxu0 %v836
    %1989 = vmatpush1.msra.mxu0 %v835
    %1990 = vmatprep.subr.mxu0 %v840
    %1991 = vmatpush1.msra.mxu0 %v839
    %1992 = vmatprep.subr.mxu0 0.0
    %1993 = vmatpush1.msra.mxu0 0.0
    %1994 = vmatprep.subr.mxu0 0.0
    %1995 = vmatpush1.msra.mxu0 0.0
    %1996 = vmatprep.subr.mxu0 0.0
    %1997 = vmatpush1.msra.mxu0 0.0
    %1998 = vmatprep.subr.mxu0 0.0
    %1999 = vmatpush1.msra.mxu0 0.0
    %2000 = vmatprep.subr.mxu0 0.0
    %2001 = vmatpush1.msra.mxu0 0.0
    %2002 = vmatprep.subr.mxu0 0.0
    %2003 = vmatpush1.msra.mxu0 0.0
    %2004 = vmatprep.subr.mxu0 0.0
    %2005 = vmatpush1.msra.mxu0 0.0
    %2006 = vmatprep.subr.mxu0 0.0
    %2007 = vmatpush1.msra.mxu0 0.0
    %2008 = vmatprep.subr.mxu0 0.0
    %2009 = vmatpush1.msra.mxu0 0.0
    %2010 = vmatprep.subr.mxu0 0.0
    %2011 = vmatpush1.msra.mxu0 0.0
    %2012 = vmatprep.subr.mxu0 0.0
    %2013 = vmatpush1.msra.mxu0 0.0
    %2014 = vmatprep.subr.mxu0 0.0
    %2015 = vmatpush1.msra.mxu0 0.0
    %2016 = vmatprep.subr.mxu0 0.0
    %2017 = vmatpush1.msra.mxu0 0.0
    %2018 = vmatprep.subr.mxu0 0.0
    %2019 = vmatpush1.msra.mxu0 0.0
    %2020 = vmatprep.subr.mxu0 0.0
    %2021 = vmatpush1.msra.mxu0 0.0
    %2022 = vmatprep.subr.mxu0 0.0
    %2023 = vmatpush1.msra.mxu0 0.0
    %2024 = vmatprep.mubr.f32.mxu0 0.0
    %2025 = vmatmul.mubr.f32.gmra.mrb[0].mxu0 %v1528
    %v2026 = vpop.f32.mrb[0].mxu0
    %v2027 = vadd.f32 0.0, %v2026
    %v2028 = vpop.f32.mrb[0].mxu0
    %v2029 = vadd.f32 0.0, %v2028
    %2030 = vdwg.mxu0
    %v2035 = vrot.slane %v1956, 6
    %v2036 = vrot.slane %v1958, 6
    %v2037 = vrot.slane %v2027, 6
    %v2038 = vrot.slane %v2029, 6
    %v2043 = vadd.f32 %v1885, %v2035
    %v2044 = vadd.f32 %v1886, %v2036
    %v2045 = vadd.f32 %v1887, %v2037
    %v2046 = vadd.f32 %v1888, %v2038
    %v2047 = vld [vmem:[#allocation3] sm:$0xc]
    %v2048 = vld [vmem:[#allocation3 + $0x8] sm:$0xc]
    %v2049 = vld [vmem:[#allocation3 + $0x10] sm:$0xc]
    %v2050 = vld [vmem:[#allocation3 + $0x18] sm:$0xc]
    %2051 = vmatprep.subr.mxu0 %v842
    %2052 = vmatpush1.msra.mxu0 %v841
    %2053 = vmatprep.subr.mxu0 %v846
    %2054 = vmatpush1.msra.mxu0 %v845
    %2055 = vmatprep.subr.mxu0 %v850
    %2056 = vmatpush1.msra.mxu0 %v849
    %2057 = vmatprep.subr.mxu0 %v854
    %2058 = vmatpush1.msra.mxu0 %v853
    %2059 = vmatprep.subr.mxu0 %v858
    %2060 = vmatpush1.msra.mxu0 %v857
    %2061 = vmatprep.subr.mxu0 %v862
    %2062 = vmatpush1.msra.mxu0 %v861
    %2063 = vmatprep.subr.mxu0 %v866
    %2064 = vmatpush1.msra.mxu0 %v865
    %2065 = vmatprep.subr.mxu0 %v870
    %2066 = vmatpush1.msra.mxu0 %v869
    %2067 = vmatprep.subr.mxu0 %v874
    %2068 = vmatpush1.msra.mxu0 %v873
    %2069 = vmatprep.subr.mxu0 %v878
    %2070 = vmatpush1.msra.mxu0 %v877
    %2071 = vmatprep.subr.mxu0 %v882
    %2072 = vmatpush1.msra.mxu0 %v881
    %2073 = vmatprep.subr.mxu0 %v886
    %2074 = vmatpush1.msra.mxu0 %v885
    %2075 = vmatprep.subr.mxu0 %v890
    %2076 = vmatpush1.msra.mxu0 %v889
    %2077 = vmatprep.subr.mxu0 %v894
    %2078 = vmatpush1.msra.mxu0 %v893
    %2079 = vmatprep.subr.mxu0 %v898
    %2080 = vmatpush1.msra.mxu0 %v897
    %2081 = vmatprep.subr.mxu0 %v902
    %2082 = vmatpush1.msra.mxu0 %v901
    %2083 = vmatprep.subr.mxu0 0.0
    %2084 = vmatpush1.msra.mxu0 0.0
    %2085 = vmatprep.subr.mxu0 0.0
    %2086 = vmatpush1.msra.mxu0 0.0
    %2087 = vmatprep.subr.mxu0 0.0
    %2088 = vmatpush1.msra.mxu0 0.0
    %2089 = vmatprep.subr.mxu0 0.0
    %2090 = vmatpush1.msra.mxu0 0.0
    %2091 = vmatprep.subr.mxu0 0.0
    %2092 = vmatpush1.msra.mxu0 0.0
    %2093 = vmatprep.subr.mxu0 0.0
    %2094 = vmatpush1.msra.mxu0 0.0
    %2095 = vmatprep.subr.mxu0 0.0
    %2096 = vmatpush1.msra.mxu0 0.0
    %2097 = vmatprep.subr.mxu0 0.0
    %2098 = vmatpush1.msra.mxu0 0.0
    %2099 = vmatprep.subr.mxu0 0.0
    %2100 = vmatpush1.msra.mxu0 0.0
    %2101 = vmatprep.subr.mxu0 0.0
    %2102 = vmatpush1.msra.mxu0 0.0
    %2103 = vmatprep.subr.mxu0 0.0
    %2104 = vmatpush1.msra.mxu0 0.0
    %2105 = vmatprep.subr.mxu0 0.0
    %2106 = vmatpush1.msra.mxu0 0.0
    %2107 = vmatprep.subr.mxu0 0.0
    %2108 = vmatpush1.msra.mxu0 0.0
    %2109 = vmatprep.subr.mxu0 0.0
    %2110 = vmatpush1.msra.mxu0 0.0
    %2111 = vmatprep.subr.mxu0 0.0
    %2112 = vmatpush1.msra.mxu0 0.0
    %2113 = vmatprep.subr.mxu0 0.0
    %2114 = vmatpush1.msra.mxu0 0.0
    %2115 = vmatprep.mubr.f32.mxu0 0.0
    %2116 = vmatmul.mubr.f32.gmra.mrb[0].mxu0 %v1552
    %v2117 = vpop.f32.mrb[0].mxu0
    %v2118 = vadd.f32 0.0, %v2117
    %v2119 = vpop.f32.mrb[0].mxu0
    %v2120 = vadd.f32 0.0, %v2119
    %2121 = vdwg.mxu0
    %2122 = vmatprep.subr.mxu0 %v844
    %2123 = vmatpush1.msra.mxu0 %v843
    %2124 = vmatprep.subr.mxu0 %v848
    %2125 = vmatpush1.msra.mxu0 %v847
    %2126 = vmatprep.subr.mxu0 %v852
    %2127 = vmatpush1.msra.mxu0 %v851
    %2128 = vmatprep.subr.mxu0 %v856
    %2129 = vmatpush1.msra.mxu0 %v855
    %2130 = vmatprep.subr.mxu0 %v860
    %2131 = vmatpush1.msra.mxu0 %v859
    %2132 = vmatprep.subr.mxu0 %v864
    %2133 = vmatpush1.msra.mxu0 %v863
    %2134 = vmatprep.subr.mxu0 %v868
    %2135 = vmatpush1.msra.mxu0 %v867
    %2136 = vmatprep.subr.mxu0 %v872
    %2137 = vmatpush1.msra.mxu0 %v871
    %2138 = vmatprep.subr.mxu0 %v876
    %2139 = vmatpush1.msra.mxu0 %v875
    %2140 = vmatprep.subr.mxu0 %v880
    %2141 = vmatpush1.msra.mxu0 %v879
    %2142 = vmatprep.subr.mxu0 %v884
    %2143 = vmatpush1.msra.mxu0 %v883
    %2144 = vmatprep.subr.mxu0 %v888
    %2145 = vmatpush1.msra.mxu0 %v887
    %2146 = vmatprep.subr.mxu0 %v892
    %2147 = vmatpush1.msra.mxu0 %v891
    %2148 = vmatprep.subr.mxu0 %v896
    %2149 = vmatpush1.msra.mxu0 %v895
    %2150 = vmatprep.subr.mxu0 %v900
    %2151 = vmatpush1.msra.mxu0 %v899
    %2152 = vmatprep.subr.mxu0 %v904
    %2153 = vmatpush1.msra.mxu0 %v903
    %2154 = vmatprep.subr.mxu0 0.0
    %2155 = vmatpush1.msra.mxu0 0.0
    %2156 = vmatprep.subr.mxu0 0.0
    %2157 = vmatpush1.msra.mxu0 0.0
    %2158 = vmatprep.subr.mxu0 0.0
    %2159 = vmatpush1.msra.mxu0 0.0
    %2160 = vmatprep.subr.mxu0 0.0
    %2161 = vmatpush1.msra.mxu0 0.0
    %2162 = vmatprep.subr.mxu0 0.0
    %2163 = vmatpush1.msra.mxu0 0.0
    %2164 = vmatprep.subr.mxu0 0.0
    %2165 = vmatpush1.msra.mxu0 0.0
    %2166 = vmatprep.subr.mxu0 0.0
    %2167 = vmatpush1.msra.mxu0 0.0
    %2168 = vmatprep.subr.mxu0 0.0
    %2169 = vmatpush1.msra.mxu0 0.0
    %2170 = vmatprep.subr.mxu0 0.0
    %2171 = vmatpush1.msra.mxu0 0.0
    %2172 = vmatprep.subr.mxu0 0.0
    %2173 = vmatpush1.msra.mxu0 0.0
    %2174 = vmatprep.subr.mxu0 0.0
    %2175 = vmatpush1.msra.mxu0 0.0
    %2176 = vmatprep.subr.mxu0 0.0
    %2177 = vmatpush1.msra.mxu0 0.0
    %2178 = vmatprep.subr.mxu0 0.0
    %2179 = vmatpush1.msra.mxu0 0.0
    %2180 = vmatprep.subr.mxu0 0.0
    %2181 = vmatpush1.msra.mxu0 0.0
    %2182 = vmatprep.subr.mxu0 0.0
    %2183 = vmatpush1.msra.mxu0 0.0
    %2184 = vmatprep.subr.mxu0 0.0
    %2185 = vmatpush1.msra.mxu0 0.0
    %2186 = vmatprep.mubr.f32.mxu0 0.0
    %2187 = vmatmul.mubr.f32.gmra.mrb[0].mxu0 %v1552
    %v2188 = vpop.f32.mrb[0].mxu0
    %v2189 = vadd.f32 0.0, %v2188
    %v2190 = vpop.f32.mrb[0].mxu0
    %v2191 = vadd.f32 0.0, %v2190
    %2192 = vdwg.mxu0
    %v2197 = vrot.slane %v2118, 6
    %v2198 = vrot.slane %v2120, 6
    %v2199 = vrot.slane %v2189, 6
    %v2200 = vrot.slane %v2191, 6
    %v2205 = vadd.f32 %v2047, %v2197
    %v2206 = vadd.f32 %v2048, %v2198
    %v2207 = vadd.f32 %v2049, %v2199
    %v2208 = vadd.f32 %v2050, %v2200
    %v2209 = vxor.u32 %v2043, 2147483648
    %v2210 = vmul.f32 %v2209, 1.442695
    %v2211 = vpow.pop %v2210
    %v2212 = vadd.f32 %v2211, 1.0
    %v2213 = vrcp.pop %v2212
    %v2214 = vmul.f32 1.0, %v2213
    %v2215 = vxor.u32 %v2044, 2147483648
    %v2216 = vmul.f32 %v2215, 1.442695
    %v2217 = vpow.pop %v2216
    %v2218 = vadd.f32 %v2217, 1.0
    %v2219 = vrcp.pop %v2218
    %v2220 = vmul.f32 1.0, %v2219
    %v2221 = vtanh.pop %v2045
    %v2222 = vxor.u32 %v2046, 2147483648
    %v2223 = vmul.f32 %v2222, 1.442695
    %v2224 = vpow.pop %v2223
    %v2225 = vadd.f32 %v2224, 1.0
    %v2226 = vrcp.pop %v2225
    %v2227 = vmul.f32 1.0, %v2226
    %v2229 = vrot.slane %v1526, 6
    %v2231 = vmul.f32 %v2220, %v2229
    %v2232 = vmul.f32 %v2214, %v2221
    %v2233 = vadd.f32 %v2231, %v2232
    %v2234 = vtanh.pop %v2233
    %v2235 = vmul.f32 %v2227, %v2234
    %v2236 = vxor.u32 %v2205, 2147483648
    %v2237 = vmul.f32 %v2236, 1.442695
    %v2238 = vpow.pop %v2237
    %v2239 = vadd.f32 %v2238, 1.0
    %v2240 = vrcp.pop %v2239
    %v2241 = vmul.f32 1.0, %v2240
    %v2242 = vxor.u32 %v2206, 2147483648
    %v2243 = vmul.f32 %v2242, 1.442695
    %v2244 = vpow.pop %v2243
    %v2245 = vadd.f32 %v2244, 1.0
    %v2246 = vrcp.pop %v2245
    %v2247 = vmul.f32 1.0, %v2246
    %v2248 = vtanh.pop %v2207
    %v2249 = vxor.u32 %v2208, 2147483648
    %v2250 = vmul.f32 %v2249, 1.442695
    %v2251 = vpow.pop %v2250
    %v2252 = vadd.f32 %v2251, 1.0
    %v2253 = vrcp.pop %v2252
    %v2254 = vmul.f32 1.0, %v2253
    %v2256 = vrot.slane %v1550, 6
    %v2258 = vmul.f32 %v2247, %v2256
    %v2259 = vmul.f32 %v2241, %v2248
    %v2260 = vadd.f32 %v2258, %v2259
    %v2261 = vtanh.pop %v2260
    %v2262 = vmul.f32 %v2254, %v2261
    %v2264 = vrot.slane %v1860, 6
    %v2266 = vrot.slane %v2235, 2
    %v2267 = vrot.slane %v2264, 2
    %2270 = vmatprep.subr.mxu0 %v906
    %2271 = vmatpush1.msra.mxu0 %v905
    %2272 = vmatprep.subr.mxu0 %v910
    %2273 = vmatpush1.msra.mxu0 %v909
    %2274 = vmatprep.subr.mxu0 %v914
    %2275 = vmatpush1.msra.mxu0 %v913
    %2276 = vmatprep.subr.mxu0 %v918
    %2277 = vmatpush1.msra.mxu0 %v917
    %2278 = vmatprep.subr.mxu0 %v922
    %2279 = vmatpush1.msra.mxu0 %v921
    %2280 = vmatprep.subr.mxu0 %v926
    %2281 = vmatpush1.msra.mxu0 %v925
    %2282 = vmatprep.subr.mxu0 %v930
    %2283 = vmatpush1.msra.mxu0 %v929
    %2284 = vmatprep.subr.mxu0 %v934
    %2285 = vmatpush1.msra.mxu0 %v933
    %2286 = vmatprep.subr.mxu0 %v938
    %2287 = vmatpush1.msra.mxu0 %v937
    %2288 = vmatprep.subr.mxu0 %v942
    %2289 = vmatpush1.msra.mxu0 %v941
    %2290 = vmatprep.subr.mxu0 %v946
    %2291 = vmatpush1.msra.mxu0 %v945
    %2292 = vmatprep.subr.mxu0 %v950
    %2293 = vmatpush1.msra.mxu0 %v949
    %2294 = vmatprep.subr.mxu0 %v954
    %2295 = vmatpush1.msra.mxu0 %v953
    %2296 = vmatprep.subr.mxu0 %v958
    %2297 = vmatpush1.msra.mxu0 %v957
    %2298 = vmatprep.subr.mxu0 %v962
    %2299 = vmatpush1.msra.mxu0 %v961
    %2300 = vmatprep.subr.mxu0 %v966
    %2301 = vmatpush1.msra.mxu0 %v965
    %2302 = vmatprep.subr.mxu0 %v970
    %2303 = vmatpush1.msra.mxu0 %v969
    %2304 = vmatprep.subr.mxu0 %v974
    %2305 = vmatpush1.msra.mxu0 %v973
    %2306 = vmatprep.subr.mxu0 %v978
    %2307 = vmatpush1.msra.mxu0 %v977
    %2308 = vmatprep.subr.mxu0 %v982
    %2309 = vmatpush1.msra.mxu0 %v981
    %2310 = vmatprep.subr.mxu0 %v986
    %2311 = vmatpush1.msra.mxu0 %v985
    %2312 = vmatprep.subr.mxu0 %v990
    %2313 = vmatpush1.msra.mxu0 %v989
    %2314 = vmatprep.subr.mxu0 %v994
    %2315 = vmatpush1.msra.mxu0 %v993
    %2316 = vmatprep.subr.mxu0 %v998
    %2317 = vmatpush1.msra.mxu0 %v997
    %2318 = vmatprep.subr.mxu0 %v1002
    %2319 = vmatpush1.msra.mxu0 %v1001
    %2320 = vmatprep.subr.mxu0 %v1006
    %2321 = vmatpush1.msra.mxu0 %v1005
    %2322 = vmatprep.subr.mxu0 %v1010
    %2323 = vmatpush1.msra.mxu0 %v1009
    %2324 = vmatprep.subr.mxu0 %v1014
    %2325 = vmatpush1.msra.mxu0 %v1013
    %2326 = vmatprep.subr.mxu0 %v1018
    %2327 = vmatpush1.msra.mxu0 %v1017
    %2328 = vmatprep.subr.mxu0 %v1022
    %2329 = vmatpush1.msra.mxu0 %v1021
    %2330 = vmatprep.subr.mxu0 %v1026
    %2331 = vmatpush1.msra.mxu0 %v1025
    %2332 = vmatprep.subr.mxu0 %v1030
    %2333 = vmatpush1.msra.mxu0 %v1029
    %2334 = vmatprep.mubr.f32.mxu0 %v2267
    %2335 = vmatmul.mubr.f32.gmra.mrb[0].mxu0 %v2266
    %v2336 = vpop.f32.mrb[0].mxu0
    %v2337 = vadd.f32 %v1166, %v2336
    %v2338 = vpop.f32.mrb[0].mxu0
    %v2339 = vadd.f32 %v1170, %v2338
    %2340 = vdwg.mxu0
    %2341 = vmatprep.subr.mxu0 %v908
    %2342 = vmatpush1.msra.mxu0 %v907
    %2343 = vmatprep.subr.mxu0 %v912
    %2344 = vmatpush1.msra.mxu0 %v911
    %2345 = vmatprep.subr.mxu0 %v916
    %2346 = vmatpush1.msra.mxu0 %v915
    %2347 = vmatprep.subr.mxu0 %v920
    %2348 = vmatpush1.msra.mxu0 %v919
    %2349 = vmatprep.subr.mxu0 %v924
    %2350 = vmatpush1.msra.mxu0 %v923
    %2351 = vmatprep.subr.mxu0 %v928
    %2352 = vmatpush1.msra.mxu0 %v927
    %2353 = vmatprep.subr.mxu0 %v932
    %2354 = vmatpush1.msra.mxu0 %v931
    %2355 = vmatprep.subr.mxu0 %v936
    %2356 = vmatpush1.msra.mxu0 %v935
    %2357 = vmatprep.subr.mxu0 %v940
    %2358 = vmatpush1.msra.mxu0 %v939
    %2359 = vmatprep.subr.mxu0 %v944
    %2360 = vmatpush1.msra.mxu0 %v943
    %2361 = vmatprep.subr.mxu0 %v948
    %2362 = vmatpush1.msra.mxu0 %v947
    %2363 = vmatprep.subr.mxu0 %v952
    %2364 = vmatpush1.msra.mxu0 %v951
    %2365 = vmatprep.subr.mxu0 %v956
    %2366 = vmatpush1.msra.mxu0 %v955
    %2367 = vmatprep.subr.mxu0 %v960
    %2368 = vmatpush1.msra.mxu0 %v959
    %2369 = vmatprep.subr.mxu0 %v964
    %2370 = vmatpush1.msra.mxu0 %v963
    %2371 = vmatprep.subr.mxu0 %v968
    %2372 = vmatpush1.msra.mxu0 %v967
    %2373 = vmatprep.subr.mxu0 %v972
    %2374 = vmatpush1.msra.mxu0 %v971
    %2375 = vmatprep.subr.mxu0 %v976
    %2376 = vmatpush1.msra.mxu0 %v975
    %2377 = vmatprep.subr.mxu0 %v980
    %2378 = vmatpush1.msra.mxu0 %v979
    %2379 = vmatprep.subr.mxu0 %v984
    %2380 = vmatpush1.msra.mxu0 %v983
    %2381 = vmatprep.subr.mxu0 %v988
    %2382 = vmatpush1.msra.mxu0 %v987
    %2383 = vmatprep.subr.mxu0 %v992
    %2384 = vmatpush1.msra.mxu0 %v991
    %2385 = vmatprep.subr.mxu0 %v996
    %2386 = vmatpush1.msra.mxu0 %v995
    %2387 = vmatprep.subr.mxu0 %v1000
    %2388 = vmatpush1.msra.mxu0 %v999
    %2389 = vmatprep.subr.mxu0 %v1004
    %2390 = vmatpush1.msra.mxu0 %v1003
    %2391 = vmatprep.subr.mxu0 %v1008
    %2392 = vmatpush1.msra.mxu0 %v1007
    %2393 = vmatprep.subr.mxu0 %v1012
    %2394 = vmatpush1.msra.mxu0 %v1011
    %2395 = vmatprep.subr.mxu0 %v1016
    %2396 = vmatpush1.msra.mxu0 %v1015
    %2397 = vmatprep.subr.mxu0 %v1020
    %2398 = vmatpush1.msra.mxu0 %v1019
    %2399 = vmatprep.subr.mxu0 %v1024
    %2400 = vmatpush1.msra.mxu0 %v1023
    %2401 = vmatprep.subr.mxu0 %v1028
    %2402 = vmatpush1.msra.mxu0 %v1027
    %2403 = vmatprep.subr.mxu0 %v1032
    %2404 = vmatpush1.msra.mxu0 %v1031
    %2405 = vmatprep.mubr.f32.mxu0 %v2267
    %2406 = vmatmul.mubr.f32.gmra.mrb[0].mxu0 %v2266
    %v2407 = vpop.f32.mrb[0].mxu0
    %v2408 = vadd.f32 %v1174, %v2407
    %v2409 = vpop.f32.mrb[0].mxu0
    %v2410 = vadd.f32 %v1178, %v2409
    %2411 = vdwg.mxu0
    %v2413 = vrot.slane %v1884, 6
    %v2415 = vrot.slane %v2262, 2
    %v2416 = vrot.slane %v2413, 2
    %2419 = vmatprep.subr.mxu0 %v1034
    %2420 = vmatpush1.msra.mxu0 %v1033
    %2421 = vmatprep.subr.mxu0 %v1038
    %2422 = vmatpush1.msra.mxu0 %v1037
    %2423 = vmatprep.subr.mxu0 %v1042
    %2424 = vmatpush1.msra.mxu0 %v1041
    %2425 = vmatprep.subr.mxu0 %v1046
    %2426 = vmatpush1.msra.mxu0 %v1045
    %2427 = vmatprep.subr.mxu0 %v1050
    %2428 = vmatpush1.msra.mxu0 %v1049
    %2429 = vmatprep.subr.mxu0 %v1054
    %2430 = vmatpush1.msra.mxu0 %v1053
    %2431 = vmatprep.subr.mxu0 %v1058
    %2432 = vmatpush1.msra.mxu0 %v1057
    %2433 = vmatprep.subr.mxu0 %v1062
    %2434 = vmatpush1.msra.mxu0 %v1061
    %2435 = vmatprep.subr.mxu0 %v1066
    %2436 = vmatpush1.msra.mxu0 %v1065
    %2437 = vmatprep.subr.mxu0 %v1070
    %2438 = vmatpush1.msra.mxu0 %v1069
    %2439 = vmatprep.subr.mxu0 %v1074
    %2440 = vmatpush1.msra.mxu0 %v1073
    %2441 = vmatprep.subr.mxu0 %v1078
    %2442 = vmatpush1.msra.mxu0 %v1077
    %2443 = vmatprep.subr.mxu0 %v1082
    %2444 = vmatpush1.msra.mxu0 %v1081
    %2445 = vmatprep.subr.mxu0 %v1086
    %2446 = vmatpush1.msra.mxu0 %v1085
    %2447 = vmatprep.subr.mxu0 %v1090
    %2448 = vmatpush1.msra.mxu0 %v1089
    %2449 = vmatprep.subr.mxu0 %v1094
    %2450 = vmatpush1.msra.mxu0 %v1093
    %2451 = vmatprep.subr.mxu0 %v1098
    %2452 = vmatpush1.msra.mxu0 %v1097
    %2453 = vmatprep.subr.mxu0 %v1102
    %2454 = vmatpush1.msra.mxu0 %v1101
    %2455 = vmatprep.subr.mxu0 %v1106
    %2456 = vmatpush1.msra.mxu0 %v1105
    %2457 = vmatprep.subr.mxu0 %v1110
    %2458 = vmatpush1.msra.mxu0 %v1109
    %2459 = vmatprep.subr.mxu0 %v1114
    %2460 = vmatpush1.msra.mxu0 %v1113
    %2461 = vmatprep.subr.mxu0 %v1118
    %2462 = vmatpush1.msra.mxu0 %v1117
    %2463 = vmatprep.subr.mxu0 %v1122
    %2464 = vmatpush1.msra.mxu0 %v1121
    %2465 = vmatprep.subr.mxu0 %v1126
    %2466 = vmatpush1.msra.mxu0 %v1125
    %2467 = vmatprep.subr.mxu0 %v1130
    %2468 = vmatpush1.msra.mxu0 %v1129
    %2469 = vmatprep.subr.mxu0 %v1134
    %2470 = vmatpush1.msra.mxu0 %v1133
    %2471 = vmatprep.subr.mxu0 %v1138
    %2472 = vmatpush1.msra.mxu0 %v1137
    %2473 = vmatprep.subr.mxu0 %v1142
    %2474 = vmatpush1.msra.mxu0 %v1141
    %2475 = vmatprep.subr.mxu0 %v1146
    %2476 = vmatpush1.msra.mxu0 %v1145
    %2477 = vmatprep.subr.mxu0 %v1150
    %2478 = vmatpush1.msra.mxu0 %v1149
    %2479 = vmatprep.subr.mxu0 %v1154
    %2480 = vmatpush1.msra.mxu0 %v1153
    %2481 = vmatprep.subr.mxu0 %v1158
    %2482 = vmatpush1.msra.mxu0 %v1157
    %2483 = vmatprep.mubr.f32.mxu0 %v2416
    %2484 = vmatmul.mubr.f32.gmra.mrb[0].mxu0 %v2415
    %v2485 = vpop.f32.mrb[0].mxu0
    %v2486 = vadd.f32 %v1188, %v2485
    %v2487 = vpop.f32.mrb[0].mxu0
    %v2488 = vadd.f32 %v1192, %v2487
    %2489 = vdwg.mxu0
    %2490 = vmatprep.subr.mxu0 %v1036
    %2491 = vmatpush1.msra.mxu0 %v1035
    %2492 = vmatprep.subr.mxu0 %v1040
    %2493 = vmatpush1.msra.mxu0 %v1039
    %2494 = vmatprep.subr.mxu0 %v1044
    %2495 = vmatpush1.msra.mxu0 %v1043
    %2496 = vmatprep.subr.mxu0 %v1048
    %2497 = vmatpush1.msra.mxu0 %v1047
    %2498 = vmatprep.subr.mxu0 %v1052
    %2499 = vmatpush1.msra.mxu0 %v1051
    %2500 = vmatprep.subr.mxu0 %v1056
    %2501 = vmatpush1.msra.mxu0 %v1055
    %2502 = vmatprep.subr.mxu0 %v1060
    %2503 = vmatpush1.msra.mxu0 %v1059
    %2504 = vmatprep.subr.mxu0 %v1064
    %2505 = vmatpush1.msra.mxu0 %v1063
    %2506 = vmatprep.subr.mxu0 %v1068
    %2507 = vmatpush1.msra.mxu0 %v1067
    %2508 = vmatprep.subr.mxu0 %v1072
    %2509 = vmatpush1.msra.mxu0 %v1071
    %2510 = vmatprep.subr.mxu0 %v1076
    %2511 = vmatpush1.msra.mxu0 %v1075
    %2512 = vmatprep.subr.mxu0 %v1080
    %2513 = vmatpush1.msra.mxu0 %v1079
    %2514 = vmatprep.subr.mxu0 %v1084
    %2515 = vmatpush1.msra.mxu0 %v1083
    %2516 = vmatprep.subr.mxu0 %v1088
    %2517 = vmatpush1.msra.mxu0 %v1087
    %2518 = vmatprep.subr.mxu0 %v1092
    %2519 = vmatpush1.msra.mxu0 %v1091
    %2520 = vmatprep.subr.mxu0 %v1096
    %2521 = vmatpush1.msra.mxu0 %v1095
    %2522 = vmatprep.subr.mxu0 %v1100
    %2523 = vmatpush1.msra.mxu0 %v1099
    %2524 = vmatprep.subr.mxu0 %v1104
    %2525 = vmatpush1.msra.mxu0 %v1103
    %2526 = vmatprep.subr.mxu0 %v1108
    %2527 = vmatpush1.msra.mxu0 %v1107
    %2528 = vmatprep.subr.mxu0 %v1112
    %2529 = vmatpush1.msra.mxu0 %v1111
    %2530 = vmatprep.subr.mxu0 %v1116
    %2531 = vmatpush1.msra.mxu0 %v1115
    %2532 = vmatprep.subr.mxu0 %v1120
    %2533 = vmatpush1.msra.mxu0 %v1119
    %2534 = vmatprep.subr.mxu0 %v1124
    %2535 = vmatpush1.msra.mxu0 %v1123
    %2536 = vmatprep.subr.mxu0 %v1128
    %2537 = vmatpush1.msra.mxu0 %v1127
    %2538 = vmatprep.subr.mxu0 %v1132
    %2539 = vmatpush1.msra.mxu0 %v1131
    %2540 = vmatprep.subr.mxu0 %v1136
    %2541 = vmatpush1.msra.mxu0 %v1135
    %2542 = vmatprep.subr.mxu0 %v1140
    %2543 = vmatpush1.msra.mxu0 %v1139
    %2544 = vmatprep.subr.mxu0 %v1144
    %2545 = vmatpush1.msra.mxu0 %v1143
    %2546 = vmatprep.subr.mxu0 %v1148
    %2547 = vmatpush1.msra.mxu0 %v1147
    %2548 = vmatprep.subr.mxu0 %v1152
    %2549 = vmatpush1.msra.mxu0 %v1151
    %2550 = vmatprep.subr.mxu0 %v1156
    %2551 = vmatpush1.msra.mxu0 %v1155
    %2552 = vmatprep.subr.mxu0 %v1160
    %2553 = vmatpush1.msra.mxu0 %v1159
    %2554 = vmatprep.mubr.f32.mxu0 %v2416
    %2555 = vmatmul.mubr.f32.gmra.mrb[0].mxu0 %v2415
    %v2556 = vpop.f32.mrb[0].mxu0
    %v2557 = vadd.f32 %v1196, %v2556
    %v2558 = vpop.f32.mrb[0].mxu0
    %v2559 = vadd.f32 %v1200, %v2558
    %2560 = vdwg.mxu0
    %v2561 = vxor.u32 %v2337, 2147483648
    %v2562 = vmul.f32 %v2561, 1.442695
    %v2563 = vpow.pop %v2562
    %v2564 = vadd.f32 %v2563, 1.0
    %v2565 = vrcp.pop %v2564
    %v2566 = vmul.f32 1.0, %v2565
    %v2567 = vxor.u32 %v2339, 2147483648
    %v2568 = vmul.f32 %v2567, 1.442695
    %v2569 = vpow.pop %v2568
    %v2570 = vadd.f32 %v2569, 1.0
    %v2571 = vrcp.pop %v2570
    %v2572 = vmul.f32 1.0, %v2571
    %v2573 = vtanh.pop %v2408
    %v2574 = vxor.u32 %v2410, 2147483648
    %v2575 = vmul.f32 %v2574, 1.442695
    %v2576 = vpow.pop %v2575
    %v2577 = vadd.f32 %v2576, 1.0
    %v2578 = vrcp.pop %v2577
    %v2579 = vmul.f32 1.0, %v2578
    %v2580 = vmul.f32 %v2572, %v1858
    %v2581 = vmul.f32 %v2566, %v2573
    %v2582 = vadd.f32 %v2580, %v2581
    %v2583 = vtanh.pop %v2582
    %v2584 = vmul.f32 %v2579, %v2583
    %v2585 = vxor.u32 %v2486, 2147483648
    %v2586 = vmul.f32 %v2585, 1.442695
    %v2587 = vpow.pop %v2586
    %v2588 = vadd.f32 %v2587, 1.0
    %v2589 = vrcp.pop %v2588
    %v2590 = vmul.f32 1.0, %v2589
    %v2591 = vxor.u32 %v2488, 2147483648
    %v2592 = vmul.f32 %v2591, 1.442695
    %v2593 = vpow.pop %v2592
    %v2594 = vadd.f32 %v2593, 1.0
    %v2595 = vrcp.pop %v2594
    %v2596 = vmul.f32 1.0, %v2595
    %v2597 = vtanh.pop %v2557
    %v2598 = vxor.u32 %v2559, 2147483648
    %v2599 = vmul.f32 %v2598, 1.442695
    %v2600 = vpow.pop %v2599
    %v2601 = vadd.f32 %v2600, 1.0
    %v2602 = vrcp.pop %v2601
    %v2603 = vmul.f32 1.0, %v2602
    %v2604 = vmul.f32 %v2596, %v1882
    %v2605 = vmul.f32 %v2590, %v2597
    %v2606 = vadd.f32 %v2604, %v2605
    %v2607 = vtanh.pop %v2606
    %v2608 = vmul.f32 %v2603, %v2607
    %v2609 = vld [vmem:[#allocation2] sm:$0x30]
    %v2610 = vld [vmem:[#allocation2 + $0x8] sm:$0x30]
    %v2611 = vld [vmem:[#allocation2 + $0x10] sm:$0x30]
    %v2612 = vld [vmem:[#allocation2 + $0x18] sm:$0x30]
    %2613 = vmatprep.subr.mxu0 %v778
    %2614 = vmatpush1.msra.mxu0 %v777
    %2615 = vmatprep.subr.mxu0 %v782
    %2616 = vmatpush1.msra.mxu0 %v781
    %2617 = vmatprep.subr.mxu0 %v786
    %2618 = vmatpush1.msra.mxu0 %v785
    %2619 = vmatprep.subr.mxu0 %v790
    %2620 = vmatpush1.msra.mxu0 %v789
    %2621 = vmatprep.subr.mxu0 %v794
    %2622 = vmatpush1.msra.mxu0 %v793
    %2623 = vmatprep.subr.mxu0 %v798
    %2624 = vmatpush1.msra.mxu0 %v797
    %2625 = vmatprep.subr.mxu0 %v802
    %2626 = vmatpush1.msra.mxu0 %v801
    %2627 = vmatprep.subr.mxu0 %v806
    %2628 = vmatpush1.msra.mxu0 %v805
    %2629 = vmatprep.subr.mxu0 %v810
    %2630 = vmatpush1.msra.mxu0 %v809
    %2631 = vmatprep.subr.mxu0 %v814
    %2632 = vmatpush1.msra.mxu0 %v813
    %2633 = vmatprep.subr.mxu0 %v818
    %2634 = vmatpush1.msra.mxu0 %v817
    %2635 = vmatprep.subr.mxu0 %v822
    %2636 = vmatpush1.msra.mxu0 %v821
    %2637 = vmatprep.subr.mxu0 %v826
    %2638 = vmatpush1.msra.mxu0 %v825
    %2639 = vmatprep.subr.mxu0 %v830
    %2640 = vmatpush1.msra.mxu0 %v829
    %2641 = vmatprep.subr.mxu0 %v834
    %2642 = vmatpush1.msra.mxu0 %v833
    %2643 = vmatprep.subr.mxu0 %v838
    %2644 = vmatpush1.msra.mxu0 %v837
    %2645 = vmatprep.subr.mxu0 0.0
    %2646 = vmatpush1.msra.mxu0 0.0
    %2647 = vmatprep.subr.mxu0 0.0
    %2648 = vmatpush1.msra.mxu0 0.0
    %2649 = vmatprep.subr.mxu0 0.0
    %2650 = vmatpush1.msra.mxu0 0.0
    %2651 = vmatprep.subr.mxu0 0.0
    %2652 = vmatpush1.msra.mxu0 0.0
    %2653 = vmatprep.subr.mxu0 0.0
    %2654 = vmatpush1.msra.mxu0 0.0
    %2655 = vmatprep.subr.mxu0 0.0
    %2656 = vmatpush1.msra.mxu0 0.0
    %2657 = vmatprep.subr.mxu0 0.0
    %2658 = vmatpush1.msra.mxu0 0.0
    %2659 = vmatprep.subr.mxu0 0.0
    %2660 = vmatpush1.msra.mxu0 0.0
    %2661 = vmatprep.subr.mxu0 0.0
    %2662 = vmatpush1.msra.mxu0 0.0
    %2663 = vmatprep.subr.mxu0 0.0
    %2664 = vmatpush1.msra.mxu0 0.0
    %2665 = vmatprep.subr.mxu0 0.0
    %2666 = vmatpush1.msra.mxu0 0.0
    %2667 = vmatprep.subr.mxu0 0.0
    %2668 = vmatpush1.msra.mxu0 0.0
    %2669 = vmatprep.subr.mxu0 0.0
    %2670 = vmatpush1.msra.mxu0 0.0
    %2671 = vmatprep.subr.mxu0 0.0
    %2672 = vmatpush1.msra.mxu0 0.0
    %2673 = vmatprep.subr.mxu0 0.0
    %2674 = vmatpush1.msra.mxu0 0.0
    %2675 = vmatprep.subr.mxu0 0.0
    %2676 = vmatpush1.msra.mxu0 0.0
    %2677 = vmatprep.mubr.f32.mxu0 0.0
    %2678 = vmatmul.mubr.f32.gmra.mrb[0].mxu0 %v2266
    %v2679 = vpop.f32.mrb[0].mxu0
    %v2680 = vadd.f32 0.0, %v2679
    %v2681 = vpop.f32.mrb[0].mxu0
    %v2682 = vadd.f32 0.0, %v2681
    %2683 = vdwg.mxu0
    %2684 = vmatprep.subr.mxu0 %v780
    %2685 = vmatpush1.msra.mxu0 %v779
    %2686 = vmatprep.subr.mxu0 %v784
    %2687 = vmatpush1.msra.mxu0 %v783
    %2688 = vmatprep.subr.mxu0 %v788
    %2689 = vmatpush1.msra.mxu0 %v787
    %2690 = vmatprep.subr.mxu0 %v792
    %2691 = vmatpush1.msra.mxu0 %v791
    %2692 = vmatprep.subr.mxu0 %v796
    %2693 = vmatpush1.msra.mxu0 %v795
    %2694 = vmatprep.subr.mxu0 %v800
    %2695 = vmatpush1.msra.mxu0 %v799
    %2696 = vmatprep.subr.mxu0 %v804
    %2697 = vmatpush1.msra.mxu0 %v803
    %2698 = vmatprep.subr.mxu0 %v808
    %2699 = vmatpush1.msra.mxu0 %v807
    %2700 = vmatprep.subr.mxu0 %v812
    %2701 = vmatpush1.msra.mxu0 %v811
    %2702 = vmatprep.subr.mxu0 %v816
    %2703 = vmatpush1.msra.mxu0 %v815
    %2704 = vmatprep.subr.mxu0 %v820
    %2705 = vmatpush1.msra.mxu0 %v819
    %2706 = vmatprep.subr.mxu0 %v824
    %2707 = vmatpush1.msra.mxu0 %v823
    %2708 = vmatprep.subr.mxu0 %v828
    %2709 = vmatpush1.msra.mxu0 %v827
    %2710 = vmatprep.subr.mxu0 %v832
    %2711 = vmatpush1.msra.mxu0 %v831
    %2712 = vmatprep.subr.mxu0 %v836
    %2713 = vmatpush1.msra.mxu0 %v835
    %2714 = vmatprep.subr.mxu0 %v840
    %2715 = vmatpush1.msra.mxu0 %v839
    %2716 = vmatprep.subr.mxu0 0.0
    %2717 = vmatpush1.msra.mxu0 0.0
    %2718 = vmatprep.subr.mxu0 0.0
    %2719 = vmatpush1.msra.mxu0 0.0
    %2720 = vmatprep.subr.mxu0 0.0
    %2721 = vmatpush1.msra.mxu0 0.0
    %2722 = vmatprep.subr.mxu0 0.0
    %2723 = vmatpush1.msra.mxu0 0.0
    %2724 = vmatprep.subr.mxu0 0.0
    %2725 = vmatpush1.msra.mxu0 0.0
    %2726 = vmatprep.subr.mxu0 0.0
    %2727 = vmatpush1.msra.mxu0 0.0
    %2728 = vmatprep.subr.mxu0 0.0
    %2729 = vmatpush1.msra.mxu0 0.0
    %2730 = vmatprep.subr.mxu0 0.0
    %2731 = vmatpush1.msra.mxu0 0.0
    %2732 = vmatprep.subr.mxu0 0.0
    %2733 = vmatpush1.msra.mxu0 0.0
    %2734 = vmatprep.subr.mxu0 0.0
    %2735 = vmatpush1.msra.mxu0 0.0
    %2736 = vmatprep.subr.mxu0 0.0
    %2737 = vmatpush1.msra.mxu0 0.0
    %2738 = vmatprep.subr.mxu0 0.0
    %2739 = vmatpush1.msra.mxu0 0.0
    %2740 = vmatprep.subr.mxu0 0.0
    %2741 = vmatpush1.msra.mxu0 0.0
    %2742 = vmatprep.subr.mxu0 0.0
    %2743 = vmatpush1.msra.mxu0 0.0
    %2744 = vmatprep.subr.mxu0 0.0
    %2745 = vmatpush1.msra.mxu0 0.0
    %2746 = vmatprep.subr.mxu0 0.0
    %2747 = vmatpush1.msra.mxu0 0.0
    %2748 = vmatprep.mubr.f32.mxu0 0.0
    %2749 = vmatmul.mubr.f32.gmra.mrb[0].mxu0 %v2266
    %v2750 = vpop.f32.mrb[0].mxu0
    %v2751 = vadd.f32 0.0, %v2750
    %v2752 = vpop.f32.mrb[0].mxu0
    %v2753 = vadd.f32 0.0, %v2752
    %2754 = vdwg.mxu0
    %v2759 = vrot.slane %v2680, 4
    %v2760 = vrot.slane %v2682, 4
    %v2761 = vrot.slane %v2751, 4
    %v2762 = vrot.slane %v2753, 4
    %v2767 = vadd.f32 %v2609, %v2759
    %v2768 = vadd.f32 %v2610, %v2760
    %v2769 = vadd.f32 %v2611, %v2761
    %v2770 = vadd.f32 %v2612, %v2762
    %v2771 = vld [vmem:[#allocation3] sm:$0x30]
    %v2772 = vld [vmem:[#allocation3 + $0x8] sm:$0x30]
    %v2773 = vld [vmem:[#allocation3 + $0x10] sm:$0x30]
    %v2774 = vld [vmem:[#allocation3 + $0x18] sm:$0x30]
    %2775 = vmatprep.subr.mxu0 %v842
    %2776 = vmatpush1.msra.mxu0 %v841
    %2777 = vmatprep.subr.mxu0 %v846
    %2778 = vmatpush1.msra.mxu0 %v845
    %2779 = vmatprep.subr.mxu0 %v850
    %2780 = vmatpush1.msra.mxu0 %v849
    %2781 = vmatprep.subr.mxu0 %v854
    %2782 = vmatpush1.msra.mxu0 %v853
    %2783 = vmatprep.subr.mxu0 %v858
    %2784 = vmatpush1.msra.mxu0 %v857
    %2785 = vmatprep.subr.mxu0 %v862
    %2786 = vmatpush1.msra.mxu0 %v861
    %2787 = vmatprep.subr.mxu0 %v866
    %2788 = vmatpush1.msra.mxu0 %v865
    %2789 = vmatprep.subr.mxu0 %v870
    %2790 = vmatpush1.msra.mxu0 %v869
    %2791 = vmatprep.subr.mxu0 %v874
    %2792 = vmatpush1.msra.mxu0 %v873
    %2793 = vmatprep.subr.mxu0 %v878
    %2794 = vmatpush1.msra.mxu0 %v877
    %2795 = vmatprep.subr.mxu0 %v882
    %2796 = vmatpush1.msra.mxu0 %v881
    %2797 = vmatprep.subr.mxu0 %v886
    %2798 = vmatpush1.msra.mxu0 %v885
    %2799 = vmatprep.subr.mxu0 %v890
    %2800 = vmatpush1.msra.mxu0 %v889
    %2801 = vmatprep.subr.mxu0 %v894
    %2802 = vmatpush1.msra.mxu0 %v893
    %2803 = vmatprep.subr.mxu0 %v898
    %2804 = vmatpush1.msra.mxu0 %v897
    %2805 = vmatprep.subr.mxu0 %v902
    %2806 = vmatpush1.msra.mxu0 %v901
    %2807 = vmatprep.subr.mxu0 0.0
    %2808 = vmatpush1.msra.mxu0 0.0
    %2809 = vmatprep.subr.mxu0 0.0
    %2810 = vmatpush1.msra.mxu0 0.0
    %2811 = vmatprep.subr.mxu0 0.0
    %2812 = vmatpush1.msra.mxu0 0.0
    %2813 = vmatprep.subr.mxu0 0.0
    %2814 = vmatpush1.msra.mxu0 0.0
    %2815 = vmatprep.subr.mxu0 0.0
    %2816 = vmatpush1.msra.mxu0 0.0
    %2817 = vmatprep.subr.mxu0 0.0
    %2818 = vmatpush1.msra.mxu0 0.0
    %2819 = vmatprep.subr.mxu0 0.0
    %2820 = vmatpush1.msra.mxu0 0.0
    %2821 = vmatprep.subr.mxu0 0.0
    %2822 = vmatpush1.msra.mxu0 0.0
    %2823 = vmatprep.subr.mxu0 0.0
    %2824 = vmatpush1.msra.mxu0 0.0
    %2825 = vmatprep.subr.mxu0 0.0
    %2826 = vmatpush1.msra.mxu0 0.0
    %2827 = vmatprep.subr.mxu0 0.0
    %2828 = vmatpush1.msra.mxu0 0.0
    %2829 = vmatprep.subr.mxu0 0.0
    %2830 = vmatpush1.msra.mxu0 0.0
    %2831 = vmatprep.subr.mxu0 0.0
    %2832 = vmatpush1.msra.mxu0 0.0
    %2833 = vmatprep.subr.mxu0 0.0
    %2834 = vmatpush1.msra.mxu0 0.0
    %2835 = vmatprep.subr.mxu0 0.0
    %2836 = vmatpush1.msra.mxu0 0.0
    %2837 = vmatprep.subr.mxu0 0.0
    %2838 = vmatpush1.msra.mxu0 0.0
    %2839 = vmatprep.mubr.f32.mxu0 0.0
    %2840 = vmatmul.mubr.f32.gmra.mrb[0].mxu0 %v2415
    %v2841 = vpop.f32.mrb[0].mxu0
    %v2842 = vadd.f32 0.0, %v2841
    %v2843 = vpop.f32.mrb[0].mxu0
    %v2844 = vadd.f32 0.0, %v2843
    %2845 = vdwg.mxu0
    %2846 = vmatprep.subr.mxu0 %v844
    %2847 = vmatpush1.msra.mxu0 %v843
    %2848 = vmatprep.subr.mxu0 %v848
    %2849 = vmatpush1.msra.mxu0 %v847
    %2850 = vmatprep.subr.mxu0 %v852
    %2851 = vmatpush1.msra.mxu0 %v851
    %2852 = vmatprep.subr.mxu0 %v856
    %2853 = vmatpush1.msra.mxu0 %v855
    %2854 = vmatprep.subr.mxu0 %v860
    %2855 = vmatpush1.msra.mxu0 %v859
    %2856 = vmatprep.subr.mxu0 %v864
    %2857 = vmatpush1.msra.mxu0 %v863
    %2858 = vmatprep.subr.mxu0 %v868
    %2859 = vmatpush1.msra.mxu0 %v867
    %2860 = vmatprep.subr.mxu0 %v872
    %2861 = vmatpush1.msra.mxu0 %v871
    %2862 = vmatprep.subr.mxu0 %v876
    %2863 = vmatpush1.msra.mxu0 %v875
    %2864 = vmatprep.subr.mxu0 %v880
    %2865 = vmatpush1.msra.mxu0 %v879
    %2866 = vmatprep.subr.mxu0 %v884
    %2867 = vmatpush1.msra.mxu0 %v883
    %2868 = vmatprep.subr.mxu0 %v888
    %2869 = vmatpush1.msra.mxu0 %v887
    %2870 = vmatprep.subr.mxu0 %v892
    %2871 = vmatpush1.msra.mxu0 %v891
    %2872 = vmatprep.subr.mxu0 %v896
    %2873 = vmatpush1.msra.mxu0 %v895
    %2874 = vmatprep.subr.mxu0 %v900
    %2875 = vmatpush1.msra.mxu0 %v899
    %2876 = vmatprep.subr.mxu0 %v904
    %2877 = vmatpush1.msra.mxu0 %v903
    %2878 = vmatprep.subr.mxu0 0.0
    %2879 = vmatpush1.msra.mxu0 0.0
    %2880 = vmatprep.subr.mxu0 0.0
    %2881 = vmatpush1.msra.mxu0 0.0
    %2882 = vmatprep.subr.mxu0 0.0
    %2883 = vmatpush1.msra.mxu0 0.0
    %2884 = vmatprep.subr.mxu0 0.0
    %2885 = vmatpush1.msra.mxu0 0.0
    %2886 = vmatprep.subr.mxu0 0.0
    %2887 = vmatpush1.msra.mxu0 0.0
    %2888 = vmatprep.subr.mxu0 0.0
    %2889 = vmatpush1.msra.mxu0 0.0
    %2890 = vmatprep.subr.mxu0 0.0
    %2891 = vmatpush1.msra.mxu0 0.0
    %2892 = vmatprep.subr.mxu0 0.0
    %2893 = vmatpush1.msra.mxu0 0.0
    %2894 = vmatprep.subr.mxu0 0.0
    %2895 = vmatpush1.msra.mxu0 0.0
    %2896 = vmatprep.subr.mxu0 0.0
    %2897 = vmatpush1.msra.mxu0 0.0
    %2898 = vmatprep.subr.mxu0 0.0
    %2899 = vmatpush1.msra.mxu0 0.0
    %2900 = vmatprep.subr.mxu0 0.0
    %2901 = vmatpush1.msra.mxu0 0.0
    %2902 = vmatprep.subr.mxu0 0.0
    %2903 = vmatpush1.msra.mxu0 0.0
    %2904 = vmatprep.subr.mxu0 0.0
    %2905 = vmatpush1.msra.mxu0 0.0
    %2906 = vmatprep.subr.mxu0 0.0
    %2907 = vmatpush1.msra.mxu0 0.0
    %2908 = vmatprep.subr.mxu0 0.0
    %2909 = vmatpush1.msra.mxu0 0.0
    %2910 = vmatprep.mubr.f32.mxu0 0.0
    %2911 = vmatmul.mubr.f32.gmra.mrb[0].mxu0 %v2415
    %v2912 = vpop.f32.mrb[0].mxu0
    %v2913 = vadd.f32 0.0, %v2912
    %v2914 = vpop.f32.mrb[0].mxu0
    %v2915 = vadd.f32 0.0, %v2914
    %2916 = vdwg.mxu0
    %v2921 = vrot.slane %v2842, 4
    %v2922 = vrot.slane %v2844, 4
    %v2923 = vrot.slane %v2913, 4
    %v2924 = vrot.slane %v2915, 4
    %v2929 = vadd.f32 %v2771, %v2921
    %v2930 = vadd.f32 %v2772, %v2922
    %v2931 = vadd.f32 %v2773, %v2923
    %v2932 = vadd.f32 %v2774, %v2924
    %v2933 = vxor.u32 %v2767, 2147483648
    %v2934 = vmul.f32 %v2933, 1.442695
    %v2935 = vpow.pop %v2934
    %v2936 = vadd.f32 %v2935, 1.0
    %v2937 = vrcp.pop %v2936
    %v2938 = vmul.f32 1.0, %v2937
    %v2939 = vxor.u32 %v2768, 2147483648
    %v2940 = vmul.f32 %v2939, 1.442695
    %v2941 = vpow.pop %v2940
    %v2942 = vadd.f32 %v2941, 1.0
    %v2943 = vrcp.pop %v2942
    %v2944 = vmul.f32 1.0, %v2943
    %v2945 = vtanh.pop %v2769
    %v2946 = vxor.u32 %v2770, 2147483648
    %v2947 = vmul.f32 %v2946, 1.442695
    %v2948 = vpow.pop %v2947
    %v2949 = vadd.f32 %v2948, 1.0
    %v2950 = vrcp.pop %v2949
    %v2951 = vmul.f32 1.0, %v2950
    %v2953 = vrot.slane %v2233, 6
    %v2955 = vmul.f32 %v2944, %v2953
    %v2956 = vmul.f32 %v2938, %v2945
    %v2957 = vadd.f32 %v2955, %v2956
    %v2958 = vtanh.pop %v2957
    %v2959 = vmul.f32 %v2951, %v2958
    %v2960 = vxor.u32 %v2929, 2147483648
    %v2961 = vmul.f32 %v2960, 1.442695
    %v2962 = vpow.pop %v2961
    %v2963 = vadd.f32 %v2962, 1.0
    %v2964 = vrcp.pop %v2963
    %v2965 = vmul.f32 1.0, %v2964
    %v2966 = vxor.u32 %v2930, 2147483648
    %v2967 = vmul.f32 %v2966, 1.442695
    %v2968 = vpow.pop %v2967
    %v2969 = vadd.f32 %v2968, 1.0
    %v2970 = vrcp.pop %v2969
    %v2971 = vmul.f32 1.0, %v2970
    %v2972 = vtanh.pop %v2931
    %v2973 = vxor.u32 %v2932, 2147483648
    %v2974 = vmul.f32 %v2973, 1.442695
    %v2975 = vpow.pop %v2974
    %v2976 = vadd.f32 %v2975, 1.0
    %v2977 = vrcp.pop %v2976
    %v2978 = vmul.f32 1.0, %v2977
    %v2980 = vrot.slane %v2260, 6
    %v2982 = vmul.f32 %v2971, %v2980
    %v2983 = vmul.f32 %v2965, %v2972
    %v2984 = vadd.f32 %v2982, %v2983
    %v2985 = vtanh.pop %v2984
    %v2986 = vmul.f32 %v2978, %v2985
    %v2988 = vrot.slane %v2584, 4
    %v2990 = vrot.slane %v2959, 4
    %v2991 = vrot.slane %v2988, 4
    %2994 = vmatprep.subr.mxu0 %v906
    %2995 = vmatpush1.msra.mxu0 %v905
    %2996 = vmatprep.subr.mxu0 %v910
    %2997 = vmatpush1.msra.mxu0 %v909
    %2998 = vmatprep.subr.mxu0 %v914
    %2999 = vmatpush1.msra.mxu0 %v913
    %3000 = vmatprep.subr.mxu0 %v918
    %3001 = vmatpush1.msra.mxu0 %v917
    %3002 = vmatprep.subr.mxu0 %v922
    %3003 = vmatpush1.msra.mxu0 %v921
    %3004 = vmatprep.subr.mxu0 %v926
    %3005 = vmatpush1.msra.mxu0 %v925
    %3006 = vmatprep.subr.mxu0 %v930
    %3007 = vmatpush1.msra.mxu0 %v929
    %3008 = vmatprep.subr.mxu0 %v934
    %3009 = vmatpush1.msra.mxu0 %v933
    %3010 = vmatprep.subr.mxu0 %v938
    %3011 = vmatpush1.msra.mxu0 %v937
    %3012 = vmatprep.subr.mxu0 %v942
    %3013 = vmatpush1.msra.mxu0 %v941
    %3014 = vmatprep.subr.mxu0 %v946
    %3015 = vmatpush1.msra.mxu0 %v945
    %3016 = vmatprep.subr.mxu0 %v950
    %3017 = vmatpush1.msra.mxu0 %v949
    %3018 = vmatprep.subr.mxu0 %v954
    %3019 = vmatpush1.msra.mxu0 %v953
    %3020 = vmatprep.subr.mxu0 %v958
    %3021 = vmatpush1.msra.mxu0 %v957
    %3022 = vmatprep.subr.mxu0 %v962
    %3023 = vmatpush1.msra.mxu0 %v961
    %3024 = vmatprep.subr.mxu0 %v966
    %3025 = vmatpush1.msra.mxu0 %v965
    %3026 = vmatprep.subr.mxu0 %v970
    %3027 = vmatpush1.msra.mxu0 %v969
    %3028 = vmatprep.subr.mxu0 %v974
    %3029 = vmatpush1.msra.mxu0 %v973
    %3030 = vmatprep.subr.mxu0 %v978
    %3031 = vmatpush1.msra.mxu0 %v977
    %3032 = vmatprep.subr.mxu0 %v982
    %3033 = vmatpush1.msra.mxu0 %v981
    %3034 = vmatprep.subr.mxu0 %v986
    %3035 = vmatpush1.msra.mxu0 %v985
    %3036 = vmatprep.subr.mxu0 %v990
    %3037 = vmatpush1.msra.mxu0 %v989
    %3038 = vmatprep.subr.mxu0 %v994
    %3039 = vmatpush1.msra.mxu0 %v993
    %3040 = vmatprep.subr.mxu0 %v998
    %3041 = vmatpush1.msra.mxu0 %v997
    %3042 = vmatprep.subr.mxu0 %v1002
    %3043 = vmatpush1.msra.mxu0 %v1001
    %3044 = vmatprep.subr.mxu0 %v1006
    %3045 = vmatpush1.msra.mxu0 %v1005
    %3046 = vmatprep.subr.mxu0 %v1010
    %3047 = vmatpush1.msra.mxu0 %v1009
    %3048 = vmatprep.subr.mxu0 %v1014
    %3049 = vmatpush1.msra.mxu0 %v1013
    %3050 = vmatprep.subr.mxu0 %v1018
    %3051 = vmatpush1.msra.mxu0 %v1017
    %3052 = vmatprep.subr.mxu0 %v1022
    %3053 = vmatpush1.msra.mxu0 %v1021
    %3054 = vmatprep.subr.mxu0 %v1026
    %3055 = vmatpush1.msra.mxu0 %v1025
    %3056 = vmatprep.subr.mxu0 %v1030
    %3057 = vmatpush1.msra.mxu0 %v1029
    %3058 = vmatprep.mubr.f32.mxu0 %v2991
    %3059 = vmatmul.mubr.f32.gmra.mrb[0].mxu0 %v2990
    %v3060 = vpop.f32.mrb[0].mxu0
    %v3061 = vadd.f32 %v1166, %v3060
    %v3062 = vpop.f32.mrb[0].mxu0
    %v3063 = vadd.f32 %v1170, %v3062
    %3064 = vdwg.mxu0
    %3065 = vmatprep.subr.mxu0 %v908
    %3066 = vmatpush1.msra.mxu0 %v907
    %3067 = vmatprep.subr.mxu0 %v912
    %3068 = vmatpush1.msra.mxu0 %v911
    %3069 = vmatprep.subr.mxu0 %v916
    %3070 = vmatpush1.msra.mxu0 %v915
    %3071 = vmatprep.subr.mxu0 %v920
    %3072 = vmatpush1.msra.mxu0 %v919
    %3073 = vmatprep.subr.mxu0 %v924
    %3074 = vmatpush1.msra.mxu0 %v923
    %3075 = vmatprep.subr.mxu0 %v928
    %3076 = vmatpush1.msra.mxu0 %v927
    %3077 = vmatprep.subr.mxu0 %v932
    %3078 = vmatpush1.msra.mxu0 %v931
    %3079 = vmatprep.subr.mxu0 %v936
    %3080 = vmatpush1.msra.mxu0 %v935
    %3081 = vmatprep.subr.mxu0 %v940
    %3082 = vmatpush1.msra.mxu0 %v939
    %3083 = vmatprep.subr.mxu0 %v944
    %3084 = vmatpush1.msra.mxu0 %v943
    %3085 = vmatprep.subr.mxu0 %v948
    %3086 = vmatpush1.msra.mxu0 %v947
    %3087 = vmatprep.subr.mxu0 %v952
    %3088 = vmatpush1.msra.mxu0 %v951
    %3089 = vmatprep.subr.mxu0 %v956
    %3090 = vmatpush1.msra.mxu0 %v955
    %3091 = vmatprep.subr.mxu0 %v960
    %3092 = vmatpush1.msra.mxu0 %v959
    %3093 = vmatprep.subr.mxu0 %v964
    %3094 = vmatpush1.msra.mxu0 %v963
    %3095 = vmatprep.subr.mxu0 %v968
    %3096 = vmatpush1.msra.mxu0 %v967
    %3097 = vmatprep.subr.mxu0 %v972
    %3098 = vmatpush1.msra.mxu0 %v971
    %3099 = vmatprep.subr.mxu0 %v976
    %3100 = vmatpush1.msra.mxu0 %v975
    %3101 = vmatprep.subr.mxu0 %v980
    %3102 = vmatpush1.msra.mxu0 %v979
    %3103 = vmatprep.subr.mxu0 %v984
    %3104 = vmatpush1.msra.mxu0 %v983
    %3105 = vmatprep.subr.mxu0 %v988
    %3106 = vmatpush1.msra.mxu0 %v987
    %3107 = vmatprep.subr.mxu0 %v992
    %3108 = vmatpush1.msra.mxu0 %v991
    %3109 = vmatprep.subr.mxu0 %v996
    %3110 = vmatpush1.msra.mxu0 %v995
    %3111 = vmatprep.subr.mxu0 %v1000
    %3112 = vmatpush1.msra.mxu0 %v999
    %3113 = vmatprep.subr.mxu0 %v1004
    %3114 = vmatpush1.msra.mxu0 %v1003
    %3115 = vmatprep.subr.mxu0 %v1008
    %3116 = vmatpush1.msra.mxu0 %v1007
    %3117 = vmatprep.subr.mxu0 %v1012
    %3118 = vmatpush1.msra.mxu0 %v1011
    %3119 = vmatprep.subr.mxu0 %v1016
    %3120 = vmatpush1.msra.mxu0 %v1015
    %3121 = vmatprep.subr.mxu0 %v1020
    %3122 = vmatpush1.msra.mxu0 %v1019
    %3123 = vmatprep.subr.mxu0 %v1024
    %3124 = vmatpush1.msra.mxu0 %v1023
    %3125 = vmatprep.subr.mxu0 %v1028
    %3126 = vmatpush1.msra.mxu0 %v1027
    %3127 = vmatprep.subr.mxu0 %v1032
    %3128 = vmatpush1.msra.mxu0 %v1031
    %3129 = vmatprep.mubr.f32.mxu0 %v2991
    %3130 = vmatmul.mubr.f32.gmra.mrb[0].mxu0 %v2990
    %v3131 = vpop.f32.mrb[0].mxu0
    %v3132 = vadd.f32 %v1174, %v3131
    %v3133 = vpop.f32.mrb[0].mxu0
    %v3134 = vadd.f32 %v1178, %v3133
    %3135 = vdwg.mxu0
    %v3137 = vrot.slane %v2608, 4
    %v3139 = vrot.slane %v2986, 4
    %v3140 = vrot.slane %v3137, 4
    %3143 = vmatprep.subr.mxu0 %v1034
    %3144 = vmatpush1.msra.mxu0 %v1033
    %3145 = vmatprep.subr.mxu0 %v1038
    %3146 = vmatpush1.msra.mxu0 %v1037
    %3147 = vmatprep.subr.mxu0 %v1042
    %3148 = vmatpush1.msra.mxu0 %v1041
    %3149 = vmatprep.subr.mxu0 %v1046
    %3150 = vmatpush1.msra.mxu0 %v1045
    %3151 = vmatprep.subr.mxu0 %v1050
    %3152 = vmatpush1.msra.mxu0 %v1049
    %3153 = vmatprep.subr.mxu0 %v1054
    %3154 = vmatpush1.msra.mxu0 %v1053
    %3155 = vmatprep.subr.mxu0 %v1058
    %3156 = vmatpush1.msra.mxu0 %v1057
    %3157 = vmatprep.subr.mxu0 %v1062
    %3158 = vmatpush1.msra.mxu0 %v1061
    %3159 = vmatprep.subr.mxu0 %v1066
    %3160 = vmatpush1.msra.mxu0 %v1065
    %3161 = vmatprep.subr.mxu0 %v1070
    %3162 = vmatpush1.msra.mxu0 %v1069
    %3163 = vmatprep.subr.mxu0 %v1074
    %3164 = vmatpush1.msra.mxu0 %v1073
    %3165 = vmatprep.subr.mxu0 %v1078
    %3166 = vmatpush1.msra.mxu0 %v1077
    %3167 = vmatprep.subr.mxu0 %v1082
    %3168 = vmatpush1.msra.mxu0 %v1081
    %3169 = vmatprep.subr.mxu0 %v1086
    %3170 = vmatpush1.msra.mxu0 %v1085
    %3171 = vmatprep.subr.mxu0 %v1090
    %3172 = vmatpush1.msra.mxu0 %v1089
    %3173 = vmatprep.subr.mxu0 %v1094
    %3174 = vmatpush1.msra.mxu0 %v1093
    %3175 = vmatprep.subr.mxu0 %v1098
    %3176 = vmatpush1.msra.mxu0 %v1097
    %3177 = vmatprep.subr.mxu0 %v1102
    %3178 = vmatpush1.msra.mxu0 %v1101
    %3179 = vmatprep.subr.mxu0 %v1106
    %3180 = vmatpush1.msra.mxu0 %v1105
    %3181 = vmatprep.subr.mxu0 %v1110
    %3182 = vmatpush1.msra.mxu0 %v1109
    %3183 = vmatprep.subr.mxu0 %v1114
    %3184 = vmatpush1.msra.mxu0 %v1113
    %3185 = vmatprep.subr.mxu0 %v1118
    %3186 = vmatpush1.msra.mxu0 %v1117
    %3187 = vmatprep.subr.mxu0 %v1122
    %3188 = vmatpush1.msra.mxu0 %v1121
    %3189 = vmatprep.subr.mxu0 %v1126
    %3190 = vmatpush1.msra.mxu0 %v1125
    %3191 = vmatprep.subr.mxu0 %v1130
    %3192 = vmatpush1.msra.mxu0 %v1129
    %3193 = vmatprep.subr.mxu0 %v1134
    %3194 = vmatpush1.msra.mxu0 %v1133
    %3195 = vmatprep.subr.mxu0 %v1138
    %3196 = vmatpush1.msra.mxu0 %v1137
    %3197 = vmatprep.subr.mxu0 %v1142
    %3198 = vmatpush1.msra.mxu0 %v1141
    %3199 = vmatprep.subr.mxu0 %v1146
    %3200 = vmatpush1.msra.mxu0 %v1145
    %3201 = vmatprep.subr.mxu0 %v1150
    %3202 = vmatpush1.msra.mxu0 %v1149
    %3203 = vmatprep.subr.mxu0 %v1154
    %3204 = vmatpush1.msra.mxu0 %v1153
    %3205 = vmatprep.subr.mxu0 %v1158
    %3206 = vmatpush1.msra.mxu0 %v1157
    %3207 = vmatprep.mubr.f32.mxu0 %v3140
    %3208 = vmatmul.mubr.f32.gmra.mrb[0].mxu0 %v3139
    %v3209 = vpop.f32.mrb[0].mxu0
    %v3210 = vadd.f32 %v1188, %v3209
    %v3211 = vpop.f32.mrb[0].mxu0
    %v3212 = vadd.f32 %v1192, %v3211
    %3213 = vdwg.mxu0
    %3214 = vmatprep.subr.mxu0 %v1036
    %3215 = vmatpush1.msra.mxu0 %v1035
    %3216 = vmatprep.subr.mxu0 %v1040
    %3217 = vmatpush1.msra.mxu0 %v1039
    %3218 = vmatprep.subr.mxu0 %v1044
    %3219 = vmatpush1.msra.mxu0 %v1043
    %3220 = vmatprep.subr.mxu0 %v1048
    %3221 = vmatpush1.msra.mxu0 %v1047
    %3222 = vmatprep.subr.mxu0 %v1052
    %3223 = vmatpush1.msra.mxu0 %v1051
    %3224 = vmatprep.subr.mxu0 %v1056
    %3225 = vmatpush1.msra.mxu0 %v1055
    %3226 = vmatprep.subr.mxu0 %v1060
    %3227 = vmatpush1.msra.mxu0 %v1059
    %3228 = vmatprep.subr.mxu0 %v1064
    %3229 = vmatpush1.msra.mxu0 %v1063
    %3230 = vmatprep.subr.mxu0 %v1068
    %3231 = vmatpush1.msra.mxu0 %v1067
    %3232 = vmatprep.subr.mxu0 %v1072
    %3233 = vmatpush1.msra.mxu0 %v1071
    %3234 = vmatprep.subr.mxu0 %v1076
    %3235 = vmatpush1.msra.mxu0 %v1075
    %3236 = vmatprep.subr.mxu0 %v1080
    %3237 = vmatpush1.msra.mxu0 %v1079
    %3238 = vmatprep.subr.mxu0 %v1084
    %3239 = vmatpush1.msra.mxu0 %v1083
    %3240 = vmatprep.subr.mxu0 %v1088
    %3241 = vmatpush1.msra.mxu0 %v1087
    %3242 = vmatprep.subr.mxu0 %v1092
    %3243 = vmatpush1.msra.mxu0 %v1091
    %3244 = vmatprep.subr.mxu0 %v1096
    %3245 = vmatpush1.msra.mxu0 %v1095
    %3246 = vmatprep.subr.mxu0 %v1100
    %3247 = vmatpush1.msra.mxu0 %v1099
    %3248 = vmatprep.subr.mxu0 %v1104
    %3249 = vmatpush1.msra.mxu0 %v1103
    %3250 = vmatprep.subr.mxu0 %v1108
    %3251 = vmatpush1.msra.mxu0 %v1107
    %3252 = vmatprep.subr.mxu0 %v1112
    %3253 = vmatpush1.msra.mxu0 %v1111
    %3254 = vmatprep.subr.mxu0 %v1116
    %3255 = vmatpush1.msra.mxu0 %v1115
    %3256 = vmatprep.subr.mxu0 %v1120
    %3257 = vmatpush1.msra.mxu0 %v1119
    %3258 = vmatprep.subr.mxu0 %v1124
    %3259 = vmatpush1.msra.mxu0 %v1123
    %3260 = vmatprep.subr.mxu0 %v1128
    %3261 = vmatpush1.msra.mxu0 %v1127
    %3262 = vmatprep.subr.mxu0 %v1132
    %3263 = vmatpush1.msra.mxu0 %v1131
    %3264 = vmatprep.subr.mxu0 %v1136
    %3265 = vmatpush1.msra.mxu0 %v1135
    %3266 = vmatprep.subr.mxu0 %v1140
    %3267 = vmatpush1.msra.mxu0 %v1139
    %3268 = vmatprep.subr.mxu0 %v1144
    %3269 = vmatpush1.msra.mxu0 %v1143
    %3270 = vmatprep.subr.mxu0 %v1148
    %3271 = vmatpush1.msra.mxu0 %v1147
    %3272 = vmatprep.subr.mxu0 %v1152
    %3273 = vmatpush1.msra.mxu0 %v1151
    %3274 = vmatprep.subr.mxu0 %v1156
    %3275 = vmatpush1.msra.mxu0 %v1155
    %3276 = vmatprep.subr.mxu0 %v1160
    %3277 = vmatpush1.msra.mxu0 %v1159
    %3278 = vmatprep.mubr.f32.mxu0 %v3140
    %3279 = vmatmul.mubr.f32.gmra.mrb[0].mxu0 %v3139
    %v3280 = vpop.f32.mrb[0].mxu0
    %v3281 = vadd.f32 %v1196, %v3280
    %v3282 = vpop.f32.mrb[0].mxu0
    %v3283 = vadd.f32 %v1200, %v3282
    %3284 = vdwg.mxu0
    %v3285 = vxor.u32 %v3061, 2147483648
    %v3286 = vmul.f32 %v3285, 1.442695
    %v3287 = vpow.pop %v3286
    %v3288 = vadd.f32 %v3287, 1.0
    %v3289 = vrcp.pop %v3288
    %v3290 = vmul.f32 1.0, %v3289
    %v3291 = vxor.u32 %v3063, 2147483648
    %v3292 = vmul.f32 %v3291, 1.442695
    %v3293 = vpow.pop %v3292
    %v3294 = vadd.f32 %v3293, 1.0
    %v3295 = vrcp.pop %v3294
    %v3296 = vmul.f32 1.0, %v3295
    %v3297 = vtanh.pop %v3132
    %v3298 = vxor.u32 %v3134, 2147483648
    %v3299 = vmul.f32 %v3298, 1.442695
    %v3300 = vpow.pop %v3299
    %v3301 = vadd.f32 %v3300, 1.0
    %v3302 = vrcp.pop %v3301
    %v3303 = vmul.f32 1.0, %v3302
    %v3304 = vmul.f32 %v3296, %v2582
    %v3305 = vmul.f32 %v3290, %v3297
    %v3306 = vadd.f32 %v3304, %v3305
    %v3307 = vtanh.pop %v3306
    %v3308 = vmul.f32 %v3303, %v3307
    %v3309 = vxor.u32 %v3210, 2147483648
    %v3310 = vmul.f32 %v3309, 1.442695
    %v3311 = vpow.pop %v3310
    %v3312 = vadd.f32 %v3311, 1.0
    %v3313 = vrcp.pop %v3312
    %v3314 = vmul.f32 1.0, %v3313
    %v3315 = vxor.u32 %v3212, 2147483648
    %v3316 = vmul.f32 %v3315, 1.442695
    %v3317 = vpow.pop %v3316
    %v3318 = vadd.f32 %v3317, 1.0
    %v3319 = vrcp.pop %v3318
    %v3320 = vmul.f32 1.0, %v3319
    %v3321 = vtanh.pop %v3281
    %v3322 = vxor.u32 %v3283, 2147483648
    %v3323 = vmul.f32 %v3322, 1.442695
    %v3324 = vpow.pop %v3323
    %v3325 = vadd.f32 %v3324, 1.0
    %v3326 = vrcp.pop %v3325
    %v3327 = vmul.f32 1.0, %v3326
    %v3328 = vmul.f32 %v3320, %v2606
    %v3329 = vmul.f32 %v3314, %v3321
    %v3330 = vadd.f32 %v3328, %v3329
    %v3331 = vtanh.pop %v3330
    %v3332 = vmul.f32 %v3327, %v3331
    %v3333 = vld [vmem:[#allocation2] sm:$0xc0]
    %v3334 = vld [vmem:[#allocation2 + $0x8] sm:$0xc0]
    %v3335 = vld [vmem:[#allocation2 + $0x10] sm:$0xc0]
    %v3336 = vld [vmem:[#allocation2 + $0x18] sm:$0xc0]
    %3337 = vmatprep.subr.mxu0 %v778
    %3338 = vmatpush1.msra.mxu0 %v777
    %3339 = vmatprep.subr.mxu0 %v782
    %3340 = vmatpush1.msra.mxu0 %v781
    %3341 = vmatprep.subr.mxu0 %v786
    %3342 = vmatpush1.msra.mxu0 %v785
    %3343 = vmatprep.subr.mxu0 %v790
    %3344 = vmatpush1.msra.mxu0 %v789
    %3345 = vmatprep.subr.mxu0 %v794
    %3346 = vmatpush1.msra.mxu0 %v793
    %3347 = vmatprep.subr.mxu0 %v798
    %3348 = vmatpush1.msra.mxu0 %v797
    %3349 = vmatprep.subr.mxu0 %v802
    %3350 = vmatpush1.msra.mxu0 %v801
    %3351 = vmatprep.subr.mxu0 %v806
    %3352 = vmatpush1.msra.mxu0 %v805
    %3353 = vmatprep.subr.mxu0 %v810
    %3354 = vmatpush1.msra.mxu0 %v809
    %3355 = vmatprep.subr.mxu0 %v814
    %3356 = vmatpush1.msra.mxu0 %v813
    %3357 = vmatprep.subr.mxu0 %v818
    %3358 = vmatpush1.msra.mxu0 %v817
    %3359 = vmatprep.subr.mxu0 %v822
    %3360 = vmatpush1.msra.mxu0 %v821
    %3361 = vmatprep.subr.mxu0 %v826
    %3362 = vmatpush1.msra.mxu0 %v825
    %3363 = vmatprep.subr.mxu0 %v830
    %3364 = vmatpush1.msra.mxu0 %v829
    %3365 = vmatprep.subr.mxu0 %v834
    %3366 = vmatpush1.msra.mxu0 %v833
    %3367 = vmatprep.subr.mxu0 %v838
    %3368 = vmatpush1.msra.mxu0 %v837
    %3369 = vmatprep.subr.mxu0 0.0
    %3370 = vmatpush1.msra.mxu0 0.0
    %3371 = vmatprep.subr.mxu0 0.0
    %3372 = vmatpush1.msra.mxu0 0.0
    %3373 = vmatprep.subr.mxu0 0.0
    %3374 = vmatpush1.msra.mxu0 0.0
    %3375 = vmatprep.subr.mxu0 0.0
    %3376 = vmatpush1.msra.mxu0 0.0
    %3377 = vmatprep.subr.mxu0 0.0
    %3378 = vmatpush1.msra.mxu0 0.0
    %3379 = vmatprep.subr.mxu0 0.0
    %3380 = vmatpush1.msra.mxu0 0.0
    %3381 = vmatprep.subr.mxu0 0.0
    %3382 = vmatpush1.msra.mxu0 0.0
    %3383 = vmatprep.subr.mxu0 0.0
    %3384 = vmatpush1.msra.mxu0 0.0
    %3385 = vmatprep.subr.mxu0 0.0
    %3386 = vmatpush1.msra.mxu0 0.0
    %3387 = vmatprep.subr.mxu0 0.0
    %3388 = vmatpush1.msra.mxu0 0.0
    %3389 = vmatprep.subr.mxu0 0.0
    %3390 = vmatpush1.msra.mxu0 0.0
    %3391 = vmatprep.subr.mxu0 0.0
    %3392 = vmatpush1.msra.mxu0 0.0
    %3393 = vmatprep.subr.mxu0 0.0
    %3394 = vmatpush1.msra.mxu0 0.0
    %3395 = vmatprep.subr.mxu0 0.0
    %3396 = vmatpush1.msra.mxu0 0.0
    %3397 = vmatprep.subr.mxu0 0.0
    %3398 = vmatpush1.msra.mxu0 0.0
    %3399 = vmatprep.subr.mxu0 0.0
    %3400 = vmatpush1.msra.mxu0 0.0
    %3401 = vmatprep.mubr.f32.mxu0 0.0
    %3402 = vmatmul.mubr.f32.gmra.mrb[0].mxu0 %v2990
    %v3403 = vpop.f32.mrb[0].mxu0
    %v3404 = vadd.f32 0.0, %v3403
    %v3405 = vpop.f32.mrb[0].mxu0
    %v3406 = vadd.f32 0.0, %v3405
    %3407 = vdwg.mxu0
    %3408 = vmatprep.subr.mxu0 %v780
    %3409 = vmatpush1.msra.mxu0 %v779
    %3410 = vmatprep.subr.mxu0 %v784
    %3411 = vmatpush1.msra.mxu0 %v783
    %3412 = vmatprep.subr.mxu0 %v788
    %3413 = vmatpush1.msra.mxu0 %v787
    %3414 = vmatprep.subr.mxu0 %v792
    %3415 = vmatpush1.msra.mxu0 %v791
    %3416 = vmatprep.subr.mxu0 %v796
    %3417 = vmatpush1.msra.mxu0 %v795
    %3418 = vmatprep.subr.mxu0 %v800
    %3419 = vmatpush1.msra.mxu0 %v799
    %3420 = vmatprep.subr.mxu0 %v804
    %3421 = vmatpush1.msra.mxu0 %v803
    %3422 = vmatprep.subr.mxu0 %v808
    %3423 = vmatpush1.msra.mxu0 %v807
    %3424 = vmatprep.subr.mxu0 %v812
    %3425 = vmatpush1.msra.mxu0 %v811
    %3426 = vmatprep.subr.mxu0 %v816
    %3427 = vmatpush1.msra.mxu0 %v815
    %3428 = vmatprep.subr.mxu0 %v820
    %3429 = vmatpush1.msra.mxu0 %v819
    %3430 = vmatprep.subr.mxu0 %v824
    %3431 = vmatpush1.msra.mxu0 %v823
    %3432 = vmatprep.subr.mxu0 %v828
    %3433 = vmatpush1.msra.mxu0 %v827
    %3434 = vmatprep.subr.mxu0 %v832
    %3435 = vmatpush1.msra.mxu0 %v831
    %3436 = vmatprep.subr.mxu0 %v836
    %3437 = vmatpush1.msra.mxu0 %v835
    %3438 = vmatprep.subr.mxu0 %v840
    %3439 = vmatpush1.msra.mxu0 %v839
    %3440 = vmatprep.subr.mxu0 0.0
    %3441 = vmatpush1.msra.mxu0 0.0
    %3442 = vmatprep.subr.mxu0 0.0
    %3443 = vmatpush1.msra.mxu0 0.0
    %3444 = vmatprep.subr.mxu0 0.0
    %3445 = vmatpush1.msra.mxu0 0.0
    %3446 = vmatprep.subr.mxu0 0.0
    %3447 = vmatpush1.msra.mxu0 0.0
    %3448 = vmatprep.subr.mxu0 0.0
    %3449 = vmatpush1.msra.mxu0 0.0
    %3450 = vmatprep.subr.mxu0 0.0
    %3451 = vmatpush1.msra.mxu0 0.0
    %3452 = vmatprep.subr.mxu0 0.0
    %3453 = vmatpush1.msra.mxu0 0.0
    %3454 = vmatprep.subr.mxu0 0.0
    %3455 = vmatpush1.msra.mxu0 0.0
    %3456 = vmatprep.subr.mxu0 0.0
    %3457 = vmatpush1.msra.mxu0 0.0
    %3458 = vmatprep.subr.mxu0 0.0
    %3459 = vmatpush1.msra.mxu0 0.0
    %3460 = vmatprep.subr.mxu0 0.0
    %3461 = vmatpush1.msra.mxu0 0.0
    %3462 = vmatprep.subr.mxu0 0.0
    %3463 = vmatpush1.msra.mxu0 0.0
    %3464 = vmatprep.subr.mxu0 0.0
    %3465 = vmatpush1.msra.mxu0 0.0
    %3466 = vmatprep.subr.mxu0 0.0
    %3467 = vmatpush1.msra.mxu0 0.0
    %3468 = vmatprep.subr.mxu0 0.0
    %3469 = vmatpush1.msra.mxu0 0.0
    %3470 = vmatprep.subr.mxu0 0.0
    %3471 = vmatpush1.msra.mxu0 0.0
    %3472 = vmatprep.mubr.f32.mxu0 0.0
    %3473 = vmatmul.mubr.f32.gmra.mrb[0].mxu0 %v2990
    %v3474 = vpop.f32.mrb[0].mxu0
    %v3475 = vadd.f32 0.0, %v3474
    %v3476 = vpop.f32.mrb[0].mxu0
    %v3477 = vadd.f32 0.0, %v3476
    %3478 = vdwg.mxu0
    %v3483 = vrot.slane %v3404, 2
    %v3484 = vrot.slane %v3406, 2
    %v3485 = vrot.slane %v3475, 2
    %v3486 = vrot.slane %v3477, 2
    %v3491 = vadd.f32 %v3333, %v3483
    %v3492 = vadd.f32 %v3334, %v3484
    %v3493 = vadd.f32 %v3335, %v3485
    %v3494 = vadd.f32 %v3336, %v3486
    %v3495 = vld [vmem:[#allocation3] sm:$0xc0]
    %v3496 = vld [vmem:[#allocation3 + $0x8] sm:$0xc0]
    %v3497 = vld [vmem:[#allocation3 + $0x10] sm:$0xc0]
    %v3498 = vld [vmem:[#allocation3 + $0x18] sm:$0xc0]
    %3499 = vmatprep.subr.mxu0 %v842
    %3500 = vmatpush1.msra.mxu0 %v841
    %3501 = vmatprep.subr.mxu0 %v846
    %3502 = vmatpush1.msra.mxu0 %v845
    %3503 = vmatprep.subr.mxu0 %v850
    %3504 = vmatpush1.msra.mxu0 %v849
    %3505 = vmatprep.subr.mxu0 %v854
    %3506 = vmatpush1.msra.mxu0 %v853
    %3507 = vmatprep.subr.mxu0 %v858
    %3508 = vmatpush1.msra.mxu0 %v857
    %3509 = vmatprep.subr.mxu0 %v862
    %3510 = vmatpush1.msra.mxu0 %v861
    %3511 = vmatprep.subr.mxu0 %v866
    %3512 = vmatpush1.msra.mxu0 %v865
    %3513 = vmatprep.subr.mxu0 %v870
    %3514 = vmatpush1.msra.mxu0 %v869
    %3515 = vmatprep.subr.mxu0 %v874
    %3516 = vmatpush1.msra.mxu0 %v873
    %3517 = vmatprep.subr.mxu0 %v878
    %3518 = vmatpush1.msra.mxu0 %v877
    %3519 = vmatprep.subr.mxu0 %v882
    %3520 = vmatpush1.msra.mxu0 %v881
    %3521 = vmatprep.subr.mxu0 %v886
    %3522 = vmatpush1.msra.mxu0 %v885
    %3523 = vmatprep.subr.mxu0 %v890
    %3524 = vmatpush1.msra.mxu0 %v889
    %3525 = vmatprep.subr.mxu0 %v894
    %3526 = vmatpush1.msra.mxu0 %v893
    %3527 = vmatprep.subr.mxu0 %v898
    %3528 = vmatpush1.msra.mxu0 %v897
    %3529 = vmatprep.subr.mxu0 %v902
    %3530 = vmatpush1.msra.mxu0 %v901
    %3531 = vmatprep.subr.mxu0 0.0
    %3532 = vmatpush1.msra.mxu0 0.0
    %3533 = vmatprep.subr.mxu0 0.0
    %3534 = vmatpush1.msra.mxu0 0.0
    %3535 = vmatprep.subr.mxu0 0.0
    %3536 = vmatpush1.msra.mxu0 0.0
    %3537 = vmatprep.subr.mxu0 0.0
    %3538 = vmatpush1.msra.mxu0 0.0
    %3539 = vmatprep.subr.mxu0 0.0
    %3540 = vmatpush1.msra.mxu0 0.0
    %3541 = vmatprep.subr.mxu0 0.0
    %3542 = vmatpush1.msra.mxu0 0.0
    %3543 = vmatprep.subr.mxu0 0.0
    %3544 = vmatpush1.msra.mxu0 0.0
    %3545 = vmatprep.subr.mxu0 0.0
    %3546 = vmatpush1.msra.mxu0 0.0
    %3547 = vmatprep.subr.mxu0 0.0
    %3548 = vmatpush1.msra.mxu0 0.0
    %3549 = vmatprep.subr.mxu0 0.0
    %3550 = vmatpush1.msra.mxu0 0.0
    %3551 = vmatprep.subr.mxu0 0.0
    %3552 = vmatpush1.msra.mxu0 0.0
    %3553 = vmatprep.subr.mxu0 0.0
    %3554 = vmatpush1.msra.mxu0 0.0
    %3555 = vmatprep.subr.mxu0 0.0
    %3556 = vmatpush1.msra.mxu0 0.0
    %3557 = vmatprep.subr.mxu0 0.0
    %3558 = vmatpush1.msra.mxu0 0.0
    %3559 = vmatprep.subr.mxu0 0.0
    %3560 = vmatpush1.msra.mxu0 0.0
    %3561 = vmatprep.subr.mxu0 0.0
    %3562 = vmatpush1.msra.mxu0 0.0
    %3563 = vmatprep.mubr.f32.mxu0 0.0
    %3564 = vmatmul.mubr.f32.gmra.mrb[0].mxu0 %v3139
    %v3565 = vpop.f32.mrb[0].mxu0
    %v3566 = vadd.f32 0.0, %v3565
    %v3567 = vpop.f32.mrb[0].mxu0
    %v3568 = vadd.f32 0.0, %v3567
    %3569 = vdwg.mxu0
    %3570 = vmatprep.subr.mxu0 %v844
    %3571 = vmatpush1.msra.mxu0 %v843
    %3572 = vmatprep.subr.mxu0 %v848
    %3573 = vmatpush1.msra.mxu0 %v847
    %3574 = vmatprep.subr.mxu0 %v852
    %3575 = vmatpush1.msra.mxu0 %v851
    %3576 = vmatprep.subr.mxu0 %v856
    %3577 = vmatpush1.msra.mxu0 %v855
    %3578 = vmatprep.subr.mxu0 %v860
    %3579 = vmatpush1.msra.mxu0 %v859
    %3580 = vmatprep.subr.mxu0 %v864
    %3581 = vmatpush1.msra.mxu0 %v863
    %3582 = vmatprep.subr.mxu0 %v868
    %3583 = vmatpush1.msra.mxu0 %v867
    %3584 = vmatprep.subr.mxu0 %v872
    %3585 = vmatpush1.msra.mxu0 %v871
    %3586 = vmatprep.subr.mxu0 %v876
    %3587 = vmatpush1.msra.mxu0 %v875
    %3588 = vmatprep.subr.mxu0 %v880
    %3589 = vmatpush1.msra.mxu0 %v879
    %3590 = vmatprep.subr.mxu0 %v884
    %3591 = vmatpush1.msra.mxu0 %v883
    %3592 = vmatprep.subr.mxu0 %v888
    %3593 = vmatpush1.msra.mxu0 %v887
    %3594 = vmatprep.subr.mxu0 %v892
    %3595 = vmatpush1.msra.mxu0 %v891
    %3596 = vmatprep.subr.mxu0 %v896
    %3597 = vmatpush1.msra.mxu0 %v895
    %3598 = vmatprep.subr.mxu0 %v900
    %3599 = vmatpush1.msra.mxu0 %v899
    %3600 = vmatprep.subr.mxu0 %v904
    %3601 = vmatpush1.msra.mxu0 %v903
    %3602 = vmatprep.subr.mxu0 0.0
    %3603 = vmatpush1.msra.mxu0 0.0
    %3604 = vmatprep.subr.mxu0 0.0
    %3605 = vmatpush1.msra.mxu0 0.0
    %3606 = vmatprep.subr.mxu0 0.0
    %3607 = vmatpush1.msra.mxu0 0.0
    %3608 = vmatprep.subr.mxu0 0.0
    %3609 = vmatpush1.msra.mxu0 0.0
    %3610 = vmatprep.subr.mxu0 0.0
    %3611 = vmatpush1.msra.mxu0 0.0
    %3612 = vmatprep.subr.mxu0 0.0
    %3613 = vmatpush1.msra.mxu0 0.0
    %3614 = vmatprep.subr.mxu0 0.0
    %3615 = vmatpush1.msra.mxu0 0.0
    %3616 = vmatprep.subr.mxu0 0.0
    %3617 = vmatpush1.msra.mxu0 0.0
    %3618 = vmatprep.subr.mxu0 0.0
    %3619 = vmatpush1.msra.mxu0 0.0
    %3620 = vmatprep.subr.mxu0 0.0
    %3621 = vmatpush1.msra.mxu0 0.0
    %3622 = vmatprep.subr.mxu0 0.0
    %3623 = vmatpush1.msra.mxu0 0.0
    %3624 = vmatprep.subr.mxu0 0.0
    %3625 = vmatpush1.msra.mxu0 0.0
    %3626 = vmatprep.subr.mxu0 0.0
    %3627 = vmatpush1.msra.mxu0 0.0
    %3628 = vmatprep.subr.mxu0 0.0
    %3629 = vmatpush1.msra.mxu0 0.0
    %3630 = vmatprep.subr.mxu0 0.0
    %3631 = vmatpush1.msra.mxu0 0.0
    %3632 = vmatprep.subr.mxu0 0.0
    %3633 = vmatpush1.msra.mxu0 0.0
    %3634 = vmatprep.mubr.f32.mxu0 0.0
    %3635 = vmatmul.mubr.f32.gmra.mrb[0].mxu0 %v3139
    %v3636 = vpop.f32.mrb[0].mxu0
    %v3637 = vadd.f32 0.0, %v3636
    %v3638 = vpop.f32.mrb[0].mxu0
    %v3639 = vadd.f32 0.0, %v3638
    %3640 = vdwg.mxu0
    %v3645 = vrot.slane %v3566, 2
    %v3646 = vrot.slane %v3568, 2
    %v3647 = vrot.slane %v3637, 2
    %v3648 = vrot.slane %v3639, 2
    %v3653 = vadd.f32 %v3495, %v3645
    %v3654 = vadd.f32 %v3496, %v3646
    %v3655 = vadd.f32 %v3497, %v3647
    %v3656 = vadd.f32 %v3498, %v3648
    %v3657 = vxor.u32 %v3491, 2147483648
    %v3658 = vmul.f32 %v3657, 1.442695
    %v3659 = vpow.pop %v3658
    %v3660 = vadd.f32 %v3659, 1.0
    %v3661 = vrcp.pop %v3660
    %v3662 = vmul.f32 1.0, %v3661
    %v3663 = vxor.u32 %v3492, 2147483648
    %v3664 = vmul.f32 %v3663, 1.442695
    %v3665 = vpow.pop %v3664
    %v3666 = vadd.f32 %v3665, 1.0
    %v3667 = vrcp.pop %v3666
    %v3668 = vmul.f32 1.0, %v3667
    %v3669 = vtanh.pop %v3493
    %v3670 = vxor.u32 %v3494, 2147483648
    %v3671 = vmul.f32 %v3670, 1.442695
    %v3672 = vpow.pop %v3671
    %v3673 = vadd.f32 %v3672, 1.0
    %v3674 = vrcp.pop %v3673
    %v3675 = vmul.f32 1.0, %v3674
    %v3677 = vrot.slane %v2957, 6
    %v3679 = vmul.f32 %v3668, %v3677
    %v3680 = vmul.f32 %v3662, %v3669
    %v3681 = vadd.f32 %v3679, %v3680
    %v3682 = vtanh.pop %v3681
    %v3683 = vmul.f32 %v3675, %v3682
    %v3684 = vxor.u32 %v3653, 2147483648
    %v3685 = vmul.f32 %v3684, 1.442695
    %v3686 = vpow.pop %v3685
    %v3687 = vadd.f32 %v3686, 1.0
    %v3688 = vrcp.pop %v3687
    %v3689 = vmul.f32 1.0, %v3688
    %v3690 = vxor.u32 %v3654, 2147483648
    %v3691 = vmul.f32 %v3690, 1.442695
    %v3692 = vpow.pop %v3691
    %v3693 = vadd.f32 %v3692, 1.0
    %v3694 = vrcp.pop %v3693
    %v3695 = vmul.f32 1.0, %v3694
    %v3696 = vtanh.pop %v3655
    %v3697 = vxor.u32 %v3656, 2147483648
    %v3698 = vmul.f32 %v3697, 1.442695
    %v3699 = vpow.pop %v3698
    %v3700 = vadd.f32 %v3699, 1.0
    %v3701 = vrcp.pop %v3700
    %v3702 = vmul.f32 1.0, %v3701
    %v3704 = vrot.slane %v2984, 6
    %v3706 = vmul.f32 %v3695, %v3704
    %v3707 = vmul.f32 %v3689, %v3696
    %v3708 = vadd.f32 %v3706, %v3707
    %v3709 = vtanh.pop %v3708
    %v3710 = vmul.f32 %v3702, %v3709
    %v3712 = vrot.slane %v3308, 2
    %v3714 = vrot.slane %v3683, 6
    %v3715 = vrot.slane %v3712, 6
    %3718 = vmatprep.subr.mxu0 %v906
    %3719 = vmatpush1.msra.mxu0 %v905
    %3720 = vmatprep.subr.mxu0 %v910
    %3721 = vmatpush1.msra.mxu0 %v909
    %3722 = vmatprep.subr.mxu0 %v914
    %3723 = vmatpush1.msra.mxu0 %v913
    %3724 = vmatprep.subr.mxu0 %v918
    %3725 = vmatpush1.msra.mxu0 %v917
    %3726 = vmatprep.subr.mxu0 %v922
    %3727 = vmatpush1.msra.mxu0 %v921
    %3728 = vmatprep.subr.mxu0 %v926
    %3729 = vmatpush1.msra.mxu0 %v925
    %3730 = vmatprep.subr.mxu0 %v930
    %3731 = vmatpush1.msra.mxu0 %v929
    %3732 = vmatprep.subr.mxu0 %v934
    %3733 = vmatpush1.msra.mxu0 %v933
    %3734 = vmatprep.subr.mxu0 %v938
    %3735 = vmatpush1.msra.mxu0 %v937
    %3736 = vmatprep.subr.mxu0 %v942
    %3737 = vmatpush1.msra.mxu0 %v941
    %3738 = vmatprep.subr.mxu0 %v946
    %3739 = vmatpush1.msra.mxu0 %v945
    %3740 = vmatprep.subr.mxu0 %v950
    %3741 = vmatpush1.msra.mxu0 %v949
    %3742 = vmatprep.subr.mxu0 %v954
    %3743 = vmatpush1.msra.mxu0 %v953
    %3744 = vmatprep.subr.mxu0 %v958
    %3745 = vmatpush1.msra.mxu0 %v957
    %3746 = vmatprep.subr.mxu0 %v962
    %3747 = vmatpush1.msra.mxu0 %v961
    %3748 = vmatprep.subr.mxu0 %v966
    %3749 = vmatpush1.msra.mxu0 %v965
    %3750 = vmatprep.subr.mxu0 %v970
    %3751 = vmatpush1.msra.mxu0 %v969
    %3752 = vmatprep.subr.mxu0 %v974
    %3753 = vmatpush1.msra.mxu0 %v973
    %3754 = vmatprep.subr.mxu0 %v978
    %3755 = vmatpush1.msra.mxu0 %v977
    %3756 = vmatprep.subr.mxu0 %v982
    %3757 = vmatpush1.msra.mxu0 %v981
    %3758 = vmatprep.subr.mxu0 %v986
    %3759 = vmatpush1.msra.mxu0 %v985
    %3760 = vmatprep.subr.mxu0 %v990
    %3761 = vmatpush1.msra.mxu0 %v989
    %3762 = vmatprep.subr.mxu0 %v994
    %3763 = vmatpush1.msra.mxu0 %v993
    %3764 = vmatprep.subr.mxu0 %v998
    %3765 = vmatpush1.msra.mxu0 %v997
    %3766 = vmatprep.subr.mxu0 %v1002
    %3767 = vmatpush1.msra.mxu0 %v1001
    %3768 = vmatprep.subr.mxu0 %v1006
    %3769 = vmatpush1.msra.mxu0 %v1005
    %3770 = vmatprep.subr.mxu0 %v1010
    %3771 = vmatpush1.msra.mxu0 %v1009
    %3772 = vmatprep.subr.mxu0 %v1014
    %3773 = vmatpush1.msra.mxu0 %v1013
    %3774 = vmatprep.subr.mxu0 %v1018
    %3775 = vmatpush1.msra.mxu0 %v1017
    %3776 = vmatprep.subr.mxu0 %v1022
    %3777 = vmatpush1.msra.mxu0 %v1021
    %3778 = vmatprep.subr.mxu0 %v1026
    %3779 = vmatpush1.msra.mxu0 %v1025
    %3780 = vmatprep.subr.mxu0 %v1030
    %3781 = vmatpush1.msra.mxu0 %v1029
    %3782 = vmatprep.mubr.f32.mxu0 %v3715
    %3783 = vmatmul.mubr.f32.gmra.mrb[0].mxu0 %v3714
    %v3784 = vpop.f32.mrb[0].mxu0
    %v3785 = vadd.f32 %v1166, %v3784
    %v3786 = vpop.f32.mrb[0].mxu0
    %v3787 = vadd.f32 %v1170, %v3786
    %3788 = vdwg.mxu0
    %3789 = vmatprep.subr.mxu0 %v908
    %3790 = vmatpush1.msra.mxu0 %v907
    %3791 = vmatprep.subr.mxu0 %v912
    %3792 = vmatpush1.msra.mxu0 %v911
    %3793 = vmatprep.subr.mxu0 %v916
    %3794 = vmatpush1.msra.mxu0 %v915
    %3795 = vmatprep.subr.mxu0 %v920
    %3796 = vmatpush1.msra.mxu0 %v919
    %3797 = vmatprep.subr.mxu0 %v924
    %3798 = vmatpush1.msra.mxu0 %v923
    %3799 = vmatprep.subr.mxu0 %v928
    %3800 = vmatpush1.msra.mxu0 %v927
    %3801 = vmatprep.subr.mxu0 %v932
    %3802 = vmatpush1.msra.mxu0 %v931
    %3803 = vmatprep.subr.mxu0 %v936
    %3804 = vmatpush1.msra.mxu0 %v935
    %3805 = vmatprep.subr.mxu0 %v940
    %3806 = vmatpush1.msra.mxu0 %v939
    %3807 = vmatprep.subr.mxu0 %v944
    %3808 = vmatpush1.msra.mxu0 %v943
    %3809 = vmatprep.subr.mxu0 %v948
    %3810 = vmatpush1.msra.mxu0 %v947
    %3811 = vmatprep.subr.mxu0 %v952
    %3812 = vmatpush1.msra.mxu0 %v951
    %3813 = vmatprep.subr.mxu0 %v956
    %3814 = vmatpush1.msra.mxu0 %v955
    %3815 = vmatprep.subr.mxu0 %v960
    %3816 = vmatpush1.msra.mxu0 %v959
    %3817 = vmatprep.subr.mxu0 %v964
    %3818 = vmatpush1.msra.mxu0 %v963
    %3819 = vmatprep.subr.mxu0 %v968
    %3820 = vmatpush1.msra.mxu0 %v967
    %3821 = vmatprep.subr.mxu0 %v972
    %3822 = vmatpush1.msra.mxu0 %v971
    %3823 = vmatprep.subr.mxu0 %v976
    %3824 = vmatpush1.msra.mxu0 %v975
    %3825 = vmatprep.subr.mxu0 %v980
    %3826 = vmatpush1.msra.mxu0 %v979
    %3827 = vmatprep.subr.mxu0 %v984
    %3828 = vmatpush1.msra.mxu0 %v983
    %3829 = vmatprep.subr.mxu0 %v988
    %3830 = vmatpush1.msra.mxu0 %v987
    %3831 = vmatprep.subr.mxu0 %v992
    %3832 = vmatpush1.msra.mxu0 %v991
    %3833 = vmatprep.subr.mxu0 %v996
    %3834 = vmatpush1.msra.mxu0 %v995
    %3835 = vmatprep.subr.mxu0 %v1000
    %3836 = vmatpush1.msra.mxu0 %v999
    %3837 = vmatprep.subr.mxu0 %v1004
    %3838 = vmatpush1.msra.mxu0 %v1003
    %3839 = vmatprep.subr.mxu0 %v1008
    %3840 = vmatpush1.msra.mxu0 %v1007
    %3841 = vmatprep.subr.mxu0 %v1012
    %3842 = vmatpush1.msra.mxu0 %v1011
    %3843 = vmatprep.subr.mxu0 %v1016
    %3844 = vmatpush1.msra.mxu0 %v1015
    %3845 = vmatprep.subr.mxu0 %v1020
    %3846 = vmatpush1.msra.mxu0 %v1019
    %3847 = vmatprep.subr.mxu0 %v1024
    %3848 = vmatpush1.msra.mxu0 %v1023
    %3849 = vmatprep.subr.mxu0 %v1028
    %3850 = vmatpush1.msra.mxu0 %v1027
    %3851 = vmatprep.subr.mxu0 %v1032
    %3852 = vmatpush1.msra.mxu0 %v1031
    %3853 = vmatprep.mubr.f32.mxu0 %v3715
    %3854 = vmatmul.mubr.f32.gmra.mrb[0].mxu0 %v3714
    %v3855 = vpop.f32.mrb[0].mxu0
    %v3856 = vadd.f32 %v1174, %v3855
    %v3857 = vpop.f32.mrb[0].mxu0
    %v3858 = vadd.f32 %v1178, %v3857
    %3859 = vdwg.mxu0
    %v3861 = vrot.slane %v3332, 2
    %v3863 = vrot.slane %v3710, 6
    %v3864 = vrot.slane %v3861, 6
    %3867 = vmatprep.subr.mxu0 %v1034
    %3868 = vmatpush1.msra.mxu0 %v1033
    %3869 = vmatprep.subr.mxu0 %v1038
    %3870 = vmatpush1.msra.mxu0 %v1037
    %3871 = vmatprep.subr.mxu0 %v1042
    %3872 = vmatpush1.msra.mxu0 %v1041
    %3873 = vmatprep.subr.mxu0 %v1046
    %3874 = vmatpush1.msra.mxu0 %v1045
    %3875 = vmatprep.subr.mxu0 %v1050
    %3876 = vmatpush1.msra.mxu0 %v1049
    %3877 = vmatprep.subr.mxu0 %v1054
    %3878 = vmatpush1.msra.mxu0 %v1053
    %3879 = vmatprep.subr.mxu0 %v1058
    %3880 = vmatpush1.msra.mxu0 %v1057
    %3881 = vmatprep.subr.mxu0 %v1062
    %3882 = vmatpush1.msra.mxu0 %v1061
    %3883 = vmatprep.subr.mxu0 %v1066
    %3884 = vmatpush1.msra.mxu0 %v1065
    %3885 = vmatprep.subr.mxu0 %v1070
    %3886 = vmatpush1.msra.mxu0 %v1069
    %3887 = vmatprep.subr.mxu0 %v1074
    %3888 = vmatpush1.msra.mxu0 %v1073
    %3889 = vmatprep.subr.mxu0 %v1078
    %3890 = vmatpush1.msra.mxu0 %v1077
    %3891 = vmatprep.subr.mxu0 %v1082
    %3892 = vmatpush1.msra.mxu0 %v1081
    %3893 = vmatprep.subr.mxu0 %v1086
    %3894 = vmatpush1.msra.mxu0 %v1085
    %3895 = vmatprep.subr.mxu0 %v1090
    %3896 = vmatpush1.msra.mxu0 %v1089
    %3897 = vmatprep.subr.mxu0 %v1094
    %3898 = vmatpush1.msra.mxu0 %v1093
    %3899 = vmatprep.subr.mxu0 %v1098
    %3900 = vmatpush1.msra.mxu0 %v1097
    %3901 = vmatprep.subr.mxu0 %v1102
    %3902 = vmatpush1.msra.mxu0 %v1101
    %3903 = vmatprep.subr.mxu0 %v1106
    %3904 = vmatpush1.msra.mxu0 %v1105
    %3905 = vmatprep.subr.mxu0 %v1110
    %3906 = vmatpush1.msra.mxu0 %v1109
    %3907 = vmatprep.subr.mxu0 %v1114
    %3908 = vmatpush1.msra.mxu0 %v1113
    %3909 = vmatprep.subr.mxu0 %v1118
    %3910 = vmatpush1.msra.mxu0 %v1117
    %3911 = vmatprep.subr.mxu0 %v1122
    %3912 = vmatpush1.msra.mxu0 %v1121
    %3913 = vmatprep.subr.mxu0 %v1126
    %3914 = vmatpush1.msra.mxu0 %v1125
    %3915 = vmatprep.subr.mxu0 %v1130
    %3916 = vmatpush1.msra.mxu0 %v1129
    %3917 = vmatprep.subr.mxu0 %v1134
    %3918 = vmatpush1.msra.mxu0 %v1133
    %3919 = vmatprep.subr.mxu0 %v1138
    %3920 = vmatpush1.msra.mxu0 %v1137
    %3921 = vmatprep.subr.mxu0 %v1142
    %3922 = vmatpush1.msra.mxu0 %v1141
    %3923 = vmatprep.subr.mxu0 %v1146
    %3924 = vmatpush1.msra.mxu0 %v1145
    %3925 = vmatprep.subr.mxu0 %v1150
    %3926 = vmatpush1.msra.mxu0 %v1149
    %3927 = vmatprep.subr.mxu0 %v1154
    %3928 = vmatpush1.msra.mxu0 %v1153
    %3929 = vmatprep.subr.mxu0 %v1158
    %3930 = vmatpush1.msra.mxu0 %v1157
    %3931 = vmatprep.mubr.f32.mxu0 %v3864
    %3932 = vmatmul.mubr.f32.gmra.mrb[0].mxu0 %v3863
    %v3933 = vpop.f32.mrb[0].mxu0
    %v3934 = vadd.f32 %v1188, %v3933
    %v3935 = vpop.f32.mrb[0].mxu0
    %v3936 = vadd.f32 %v1192, %v3935
    %3937 = vdwg.mxu0
    %3938 = vmatprep.subr.mxu0 %v1036
    %3939 = vmatpush1.msra.mxu0 %v1035
    %3940 = vmatprep.subr.mxu0 %v1040
    %3941 = vmatpush1.msra.mxu0 %v1039
    %3942 = vmatprep.subr.mxu0 %v1044
    %3943 = vmatpush1.msra.mxu0 %v1043
    %3944 = vmatprep.subr.mxu0 %v1048
    %3945 = vmatpush1.msra.mxu0 %v1047
    %3946 = vmatprep.subr.mxu0 %v1052
    %3947 = vmatpush1.msra.mxu0 %v1051
    %3948 = vmatprep.subr.mxu0 %v1056
    %3949 = vmatpush1.msra.mxu0 %v1055
    %3950 = vmatprep.subr.mxu0 %v1060
    %3951 = vmatpush1.msra.mxu0 %v1059
    %3952 = vmatprep.subr.mxu0 %v1064
    %3953 = vmatpush1.msra.mxu0 %v1063
    %3954 = vmatprep.subr.mxu0 %v1068
    %3955 = vmatpush1.msra.mxu0 %v1067
    %3956 = vmatprep.subr.mxu0 %v1072
    %3957 = vmatpush1.msra.mxu0 %v1071
    %3958 = vmatprep.subr.mxu0 %v1076
    %3959 = vmatpush1.msra.mxu0 %v1075
    %3960 = vmatprep.subr.mxu0 %v1080
    %3961 = vmatpush1.msra.mxu0 %v1079
    %3962 = vmatprep.subr.mxu0 %v1084
    %3963 = vmatpush1.msra.mxu0 %v1083
    %3964 = vmatprep.subr.mxu0 %v1088
    %3965 = vmatpush1.msra.mxu0 %v1087
    %3966 = vmatprep.subr.mxu0 %v1092
    %3967 = vmatpush1.msra.mxu0 %v1091
    %3968 = vmatprep.subr.mxu0 %v1096
    %3969 = vmatpush1.msra.mxu0 %v1095
    %3970 = vmatprep.subr.mxu0 %v1100
    %3971 = vmatpush1.msra.mxu0 %v1099
    %3972 = vmatprep.subr.mxu0 %v1104
    %3973 = vmatpush1.msra.mxu0 %v1103
    %3974 = vmatprep.subr.mxu0 %v1108
    %3975 = vmatpush1.msra.mxu0 %v1107
    %3976 = vmatprep.subr.mxu0 %v1112
    %3977 = vmatpush1.msra.mxu0 %v1111
    %3978 = vmatprep.subr.mxu0 %v1116
    %3979 = vmatpush1.msra.mxu0 %v1115
    %3980 = vmatprep.subr.mxu0 %v1120
    %3981 = vmatpush1.msra.mxu0 %v1119
    %3982 = vmatprep.subr.mxu0 %v1124
    %3983 = vmatpush1.msra.mxu0 %v1123
    %3984 = vmatprep.subr.mxu0 %v1128
    %3985 = vmatpush1.msra.mxu0 %v1127
    %3986 = vmatprep.subr.mxu0 %v1132
    %3987 = vmatpush1.msra.mxu0 %v1131
    %3988 = vmatprep.subr.mxu0 %v1136
    %3989 = vmatpush1.msra.mxu0 %v1135
    %3990 = vmatprep.subr.mxu0 %v1140
    %3991 = vmatpush1.msra.mxu0 %v1139
    %3992 = vmatprep.subr.mxu0 %v1144
    %3993 = vmatpush1.msra.mxu0 %v1143
    %3994 = vmatprep.subr.mxu0 %v1148
    %3995 = vmatpush1.msra.mxu0 %v1147
    %3996 = vmatprep.subr.mxu0 %v1152
    %3997 = vmatpush1.msra.mxu0 %v1151
    %3998 = vmatprep.subr.mxu0 %v1156
    %3999 = vmatpush1.msra.mxu0 %v1155
    %4000 = vmatprep.subr.mxu0 %v1160
    %4001 = vmatpush1.msra.mxu0 %v1159
    %4002 = vmatprep.mubr.f32.mxu0 %v3864
    %4003 = vmatmul.mubr.f32.gmra.mrb[0].mxu0 %v3863
    %v4004 = vpop.f32.mrb[0].mxu0
    %v4005 = vadd.f32 %v1196, %v4004
    %v4006 = vpop.f32.mrb[0].mxu0
    %v4007 = vadd.f32 %v1200, %v4006
    %4008 = vdwg.mxu0
    %v4009 = vxor.u32 %v3785, 2147483648
    %v4010 = vmul.f32 %v4009, 1.442695
    %v4011 = vpow.pop %v4010
    %v4012 = vadd.f32 %v4011, 1.0
    %v4013 = vrcp.pop %v4012
    %v4014 = vmul.f32 1.0, %v4013
    %v4015 = vxor.u32 %v3787, 2147483648
    %v4016 = vmul.f32 %v4015, 1.442695
    %v4017 = vpow.pop %v4016
    %v4018 = vadd.f32 %v4017, 1.0
    %v4019 = vrcp.pop %v4018
    %v4020 = vmul.f32 1.0, %v4019
    %v4021 = vtanh.pop %v3856
    %v4022 = vxor.u32 %v3858, 2147483648
    %v4023 = vmul.f32 %v4022, 1.442695
    %v4024 = vpow.pop %v4023
    %v4025 = vadd.f32 %v4024, 1.0
    %v4026 = vrcp.pop %v4025
    %v4027 = vmul.f32 1.0, %v4026
    %v4028 = vmul.f32 %v4020, %v3306
    %v4029 = vmul.f32 %v4014, %v4021
    %v4030 = vadd.f32 %v4028, %v4029
    %v4031 = vtanh.pop %v4030
    %v4032 = vmul.f32 %v4027, %v4031
    %v4033 = vxor.u32 %v3934, 2147483648
    %v4034 = vmul.f32 %v4033, 1.442695
    %v4035 = vpow.pop %v4034
    %v4036 = vadd.f32 %v4035, 1.0
    %v4037 = vrcp.pop %v4036
    %v4038 = vmul.f32 1.0, %v4037
    %v4039 = vxor.u32 %v3936, 2147483648
    %v4040 = vmul.f32 %v4039, 1.442695
    %v4041 = vpow.pop %v4040
    %v4042 = vadd.f32 %v4041, 1.0
    %v4043 = vrcp.pop %v4042
    %v4044 = vmul.f32 1.0, %v4043
    %v4045 = vtanh.pop %v4005
    %v4046 = vxor.u32 %v4007, 2147483648
    %v4047 = vmul.f32 %v4046, 1.442695
    %v4048 = vpow.pop %v4047
    %v4049 = vadd.f32 %v4048, 1.0
    %v4050 = vrcp.pop %v4049
    %v4051 = vmul.f32 1.0, %v4050
    %v4052 = vmul.f32 %v4044, %v3330
    %v4053 = vmul.f32 %v4038, %v4045
    %v4054 = vadd.f32 %v4052, %v4053
    %v4055 = vtanh.pop %v4054
    %v4056 = vmul.f32 %v4051, %v4055
    %v4057 = vld [vmem:[#allocation2 + $0x20] sm:$0x3]
    %v4058 = vld [vmem:[#allocation2 + $0x28] sm:$0x3]
    %v4059 = vld [vmem:[#allocation2 + $0x30] sm:$0x3]
    %v4060 = vld [vmem:[#allocation2 + $0x38] sm:$0x3]
    %4061 = vmatprep.subr.mxu0 %v778
    %4062 = vmatpush1.msra.mxu0 %v777
    %4063 = vmatprep.subr.mxu0 %v782
    %4064 = vmatpush1.msra.mxu0 %v781
    %4065 = vmatprep.subr.mxu0 %v786
    %4066 = vmatpush1.msra.mxu0 %v785
    %4067 = vmatprep.subr.mxu0 %v790
    %4068 = vmatpush1.msra.mxu0 %v789
    %4069 = vmatprep.subr.mxu0 %v794
    %4070 = vmatpush1.msra.mxu0 %v793
    %4071 = vmatprep.subr.mxu0 %v798
    %4072 = vmatpush1.msra.mxu0 %v797
    %4073 = vmatprep.subr.mxu0 %v802
    %4074 = vmatpush1.msra.mxu0 %v801
    %4075 = vmatprep.subr.mxu0 %v806
    %4076 = vmatpush1.msra.mxu0 %v805
    %4077 = vmatprep.subr.mxu0 %v810
    %4078 = vmatpush1.msra.mxu0 %v809
    %4079 = vmatprep.subr.mxu0 %v814
    %4080 = vmatpush1.msra.mxu0 %v813
    %4081 = vmatprep.subr.mxu0 %v818
    %4082 = vmatpush1.msra.mxu0 %v817
    %4083 = vmatprep.subr.mxu0 %v822
    %4084 = vmatpush1.msra.mxu0 %v821
    %4085 = vmatprep.subr.mxu0 %v826
    %4086 = vmatpush1.msra.mxu0 %v825
    %4087 = vmatprep.subr.mxu0 %v830
    %4088 = vmatpush1.msra.mxu0 %v829
    %4089 = vmatprep.subr.mxu0 %v834
    %4090 = vmatpush1.msra.mxu0 %v833
    %4091 = vmatprep.subr.mxu0 %v838
    %4092 = vmatpush1.msra.mxu0 %v837
    %4093 = vmatprep.subr.mxu0 0.0
    %4094 = vmatpush1.msra.mxu0 0.0
    %4095 = vmatprep.subr.mxu0 0.0
    %4096 = vmatpush1.msra.mxu0 0.0
    %4097 = vmatprep.subr.mxu0 0.0
    %4098 = vmatpush1.msra.mxu0 0.0
    %4099 = vmatprep.subr.mxu0 0.0
    %4100 = vmatpush1.msra.mxu0 0.0
    %4101 = vmatprep.subr.mxu0 0.0
    %4102 = vmatpush1.msra.mxu0 0.0
    %4103 = vmatprep.subr.mxu0 0.0
    %4104 = vmatpush1.msra.mxu0 0.0
    %4105 = vmatprep.subr.mxu0 0.0
    %4106 = vmatpush1.msra.mxu0 0.0
    %4107 = vmatprep.subr.mxu0 0.0
    %4108 = vmatpush1.msra.mxu0 0.0
    %4109 = vmatprep.subr.mxu0 0.0
    %4110 = vmatpush1.msra.mxu0 0.0
    %4111 = vmatprep.subr.mxu0 0.0
    %4112 = vmatpush1.msra.mxu0 0.0
    %4113 = vmatprep.subr.mxu0 0.0
    %4114 = vmatpush1.msra.mxu0 0.0
    %4115 = vmatprep.subr.mxu0 0.0
    %4116 = vmatpush1.msra.mxu0 0.0
    %4117 = vmatprep.subr.mxu0 0.0
    %4118 = vmatpush1.msra.mxu0 0.0
    %4119 = vmatprep.subr.mxu0 0.0
    %4120 = vmatpush1.msra.mxu0 0.0
    %4121 = vmatprep.subr.mxu0 0.0
    %4122 = vmatpush1.msra.mxu0 0.0
    %4123 = vmatprep.subr.mxu0 0.0
    %4124 = vmatpush1.msra.mxu0 0.0
    %4125 = vmatprep.mubr.f32.mxu0 0.0
    %4126 = vmatmul.mubr.f32.gmra.mrb[0].mxu0 %v3714
    %v4127 = vpop.f32.mrb[0].mxu0
    %v4128 = vadd.f32 0.0, %v4127
    %v4129 = vpop.f32.mrb[0].mxu0
    %v4130 = vadd.f32 0.0, %v4129
    %4131 = vdwg.mxu0
    %4132 = vmatprep.subr.mxu0 %v780
    %4133 = vmatpush1.msra.mxu0 %v779
    %4134 = vmatprep.subr.mxu0 %v784
    %4135 = vmatpush1.msra.mxu0 %v783
    %4136 = vmatprep.subr.mxu0 %v788
    %4137 = vmatpush1.msra.mxu0 %v787
    %4138 = vmatprep.subr.mxu0 %v792
    %4139 = vmatpush1.msra.mxu0 %v791
    %4140 = vmatprep.subr.mxu0 %v796
    %4141 = vmatpush1.msra.mxu0 %v795
    %4142 = vmatprep.subr.mxu0 %v800
    %4143 = vmatpush1.msra.mxu0 %v799
    %4144 = vmatprep.subr.mxu0 %v804
    %4145 = vmatpush1.msra.mxu0 %v803
    %4146 = vmatprep.subr.mxu0 %v808
    %4147 = vmatpush1.msra.mxu0 %v807
    %4148 = vmatprep.subr.mxu0 %v812
    %4149 = vmatpush1.msra.mxu0 %v811
    %4150 = vmatprep.subr.mxu0 %v816
    %4151 = vmatpush1.msra.mxu0 %v815
    %4152 = vmatprep.subr.mxu0 %v820
    %4153 = vmatpush1.msra.mxu0 %v819
    %4154 = vmatprep.subr.mxu0 %v824
    %4155 = vmatpush1.msra.mxu0 %v823
    %4156 = vmatprep.subr.mxu0 %v828
    %4157 = vmatpush1.msra.mxu0 %v827
    %4158 = vmatprep.subr.mxu0 %v832
    %4159 = vmatpush1.msra.mxu0 %v831
    %4160 = vmatprep.subr.mxu0 %v836
    %4161 = vmatpush1.msra.mxu0 %v835
    %4162 = vmatprep.subr.mxu0 %v840
    %4163 = vmatpush1.msra.mxu0 %v839
    %4164 = vmatprep.subr.mxu0 0.0
    %4165 = vmatpush1.msra.mxu0 0.0
    %4166 = vmatprep.subr.mxu0 0.0
    %4167 = vmatpush1.msra.mxu0 0.0
    %4168 = vmatprep.subr.mxu0 0.0
    %4169 = vmatpush1.msra.mxu0 0.0
    %4170 = vmatprep.subr.mxu0 0.0
    %4171 = vmatpush1.msra.mxu0 0.0
    %4172 = vmatprep.subr.mxu0 0.0
    %4173 = vmatpush1.msra.mxu0 0.0
    %4174 = vmatprep.subr.mxu0 0.0
    %4175 = vmatpush1.msra.mxu0 0.0
    %4176 = vmatprep.subr.mxu0 0.0
    %4177 = vmatpush1.msra.mxu0 0.0
    %4178 = vmatprep.subr.mxu0 0.0
    %4179 = vmatpush1.msra.mxu0 0.0
    %4180 = vmatprep.subr.mxu0 0.0
    %4181 = vmatpush1.msra.mxu0 0.0
    %4182 = vmatprep.subr.mxu0 0.0
    %4183 = vmatpush1.msra.mxu0 0.0
    %4184 = vmatprep.subr.mxu0 0.0
    %4185 = vmatpush1.msra.mxu0 0.0
    %4186 = vmatprep.subr.mxu0 0.0
    %4187 = vmatpush1.msra.mxu0 0.0
    %4188 = vmatprep.subr.mxu0 0.0
    %4189 = vmatpush1.msra.mxu0 0.0
    %4190 = vmatprep.subr.mxu0 0.0
    %4191 = vmatpush1.msra.mxu0 0.0
    %4192 = vmatprep.subr.mxu0 0.0
    %4193 = vmatpush1.msra.mxu0 0.0
    %4194 = vmatprep.subr.mxu0 0.0
    %4195 = vmatpush1.msra.mxu0 0.0
    %4196 = vmatprep.mubr.f32.mxu0 0.0
    %4197 = vmatmul.mubr.f32.gmra.mrb[0].mxu0 %v3714
    %v4198 = vpop.f32.mrb[0].mxu0
    %v4199 = vadd.f32 0.0, %v4198
    %v4200 = vpop.f32.mrb[0].mxu0
    %v4201 = vadd.f32 0.0, %v4200
    %4202 = vdwg.mxu0
    %v4203 = vadd.f32 %v4057, %v4128
    %v4204 = vadd.f32 %v4058, %v4130
    %v4205 = vadd.f32 %v4059, %v4199
    %v4206 = vadd.f32 %v4060, %v4201
    %v4207 = vld [vmem:[#allocation3 + $0x20] sm:$0x3]
    %v4208 = vld [vmem:[#allocation3 + $0x28] sm:$0x3]
    %v4209 = vld [vmem:[#allocation3 + $0x30] sm:$0x3]
    %v4210 = vld [vmem:[#allocation3 + $0x38] sm:$0x3]
    %4211 = vmatprep.subr.mxu0 %v842
    %4212 = vmatpush1.msra.mxu0 %v841
    %4213 = vmatprep.subr.mxu0 %v846
    %4214 = vmatpush1.msra.mxu0 %v845
    %4215 = vmatprep.subr.mxu0 %v850
    %4216 = vmatpush1.msra.mxu0 %v849
    %4217 = vmatprep.subr.mxu0 %v854
    %4218 = vmatpush1.msra.mxu0 %v853
    %4219 = vmatprep.subr.mxu0 %v858
    %4220 = vmatpush1.msra.mxu0 %v857
    %4221 = vmatprep.subr.mxu0 %v862
    %4222 = vmatpush1.msra.mxu0 %v861
    %4223 = vmatprep.subr.mxu0 %v866
    %4224 = vmatpush1.msra.mxu0 %v865
    %4225 = vmatprep.subr.mxu0 %v870
    %4226 = vmatpush1.msra.mxu0 %v869
    %4227 = vmatprep.subr.mxu0 %v874
    %4228 = vmatpush1.msra.mxu0 %v873
    %4229 = vmatprep.subr.mxu0 %v878
    %4230 = vmatpush1.msra.mxu0 %v877
    %4231 = vmatprep.subr.mxu0 %v882
    %4232 = vmatpush1.msra.mxu0 %v881
    %4233 = vmatprep.subr.mxu0 %v886
    %4234 = vmatpush1.msra.mxu0 %v885
    %4235 = vmatprep.subr.mxu0 %v890
    %4236 = vmatpush1.msra.mxu0 %v889
    %4237 = vmatprep.subr.mxu0 %v894
    %4238 = vmatpush1.msra.mxu0 %v893
    %4239 = vmatprep.subr.mxu0 %v898
    %4240 = vmatpush1.msra.mxu0 %v897
    %4241 = vmatprep.subr.mxu0 %v902
    %4242 = vmatpush1.msra.mxu0 %v901
    %4243 = vmatprep.subr.mxu0 0.0
    %4244 = vmatpush1.msra.mxu0 0.0
    %4245 = vmatprep.subr.mxu0 0.0
    %4246 = vmatpush1.msra.mxu0 0.0
    %4247 = vmatprep.subr.mxu0 0.0
    %4248 = vmatpush1.msra.mxu0 0.0
    %4249 = vmatprep.subr.mxu0 0.0
    %4250 = vmatpush1.msra.mxu0 0.0
    %4251 = vmatprep.subr.mxu0 0.0
    %4252 = vmatpush1.msra.mxu0 0.0
    %4253 = vmatprep.subr.mxu0 0.0
    %4254 = vmatpush1.msra.mxu0 0.0
    %4255 = vmatprep.subr.mxu0 0.0
    %4256 = vmatpush1.msra.mxu0 0.0
    %4257 = vmatprep.subr.mxu0 0.0
    %4258 = vmatpush1.msra.mxu0 0.0
    %4259 = vmatprep.subr.mxu0 0.0
    %4260 = vmatpush1.msra.mxu0 0.0
    %4261 = vmatprep.subr.mxu0 0.0
    %4262 = vmatpush1.msra.mxu0 0.0
    %4263 = vmatprep.subr.mxu0 0.0
    %4264 = vmatpush1.msra.mxu0 0.0
    %4265 = vmatprep.subr.mxu0 0.0
    %4266 = vmatpush1.msra.mxu0 0.0
    %4267 = vmatprep.subr.mxu0 0.0
    %4268 = vmatpush1.msra.mxu0 0.0
    %4269 = vmatprep.subr.mxu0 0.0
    %4270 = vmatpush1.msra.mxu0 0.0
    %4271 = vmatprep.subr.mxu0 0.0
    %4272 = vmatpush1.msra.mxu0 0.0
    %4273 = vmatprep.subr.mxu0 0.0
    %4274 = vmatpush1.msra.mxu0 0.0
    %4275 = vmatprep.mubr.f32.mxu0 0.0
    %4276 = vmatmul.mubr.f32.gmra.mrb[0].mxu0 %v3863
    %v4277 = vpop.f32.mrb[0].mxu0
    %v4278 = vadd.f32 0.0, %v4277
    %v4279 = vpop.f32.mrb[0].mxu0
    %v4280 = vadd.f32 0.0, %v4279
    %4281 = vdwg.mxu0
    %4282 = vmatprep.subr.mxu0 %v844
    %4283 = vmatpush1.msra.mxu0 %v843
    %4284 = vmatprep.subr.mxu0 %v848
    %4285 = vmatpush1.msra.mxu0 %v847
    %4286 = vmatprep.subr.mxu0 %v852
    %4287 = vmatpush1.msra.mxu0 %v851
    %4288 = vmatprep.subr.mxu0 %v856
    %4289 = vmatpush1.msra.mxu0 %v855
    %4290 = vmatprep.subr.mxu0 %v860
    %4291 = vmatpush1.msra.mxu0 %v859
    %4292 = vmatprep.subr.mxu0 %v864
    %4293 = vmatpush1.msra.mxu0 %v863
    %4294 = vmatprep.subr.mxu0 %v868
    %4295 = vmatpush1.msra.mxu0 %v867
    %4296 = vmatprep.subr.mxu0 %v872
    %4297 = vmatpush1.msra.mxu0 %v871
    %4298 = vmatprep.subr.mxu0 %v876
    %4299 = vmatpush1.msra.mxu0 %v875
    %4300 = vmatprep.subr.mxu0 %v880
    %4301 = vmatpush1.msra.mxu0 %v879
    %4302 = vmatprep.subr.mxu0 %v884
    %4303 = vmatpush1.msra.mxu0 %v883
    %4304 = vmatprep.subr.mxu0 %v888
    %4305 = vmatpush1.msra.mxu0 %v887
    %4306 = vmatprep.subr.mxu0 %v892
    %4307 = vmatpush1.msra.mxu0 %v891
    %4308 = vmatprep.subr.mxu0 %v896
    %4309 = vmatpush1.msra.mxu0 %v895
    %4310 = vmatprep.subr.mxu0 %v900
    %4311 = vmatpush1.msra.mxu0 %v899
    %4312 = vmatprep.subr.mxu0 %v904
    %4313 = vmatpush1.msra.mxu0 %v903
    %4314 = vmatprep.subr.mxu0 0.0
    %4315 = vmatpush1.msra.mxu0 0.0
    %4316 = vmatprep.subr.mxu0 0.0
    %4317 = vmatpush1.msra.mxu0 0.0
    %4318 = vmatprep.subr.mxu0 0.0
    %4319 = vmatpush1.msra.mxu0 0.0
    %4320 = vmatprep.subr.mxu0 0.0
    %4321 = vmatpush1.msra.mxu0 0.0
    %4322 = vmatprep.subr.mxu0 0.0
    %4323 = vmatpush1.msra.mxu0 0.0
    %4324 = vmatprep.subr.mxu0 0.0
    %4325 = vmatpush1.msra.mxu0 0.0
    %4326 = vmatprep.subr.mxu0 0.0
    %4327 = vmatpush1.msra.mxu0 0.0
    %4328 = vmatprep.subr.mxu0 0.0
    %4329 = vmatpush1.msra.mxu0 0.0
    %4330 = vmatprep.subr.mxu0 0.0
    %4331 = vmatpush1.msra.mxu0 0.0
    %4332 = vmatprep.subr.mxu0 0.0
    %4333 = vmatpush1.msra.mxu0 0.0
    %4334 = vmatprep.subr.mxu0 0.0
    %4335 = vmatpush1.msra.mxu0 0.0
    %4336 = vmatprep.subr.mxu0 0.0
    %4337 = vmatpush1.msra.mxu0 0.0
    %4338 = vmatprep.subr.mxu0 0.0
    %4339 = vmatpush1.msra.mxu0 0.0
    %4340 = vmatprep.subr.mxu0 0.0
    %4341 = vmatpush1.msra.mxu0 0.0
    %4342 = vmatprep.subr.mxu0 0.0
    %4343 = vmatpush1.msra.mxu0 0.0
    %4344 = vmatprep.subr.mxu0 0.0
    %4345 = vmatpush1.msra.mxu0 0.0
    %4346 = vmatprep.mubr.f32.mxu0 0.0
    %4347 = vmatmul.mubr.f32.gmra.mrb[0].mxu0 %v3863
    %v4348 = vpop.f32.mrb[0].mxu0
    %v4349 = vadd.f32 0.0, %v4348
    %v4350 = vpop.f32.mrb[0].mxu0
    %v4351 = vadd.f32 0.0, %v4350
    %4352 = vdwg.mxu0
    %v4353 = vadd.f32 %v4207, %v4278
    %v4354 = vadd.f32 %v4208, %v4280
    %v4355 = vadd.f32 %v4209, %v4349
    %v4356 = vadd.f32 %v4210, %v4351
    %v4357 = vxor.u32 %v4203, 2147483648
    %v4358 = vmul.f32 %v4357, 1.442695
    %v4359 = vpow.pop %v4358
    %v4360 = vadd.f32 %v4359, 1.0
    %v4361 = vrcp.pop %v4360
    %v4362 = vmul.f32 1.0, %v4361
    %v4363 = vxor.u32 %v4204, 2147483648
    %v4364 = vmul.f32 %v4363, 1.442695
    %v4365 = vpow.pop %v4364
    %v4366 = vadd.f32 %v4365, 1.0
    %v4367 = vrcp.pop %v4366
    %v4368 = vmul.f32 1.0, %v4367
    %v4369 = vtanh.pop %v4205
    %v4370 = vxor.u32 %v4206, 2147483648
    %v4371 = vmul.f32 %v4370, 1.442695
    %v4372 = vpow.pop %v4371
    %v4373 = vadd.f32 %v4372, 1.0
    %v4374 = vrcp.pop %v4373
    %v4375 = vmul.f32 1.0, %v4374
    %v4377 = vrot.slane %v3681, 6
    %v4379 = vmul.f32 %v4368, %v4377
    %v4380 = vmul.f32 %v4362, %v4369
    %v4381 = vadd.f32 %v4379, %v4380
    %v4382 = vtanh.pop %v4381
    %v4383 = vmul.f32 %v4375, %v4382
    %v4384 = vxor.u32 %v4353, 2147483648
    %v4385 = vmul.f32 %v4384, 1.442695
    %v4386 = vpow.pop %v4385
    %v4387 = vadd.f32 %v4386, 1.0
    %v4388 = vrcp.pop %v4387
    %v4389 = vmul.f32 1.0, %v4388
    %v4390 = vxor.u32 %v4354, 2147483648
    %v4391 = vmul.f32 %v4390, 1.442695
    %v4392 = vpow.pop %v4391
    %v4393 = vadd.f32 %v4392, 1.0
    %v4394 = vrcp.pop %v4393
    %v4395 = vmul.f32 1.0, %v4394
    %v4396 = vtanh.pop %v4355
    %v4397 = vxor.u32 %v4356, 2147483648
    %v4398 = vmul.f32 %v4397, 1.442695
    %v4399 = vpow.pop %v4398
    %v4400 = vadd.f32 %v4399, 1.0
    %v4401 = vrcp.pop %v4400
    %v4402 = vmul.f32 1.0, %v4401
    %v4404 = vrot.slane %v3708, 6
    %v4406 = vmul.f32 %v4395, %v4404
    %v4407 = vmul.f32 %v4389, %v4396
    %v4408 = vadd.f32 %v4406, %v4407
    %v4409 = vtanh.pop %v4408
    %v4410 = vmul.f32 %v4402, %v4409
    %4411 = vmatprep.subr.mxu0 %v906
    %4412 = vmatpush1.msra.mxu0 %v905
    %4413 = vmatprep.subr.mxu0 %v910
    %4414 = vmatpush1.msra.mxu0 %v909
    %4415 = vmatprep.subr.mxu0 %v914
    %4416 = vmatpush1.msra.mxu0 %v913
    %4417 = vmatprep.subr.mxu0 %v918
    %4418 = vmatpush1.msra.mxu0 %v917
    %4419 = vmatprep.subr.mxu0 %v922
    %4420 = vmatpush1.msra.mxu0 %v921
    %4421 = vmatprep.subr.mxu0 %v926
    %4422 = vmatpush1.msra.mxu0 %v925
    %4423 = vmatprep.subr.mxu0 %v930
    %4424 = vmatpush1.msra.mxu0 %v929
    %4425 = vmatprep.subr.mxu0 %v934
    %4426 = vmatpush1.msra.mxu0 %v933
    %4427 = vmatprep.subr.mxu0 %v938
    %4428 = vmatpush1.msra.mxu0 %v937
    %4429 = vmatprep.subr.mxu0 %v942
    %4430 = vmatpush1.msra.mxu0 %v941
    %4431 = vmatprep.subr.mxu0 %v946
    %4432 = vmatpush1.msra.mxu0 %v945
    %4433 = vmatprep.subr.mxu0 %v950
    %4434 = vmatpush1.msra.mxu0 %v949
    %4435 = vmatprep.subr.mxu0 %v954
    %4436 = vmatpush1.msra.mxu0 %v953
    %4437 = vmatprep.subr.mxu0 %v958
    %4438 = vmatpush1.msra.mxu0 %v957
    %4439 = vmatprep.subr.mxu0 %v962
    %4440 = vmatpush1.msra.mxu0 %v961
    %4441 = vmatprep.subr.mxu0 %v966
    %4442 = vmatpush1.msra.mxu0 %v965
    %4443 = vmatprep.subr.mxu0 %v970
    %4444 = vmatpush1.msra.mxu0 %v969
    %4445 = vmatprep.subr.mxu0 %v974
    %4446 = vmatpush1.msra.mxu0 %v973
    %4447 = vmatprep.subr.mxu0 %v978
    %4448 = vmatpush1.msra.mxu0 %v977
    %4449 = vmatprep.subr.mxu0 %v982
    %4450 = vmatpush1.msra.mxu0 %v981
    %4451 = vmatprep.subr.mxu0 %v986
    %4452 = vmatpush1.msra.mxu0 %v985
    %4453 = vmatprep.subr.mxu0 %v990
    %4454 = vmatpush1.msra.mxu0 %v989
    %4455 = vmatprep.subr.mxu0 %v994
    %4456 = vmatpush1.msra.mxu0 %v993
    %4457 = vmatprep.subr.mxu0 %v998
    %4458 = vmatpush1.msra.mxu0 %v997
    %4459 = vmatprep.subr.mxu0 %v1002
    %4460 = vmatpush1.msra.mxu0 %v1001
    %4461 = vmatprep.subr.mxu0 %v1006
    %4462 = vmatpush1.msra.mxu0 %v1005
    %4463 = vmatprep.subr.mxu0 %v1010
    %4464 = vmatpush1.msra.mxu0 %v1009
    %4465 = vmatprep.subr.mxu0 %v1014
    %4466 = vmatpush1.msra.mxu0 %v1013
    %4467 = vmatprep.subr.mxu0 %v1018
    %4468 = vmatpush1.msra.mxu0 %v1017
    %4469 = vmatprep.subr.mxu0 %v1022
    %4470 = vmatpush1.msra.mxu0 %v1021
    %4471 = vmatprep.subr.mxu0 %v1026
    %4472 = vmatpush1.msra.mxu0 %v1025
    %4473 = vmatprep.subr.mxu0 %v1030
    %4474 = vmatpush1.msra.mxu0 %v1029
    %4475 = vmatprep.mubr.f32.mxu0 %v4032
    %4476 = vmatmul.mubr.f32.gmra.mrb[0].mxu0 %v4383
    %v4477 = vpop.f32.mrb[0].mxu0
    %v4478 = vadd.f32 %v1166, %v4477
    %v4479 = vpop.f32.mrb[0].mxu0
    %v4480 = vadd.f32 %v1170, %v4479
    %4481 = vdwg.mxu0
    %4482 = vmatprep.subr.mxu0 %v908
    %4483 = vmatpush1.msra.mxu0 %v907
    %4484 = vmatprep.subr.mxu0 %v912
    %4485 = vmatpush1.msra.mxu0 %v911
    %4486 = vmatprep.subr.mxu0 %v916
    %4487 = vmatpush1.msra.mxu0 %v915
    %4488 = vmatprep.subr.mxu0 %v920
    %4489 = vmatpush1.msra.mxu0 %v919
    %4490 = vmatprep.subr.mxu0 %v924
    %4491 = vmatpush1.msra.mxu0 %v923
    %4492 = vmatprep.subr.mxu0 %v928
    %4493 = vmatpush1.msra.mxu0 %v927
    %4494 = vmatprep.subr.mxu0 %v932
    %4495 = vmatpush1.msra.mxu0 %v931
    %4496 = vmatprep.subr.mxu0 %v936
    %4497 = vmatpush1.msra.mxu0 %v935
    %4498 = vmatprep.subr.mxu0 %v940
    %4499 = vmatpush1.msra.mxu0 %v939
    %4500 = vmatprep.subr.mxu0 %v944
    %4501 = vmatpush1.msra.mxu0 %v943
    %4502 = vmatprep.subr.mxu0 %v948
    %4503 = vmatpush1.msra.mxu0 %v947
    %4504 = vmatprep.subr.mxu0 %v952
    %4505 = vmatpush1.msra.mxu0 %v951
    %4506 = vmatprep.subr.mxu0 %v956
    %4507 = vmatpush1.msra.mxu0 %v955
    %4508 = vmatprep.subr.mxu0 %v960
    %4509 = vmatpush1.msra.mxu0 %v959
    %4510 = vmatprep.subr.mxu0 %v964
    %4511 = vmatpush1.msra.mxu0 %v963
    %4512 = vmatprep.subr.mxu0 %v968
    %4513 = vmatpush1.msra.mxu0 %v967
    %4514 = vmatprep.subr.mxu0 %v972
    %4515 = vmatpush1.msra.mxu0 %v971
    %4516 = vmatprep.subr.mxu0 %v976
    %4517 = vmatpush1.msra.mxu0 %v975
    %4518 = vmatprep.subr.mxu0 %v980
    %4519 = vmatpush1.msra.mxu0 %v979
    %4520 = vmatprep.subr.mxu0 %v984
    %4521 = vmatpush1.msra.mxu0 %v983
    %4522 = vmatprep.subr.mxu0 %v988
    %4523 = vmatpush1.msra.mxu0 %v987
    %4524 = vmatprep.subr.mxu0 %v992
    %4525 = vmatpush1.msra.mxu0 %v991
    %4526 = vmatprep.subr.mxu0 %v996
    %4527 = vmatpush1.msra.mxu0 %v995
    %4528 = vmatprep.subr.mxu0 %v1000
    %4529 = vmatpush1.msra.mxu0 %v999
    %4530 = vmatprep.subr.mxu0 %v1004
    %4531 = vmatpush1.msra.mxu0 %v1003
    %4532 = vmatprep.subr.mxu0 %v1008
    %4533 = vmatpush1.msra.mxu0 %v1007
    %4534 = vmatprep.subr.mxu0 %v1012
    %4535 = vmatpush1.msra.mxu0 %v1011
    %4536 = vmatprep.subr.mxu0 %v1016
    %4537 = vmatpush1.msra.mxu0 %v1015
    %4538 = vmatprep.subr.mxu0 %v1020
    %4539 = vmatpush1.msra.mxu0 %v1019
    %4540 = vmatprep.subr.mxu0 %v1024
    %4541 = vmatpush1.msra.mxu0 %v1023
    %4542 = vmatprep.subr.mxu0 %v1028
    %4543 = vmatpush1.msra.mxu0 %v1027
    %4544 = vmatprep.subr.mxu0 %v1032
    %4545 = vmatpush1.msra.mxu0 %v1031
    %4546 = vmatprep.mubr.f32.mxu0 %v4032
    %4547 = vmatmul.mubr.f32.gmra.mrb[0].mxu0 %v4383
    %v4548 = vpop.f32.mrb[0].mxu0
    %v4549 = vadd.f32 %v1174, %v4548
    %v4550 = vpop.f32.mrb[0].mxu0
    %v4551 = vadd.f32 %v1178, %v4550
    %4552 = vdwg.mxu0
    %4553 = vmatprep.subr.mxu0 %v1034
    %4554 = vmatpush1.msra.mxu0 %v1033
    %4555 = vmatprep.subr.mxu0 %v1038
    %4556 = vmatpush1.msra.mxu0 %v1037
    %4557 = vmatprep.subr.mxu0 %v1042
    %4558 = vmatpush1.msra.mxu0 %v1041
    %4559 = vmatprep.subr.mxu0 %v1046
    %4560 = vmatpush1.msra.mxu0 %v1045
    %4561 = vmatprep.subr.mxu0 %v1050
    %4562 = vmatpush1.msra.mxu0 %v1049
    %4563 = vmatprep.subr.mxu0 %v1054
    %4564 = vmatpush1.msra.mxu0 %v1053
    %4565 = vmatprep.subr.mxu0 %v1058
    %4566 = vmatpush1.msra.mxu0 %v1057
    %4567 = vmatprep.subr.mxu0 %v1062
    %4568 = vmatpush1.msra.mxu0 %v1061
    %4569 = vmatprep.subr.mxu0 %v1066
    %4570 = vmatpush1.msra.mxu0 %v1065
    %4571 = vmatprep.subr.mxu0 %v1070
    %4572 = vmatpush1.msra.mxu0 %v1069
    %4573 = vmatprep.subr.mxu0 %v1074
    %4574 = vmatpush1.msra.mxu0 %v1073
    %4575 = vmatprep.subr.mxu0 %v1078
    %4576 = vmatpush1.msra.mxu0 %v1077
    %4577 = vmatprep.subr.mxu0 %v1082
    %4578 = vmatpush1.msra.mxu0 %v1081
    %4579 = vmatprep.subr.mxu0 %v1086
    %4580 = vmatpush1.msra.mxu0 %v1085
    %4581 = vmatprep.subr.mxu0 %v1090
    %4582 = vmatpush1.msra.mxu0 %v1089
    %4583 = vmatprep.subr.mxu0 %v1094
    %4584 = vmatpush1.msra.mxu0 %v1093
    %4585 = vmatprep.subr.mxu0 %v1098
    %4586 = vmatpush1.msra.mxu0 %v1097
    %4587 = vmatprep.subr.mxu0 %v1102
    %4588 = vmatpush1.msra.mxu0 %v1101
    %4589 = vmatprep.subr.mxu0 %v1106
    %4590 = vmatpush1.msra.mxu0 %v1105
    %4591 = vmatprep.subr.mxu0 %v1110
    %4592 = vmatpush1.msra.mxu0 %v1109
    %4593 = vmatprep.subr.mxu0 %v1114
    %4594 = vmatpush1.msra.mxu0 %v1113
    %4595 = vmatprep.subr.mxu0 %v1118
    %4596 = vmatpush1.msra.mxu0 %v1117
    %4597 = vmatprep.subr.mxu0 %v1122
    %4598 = vmatpush1.msra.mxu0 %v1121
    %4599 = vmatprep.subr.mxu0 %v1126
    %4600 = vmatpush1.msra.mxu0 %v1125
    %4601 = vmatprep.subr.mxu0 %v1130
    %4602 = vmatpush1.msra.mxu0 %v1129
    %4603 = vmatprep.subr.mxu0 %v1134
    %4604 = vmatpush1.msra.mxu0 %v1133
    %4605 = vmatprep.subr.mxu0 %v1138
    %4606 = vmatpush1.msra.mxu0 %v1137
    %4607 = vmatprep.subr.mxu0 %v1142
    %4608 = vmatpush1.msra.mxu0 %v1141
    %4609 = vmatprep.subr.mxu0 %v1146
    %4610 = vmatpush1.msra.mxu0 %v1145
    %4611 = vmatprep.subr.mxu0 %v1150
    %4612 = vmatpush1.msra.mxu0 %v1149
    %4613 = vmatprep.subr.mxu0 %v1154
    %4614 = vmatpush1.msra.mxu0 %v1153
    %4615 = vmatprep.subr.mxu0 %v1158
    %4616 = vmatpush1.msra.mxu0 %v1157
    %4617 = vmatprep.mubr.f32.mxu0 %v4056
    %4618 = vmatmul.mubr.f32.gmra.mrb[0].mxu0 %v4410
    %v4619 = vpop.f32.mrb[0].mxu0
    %v4620 = vadd.f32 %v1188, %v4619
    %v4621 = vpop.f32.mrb[0].mxu0
    %v4622 = vadd.f32 %v1192, %v4621
    %4623 = vdwg.mxu0
    %4624 = vmatprep.subr.mxu0 %v1036
    %4625 = vmatpush1.msra.mxu0 %v1035
    %4626 = vmatprep.subr.mxu0 %v1040
    %4627 = vmatpush1.msra.mxu0 %v1039
    %4628 = vmatprep.subr.mxu0 %v1044
    %4629 = vmatpush1.msra.mxu0 %v1043
    %4630 = vmatprep.subr.mxu0 %v1048
    %4631 = vmatpush1.msra.mxu0 %v1047
    %4632 = vmatprep.subr.mxu0 %v1052
    %4633 = vmatpush1.msra.mxu0 %v1051
    %4634 = vmatprep.subr.mxu0 %v1056
    %4635 = vmatpush1.msra.mxu0 %v1055
    %4636 = vmatprep.subr.mxu0 %v1060
    %4637 = vmatpush1.msra.mxu0 %v1059
    %4638 = vmatprep.subr.mxu0 %v1064
    %4639 = vmatpush1.msra.mxu0 %v1063
    %4640 = vmatprep.subr.mxu0 %v1068
    %4641 = vmatpush1.msra.mxu0 %v1067
    %4642 = vmatprep.subr.mxu0 %v1072
    %4643 = vmatpush1.msra.mxu0 %v1071
    %4644 = vmatprep.subr.mxu0 %v1076
    %4645 = vmatpush1.msra.mxu0 %v1075
    %4646 = vmatprep.subr.mxu0 %v1080
    %4647 = vmatpush1.msra.mxu0 %v1079
    %4648 = vmatprep.subr.mxu0 %v1084
    %4649 = vmatpush1.msra.mxu0 %v1083
    %4650 = vmatprep.subr.mxu0 %v1088
    %4651 = vmatpush1.msra.mxu0 %v1087
    %4652 = vmatprep.subr.mxu0 %v1092
    %4653 = vmatpush1.msra.mxu0 %v1091
    %4654 = vmatprep.subr.mxu0 %v1096
    %4655 = vmatpush1.msra.mxu0 %v1095
    %4656 = vmatprep.subr.mxu0 %v1100
    %4657 = vmatpush1.msra.mxu0 %v1099
    %4658 = vmatprep.subr.mxu0 %v1104
    %4659 = vmatpush1.msra.mxu0 %v1103
    %4660 = vmatprep.subr.mxu0 %v1108
    %4661 = vmatpush1.msra.mxu0 %v1107
    %4662 = vmatprep.subr.mxu0 %v1112
    %4663 = vmatpush1.msra.mxu0 %v1111
    %4664 = vmatprep.subr.mxu0 %v1116
    %4665 = vmatpush1.msra.mxu0 %v1115
    %4666 = vmatprep.subr.mxu0 %v1120
    %4667 = vmatpush1.msra.mxu0 %v1119
    %4668 = vmatprep.subr.mxu0 %v1124
    %4669 = vmatpush1.msra.mxu0 %v1123
    %4670 = vmatprep.subr.mxu0 %v1128
    %4671 = vmatpush1.msra.mxu0 %v1127
    %4672 = vmatprep.subr.mxu0 %v1132
    %4673 = vmatpush1.msra.mxu0 %v1131
    %4674 = vmatprep.subr.mxu0 %v1136
    %4675 = vmatpush1.msra.mxu0 %v1135
    %4676 = vmatprep.subr.mxu0 %v1140
    %4677 = vmatpush1.msra.mxu0 %v1139
    %4678 = vmatprep.subr.mxu0 %v1144
    %4679 = vmatpush1.msra.mxu0 %v1143
    %4680 = vmatprep.subr.mxu0 %v1148
    %4681 = vmatpush1.msra.mxu0 %v1147
    %4682 = vmatprep.subr.mxu0 %v1152
    %4683 = vmatpush1.msra.mxu0 %v1151
    %4684 = vmatprep.subr.mxu0 %v1156
    %4685 = vmatpush1.msra.mxu0 %v1155
    %4686 = vmatprep.subr.mxu0 %v1160
    %4687 = vmatpush1.msra.mxu0 %v1159
    %4688 = vmatprep.mubr.f32.mxu0 %v4056
    %4689 = vmatmul.mubr.f32.gmra.mrb[0].mxu0 %v4410
    %v4690 = vpop.f32.mrb[0].mxu0
    %v4691 = vadd.f32 %v1196, %v4690
    %v4692 = vpop.f32.mrb[0].mxu0
    %v4693 = vadd.f32 %v1200, %v4692
    %4694 = vdwg.mxu0
    %v4695 = vxor.u32 %v4478, 2147483648
    %v4696 = vmul.f32 %v4695, 1.442695
    %v4697 = vpow.pop %v4696
    %v4698 = vadd.f32 %v4697, 1.0
    %v4699 = vrcp.pop %v4698
    %v4700 = vmul.f32 1.0, %v4699
    %v4701 = vxor.u32 %v4480, 2147483648
    %v4702 = vmul.f32 %v4701, 1.442695
    %v4703 = vpow.pop %v4702
    %v4704 = vadd.f32 %v4703, 1.0
    %v4705 = vrcp.pop %v4704
    %v4706 = vmul.f32 1.0, %v4705
    %v4707 = vtanh.pop %v4549
    %v4708 = vxor.u32 %v4551, 2147483648
    %v4709 = vmul.f32 %v4708, 1.442695
    %v4710 = vpow.pop %v4709
    %v4711 = vadd.f32 %v4710, 1.0
    %v4712 = vrcp.pop %v4711
    %v4713 = vmul.f32 1.0, %v4712
    %v4714 = vmul.f32 %v4706, %v4030
    %v4715 = vmul.f32 %v4700, %v4707
    %v4716 = vadd.f32 %v4714, %v4715
    %v4717 = vtanh.pop %v4716
    %v4718 = vmul.f32 %v4713, %v4717
    %v4719 = vxor.u32 %v4620, 2147483648
    %v4720 = vmul.f32 %v4719, 1.442695
    %v4721 = vpow.pop %v4720
    %v4722 = vadd.f32 %v4721, 1.0
    %v4723 = vrcp.pop %v4722
    %v4724 = vmul.f32 1.0, %v4723
    %v4725 = vxor.u32 %v4622, 2147483648
    %v4726 = vmul.f32 %v4725, 1.442695
    %v4727 = vpow.pop %v4726
    %v4728 = vadd.f32 %v4727, 1.0
    %v4729 = vrcp.pop %v4728
    %v4730 = vmul.f32 1.0, %v4729
    %v4731 = vtanh.pop %v4691
    %v4732 = vxor.u32 %v4693, 2147483648
    %v4733 = vmul.f32 %v4732, 1.442695
    %v4734 = vpow.pop %v4733
    %v4735 = vadd.f32 %v4734, 1.0
    %v4736 = vrcp.pop %v4735
    %v4737 = vmul.f32 1.0, %v4736
    %v4738 = vmul.f32 %v4730, %v4054
    %v4739 = vmul.f32 %v4724, %v4731
    %v4740 = vadd.f32 %v4738, %v4739
    %v4741 = vtanh.pop %v4740
    %v4742 = vmul.f32 %v4737, %v4741
    %v4743 = vld [vmem:[#allocation2 + $0x20] sm:$0xc]
    %v4744 = vld [vmem:[#allocation2 + $0x28] sm:$0xc]
    %v4745 = vld [vmem:[#allocation2 + $0x30] sm:$0xc]
    %v4746 = vld [vmem:[#allocation2 + $0x38] sm:$0xc]
    %4747 = vmatprep.subr.mxu0 %v778
    %4748 = vmatpush1.msra.mxu0 %v777
    %4749 = vmatprep.subr.mxu0 %v782
    %4750 = vmatpush1.msra.mxu0 %v781
    %4751 = vmatprep.subr.mxu0 %v786
    %4752 = vmatpush1.msra.mxu0 %v785
    %4753 = vmatprep.subr.mxu0 %v790
    %4754 = vmatpush1.msra.mxu0 %v789
    %4755 = vmatprep.subr.mxu0 %v794
    %4756 = vmatpush1.msra.mxu0 %v793
    %4757 = vmatprep.subr.mxu0 %v798
    %4758 = vmatpush1.msra.mxu0 %v797
    %4759 = vmatprep.subr.mxu0 %v802
    %4760 = vmatpush1.msra.mxu0 %v801
    %4761 = vmatprep.subr.mxu0 %v806
    %4762 = vmatpush1.msra.mxu0 %v805
    %4763 = vmatprep.subr.mxu0 %v810
    %4764 = vmatpush1.msra.mxu0 %v809
    %4765 = vmatprep.subr.mxu0 %v814
    %4766 = vmatpush1.msra.mxu0 %v813
    %4767 = vmatprep.subr.mxu0 %v818
    %4768 = vmatpush1.msra.mxu0 %v817
    %4769 = vmatprep.subr.mxu0 %v822
    %4770 = vmatpush1.msra.mxu0 %v821
    %4771 = vmatprep.subr.mxu0 %v826
    %4772 = vmatpush1.msra.mxu0 %v825
    %4773 = vmatprep.subr.mxu0 %v830
    %4774 = vmatpush1.msra.mxu0 %v829
    %4775 = vmatprep.subr.mxu0 %v834
    %4776 = vmatpush1.msra.mxu0 %v833
    %4777 = vmatprep.subr.mxu0 %v838
    %4778 = vmatpush1.msra.mxu0 %v837
    %4779 = vmatprep.subr.mxu0 0.0
    %4780 = vmatpush1.msra.mxu0 0.0
    %4781 = vmatprep.subr.mxu0 0.0
    %4782 = vmatpush1.msra.mxu0 0.0
    %4783 = vmatprep.subr.mxu0 0.0
    %4784 = vmatpush1.msra.mxu0 0.0
    %4785 = vmatprep.subr.mxu0 0.0
    %4786 = vmatpush1.msra.mxu0 0.0
    %4787 = vmatprep.subr.mxu0 0.0
    %4788 = vmatpush1.msra.mxu0 0.0
    %4789 = vmatprep.subr.mxu0 0.0
    %4790 = vmatpush1.msra.mxu0 0.0
    %4791 = vmatprep.subr.mxu0 0.0
    %4792 = vmatpush1.msra.mxu0 0.0
    %4793 = vmatprep.subr.mxu0 0.0
    %4794 = vmatpush1.msra.mxu0 0.0
    %4795 = vmatprep.subr.mxu0 0.0
    %4796 = vmatpush1.msra.mxu0 0.0
    %4797 = vmatprep.subr.mxu0 0.0
    %4798 = vmatpush1.msra.mxu0 0.0
    %4799 = vmatprep.subr.mxu0 0.0
    %4800 = vmatpush1.msra.mxu0 0.0
    %4801 = vmatprep.subr.mxu0 0.0
    %4802 = vmatpush1.msra.mxu0 0.0
    %4803 = vmatprep.subr.mxu0 0.0
    %4804 = vmatpush1.msra.mxu0 0.0
    %4805 = vmatprep.subr.mxu0 0.0
    %4806 = vmatpush1.msra.mxu0 0.0
    %4807 = vmatprep.subr.mxu0 0.0
    %4808 = vmatpush1.msra.mxu0 0.0
    %4809 = vmatprep.subr.mxu0 0.0
    %4810 = vmatpush1.msra.mxu0 0.0
    %4811 = vmatprep.mubr.f32.mxu0 0.0
    %4812 = vmatmul.mubr.f32.gmra.mrb[0].mxu0 %v4383
    %v4813 = vpop.f32.mrb[0].mxu0
    %v4814 = vadd.f32 0.0, %v4813
    %v4815 = vpop.f32.mrb[0].mxu0
    %v4816 = vadd.f32 0.0, %v4815
    %4817 = vdwg.mxu0
    %4818 = vmatprep.subr.mxu0 %v780
    %4819 = vmatpush1.msra.mxu0 %v779
    %4820 = vmatprep.subr.mxu0 %v784
    %4821 = vmatpush1.msra.mxu0 %v783
    %4822 = vmatprep.subr.mxu0 %v788
    %4823 = vmatpush1.msra.mxu0 %v787
    %4824 = vmatprep.subr.mxu0 %v792
    %4825 = vmatpush1.msra.mxu0 %v791
    %4826 = vmatprep.subr.mxu0 %v796
    %4827 = vmatpush1.msra.mxu0 %v795
    %4828 = vmatprep.subr.mxu0 %v800
    %4829 = vmatpush1.msra.mxu0 %v799
    %4830 = vmatprep.subr.mxu0 %v804
    %4831 = vmatpush1.msra.mxu0 %v803
    %4832 = vmatprep.subr.mxu0 %v808
    %4833 = vmatpush1.msra.mxu0 %v807
    %4834 = vmatprep.subr.mxu0 %v812
    %4835 = vmatpush1.msra.mxu0 %v811
    %4836 = vmatprep.subr.mxu0 %v816
    %4837 = vmatpush1.msra.mxu0 %v815
    %4838 = vmatprep.subr.mxu0 %v820
    %4839 = vmatpush1.msra.mxu0 %v819
    %4840 = vmatprep.subr.mxu0 %v824
    %4841 = vmatpush1.msra.mxu0 %v823
    %4842 = vmatprep.subr.mxu0 %v828
    %4843 = vmatpush1.msra.mxu0 %v827
    %4844 = vmatprep.subr.mxu0 %v832
    %4845 = vmatpush1.msra.mxu0 %v831
    %4846 = vmatprep.subr.mxu0 %v836
    %4847 = vmatpush1.msra.mxu0 %v835
    %4848 = vmatprep.subr.mxu0 %v840
    %4849 = vmatpush1.msra.mxu0 %v839
    %4850 = vmatprep.subr.mxu0 0.0
    %4851 = vmatpush1.msra.mxu0 0.0
    %4852 = vmatprep.subr.mxu0 0.0
    %4853 = vmatpush1.msra.mxu0 0.0
    %4854 = vmatprep.subr.mxu0 0.0
    %4855 = vmatpush1.msra.mxu0 0.0
    %4856 = vmatprep.subr.mxu0 0.0
    %4857 = vmatpush1.msra.mxu0 0.0
    %4858 = vmatprep.subr.mxu0 0.0
    %4859 = vmatpush1.msra.mxu0 0.0
    %4860 = vmatprep.subr.mxu0 0.0
    %4861 = vmatpush1.msra.mxu0 0.0
    %4862 = vmatprep.subr.mxu0 0.0
    %4863 = vmatpush1.msra.mxu0 0.0
    %4864 = vmatprep.subr.mxu0 0.0
    %4865 = vmatpush1.msra.mxu0 0.0
    %4866 = vmatprep.subr.mxu0 0.0
    %4867 = vmatpush1.msra.mxu0 0.0
    %4868 = vmatprep.subr.mxu0 0.0
    %4869 = vmatpush1.msra.mxu0 0.0
    %4870 = vmatprep.subr.mxu0 0.0
    %4871 = vmatpush1.msra.mxu0 0.0
    %4872 = vmatprep.subr.mxu0 0.0
    %4873 = vmatpush1.msra.mxu0 0.0
    %4874 = vmatprep.subr.mxu0 0.0
    %4875 = vmatpush1.msra.mxu0 0.0
    %4876 = vmatprep.subr.mxu0 0.0
    %4877 = vmatpush1.msra.mxu0 0.0
    %4878 = vmatprep.subr.mxu0 0.0
    %4879 = vmatpush1.msra.mxu0 0.0
    %4880 = vmatprep.subr.mxu0 0.0
    %4881 = vmatpush1.msra.mxu0 0.0
    %4882 = vmatprep.mubr.f32.mxu0 0.0
    %4883 = vmatmul.mubr.f32.gmra.mrb[0].mxu0 %v4383
    %v4884 = vpop.f32.mrb[0].mxu0
    %v4885 = vadd.f32 0.0, %v4884
    %v4886 = vpop.f32.mrb[0].mxu0
    %v4887 = vadd.f32 0.0, %v4886
    %4888 = vdwg.mxu0
    %v4893 = vrot.slane %v4814, 6
    %v4894 = vrot.slane %v4816, 6
    %v4895 = vrot.slane %v4885, 6
    %v4896 = vrot.slane %v4887, 6
    %v4901 = vadd.f32 %v4743, %v4893
    %v4902 = vadd.f32 %v4744, %v4894
    %v4903 = vadd.f32 %v4745, %v4895
    %v4904 = vadd.f32 %v4746, %v4896
    %v4905 = vld [vmem:[#allocation3 + $0x20] sm:$0xc]
    %v4906 = vld [vmem:[#allocation3 + $0x28] sm:$0xc]
    %v4907 = vld [vmem:[#allocation3 + $0x30] sm:$0xc]
    %v4908 = vld [vmem:[#allocation3 + $0x38] sm:$0xc]
    %4909 = vmatprep.subr.mxu0 %v842
    %4910 = vmatpush1.msra.mxu0 %v841
    %4911 = vmatprep.subr.mxu0 %v846
    %4912 = vmatpush1.msra.mxu0 %v845
    %4913 = vmatprep.subr.mxu0 %v850
    %4914 = vmatpush1.msra.mxu0 %v849
    %4915 = vmatprep.subr.mxu0 %v854
    %4916 = vmatpush1.msra.mxu0 %v853
    %4917 = vmatprep.subr.mxu0 %v858
    %4918 = vmatpush1.msra.mxu0 %v857
    %4919 = vmatprep.subr.mxu0 %v862
    %4920 = vmatpush1.msra.mxu0 %v861
    %4921 = vmatprep.subr.mxu0 %v866
    %4922 = vmatpush1.msra.mxu0 %v865
    %4923 = vmatprep.subr.mxu0 %v870
    %4924 = vmatpush1.msra.mxu0 %v869
    %4925 = vmatprep.subr.mxu0 %v874
    %4926 = vmatpush1.msra.mxu0 %v873
    %4927 = vmatprep.subr.mxu0 %v878
    %4928 = vmatpush1.msra.mxu0 %v877
    %4929 = vmatprep.subr.mxu0 %v882
    %4930 = vmatpush1.msra.mxu0 %v881
    %4931 = vmatprep.subr.mxu0 %v886
    %4932 = vmatpush1.msra.mxu0 %v885
    %4933 = vmatprep.subr.mxu0 %v890
    %4934 = vmatpush1.msra.mxu0 %v889
    %4935 = vmatprep.subr.mxu0 %v894
    %4936 = vmatpush1.msra.mxu0 %v893
    %4937 = vmatprep.subr.mxu0 %v898
    %4938 = vmatpush1.msra.mxu0 %v897
    %4939 = vmatprep.subr.mxu0 %v902
    %4940 = vmatpush1.msra.mxu0 %v901
    %4941 = vmatprep.subr.mxu0 0.0
    %4942 = vmatpush1.msra.mxu0 0.0
    %4943 = vmatprep.subr.mxu0 0.0
    %4944 = vmatpush1.msra.mxu0 0.0
    %4945 = vmatprep.subr.mxu0 0.0
    %4946 = vmatpush1.msra.mxu0 0.0
    %4947 = vmatprep.subr.mxu0 0.0
    %4948 = vmatpush1.msra.mxu0 0.0
    %4949 = vmatprep.subr.mxu0 0.0
    %4950 = vmatpush1.msra.mxu0 0.0
    %4951 = vmatprep.subr.mxu0 0.0
    %4952 = vmatpush1.msra.mxu0 0.0
    %4953 = vmatprep.subr.mxu0 0.0
    %4954 = vmatpush1.msra.mxu0 0.0
    %4955 = vmatprep.subr.mxu0 0.0
    %4956 = vmatpush1.msra.mxu0 0.0
    %4957 = vmatprep.subr.mxu0 0.0
    %4958 = vmatpush1.msra.mxu0 0.0
    %4959 = vmatprep.subr.mxu0 0.0
    %4960 = vmatpush1.msra.mxu0 0.0
    %4961 = vmatprep.subr.mxu0 0.0
    %4962 = vmatpush1.msra.mxu0 0.0
    %4963 = vmatprep.subr.mxu0 0.0
    %4964 = vmatpush1.msra.mxu0 0.0
    %4965 = vmatprep.subr.mxu0 0.0
    %4966 = vmatpush1.msra.mxu0 0.0
    %4967 = vmatprep.subr.mxu0 0.0
    %4968 = vmatpush1.msra.mxu0 0.0
    %4969 = vmatprep.subr.mxu0 0.0
    %4970 = vmatpush1.msra.mxu0 0.0
    %4971 = vmatprep.subr.mxu0 0.0
    %4972 = vmatpush1.msra.mxu0 0.0
    %4973 = vmatprep.mubr.f32.mxu0 0.0
    %4974 = vmatmul.mubr.f32.gmra.mrb[0].mxu0 %v4410
    %v4975 = vpop.f32.mrb[0].mxu0
    %v4976 = vadd.f32 0.0, %v4975
    %v4977 = vpop.f32.mrb[0].mxu0
    %v4978 = vadd.f32 0.0, %v4977
    %4979 = vdwg.mxu0
    %4980 = vmatprep.subr.mxu0 %v844
    %4981 = vmatpush1.msra.mxu0 %v843
    %4982 = vmatprep.subr.mxu0 %v848
    %4983 = vmatpush1.msra.mxu0 %v847
    %4984 = vmatprep.subr.mxu0 %v852
    %4985 = vmatpush1.msra.mxu0 %v851
    %4986 = vmatprep.subr.mxu0 %v856
    %4987 = vmatpush1.msra.mxu0 %v855
    %4988 = vmatprep.subr.mxu0 %v860
    %4989 = vmatpush1.msra.mxu0 %v859
    %4990 = vmatprep.subr.mxu0 %v864
    %4991 = vmatpush1.msra.mxu0 %v863
    %4992 = vmatprep.subr.mxu0 %v868
    %4993 = vmatpush1.msra.mxu0 %v867
    %4994 = vmatprep.subr.mxu0 %v872
    %4995 = vmatpush1.msra.mxu0 %v871
    %4996 = vmatprep.subr.mxu0 %v876
    %4997 = vmatpush1.msra.mxu0 %v875
    %4998 = vmatprep.subr.mxu0 %v880
    %4999 = vmatpush1.msra.mxu0 %v879
    %5000 = vmatprep.subr.mxu0 %v884
    %5001 = vmatpush1.msra.mxu0 %v883
    %5002 = vmatprep.subr.mxu0 %v888
    %5003 = vmatpush1.msra.mxu0 %v887
    %5004 = vmatprep.subr.mxu0 %v892
    %5005 = vmatpush1.msra.mxu0 %v891
    %5006 = vmatprep.subr.mxu0 %v896
    %5007 = vmatpush1.msra.mxu0 %v895
    %5008 = vmatprep.subr.mxu0 %v900
    %5009 = vmatpush1.msra.mxu0 %v899
    %5010 = vmatprep.subr.mxu0 %v904
    %5011 = vmatpush1.msra.mxu0 %v903
    %5012 = vmatprep.subr.mxu0 0.0
    %5013 = vmatpush1.msra.mxu0 0.0
    %5014 = vmatprep.subr.mxu0 0.0
    %5015 = vmatpush1.msra.mxu0 0.0
    %5016 = vmatprep.subr.mxu0 0.0
    %5017 = vmatpush1.msra.mxu0 0.0
    %5018 = vmatprep.subr.mxu0 0.0
    %5019 = vmatpush1.msra.mxu0 0.0
    %5020 = vmatprep.subr.mxu0 0.0
    %5021 = vmatpush1.msra.mxu0 0.0
    %5022 = vmatprep.subr.mxu0 0.0
    %5023 = vmatpush1.msra.mxu0 0.0
    %5024 = vmatprep.subr.mxu0 0.0
    %5025 = vmatpush1.msra.mxu0 0.0
    %5026 = vmatprep.subr.mxu0 0.0
    %5027 = vmatpush1.msra.mxu0 0.0
    %5028 = vmatprep.subr.mxu0 0.0
    %5029 = vmatpush1.msra.mxu0 0.0
    %5030 = vmatprep.subr.mxu0 0.0
    %5031 = vmatpush1.msra.mxu0 0.0
    %5032 = vmatprep.subr.mxu0 0.0
    %5033 = vmatpush1.msra.mxu0 0.0
    %5034 = vmatprep.subr.mxu0 0.0
    %5035 = vmatpush1.msra.mxu0 0.0
    %5036 = vmatprep.subr.mxu0 0.0
    %5037 = vmatpush1.msra.mxu0 0.0
    %5038 = vmatprep.subr.mxu0 0.0
    %5039 = vmatpush1.msra.mxu0 0.0
    %5040 = vmatprep.subr.mxu0 0.0
    %5041 = vmatpush1.msra.mxu0 0.0
    %5042 = vmatprep.subr.mxu0 0.0
    %5043 = vmatpush1.msra.mxu0 0.0
    %5044 = vmatprep.mubr.f32.mxu0 0.0
    %5045 = vmatmul.mubr.f32.gmra.mrb[0].mxu0 %v4410
    %v5046 = vpop.f32.mrb[0].mxu0
    %v5047 = vadd.f32 0.0, %v5046
    %v5048 = vpop.f32.mrb[0].mxu0
    %v5049 = vadd.f32 0.0, %v5048
    %5050 = vdwg.mxu0
    %v5055 = vrot.slane %v4976, 6
    %v5056 = vrot.slane %v4978, 6
    %v5057 = vrot.slane %v5047, 6
    %v5058 = vrot.slane %v5049, 6
    %v5063 = vadd.f32 %v4905, %v5055
    %v5064 = vadd.f32 %v4906, %v5056
    %v5065 = vadd.f32 %v4907, %v5057
    %v5066 = vadd.f32 %v4908, %v5058
    %v5067 = vxor.u32 %v4901, 2147483648
    %v5068 = vmul.f32 %v5067, 1.442695
    %v5069 = vpow.pop %v5068
    %v5070 = vadd.f32 %v5069, 1.0
    %v5071 = vrcp.pop %v5070
    %v5072 = vmul.f32 1.0, %v5071
    %v5073 = vxor.u32 %v4902, 2147483648
    %v5074 = vmul.f32 %v5073, 1.442695
    %v5075 = vpow.pop %v5074
    %v5076 = vadd.f32 %v5075, 1.0
    %v5077 = vrcp.pop %v5076
    %v5078 = vmul.f32 1.0, %v5077
    %v5079 = vtanh.pop %v4903
    %v5080 = vxor.u32 %v4904, 2147483648
    %v5081 = vmul.f32 %v5080, 1.442695
    %v5082 = vpow.pop %v5081
    %v5083 = vadd.f32 %v5082, 1.0
    %v5084 = vrcp.pop %v5083
    %v5085 = vmul.f32 1.0, %v5084
    %v5087 = vrot.slane %v4381, 6
    %v5089 = vmul.f32 %v5078, %v5087
    %v5090 = vmul.f32 %v5072, %v5079
    %v5091 = vadd.f32 %v5089, %v5090
    %v5092 = vtanh.pop %v5091
    %v5093 = vmul.f32 %v5085, %v5092
    %v5094 = vxor.u32 %v5063, 2147483648
    %v5095 = vmul.f32 %v5094, 1.442695
    %v5096 = vpow.pop %v5095
    %v5097 = vadd.f32 %v5096, 1.0
    %v5098 = vrcp.pop %v5097
    %v5099 = vmul.f32 1.0, %v5098
    %v5100 = vxor.u32 %v5064, 2147483648
    %v5101 = vmul.f32 %v5100, 1.442695
    %v5102 = vpow.pop %v5101
    %v5103 = vadd.f32 %v5102, 1.0
    %v5104 = vrcp.pop %v5103
    %v5105 = vmul.f32 1.0, %v5104
    %v5106 = vtanh.pop %v5065
    %v5107 = vxor.u32 %v5066, 2147483648
    %v5108 = vmul.f32 %v5107, 1.442695
    %v5109 = vpow.pop %v5108
    %v5110 = vadd.f32 %v5109, 1.0
    %v5111 = vrcp.pop %v5110
    %v5112 = vmul.f32 1.0, %v5111
    %v5114 = vrot.slane %v4408, 6
    %v5116 = vmul.f32 %v5105, %v5114
    %v5117 = vmul.f32 %v5099, %v5106
    %v5118 = vadd.f32 %v5116, %v5117
    %v5119 = vtanh.pop %v5118
    %v5120 = vmul.f32 %v5112, %v5119
    %v5122 = vrot.slane %v4718, 6
    %v5124 = vrot.slane %v5093, 2
    %v5125 = vrot.slane %v5122, 2
    %5128 = vmatprep.subr.mxu0 %v906
    %5129 = vmatpush1.msra.mxu0 %v905
    %5130 = vmatprep.subr.mxu0 %v910
    %5131 = vmatpush1.msra.mxu0 %v909
    %5132 = vmatprep.subr.mxu0 %v914
    %5133 = vmatpush1.msra.mxu0 %v913
    %5134 = vmatprep.subr.mxu0 %v918
    %5135 = vmatpush1.msra.mxu0 %v917
    %5136 = vmatprep.subr.mxu0 %v922
    %5137 = vmatpush1.msra.mxu0 %v921
    %5138 = vmatprep.subr.mxu0 %v926
    %5139 = vmatpush1.msra.mxu0 %v925
    %5140 = vmatprep.subr.mxu0 %v930
    %5141 = vmatpush1.msra.mxu0 %v929
    %5142 = vmatprep.subr.mxu0 %v934
    %5143 = vmatpush1.msra.mxu0 %v933
    %5144 = vmatprep.subr.mxu0 %v938
    %5145 = vmatpush1.msra.mxu0 %v937
    %5146 = vmatprep.subr.mxu0 %v942
    %5147 = vmatpush1.msra.mxu0 %v941
    %5148 = vmatprep.subr.mxu0 %v946
    %5149 = vmatpush1.msra.mxu0 %v945
    %5150 = vmatprep.subr.mxu0 %v950
    %5151 = vmatpush1.msra.mxu0 %v949
    %5152 = vmatprep.subr.mxu0 %v954
    %5153 = vmatpush1.msra.mxu0 %v953
    %5154 = vmatprep.subr.mxu0 %v958
    %5155 = vmatpush1.msra.mxu0 %v957
    %5156 = vmatprep.subr.mxu0 %v962
    %5157 = vmatpush1.msra.mxu0 %v961
    %5158 = vmatprep.subr.mxu0 %v966
    %5159 = vmatpush1.msra.mxu0 %v965
    %5160 = vmatprep.subr.mxu0 %v970
    %5161 = vmatpush1.msra.mxu0 %v969
    %5162 = vmatprep.subr.mxu0 %v974
    %5163 = vmatpush1.msra.mxu0 %v973
    %5164 = vmatprep.subr.mxu0 %v978
    %5165 = vmatpush1.msra.mxu0 %v977
    %5166 = vmatprep.subr.mxu0 %v982
    %5167 = vmatpush1.msra.mxu0 %v981
    %5168 = vmatprep.subr.mxu0 %v986
    %5169 = vmatpush1.msra.mxu0 %v985
    %5170 = vmatprep.subr.mxu0 %v990
    %5171 = vmatpush1.msra.mxu0 %v989
    %5172 = vmatprep.subr.mxu0 %v994
    %5173 = vmatpush1.msra.mxu0 %v993
    %5174 = vmatprep.subr.mxu0 %v998
    %5175 = vmatpush1.msra.mxu0 %v997
    %5176 = vmatprep.subr.mxu0 %v1002
    %5177 = vmatpush1.msra.mxu0 %v1001
    %5178 = vmatprep.subr.mxu0 %v1006
    %5179 = vmatpush1.msra.mxu0 %v1005
    %5180 = vmatprep.subr.mxu0 %v1010
    %5181 = vmatpush1.msra.mxu0 %v1009
    %5182 = vmatprep.subr.mxu0 %v1014
    %5183 = vmatpush1.msra.mxu0 %v1013
    %5184 = vmatprep.subr.mxu0 %v1018
    %5185 = vmatpush1.msra.mxu0 %v1017
    %5186 = vmatprep.subr.mxu0 %v1022
    %5187 = vmatpush1.msra.mxu0 %v1021
    %5188 = vmatprep.subr.mxu0 %v1026
    %5189 = vmatpush1.msra.mxu0 %v1025
    %5190 = vmatprep.subr.mxu0 %v1030
    %5191 = vmatpush1.msra.mxu0 %v1029
    %5192 = vmatprep.mubr.f32.mxu0 %v5125
    %5193 = vmatmul.mubr.f32.gmra.mrb[0].mxu0 %v5124
    %v5194 = vpop.f32.mrb[0].mxu0
    %v5195 = vadd.f32 %v1166, %v5194
    %v5196 = vpop.f32.mrb[0].mxu0
    %v5197 = vadd.f32 %v1170, %v5196
    %5198 = vdwg.mxu0
    %5199 = vmatprep.subr.mxu0 %v908
    %5200 = vmatpush1.msra.mxu0 %v907
    %5201 = vmatprep.subr.mxu0 %v912
    %5202 = vmatpush1.msra.mxu0 %v911
    %5203 = vmatprep.subr.mxu0 %v916
    %5204 = vmatpush1.msra.mxu0 %v915
    %5205 = vmatprep.subr.mxu0 %v920
    %5206 = vmatpush1.msra.mxu0 %v919
    %5207 = vmatprep.subr.mxu0 %v924
    %5208 = vmatpush1.msra.mxu0 %v923
    %5209 = vmatprep.subr.mxu0 %v928
    %5210 = vmatpush1.msra.mxu0 %v927
    %5211 = vmatprep.subr.mxu0 %v932
    %5212 = vmatpush1.msra.mxu0 %v931
    %5213 = vmatprep.subr.mxu0 %v936
    %5214 = vmatpush1.msra.mxu0 %v935
    %5215 = vmatprep.subr.mxu0 %v940
    %5216 = vmatpush1.msra.mxu0 %v939
    %5217 = vmatprep.subr.mxu0 %v944
    %5218 = vmatpush1.msra.mxu0 %v943
    %5219 = vmatprep.subr.mxu0 %v948
    %5220 = vmatpush1.msra.mxu0 %v947
    %5221 = vmatprep.subr.mxu0 %v952
    %5222 = vmatpush1.msra.mxu0 %v951
    %5223 = vmatprep.subr.mxu0 %v956
    %5224 = vmatpush1.msra.mxu0 %v955
    %5225 = vmatprep.subr.mxu0 %v960
    %5226 = vmatpush1.msra.mxu0 %v959
    %5227 = vmatprep.subr.mxu0 %v964
    %5228 = vmatpush1.msra.mxu0 %v963
    %5229 = vmatprep.subr.mxu0 %v968
    %5230 = vmatpush1.msra.mxu0 %v967
    %5231 = vmatprep.subr.mxu0 %v972
    %5232 = vmatpush1.msra.mxu0 %v971
    %5233 = vmatprep.subr.mxu0 %v976
    %5234 = vmatpush1.msra.mxu0 %v975
    %5235 = vmatprep.subr.mxu0 %v980
    %5236 = vmatpush1.msra.mxu0 %v979
    %5237 = vmatprep.subr.mxu0 %v984
    %5238 = vmatpush1.msra.mxu0 %v983
    %5239 = vmatprep.subr.mxu0 %v988
    %5240 = vmatpush1.msra.mxu0 %v987
    %5241 = vmatprep.subr.mxu0 %v992
    %5242 = vmatpush1.msra.mxu0 %v991
    %5243 = vmatprep.subr.mxu0 %v996
    %5244 = vmatpush1.msra.mxu0 %v995
    %5245 = vmatprep.subr.mxu0 %v1000
    %5246 = vmatpush1.msra.mxu0 %v999
    %5247 = vmatprep.subr.mxu0 %v1004
    %5248 = vmatpush1.msra.mxu0 %v1003
    %5249 = vmatprep.subr.mxu0 %v1008
    %5250 = vmatpush1.msra.mxu0 %v1007
    %5251 = vmatprep.subr.mxu0 %v1012
    %5252 = vmatpush1.msra.mxu0 %v1011
    %5253 = vmatprep.subr.mxu0 %v1016
    %5254 = vmatpush1.msra.mxu0 %v1015
    %5255 = vmatprep.subr.mxu0 %v1020
    %5256 = vmatpush1.msra.mxu0 %v1019
    %5257 = vmatprep.subr.mxu0 %v1024
    %5258 = vmatpush1.msra.mxu0 %v1023
    %5259 = vmatprep.subr.mxu0 %v1028
    %5260 = vmatpush1.msra.mxu0 %v1027
    %5261 = vmatprep.subr.mxu0 %v1032
    %5262 = vmatpush1.msra.mxu0 %v1031
    %5263 = vmatprep.mubr.f32.mxu0 %v5125
    %5264 = vmatmul.mubr.f32.gmra.mrb[0].mxu0 %v5124
    %v5265 = vpop.f32.mrb[0].mxu0
    %v5266 = vadd.f32 %v1174, %v5265
    %v5267 = vpop.f32.mrb[0].mxu0
    %v5268 = vadd.f32 %v1178, %v5267
    %5269 = vdwg.mxu0
    %v5271 = vrot.slane %v4742, 6
    %v5273 = vrot.slane %v5120, 2
    %v5274 = vrot.slane %v5271, 2
    %5277 = vmatprep.subr.mxu0 %v1034
    %5278 = vmatpush1.msra.mxu0 %v1033
    %5279 = vmatprep.subr.mxu0 %v1038
    %5280 = vmatpush1.msra.mxu0 %v1037
    %5281 = vmatprep.subr.mxu0 %v1042
    %5282 = vmatpush1.msra.mxu0 %v1041
    %5283 = vmatprep.subr.mxu0 %v1046
    %5284 = vmatpush1.msra.mxu0 %v1045
    %5285 = vmatprep.subr.mxu0 %v1050
    %5286 = vmatpush1.msra.mxu0 %v1049
    %5287 = vmatprep.subr.mxu0 %v1054
    %5288 = vmatpush1.msra.mxu0 %v1053
    %5289 = vmatprep.subr.mxu0 %v1058
    %5290 = vmatpush1.msra.mxu0 %v1057
    %5291 = vmatprep.subr.mxu0 %v1062
    %5292 = vmatpush1.msra.mxu0 %v1061
    %5293 = vmatprep.subr.mxu0 %v1066
    %5294 = vmatpush1.msra.mxu0 %v1065
    %5295 = vmatprep.subr.mxu0 %v1070
    %5296 = vmatpush1.msra.mxu0 %v1069
    %5297 = vmatprep.subr.mxu0 %v1074
    %5298 = vmatpush1.msra.mxu0 %v1073
    %5299 = vmatprep.subr.mxu0 %v1078
    %5300 = vmatpush1.msra.mxu0 %v1077
    %5301 = vmatprep.subr.mxu0 %v1082
    %5302 = vmatpush1.msra.mxu0 %v1081
    %5303 = vmatprep.subr.mxu0 %v1086
    %5304 = vmatpush1.msra.mxu0 %v1085
    %5305 = vmatprep.subr.mxu0 %v1090
    %5306 = vmatpush1.msra.mxu0 %v1089
    %5307 = vmatprep.subr.mxu0 %v1094
    %5308 = vmatpush1.msra.mxu0 %v1093
    %5309 = vmatprep.subr.mxu0 %v1098
    %5310 = vmatpush1.msra.mxu0 %v1097
    %5311 = vmatprep.subr.mxu0 %v1102
    %5312 = vmatpush1.msra.mxu0 %v1101
    %5313 = vmatprep.subr.mxu0 %v1106
    %5314 = vmatpush1.msra.mxu0 %v1105
    %5315 = vmatprep.subr.mxu0 %v1110
    %5316 = vmatpush1.msra.mxu0 %v1109
    %5317 = vmatprep.subr.mxu0 %v1114
    %5318 = vmatpush1.msra.mxu0 %v1113
    %5319 = vmatprep.subr.mxu0 %v1118
    %5320 = vmatpush1.msra.mxu0 %v1117
    %5321 = vmatprep.subr.mxu0 %v1122
    %5322 = vmatpush1.msra.mxu0 %v1121
    %5323 = vmatprep.subr.mxu0 %v1126
    %5324 = vmatpush1.msra.mxu0 %v1125
    %5325 = vmatprep.subr.mxu0 %v1130
    %5326 = vmatpush1.msra.mxu0 %v1129
    %5327 = vmatprep.subr.mxu0 %v1134
    %5328 = vmatpush1.msra.mxu0 %v1133
    %5329 = vmatprep.subr.mxu0 %v1138
    %5330 = vmatpush1.msra.mxu0 %v1137
    %5331 = vmatprep.subr.mxu0 %v1142
    %5332 = vmatpush1.msra.mxu0 %v1141
    %5333 = vmatprep.subr.mxu0 %v1146
    %5334 = vmatpush1.msra.mxu0 %v1145
    %5335 = vmatprep.subr.mxu0 %v1150
    %5336 = vmatpush1.msra.mxu0 %v1149
    %5337 = vmatprep.subr.mxu0 %v1154
    %5338 = vmatpush1.msra.mxu0 %v1153
    %5339 = vmatprep.subr.mxu0 %v1158
    %5340 = vmatpush1.msra.mxu0 %v1157
    %5341 = vmatprep.mubr.f32.mxu0 %v5274
    %5342 = vmatmul.mubr.f32.gmra.mrb[0].mxu0 %v5273
    %v5343 = vpop.f32.mrb[0].mxu0
    %v5344 = vadd.f32 %v1188, %v5343
    %v5345 = vpop.f32.mrb[0].mxu0
    %v5346 = vadd.f32 %v1192, %v5345
    %5347 = vdwg.mxu0
    %5348 = vmatprep.subr.mxu0 %v1036
    %5349 = vmatpush1.msra.mxu0 %v1035
    %5350 = vmatprep.subr.mxu0 %v1040
    %5351 = vmatpush1.msra.mxu0 %v1039
    %5352 = vmatprep.subr.mxu0 %v1044
    %5353 = vmatpush1.msra.mxu0 %v1043
    %5354 = vmatprep.subr.mxu0 %v1048
    %5355 = vmatpush1.msra.mxu0 %v1047
    %5356 = vmatprep.subr.mxu0 %v1052
    %5357 = vmatpush1.msra.mxu0 %v1051
    %5358 = vmatprep.subr.mxu0 %v1056
    %5359 = vmatpush1.msra.mxu0 %v1055
    %5360 = vmatprep.subr.mxu0 %v1060
    %5361 = vmatpush1.msra.mxu0 %v1059
    %5362 = vmatprep.subr.mxu0 %v1064
    %5363 = vmatpush1.msra.mxu0 %v1063
    %5364 = vmatprep.subr.mxu0 %v1068
    %5365 = vmatpush1.msra.mxu0 %v1067
    %5366 = vmatprep.subr.mxu0 %v1072
    %5367 = vmatpush1.msra.mxu0 %v1071
    %5368 = vmatprep.subr.mxu0 %v1076
    %5369 = vmatpush1.msra.mxu0 %v1075
    %5370 = vmatprep.subr.mxu0 %v1080
    %5371 = vmatpush1.msra.mxu0 %v1079
    %5372 = vmatprep.subr.mxu0 %v1084
    %5373 = vmatpush1.msra.mxu0 %v1083
    %5374 = vmatprep.subr.mxu0 %v1088
    %5375 = vmatpush1.msra.mxu0 %v1087
    %5376 = vmatprep.subr.mxu0 %v1092
    %5377 = vmatpush1.msra.mxu0 %v1091
    %5378 = vmatprep.subr.mxu0 %v1096
    %5379 = vmatpush1.msra.mxu0 %v1095
    %5380 = vmatprep.subr.mxu0 %v1100
    %5381 = vmatpush1.msra.mxu0 %v1099
    %5382 = vmatprep.subr.mxu0 %v1104
    %5383 = vmatpush1.msra.mxu0 %v1103
    %5384 = vmatprep.subr.mxu0 %v1108
    %5385 = vmatpush1.msra.mxu0 %v1107
    %5386 = vmatprep.subr.mxu0 %v1112
    %5387 = vmatpush1.msra.mxu0 %v1111
    %5388 = vmatprep.subr.mxu0 %v1116
    %5389 = vmatpush1.msra.mxu0 %v1115
    %5390 = vmatprep.subr.mxu0 %v1120
    %5391 = vmatpush1.msra.mxu0 %v1119
    %5392 = vmatprep.subr.mxu0 %v1124
    %5393 = vmatpush1.msra.mxu0 %v1123
    %5394 = vmatprep.subr.mxu0 %v1128
    %5395 = vmatpush1.msra.mxu0 %v1127
    %5396 = vmatprep.subr.mxu0 %v1132
    %5397 = vmatpush1.msra.mxu0 %v1131
    %5398 = vmatprep.subr.mxu0 %v1136
    %5399 = vmatpush1.msra.mxu0 %v1135
    %5400 = vmatprep.subr.mxu0 %v1140
    %5401 = vmatpush1.msra.mxu0 %v1139
    %5402 = vmatprep.subr.mxu0 %v1144
    %5403 = vmatpush1.msra.mxu0 %v1143
    %5404 = vmatprep.subr.mxu0 %v1148
    %5405 = vmatpush1.msra.mxu0 %v1147
    %5406 = vmatprep.subr.mxu0 %v1152
    %5407 = vmatpush1.msra.mxu0 %v1151
    %5408 = vmatprep.subr.mxu0 %v1156
    %5409 = vmatpush1.msra.mxu0 %v1155
    %5410 = vmatprep.subr.mxu0 %v1160
    %5411 = vmatpush1.msra.mxu0 %v1159
    %5412 = vmatprep.mubr.f32.mxu0 %v5274
    %5413 = vmatmul.mubr.f32.gmra.mrb[0].mxu0 %v5273
    %v5414 = vpop.f32.mrb[0].mxu0
    %v5415 = vadd.f32 %v1196, %v5414
    %v5416 = vpop.f32.mrb[0].mxu0
    %v5417 = vadd.f32 %v1200, %v5416
    %5418 = vdwg.mxu0
    %v5419 = vxor.u32 %v5195, 2147483648
    %v5420 = vmul.f32 %v5419, 1.442695
    %v5421 = vpow.pop %v5420
    %v5422 = vadd.f32 %v5421, 1.0
    %v5423 = vrcp.pop %v5422
    %v5424 = vmul.f32 1.0, %v5423
    %v5425 = vxor.u32 %v5197, 2147483648
    %v5426 = vmul.f32 %v5425, 1.442695
    %v5427 = vpow.pop %v5426
    %v5428 = vadd.f32 %v5427, 1.0
    %v5429 = vrcp.pop %v5428
    %v5430 = vmul.f32 1.0, %v5429
    %v5431 = vtanh.pop %v5266
    %v5432 = vxor.u32 %v5268, 2147483648
    %v5433 = vmul.f32 %v5432, 1.442695
    %v5434 = vpow.pop %v5433
    %v5435 = vadd.f32 %v5434, 1.0
    %v5436 = vrcp.pop %v5435
    %v5437 = vmul.f32 1.0, %v5436
    %v5438 = vmul.f32 %v5430, %v4716
    %v5439 = vmul.f32 %v5424, %v5431
    %v5440 = vadd.f32 %v5438, %v5439
    %v5441 = vtanh.pop %v5440
    %v5442 = vmul.f32 %v5437, %v5441
    %v5443 = vxor.u32 %v5344, 2147483648
    %v5444 = vmul.f32 %v5443, 1.442695
    %v5445 = vpow.pop %v5444
    %v5446 = vadd.f32 %v5445, 1.0
    %v5447 = vrcp.pop %v5446
    %v5448 = vmul.f32 1.0, %v5447
    %v5449 = vxor.u32 %v5346, 2147483648
    %v5450 = vmul.f32 %v5449, 1.442695
    %v5451 = vpow.pop %v5450
    %v5452 = vadd.f32 %v5451, 1.0
    %v5453 = vrcp.pop %v5452
    %v5454 = vmul.f32 1.0, %v5453
    %v5455 = vtanh.pop %v5415
    %v5456 = vxor.u32 %v5417, 2147483648
    %v5457 = vmul.f32 %v5456, 1.442695
    %v5458 = vpow.pop %v5457
    %v5459 = vadd.f32 %v5458, 1.0
    %v5460 = vrcp.pop %v5459
    %v5461 = vmul.f32 1.0, %v5460
    %v5462 = vmul.f32 %v5454, %v4740
    %v5463 = vmul.f32 %v5448, %v5455
    %v5464 = vadd.f32 %v5462, %v5463
    %v5465 = vtanh.pop %v5464
    %v5466 = vmul.f32 %v5461, %v5465
    %v5467 = vld [vmem:[#allocation2 + $0x20] sm:$0x30]
    %v5468 = vld [vmem:[#allocation2 + $0x28] sm:$0x30]
    %v5469 = vld [vmem:[#allocation2 + $0x30] sm:$0x30]
    %v5470 = vld [vmem:[#allocation2 + $0x38] sm:$0x30]
    %5471 = vmatprep.subr.mxu0 %v778
    %5472 = vmatpush1.msra.mxu0 %v777
    %5473 = vmatprep.subr.mxu0 %v782
    %5474 = vmatpush1.msra.mxu0 %v781
    %5475 = vmatprep.subr.mxu0 %v786
    %5476 = vmatpush1.msra.mxu0 %v785
    %5477 = vmatprep.subr.mxu0 %v790
    %5478 = vmatpush1.msra.mxu0 %v789
    %5479 = vmatprep.subr.mxu0 %v794
    %5480 = vmatpush1.msra.mxu0 %v793
    %5481 = vmatprep.subr.mxu0 %v798
    %5482 = vmatpush1.msra.mxu0 %v797
    %5483 = vmatprep.subr.mxu0 %v802
    %5484 = vmatpush1.msra.mxu0 %v801
    %5485 = vmatprep.subr.mxu0 %v806
    %5486 = vmatpush1.msra.mxu0 %v805
    %5487 = vmatprep.subr.mxu0 %v810
    %5488 = vmatpush1.msra.mxu0 %v809
    %5489 = vmatprep.subr.mxu0 %v814
    %5490 = vmatpush1.msra.mxu0 %v813
    %5491 = vmatprep.subr.mxu0 %v818
    %5492 = vmatpush1.msra.mxu0 %v817
    %5493 = vmatprep.subr.mxu0 %v822
    %5494 = vmatpush1.msra.mxu0 %v821
    %5495 = vmatprep.subr.mxu0 %v826
    %5496 = vmatpush1.msra.mxu0 %v825
    %5497 = vmatprep.subr.mxu0 %v830
    %5498 = vmatpush1.msra.mxu0 %v829
    %5499 = vmatprep.subr.mxu0 %v834
    %5500 = vmatpush1.msra.mxu0 %v833
    %5501 = vmatprep.subr.mxu0 %v838
    %5502 = vmatpush1.msra.mxu0 %v837
    %5503 = vmatprep.subr.mxu0 0.0
    %5504 = vmatpush1.msra.mxu0 0.0
    %5505 = vmatprep.subr.mxu0 0.0
    %5506 = vmatpush1.msra.mxu0 0.0
    %5507 = vmatprep.subr.mxu0 0.0
    %5508 = vmatpush1.msra.mxu0 0.0
    %5509 = vmatprep.subr.mxu0 0.0
    %5510 = vmatpush1.msra.mxu0 0.0
    %5511 = vmatprep.subr.mxu0 0.0
    %5512 = vmatpush1.msra.mxu0 0.0
    %5513 = vmatprep.subr.mxu0 0.0
    %5514 = vmatpush1.msra.mxu0 0.0
    %5515 = vmatprep.subr.mxu0 0.0
    %5516 = vmatpush1.msra.mxu0 0.0
    %5517 = vmatprep.subr.mxu0 0.0
    %5518 = vmatpush1.msra.mxu0 0.0
    %5519 = vmatprep.subr.mxu0 0.0
    %5520 = vmatpush1.msra.mxu0 0.0
    %5521 = vmatprep.subr.mxu0 0.0
    %5522 = vmatpush1.msra.mxu0 0.0
    %5523 = vmatprep.subr.mxu0 0.0
    %5524 = vmatpush1.msra.mxu0 0.0
    %5525 = vmatprep.subr.mxu0 0.0
    %5526 = vmatpush1.msra.mxu0 0.0
    %5527 = vmatprep.subr.mxu0 0.0
    %5528 = vmatpush1.msra.mxu0 0.0
    %5529 = vmatprep.subr.mxu0 0.0
    %5530 = vmatpush1.msra.mxu0 0.0
    %5531 = vmatprep.subr.mxu0 0.0
    %5532 = vmatpush1.msra.mxu0 0.0
    %5533 = vmatprep.subr.mxu0 0.0
    %5534 = vmatpush1.msra.mxu0 0.0
    %5535 = vmatprep.mubr.f32.mxu0 0.0
    %5536 = vmatmul.mubr.f32.gmra.mrb[0].mxu0 %v5124
    %v5537 = vpop.f32.mrb[0].mxu0
    %v5538 = vadd.f32 0.0, %v5537
    %v5539 = vpop.f32.mrb[0].mxu0
    %v5540 = vadd.f32 0.0, %v5539
    %5541 = vdwg.mxu0
    %5542 = vmatprep.subr.mxu0 %v780
    %5543 = vmatpush1.msra.mxu0 %v779
    %5544 = vmatprep.subr.mxu0 %v784
    %5545 = vmatpush1.msra.mxu0 %v783
    %5546 = vmatprep.subr.mxu0 %v788
    %5547 = vmatpush1.msra.mxu0 %v787
    %5548 = vmatprep.subr.mxu0 %v792
    %5549 = vmatpush1.msra.mxu0 %v791
    %5550 = vmatprep.subr.mxu0 %v796
    %5551 = vmatpush1.msra.mxu0 %v795
    %5552 = vmatprep.subr.mxu0 %v800
    %5553 = vmatpush1.msra.mxu0 %v799
    %5554 = vmatprep.subr.mxu0 %v804
    %5555 = vmatpush1.msra.mxu0 %v803
    %5556 = vmatprep.subr.mxu0 %v808
    %5557 = vmatpush1.msra.mxu0 %v807
    %5558 = vmatprep.subr.mxu0 %v812
    %5559 = vmatpush1.msra.mxu0 %v811
    %5560 = vmatprep.subr.mxu0 %v816
    %5561 = vmatpush1.msra.mxu0 %v815
    %5562 = vmatprep.subr.mxu0 %v820
    %5563 = vmatpush1.msra.mxu0 %v819
    %5564 = vmatprep.subr.mxu0 %v824
    %5565 = vmatpush1.msra.mxu0 %v823
    %5566 = vmatprep.subr.mxu0 %v828
    %5567 = vmatpush1.msra.mxu0 %v827
    %5568 = vmatprep.subr.mxu0 %v832
    %5569 = vmatpush1.msra.mxu0 %v831
    %5570 = vmatprep.subr.mxu0 %v836
    %5571 = vmatpush1.msra.mxu0 %v835
    %5572 = vmatprep.subr.mxu0 %v840
    %5573 = vmatpush1.msra.mxu0 %v839
    %5574 = vmatprep.subr.mxu0 0.0
    %5575 = vmatpush1.msra.mxu0 0.0
    %5576 = vmatprep.subr.mxu0 0.0
    %5577 = vmatpush1.msra.mxu0 0.0
    %5578 = vmatprep.subr.mxu0 0.0
    %5579 = vmatpush1.msra.mxu0 0.0
    %5580 = vmatprep.subr.mxu0 0.0
    %5581 = vmatpush1.msra.mxu0 0.0
    %5582 = vmatprep.subr.mxu0 0.0
    %5583 = vmatpush1.msra.mxu0 0.0
    %5584 = vmatprep.subr.mxu0 0.0
    %5585 = vmatpush1.msra.mxu0 0.0
    %5586 = vmatprep.subr.mxu0 0.0
    %5587 = vmatpush1.msra.mxu0 0.0
    %5588 = vmatprep.subr.mxu0 0.0
    %5589 = vmatpush1.msra.mxu0 0.0
    %5590 = vmatprep.subr.mxu0 0.0
    %5591 = vmatpush1.msra.mxu0 0.0
    %5592 = vmatprep.subr.mxu0 0.0
    %5593 = vmatpush1.msra.mxu0 0.0
    %5594 = vmatprep.subr.mxu0 0.0
    %5595 = vmatpush1.msra.mxu0 0.0
    %5596 = vmatprep.subr.mxu0 0.0
    %5597 = vmatpush1.msra.mxu0 0.0
    %5598 = vmatprep.subr.mxu0 0.0
    %5599 = vmatpush1.msra.mxu0 0.0
    %5600 = vmatprep.subr.mxu0 0.0
    %5601 = vmatpush1.msra.mxu0 0.0
    %5602 = vmatprep.subr.mxu0 0.0
    %5603 = vmatpush1.msra.mxu0 0.0
    %5604 = vmatprep.subr.mxu0 0.0
    %5605 = vmatpush1.msra.mxu0 0.0
    %5606 = vmatprep.mubr.f32.mxu0 0.0
    %5607 = vmatmul.mubr.f32.gmra.mrb[0].mxu0 %v5124
    %v5608 = vpop.f32.mrb[0].mxu0
    %v5609 = vadd.f32 0.0, %v5608
    %v5610 = vpop.f32.mrb[0].mxu0
    %v5611 = vadd.f32 0.0, %v5610
    %5612 = vdwg.mxu0
    %v5617 = vrot.slane %v5538, 4
    %v5618 = vrot.slane %v5540, 4
    %v5619 = vrot.slane %v5609, 4
    %v5620 = vrot.slane %v5611, 4
    %v5625 = vadd.f32 %v5467, %v5617
    %v5626 = vadd.f32 %v5468, %v5618
    %v5627 = vadd.f32 %v5469, %v5619
    %v5628 = vadd.f32 %v5470, %v5620
    %v5629 = vld [vmem:[#allocation3 + $0x20] sm:$0x30]
    %v5630 = vld [vmem:[#allocation3 + $0x28] sm:$0x30]
    %v5631 = vld [vmem:[#allocation3 + $0x30] sm:$0x30]
    %v5632 = vld [vmem:[#allocation3 + $0x38] sm:$0x30]
    %5633 = vmatprep.subr.mxu0 %v842
    %5634 = vmatpush1.msra.mxu0 %v841
    %5635 = vmatprep.subr.mxu0 %v846
    %5636 = vmatpush1.msra.mxu0 %v845
    %5637 = vmatprep.subr.mxu0 %v850
    %5638 = vmatpush1.msra.mxu0 %v849
    %5639 = vmatprep.subr.mxu0 %v854
    %5640 = vmatpush1.msra.mxu0 %v853
    %5641 = vmatprep.subr.mxu0 %v858
    %5642 = vmatpush1.msra.mxu0 %v857
    %5643 = vmatprep.subr.mxu0 %v862
    %5644 = vmatpush1.msra.mxu0 %v861
    %5645 = vmatprep.subr.mxu0 %v866
    %5646 = vmatpush1.msra.mxu0 %v865
    %5647 = vmatprep.subr.mxu0 %v870
    %5648 = vmatpush1.msra.mxu0 %v869
    %5649 = vmatprep.subr.mxu0 %v874
    %5650 = vmatpush1.msra.mxu0 %v873
    %5651 = vmatprep.subr.mxu0 %v878
    %5652 = vmatpush1.msra.mxu0 %v877
    %5653 = vmatprep.subr.mxu0 %v882
    %5654 = vmatpush1.msra.mxu0 %v881
    %5655 = vmatprep.subr.mxu0 %v886
    %5656 = vmatpush1.msra.mxu0 %v885
    %5657 = vmatprep.subr.mxu0 %v890
    %5658 = vmatpush1.msra.mxu0 %v889
    %5659 = vmatprep.subr.mxu0 %v894
    %5660 = vmatpush1.msra.mxu0 %v893
    %5661 = vmatprep.subr.mxu0 %v898
    %5662 = vmatpush1.msra.mxu0 %v897
    %5663 = vmatprep.subr.mxu0 %v902
    %5664 = vmatpush1.msra.mxu0 %v901
    %5665 = vmatprep.subr.mxu0 0.0
    %5666 = vmatpush1.msra.mxu0 0.0
    %5667 = vmatprep.subr.mxu0 0.0
    %5668 = vmatpush1.msra.mxu0 0.0
    %5669 = vmatprep.subr.mxu0 0.0
    %5670 = vmatpush1.msra.mxu0 0.0
    %5671 = vmatprep.subr.mxu0 0.0
    %5672 = vmatpush1.msra.mxu0 0.0
    %5673 = vmatprep.subr.mxu0 0.0
    %5674 = vmatpush1.msra.mxu0 0.0
    %5675 = vmatprep.subr.mxu0 0.0
    %5676 = vmatpush1.msra.mxu0 0.0
    %5677 = vmatprep.subr.mxu0 0.0
    %5678 = vmatpush1.msra.mxu0 0.0
    %5679 = vmatprep.subr.mxu0 0.0
    %5680 = vmatpush1.msra.mxu0 0.0
    %5681 = vmatprep.subr.mxu0 0.0
    %5682 = vmatpush1.msra.mxu0 0.0
    %5683 = vmatprep.subr.mxu0 0.0
    %5684 = vmatpush1.msra.mxu0 0.0
    %5685 = vmatprep.subr.mxu0 0.0
    %5686 = vmatpush1.msra.mxu0 0.0
    %5687 = vmatprep.subr.mxu0 0.0
    %5688 = vmatpush1.msra.mxu0 0.0
    %5689 = vmatprep.subr.mxu0 0.0
    %5690 = vmatpush1.msra.mxu0 0.0
    %5691 = vmatprep.subr.mxu0 0.0
    %5692 = vmatpush1.msra.mxu0 0.0
    %5693 = vmatprep.subr.mxu0 0.0
    %5694 = vmatpush1.msra.mxu0 0.0
    %5695 = vmatprep.subr.mxu0 0.0
    %5696 = vmatpush1.msra.mxu0 0.0
    %5697 = vmatprep.mubr.f32.mxu0 0.0
    %5698 = vmatmul.mubr.f32.gmra.mrb[0].mxu0 %v5273
    %v5699 = vpop.f32.mrb[0].mxu0
    %v5700 = vadd.f32 0.0, %v5699
    %v5701 = vpop.f32.mrb[0].mxu0
    %v5702 = vadd.f32 0.0, %v5701
    %5703 = vdwg.mxu0
    %5704 = vmatprep.subr.mxu0 %v844
    %5705 = vmatpush1.msra.mxu0 %v843
    %5706 = vmatprep.subr.mxu0 %v848
    %5707 = vmatpush1.msra.mxu0 %v847
    %5708 = vmatprep.subr.mxu0 %v852
    %5709 = vmatpush1.msra.mxu0 %v851
    %5710 = vmatprep.subr.mxu0 %v856
    %5711 = vmatpush1.msra.mxu0 %v855
    %5712 = vmatprep.subr.mxu0 %v860
    %5713 = vmatpush1.msra.mxu0 %v859
    %5714 = vmatprep.subr.mxu0 %v864
    %5715 = vmatpush1.msra.mxu0 %v863
    %5716 = vmatprep.subr.mxu0 %v868
    %5717 = vmatpush1.msra.mxu0 %v867
    %5718 = vmatprep.subr.mxu0 %v872
    %5719 = vmatpush1.msra.mxu0 %v871
    %5720 = vmatprep.subr.mxu0 %v876
    %5721 = vmatpush1.msra.mxu0 %v875
    %5722 = vmatprep.subr.mxu0 %v880
    %5723 = vmatpush1.msra.mxu0 %v879
    %5724 = vmatprep.subr.mxu0 %v884
    %5725 = vmatpush1.msra.mxu0 %v883
    %5726 = vmatprep.subr.mxu0 %v888
    %5727 = vmatpush1.msra.mxu0 %v887
    %5728 = vmatprep.subr.mxu0 %v892
    %5729 = vmatpush1.msra.mxu0 %v891
    %5730 = vmatprep.subr.mxu0 %v896
    %5731 = vmatpush1.msra.mxu0 %v895
    %5732 = vmatprep.subr.mxu0 %v900
    %5733 = vmatpush1.msra.mxu0 %v899
    %5734 = vmatprep.subr.mxu0 %v904
    %5735 = vmatpush1.msra.mxu0 %v903
    %5736 = vmatprep.subr.mxu0 0.0
    %5737 = vmatpush1.msra.mxu0 0.0
    %5738 = vmatprep.subr.mxu0 0.0
    %5739 = vmatpush1.msra.mxu0 0.0
    %5740 = vmatprep.subr.mxu0 0.0
    %5741 = vmatpush1.msra.mxu0 0.0
    %5742 = vmatprep.subr.mxu0 0.0
    %5743 = vmatpush1.msra.mxu0 0.0
    %5744 = vmatprep.subr.mxu0 0.0
    %5745 = vmatpush1.msra.mxu0 0.0
    %5746 = vmatprep.subr.mxu0 0.0
    %5747 = vmatpush1.msra.mxu0 0.0
    %5748 = vmatprep.subr.mxu0 0.0
    %5749 = vmatpush1.msra.mxu0 0.0
    %5750 = vmatprep.subr.mxu0 0.0
    %5751 = vmatpush1.msra.mxu0 0.0
    %5752 = vmatprep.subr.mxu0 0.0
    %5753 = vmatpush1.msra.mxu0 0.0
    %5754 = vmatprep.subr.mxu0 0.0
    %5755 = vmatpush1.msra.mxu0 0.0
    %5756 = vmatprep.subr.mxu0 0.0
    %5757 = vmatpush1.msra.mxu0 0.0
    %5758 = vmatprep.subr.mxu0 0.0
    %5759 = vmatpush1.msra.mxu0 0.0
    %5760 = vmatprep.subr.mxu0 0.0
    %5761 = vmatpush1.msra.mxu0 0.0
    %5762 = vmatprep.subr.mxu0 0.0
    %5763 = vmatpush1.msra.mxu0 0.0
    %5764 = vmatprep.subr.mxu0 0.0
    %5765 = vmatpush1.msra.mxu0 0.0
    %5766 = vmatprep.subr.mxu0 0.0
    %5767 = vmatpush1.msra.mxu0 0.0
    %5768 = vmatprep.mubr.f32.mxu0 0.0
    %5769 = vmatmul.mubr.f32.gmra.mrb[0].mxu0 %v5273
    %v5770 = vpop.f32.mrb[0].mxu0
    %v5771 = vadd.f32 0.0, %v5770
    %v5772 = vpop.f32.mrb[0].mxu0
    %v5773 = vadd.f32 0.0, %v5772
    %5774 = vdwg.mxu0
    %v5779 = vrot.slane %v5700, 4
    %v5780 = vrot.slane %v5702, 4
    %v5781 = vrot.slane %v5771, 4
    %v5782 = vrot.slane %v5773, 4
    %v5787 = vadd.f32 %v5629, %v5779
    %v5788 = vadd.f32 %v5630, %v5780
    %v5789 = vadd.f32 %v5631, %v5781
    %v5790 = vadd.f32 %v5632, %v5782
    %v5791 = vxor.u32 %v5625, 2147483648
    %v5792 = vmul.f32 %v5791, 1.442695
    %v5793 = vpow.pop %v5792
    %v5794 = vadd.f32 %v5793, 1.0
    %v5795 = vrcp.pop %v5794
    %v5796 = vmul.f32 1.0, %v5795
    %v5797 = vxor.u32 %v5626, 2147483648
    %v5798 = vmul.f32 %v5797, 1.442695
    %v5799 = vpow.pop %v5798
    %v5800 = vadd.f32 %v5799, 1.0
    %v5801 = vrcp.pop %v5800
    %v5802 = vmul.f32 1.0, %v5801
    %v5803 = vtanh.pop %v5627
    %v5804 = vxor.u32 %v5628, 2147483648
    %v5805 = vmul.f32 %v5804, 1.442695
    %v5806 = vpow.pop %v5805
    %v5807 = vadd.f32 %v5806, 1.0
    %v5808 = vrcp.pop %v5807
    %v5809 = vmul.f32 1.0, %v5808
    %v5811 = vrot.slane %v5091, 6
    %v5813 = vmul.f32 %v5802, %v5811
    %v5814 = vmul.f32 %v5796, %v5803
    %v5815 = vadd.f32 %v5813, %v5814
    %v5816 = vtanh.pop %v5815
    %v5817 = vmul.f32 %v5809, %v5816
    %v5818 = vxor.u32 %v5787, 2147483648
    %v5819 = vmul.f32 %v5818, 1.442695
    %v5820 = vpow.pop %v5819
    %v5821 = vadd.f32 %v5820, 1.0
    %v5822 = vrcp.pop %v5821
    %v5823 = vmul.f32 1.0, %v5822
    %v5824 = vxor.u32 %v5788, 2147483648
    %v5825 = vmul.f32 %v5824, 1.442695
    %v5826 = vpow.pop %v5825
    %v5827 = vadd.f32 %v5826, 1.0
    %v5828 = vrcp.pop %v5827
    %v5829 = vmul.f32 1.0, %v5828
    %v5830 = vtanh.pop %v5789
    %v5831 = vxor.u32 %v5790, 2147483648
    %v5832 = vmul.f32 %v5831, 1.442695
    %v5833 = vpow.pop %v5832
    %v5834 = vadd.f32 %v5833, 1.0
    %v5835 = vrcp.pop %v5834
    %v5836 = vmul.f32 1.0, %v5835
    %v5838 = vrot.slane %v5118, 6
    %v5840 = vmul.f32 %v5829, %v5838
    %v5841 = vmul.f32 %v5823, %v5830
    %v5842 = vadd.f32 %v5840, %v5841
    %v5843 = vtanh.pop %v5842
    %v5844 = vmul.f32 %v5836, %v5843
    %v5846 = vrot.slane %v5442, 4
    %v5848 = vrot.slane %v5817, 4
    %v5849 = vrot.slane %v5846, 4
    %5852 = vmatprep.subr.mxu0 %v906
    %5853 = vmatpush1.msra.mxu0 %v905
    %5854 = vmatprep.subr.mxu0 %v910
    %5855 = vmatpush1.msra.mxu0 %v909
    %5856 = vmatprep.subr.mxu0 %v914
    %5857 = vmatpush1.msra.mxu0 %v913
    %5858 = vmatprep.subr.mxu0 %v918
    %5859 = vmatpush1.msra.mxu0 %v917
    %5860 = vmatprep.subr.mxu0 %v922
    %5861 = vmatpush1.msra.mxu0 %v921
    %5862 = vmatprep.subr.mxu0 %v926
    %5863 = vmatpush1.msra.mxu0 %v925
    %5864 = vmatprep.subr.mxu0 %v930
    %5865 = vmatpush1.msra.mxu0 %v929
    %5866 = vmatprep.subr.mxu0 %v934
    %5867 = vmatpush1.msra.mxu0 %v933
    %5868 = vmatprep.subr.mxu0 %v938
    %5869 = vmatpush1.msra.mxu0 %v937
    %5870 = vmatprep.subr.mxu0 %v942
    %5871 = vmatpush1.msra.mxu0 %v941
    %5872 = vmatprep.subr.mxu0 %v946
    %5873 = vmatpush1.msra.mxu0 %v945
    %5874 = vmatprep.subr.mxu0 %v950
    %5875 = vmatpush1.msra.mxu0 %v949
    %5876 = vmatprep.subr.mxu0 %v954
    %5877 = vmatpush1.msra.mxu0 %v953
    %5878 = vmatprep.subr.mxu0 %v958
    %5879 = vmatpush1.msra.mxu0 %v957
    %5880 = vmatprep.subr.mxu0 %v962
    %5881 = vmatpush1.msra.mxu0 %v961
    %5882 = vmatprep.subr.mxu0 %v966
    %5883 = vmatpush1.msra.mxu0 %v965
    %5884 = vmatprep.subr.mxu0 %v970
    %5885 = vmatpush1.msra.mxu0 %v969
    %5886 = vmatprep.subr.mxu0 %v974
    %5887 = vmatpush1.msra.mxu0 %v973
    %5888 = vmatprep.subr.mxu0 %v978
    %5889 = vmatpush1.msra.mxu0 %v977
    %5890 = vmatprep.subr.mxu0 %v982
    %5891 = vmatpush1.msra.mxu0 %v981
    %5892 = vmatprep.subr.mxu0 %v986
    %5893 = vmatpush1.msra.mxu0 %v985
    %5894 = vmatprep.subr.mxu0 %v990
    %5895 = vmatpush1.msra.mxu0 %v989
    %5896 = vmatprep.subr.mxu0 %v994
    %5897 = vmatpush1.msra.mxu0 %v993
    %5898 = vmatprep.subr.mxu0 %v998
    %5899 = vmatpush1.msra.mxu0 %v997
    %5900 = vmatprep.subr.mxu0 %v1002
    %5901 = vmatpush1.msra.mxu0 %v1001
    %5902 = vmatprep.subr.mxu0 %v1006
    %5903 = vmatpush1.msra.mxu0 %v1005
    %5904 = vmatprep.subr.mxu0 %v1010
    %5905 = vmatpush1.msra.mxu0 %v1009
    %5906 = vmatprep.subr.mxu0 %v1014
    %5907 = vmatpush1.msra.mxu0 %v1013
    %5908 = vmatprep.subr.mxu0 %v1018
    %5909 = vmatpush1.msra.mxu0 %v1017
    %5910 = vmatprep.subr.mxu0 %v1022
    %5911 = vmatpush1.msra.mxu0 %v1021
    %5912 = vmatprep.subr.mxu0 %v1026
    %5913 = vmatpush1.msra.mxu0 %v1025
    %5914 = vmatprep.subr.mxu0 %v1030
    %5915 = vmatpush1.msra.mxu0 %v1029
    %5916 = vmatprep.mubr.f32.mxu0 %v5849
    %5917 = vmatmul.mubr.f32.gmra.mrb[0].mxu0 %v5848
    %v5918 = vpop.f32.mrb[0].mxu0
    %v5919 = vadd.f32 %v1166, %v5918
    %v5920 = vpop.f32.mrb[0].mxu0
    %v5921 = vadd.f32 %v1170, %v5920
    %5922 = vdwg.mxu0
    %5923 = vmatprep.subr.mxu0 %v908
    %5924 = vmatpush1.msra.mxu0 %v907
    %5925 = vmatprep.subr.mxu0 %v912
    %5926 = vmatpush1.msra.mxu0 %v911
    %5927 = vmatprep.subr.mxu0 %v916
    %5928 = vmatpush1.msra.mxu0 %v915
    %5929 = vmatprep.subr.mxu0 %v920
    %5930 = vmatpush1.msra.mxu0 %v919
    %5931 = vmatprep.subr.mxu0 %v924
    %5932 = vmatpush1.msra.mxu0 %v923
    %5933 = vmatprep.subr.mxu0 %v928
    %5934 = vmatpush1.msra.mxu0 %v927
    %5935 = vmatprep.subr.mxu0 %v932
    %5936 = vmatpush1.msra.mxu0 %v931
    %5937 = vmatprep.subr.mxu0 %v936
    %5938 = vmatpush1.msra.mxu0 %v935
    %5939 = vmatprep.subr.mxu0 %v940
    %5940 = vmatpush1.msra.mxu0 %v939
    %5941 = vmatprep.subr.mxu0 %v944
    %5942 = vmatpush1.msra.mxu0 %v943
    %5943 = vmatprep.subr.mxu0 %v948
    %5944 = vmatpush1.msra.mxu0 %v947
    %5945 = vmatprep.subr.mxu0 %v952
    %5946 = vmatpush1.msra.mxu0 %v951
    %5947 = vmatprep.subr.mxu0 %v956
    %5948 = vmatpush1.msra.mxu0 %v955
    %5949 = vmatprep.subr.mxu0 %v960
    %5950 = vmatpush1.msra.mxu0 %v959
    %5951 = vmatprep.subr.mxu0 %v964
    %5952 = vmatpush1.msra.mxu0 %v963
    %5953 = vmatprep.subr.mxu0 %v968
    %5954 = vmatpush1.msra.mxu0 %v967
    %5955 = vmatprep.subr.mxu0 %v972
    %5956 = vmatpush1.msra.mxu0 %v971
    %5957 = vmatprep.subr.mxu0 %v976
    %5958 = vmatpush1.msra.mxu0 %v975
    %5959 = vmatprep.subr.mxu0 %v980
    %5960 = vmatpush1.msra.mxu0 %v979
    %5961 = vmatprep.subr.mxu0 %v984
    %5962 = vmatpush1.msra.mxu0 %v983
    %5963 = vmatprep.subr.mxu0 %v988
    %5964 = vmatpush1.msra.mxu0 %v987
    %5965 = vmatprep.subr.mxu0 %v992
    %5966 = vmatpush1.msra.mxu0 %v991
    %5967 = vmatprep.subr.mxu0 %v996
    %5968 = vmatpush1.msra.mxu0 %v995
    %5969 = vmatprep.subr.mxu0 %v1000
    %5970 = vmatpush1.msra.mxu0 %v999
    %5971 = vmatprep.subr.mxu0 %v1004
    %5972 = vmatpush1.msra.mxu0 %v1003
    %5973 = vmatprep.subr.mxu0 %v1008
    %5974 = vmatpush1.msra.mxu0 %v1007
    %5975 = vmatprep.subr.mxu0 %v1012
    %5976 = vmatpush1.msra.mxu0 %v1011
    %5977 = vmatprep.subr.mxu0 %v1016
    %5978 = vmatpush1.msra.mxu0 %v1015
    %5979 = vmatprep.subr.mxu0 %v1020
    %5980 = vmatpush1.msra.mxu0 %v1019
    %5981 = vmatprep.subr.mxu0 %v1024
    %5982 = vmatpush1.msra.mxu0 %v1023
    %5983 = vmatprep.subr.mxu0 %v1028
    %5984 = vmatpush1.msra.mxu0 %v1027
    %5985 = vmatprep.subr.mxu0 %v1032
    %5986 = vmatpush1.msra.mxu0 %v1031
    %5987 = vmatprep.mubr.f32.mxu0 %v5849
    %5988 = vmatmul.mubr.f32.gmra.mrb[0].mxu0 %v5848
    %v5989 = vpop.f32.mrb[0].mxu0
    %v5990 = vadd.f32 %v1174, %v5989
    %v5991 = vpop.f32.mrb[0].mxu0
    %v5992 = vadd.f32 %v1178, %v5991
    %5993 = vdwg.mxu0
    %v5995 = vrot.slane %v5466, 4
    %v5997 = vrot.slane %v5844, 4
    %v5998 = vrot.slane %v5995, 4
    %6001 = vmatprep.subr.mxu0 %v1034
    %6002 = vmatpush1.msra.mxu0 %v1033
    %6003 = vmatprep.subr.mxu0 %v1038
    %6004 = vmatpush1.msra.mxu0 %v1037
    %6005 = vmatprep.subr.mxu0 %v1042
    %6006 = vmatpush1.msra.mxu0 %v1041
    %6007 = vmatprep.subr.mxu0 %v1046
    %6008 = vmatpush1.msra.mxu0 %v1045
    %6009 = vmatprep.subr.mxu0 %v1050
    %6010 = vmatpush1.msra.mxu0 %v1049
    %6011 = vmatprep.subr.mxu0 %v1054
    %6012 = vmatpush1.msra.mxu0 %v1053
    %6013 = vmatprep.subr.mxu0 %v1058
    %6014 = vmatpush1.msra.mxu0 %v1057
    %6015 = vmatprep.subr.mxu0 %v1062
    %6016 = vmatpush1.msra.mxu0 %v1061
    %6017 = vmatprep.subr.mxu0 %v1066
    %6018 = vmatpush1.msra.mxu0 %v1065
    %6019 = vmatprep.subr.mxu0 %v1070
    %6020 = vmatpush1.msra.mxu0 %v1069
    %6021 = vmatprep.subr.mxu0 %v1074
    %6022 = vmatpush1.msra.mxu0 %v1073
    %6023 = vmatprep.subr.mxu0 %v1078
    %6024 = vmatpush1.msra.mxu0 %v1077
    %6025 = vmatprep.subr.mxu0 %v1082
    %6026 = vmatpush1.msra.mxu0 %v1081
    %6027 = vmatprep.subr.mxu0 %v1086
    %6028 = vmatpush1.msra.mxu0 %v1085
    %6029 = vmatprep.subr.mxu0 %v1090
    %6030 = vmatpush1.msra.mxu0 %v1089
    %6031 = vmatprep.subr.mxu0 %v1094
    %6032 = vmatpush1.msra.mxu0 %v1093
    %6033 = vmatprep.subr.mxu0 %v1098
    %6034 = vmatpush1.msra.mxu0 %v1097
    %6035 = vmatprep.subr.mxu0 %v1102
    %6036 = vmatpush1.msra.mxu0 %v1101
    %6037 = vmatprep.subr.mxu0 %v1106
    %6038 = vmatpush1.msra.mxu0 %v1105
    %6039 = vmatprep.subr.mxu0 %v1110
    %6040 = vmatpush1.msra.mxu0 %v1109
    %6041 = vmatprep.subr.mxu0 %v1114
    %6042 = vmatpush1.msra.mxu0 %v1113
    %6043 = vmatprep.subr.mxu0 %v1118
    %6044 = vmatpush1.msra.mxu0 %v1117
    %6045 = vmatprep.subr.mxu0 %v1122
    %6046 = vmatpush1.msra.mxu0 %v1121
    %6047 = vmatprep.subr.mxu0 %v1126
    %6048 = vmatpush1.msra.mxu0 %v1125
    %6049 = vmatprep.subr.mxu0 %v1130
    %6050 = vmatpush1.msra.mxu0 %v1129
    %6051 = vmatprep.subr.mxu0 %v1134
    %6052 = vmatpush1.msra.mxu0 %v1133
    %6053 = vmatprep.subr.mxu0 %v1138
    %6054 = vmatpush1.msra.mxu0 %v1137
    %6055 = vmatprep.subr.mxu0 %v1142
    %6056 = vmatpush1.msra.mxu0 %v1141
    %6057 = vmatprep.subr.mxu0 %v1146
    %6058 = vmatpush1.msra.mxu0 %v1145
    %6059 = vmatprep.subr.mxu0 %v1150
    %6060 = vmatpush1.msra.mxu0 %v1149
    %6061 = vmatprep.subr.mxu0 %v1154
    %6062 = vmatpush1.msra.mxu0 %v1153
    %6063 = vmatprep.subr.mxu0 %v1158
    %6064 = vmatpush1.msra.mxu0 %v1157
    %6065 = vmatprep.mubr.f32.mxu0 %v5998
    %6066 = vmatmul.mubr.f32.gmra.mrb[0].mxu0 %v5997
    %v6067 = vpop.f32.mrb[0].mxu0
    %v6068 = vadd.f32 %v1188, %v6067
    %v6069 = vpop.f32.mrb[0].mxu0
    %v6070 = vadd.f32 %v1192, %v6069
    %6071 = vdwg.mxu0
    %6072 = vmatprep.subr.mxu0 %v1036
    %6073 = vmatpush1.msra.mxu0 %v1035
    %6074 = vmatprep.subr.mxu0 %v1040
    %6075 = vmatpush1.msra.mxu0 %v1039
    %6076 = vmatprep.subr.mxu0 %v1044
    %6077 = vmatpush1.msra.mxu0 %v1043
    %6078 = vmatprep.subr.mxu0 %v1048
    %6079 = vmatpush1.msra.mxu0 %v1047
    %6080 = vmatprep.subr.mxu0 %v1052
    %6081 = vmatpush1.msra.mxu0 %v1051
    %6082 = vmatprep.subr.mxu0 %v1056
    %6083 = vmatpush1.msra.mxu0 %v1055
    %6084 = vmatprep.subr.mxu0 %v1060
    %6085 = vmatpush1.msra.mxu0 %v1059
    %6086 = vmatprep.subr.mxu0 %v1064
    %6087 = vmatpush1.msra.mxu0 %v1063
    %6088 = vmatprep.subr.mxu0 %v1068
    %6089 = vmatpush1.msra.mxu0 %v1067
    %6090 = vmatprep.subr.mxu0 %v1072
    %6091 = vmatpush1.msra.mxu0 %v1071
    %6092 = vmatprep.subr.mxu0 %v1076
    %6093 = vmatpush1.msra.mxu0 %v1075
    %6094 = vmatprep.subr.mxu0 %v1080
    %6095 = vmatpush1.msra.mxu0 %v1079
    %6096 = vmatprep.subr.mxu0 %v1084
    %6097 = vmatpush1.msra.mxu0 %v1083
    %6098 = vmatprep.subr.mxu0 %v1088
    %6099 = vmatpush1.msra.mxu0 %v1087
    %6100 = vmatprep.subr.mxu0 %v1092
    %6101 = vmatpush1.msra.mxu0 %v1091
    %6102 = vmatprep.subr.mxu0 %v1096
    %6103 = vmatpush1.msra.mxu0 %v1095
    %6104 = vmatprep.subr.mxu0 %v1100
    %6105 = vmatpush1.msra.mxu0 %v1099
    %6106 = vmatprep.subr.mxu0 %v1104
    %6107 = vmatpush1.msra.mxu0 %v1103
    %6108 = vmatprep.subr.mxu0 %v1108
    %6109 = vmatpush1.msra.mxu0 %v1107
    %6110 = vmatprep.subr.mxu0 %v1112
    %6111 = vmatpush1.msra.mxu0 %v1111
    %6112 = vmatprep.subr.mxu0 %v1116
    %6113 = vmatpush1.msra.mxu0 %v1115
    %6114 = vmatprep.subr.mxu0 %v1120
    %6115 = vmatpush1.msra.mxu0 %v1119
    %6116 = vmatprep.subr.mxu0 %v1124
    %6117 = vmatpush1.msra.mxu0 %v1123
    %6118 = vmatprep.subr.mxu0 %v1128
    %6119 = vmatpush1.msra.mxu0 %v1127
    %6120 = vmatprep.subr.mxu0 %v1132
    %6121 = vmatpush1.msra.mxu0 %v1131
    %6122 = vmatprep.subr.mxu0 %v1136
    %6123 = vmatpush1.msra.mxu0 %v1135
    %6124 = vmatprep.subr.mxu0 %v1140
    %6125 = vmatpush1.msra.mxu0 %v1139
    %6126 = vmatprep.subr.mxu0 %v1144
    %6127 = vmatpush1.msra.mxu0 %v1143
    %6128 = vmatprep.subr.mxu0 %v1148
    %6129 = vmatpush1.msra.mxu0 %v1147
    %6130 = vmatprep.subr.mxu0 %v1152
    %6131 = vmatpush1.msra.mxu0 %v1151
    %6132 = vmatprep.subr.mxu0 %v1156
    %6133 = vmatpush1.msra.mxu0 %v1155
    %6134 = vmatprep.subr.mxu0 %v1160
    %6135 = vmatpush1.msra.mxu0 %v1159
    %6136 = vmatprep.mubr.f32.mxu0 %v5998
    %6137 = vmatmul.mubr.f32.gmra.mrb[0].mxu0 %v5997
    %v6138 = vpop.f32.mrb[0].mxu0
    %v6139 = vadd.f32 %v1196, %v6138
    %v6140 = vpop.f32.mrb[0].mxu0
    %v6141 = vadd.f32 %v1200, %v6140
    %6142 = vdwg.mxu0
    %v6143 = vxor.u32 %v5919, 2147483648
    %v6144 = vmul.f32 %v6143, 1.442695
    %v6145 = vpow.pop %v6144
    %v6146 = vadd.f32 %v6145, 1.0
    %v6147 = vrcp.pop %v6146
    %v6148 = vmul.f32 1.0, %v6147
    %v6149 = vxor.u32 %v5921, 2147483648
    %v6150 = vmul.f32 %v6149, 1.442695
    %v6151 = vpow.pop %v6150
    %v6152 = vadd.f32 %v6151, 1.0
    %v6153 = vrcp.pop %v6152
    %v6154 = vmul.f32 1.0, %v6153
    %v6155 = vtanh.pop %v5990
    %v6156 = vxor.u32 %v5992, 2147483648
    %v6157 = vmul.f32 %v6156, 1.442695
    %v6158 = vpow.pop %v6157
    %v6159 = vadd.f32 %v6158, 1.0
    %v6160 = vrcp.pop %v6159
    %v6161 = vmul.f32 1.0, %v6160
    %v6162 = vmul.f32 %v6154, %v5440
    %v6163 = vmul.f32 %v6148, %v6155
    %v6164 = vadd.f32 %v6162, %v6163
    %v6165 = vtanh.pop %v6164
    %v6166 = vmul.f32 %v6161, %v6165
    %v6167 = vxor.u32 %v6068, 2147483648
    %v6168 = vmul.f32 %v6167, 1.442695
    %v6169 = vpow.pop %v6168
    %v6170 = vadd.f32 %v6169, 1.0
    %v6171 = vrcp.pop %v6170
    %v6172 = vmul.f32 1.0, %v6171
    %v6173 = vxor.u32 %v6070, 2147483648
    %v6174 = vmul.f32 %v6173, 1.442695
    %v6175 = vpow.pop %v6174
    %v6176 = vadd.f32 %v6175, 1.0
    %v6177 = vrcp.pop %v6176
    %v6178 = vmul.f32 1.0, %v6177
    %v6179 = vtanh.pop %v6139
    %v6180 = vxor.u32 %v6141, 2147483648
    %v6181 = vmul.f32 %v6180, 1.442695
    %v6182 = vpow.pop %v6181
    %v6183 = vadd.f32 %v6182, 1.0
    %v6184 = vrcp.pop %v6183
    %v6185 = vmul.f32 1.0, %v6184
    %v6186 = vmul.f32 %v6178, %v5464
    %v6187 = vmul.f32 %v6172, %v6179
    %v6188 = vadd.f32 %v6186, %v6187
    %v6189 = vtanh.pop %v6188
    %v6190 = vmul.f32 %v6185, %v6189
    %v6191 = vld [vmem:[#allocation2 + $0x20] sm:$0xc0]
    %v6192 = vld [vmem:[#allocation2 + $0x28] sm:$0xc0]
    %v6193 = vld [vmem:[#allocation2 + $0x30] sm:$0xc0]
    %v6194 = vld [vmem:[#allocation2 + $0x38] sm:$0xc0]
    %6195 = vmatprep.subr.mxu0 %v778
    %6196 = vmatpush1.msra.mxu0 %v777
    %6197 = vmatprep.subr.mxu0 %v782
    %6198 = vmatpush1.msra.mxu0 %v781
    %6199 = vmatprep.subr.mxu0 %v786
    %6200 = vmatpush1.msra.mxu0 %v785
    %6201 = vmatprep.subr.mxu0 %v790
    %6202 = vmatpush1.msra.mxu0 %v789
    %6203 = vmatprep.subr.mxu0 %v794
    %6204 = vmatpush1.msra.mxu0 %v793
    %6205 = vmatprep.subr.mxu0 %v798
    %6206 = vmatpush1.msra.mxu0 %v797
    %6207 = vmatprep.subr.mxu0 %v802
    %6208 = vmatpush1.msra.mxu0 %v801
    %6209 = vmatprep.subr.mxu0 %v806
    %6210 = vmatpush1.msra.mxu0 %v805
    %6211 = vmatprep.subr.mxu0 %v810
    %6212 = vmatpush1.msra.mxu0 %v809
    %6213 = vmatprep.subr.mxu0 %v814
    %6214 = vmatpush1.msra.mxu0 %v813
    %6215 = vmatprep.subr.mxu0 %v818
    %6216 = vmatpush1.msra.mxu0 %v817
    %6217 = vmatprep.subr.mxu0 %v822
    %6218 = vmatpush1.msra.mxu0 %v821
    %6219 = vmatprep.subr.mxu0 %v826
    %6220 = vmatpush1.msra.mxu0 %v825
    %6221 = vmatprep.subr.mxu0 %v830
    %6222 = vmatpush1.msra.mxu0 %v829
    %6223 = vmatprep.subr.mxu0 %v834
    %6224 = vmatpush1.msra.mxu0 %v833
    %6225 = vmatprep.subr.mxu0 %v838
    %6226 = vmatpush1.msra.mxu0 %v837
    %6227 = vmatprep.subr.mxu0 0.0
    %6228 = vmatpush1.msra.mxu0 0.0
    %6229 = vmatprep.subr.mxu0 0.0
    %6230 = vmatpush1.msra.mxu0 0.0
    %6231 = vmatprep.subr.mxu0 0.0
    %6232 = vmatpush1.msra.mxu0 0.0
    %6233 = vmatprep.subr.mxu0 0.0
    %6234 = vmatpush1.msra.mxu0 0.0
    %6235 = vmatprep.subr.mxu0 0.0
    %6236 = vmatpush1.msra.mxu0 0.0
    %6237 = vmatprep.subr.mxu0 0.0
    %6238 = vmatpush1.msra.mxu0 0.0
    %6239 = vmatprep.subr.mxu0 0.0
    %6240 = vmatpush1.msra.mxu0 0.0
    %6241 = vmatprep.subr.mxu0 0.0
    %6242 = vmatpush1.msra.mxu0 0.0
    %6243 = vmatprep.subr.mxu0 0.0
    %6244 = vmatpush1.msra.mxu0 0.0
    %6245 = vmatprep.subr.mxu0 0.0
    %6246 = vmatpush1.msra.mxu0 0.0
    %6247 = vmatprep.subr.mxu0 0.0
    %6248 = vmatpush1.msra.mxu0 0.0
    %6249 = vmatprep.subr.mxu0 0.0
    %6250 = vmatpush1.msra.mxu0 0.0
    %6251 = vmatprep.subr.mxu0 0.0
    %6252 = vmatpush1.msra.mxu0 0.0
    %6253 = vmatprep.subr.mxu0 0.0
    %6254 = vmatpush1.msra.mxu0 0.0
    %6255 = vmatprep.subr.mxu0 0.0
    %6256 = vmatpush1.msra.mxu0 0.0
    %6257 = vmatprep.subr.mxu0 0.0
    %6258 = vmatpush1.msra.mxu0 0.0
    %6259 = vmatprep.mubr.f32.mxu0 0.0
    %6260 = vmatmul.mubr.f32.gmra.mrb[0].mxu0 %v5848
    %v6261 = vpop.f32.mrb[0].mxu0
    %v6262 = vadd.f32 0.0, %v6261
    %v6263 = vpop.f32.mrb[0].mxu0
    %v6264 = vadd.f32 0.0, %v6263
    %6265 = vdwg.mxu0
    %6266 = vmatprep.subr.mxu0 %v780
    %6267 = vmatpush1.msra.mxu0 %v779
    %6268 = vmatprep.subr.mxu0 %v784
    %6269 = vmatpush1.msra.mxu0 %v783
    %6270 = vmatprep.subr.mxu0 %v788
    %6271 = vmatpush1.msra.mxu0 %v787
    %6272 = vmatprep.subr.mxu0 %v792
    %6273 = vmatpush1.msra.mxu0 %v791
    %6274 = vmatprep.subr.mxu0 %v796
    %6275 = vmatpush1.msra.mxu0 %v795
    %6276 = vmatprep.subr.mxu0 %v800
    %6277 = vmatpush1.msra.mxu0 %v799
    %6278 = vmatprep.subr.mxu0 %v804
    %6279 = vmatpush1.msra.mxu0 %v803
    %6280 = vmatprep.subr.mxu0 %v808
    %6281 = vmatpush1.msra.mxu0 %v807
    %6282 = vmatprep.subr.mxu0 %v812
    %6283 = vmatpush1.msra.mxu0 %v811
    %6284 = vmatprep.subr.mxu0 %v816
    %6285 = vmatpush1.msra.mxu0 %v815
    %6286 = vmatprep.subr.mxu0 %v820
    %6287 = vmatpush1.msra.mxu0 %v819
    %6288 = vmatprep.subr.mxu0 %v824
    %6289 = vmatpush1.msra.mxu0 %v823
    %6290 = vmatprep.subr.mxu0 %v828
    %6291 = vmatpush1.msra.mxu0 %v827
    %6292 = vmatprep.subr.mxu0 %v832
    %6293 = vmatpush1.msra.mxu0 %v831
    %6294 = vmatprep.subr.mxu0 %v836
    %6295 = vmatpush1.msra.mxu0 %v835
    %6296 = vmatprep.subr.mxu0 %v840
    %6297 = vmatpush1.msra.mxu0 %v839
    %6298 = vmatprep.subr.mxu0 0.0
    %6299 = vmatpush1.msra.mxu0 0.0
    %6300 = vmatprep.subr.mxu0 0.0
    %6301 = vmatpush1.msra.mxu0 0.0
    %6302 = vmatprep.subr.mxu0 0.0
    %6303 = vmatpush1.msra.mxu0 0.0
    %6304 = vmatprep.subr.mxu0 0.0
    %6305 = vmatpush1.msra.mxu0 0.0
    %6306 = vmatprep.subr.mxu0 0.0
    %6307 = vmatpush1.msra.mxu0 0.0
    %6308 = vmatprep.subr.mxu0 0.0
    %6309 = vmatpush1.msra.mxu0 0.0
    %6310 = vmatprep.subr.mxu0 0.0
    %6311 = vmatpush1.msra.mxu0 0.0
    %6312 = vmatprep.subr.mxu0 0.0
    %6313 = vmatpush1.msra.mxu0 0.0
    %6314 = vmatprep.subr.mxu0 0.0
    %6315 = vmatpush1.msra.mxu0 0.0
    %6316 = vmatprep.subr.mxu0 0.0
    %6317 = vmatpush1.msra.mxu0 0.0
    %6318 = vmatprep.subr.mxu0 0.0
    %6319 = vmatpush1.msra.mxu0 0.0
    %6320 = vmatprep.subr.mxu0 0.0
    %6321 = vmatpush1.msra.mxu0 0.0
    %6322 = vmatprep.subr.mxu0 0.0
    %6323 = vmatpush1.msra.mxu0 0.0
    %6324 = vmatprep.subr.mxu0 0.0
    %6325 = vmatpush1.msra.mxu0 0.0
    %6326 = vmatprep.subr.mxu0 0.0
    %6327 = vmatpush1.msra.mxu0 0.0
    %6328 = vmatprep.subr.mxu0 0.0
    %6329 = vmatpush1.msra.mxu0 0.0
    %6330 = vmatprep.mubr.f32.mxu0 0.0
    %6331 = vmatmul.mubr.f32.gmra.mrb[0].mxu0 %v5848
    %v6332 = vpop.f32.mrb[0].mxu0
    %v6333 = vadd.f32 0.0, %v6332
    %v6334 = vpop.f32.mrb[0].mxu0
    %v6335 = vadd.f32 0.0, %v6334
    %6336 = vdwg.mxu0
    %v6341 = vrot.slane %v6262, 2
    %v6342 = vrot.slane %v6264, 2
    %v6343 = vrot.slane %v6333, 2
    %v6344 = vrot.slane %v6335, 2
    %v6349 = vadd.f32 %v6191, %v6341
    %v6350 = vadd.f32 %v6192, %v6342
    %v6351 = vadd.f32 %v6193, %v6343
    %v6352 = vadd.f32 %v6194, %v6344
    %v6353 = vld [vmem:[#allocation3 + $0x20] sm:$0xc0]
    %v6354 = vld [vmem:[#allocation3 + $0x28] sm:$0xc0]
    %v6355 = vld [vmem:[#allocation3 + $0x30] sm:$0xc0]
    %v6356 = vld [vmem:[#allocation3 + $0x38] sm:$0xc0]
    %6357 = vmatprep.subr.mxu0 %v842
    %6358 = vmatpush1.msra.mxu0 %v841
    %6359 = vmatprep.subr.mxu0 %v846
    %6360 = vmatpush1.msra.mxu0 %v845
    %6361 = vmatprep.subr.mxu0 %v850
    %6362 = vmatpush1.msra.mxu0 %v849
    %6363 = vmatprep.subr.mxu0 %v854
    %6364 = vmatpush1.msra.mxu0 %v853
    %6365 = vmatprep.subr.mxu0 %v858
    %6366 = vmatpush1.msra.mxu0 %v857
    %6367 = vmatprep.subr.mxu0 %v862
    %6368 = vmatpush1.msra.mxu0 %v861
    %6369 = vmatprep.subr.mxu0 %v866
    %6370 = vmatpush1.msra.mxu0 %v865
    %6371 = vmatprep.subr.mxu0 %v870
    %6372 = vmatpush1.msra.mxu0 %v869
    %6373 = vmatprep.subr.mxu0 %v874
    %6374 = vmatpush1.msra.mxu0 %v873
    %6375 = vmatprep.subr.mxu0 %v878
    %6376 = vmatpush1.msra.mxu0 %v877
    %6377 = vmatprep.subr.mxu0 %v882
    %6378 = vmatpush1.msra.mxu0 %v881
    %6379 = vmatprep.subr.mxu0 %v886
    %6380 = vmatpush1.msra.mxu0 %v885
    %6381 = vmatprep.subr.mxu0 %v890
    %6382 = vmatpush1.msra.mxu0 %v889
    %6383 = vmatprep.subr.mxu0 %v894
    %6384 = vmatpush1.msra.mxu0 %v893
    %6385 = vmatprep.subr.mxu0 %v898
    %6386 = vmatpush1.msra.mxu0 %v897
    %6387 = vmatprep.subr.mxu0 %v902
    %6388 = vmatpush1.msra.mxu0 %v901
    %6389 = vmatprep.subr.mxu0 0.0
    %6390 = vmatpush1.msra.mxu0 0.0
    %6391 = vmatprep.subr.mxu0 0.0
    %6392 = vmatpush1.msra.mxu0 0.0
    %6393 = vmatprep.subr.mxu0 0.0
    %6394 = vmatpush1.msra.mxu0 0.0
    %6395 = vmatprep.subr.mxu0 0.0
    %6396 = vmatpush1.msra.mxu0 0.0
    %6397 = vmatprep.subr.mxu0 0.0
    %6398 = vmatpush1.msra.mxu0 0.0
    %6399 = vmatprep.subr.mxu0 0.0
    %6400 = vmatpush1.msra.mxu0 0.0
    %6401 = vmatprep.subr.mxu0 0.0
    %6402 = vmatpush1.msra.mxu0 0.0
    %6403 = vmatprep.subr.mxu0 0.0
    %6404 = vmatpush1.msra.mxu0 0.0
    %6405 = vmatprep.subr.mxu0 0.0
    %6406 = vmatpush1.msra.mxu0 0.0
    %6407 = vmatprep.subr.mxu0 0.0
    %6408 = vmatpush1.msra.mxu0 0.0
    %6409 = vmatprep.subr.mxu0 0.0
    %6410 = vmatpush1.msra.mxu0 0.0
    %6411 = vmatprep.subr.mxu0 0.0
    %6412 = vmatpush1.msra.mxu0 0.0
    %6413 = vmatprep.subr.mxu0 0.0
    %6414 = vmatpush1.msra.mxu0 0.0
    %6415 = vmatprep.subr.mxu0 0.0
    %6416 = vmatpush1.msra.mxu0 0.0
    %6417 = vmatprep.subr.mxu0 0.0
    %6418 = vmatpush1.msra.mxu0 0.0
    %6419 = vmatprep.subr.mxu0 0.0
    %6420 = vmatpush1.msra.mxu0 0.0
    %6421 = vmatprep.mubr.f32.mxu0 0.0
    %6422 = vmatmul.mubr.f32.gmra.mrb[0].mxu0 %v5997
    %v6423 = vpop.f32.mrb[0].mxu0
    %v6424 = vadd.f32 0.0, %v6423
    %v6425 = vpop.f32.mrb[0].mxu0
    %v6426 = vadd.f32 0.0, %v6425
    %6427 = vdwg.mxu0
    %6428 = vmatprep.subr.mxu0 %v844
    %6429 = vmatpush1.msra.mxu0 %v843
    %6430 = vmatprep.subr.mxu0 %v848
    %6431 = vmatpush1.msra.mxu0 %v847
    %6432 = vmatprep.subr.mxu0 %v852
    %6433 = vmatpush1.msra.mxu0 %v851
    %6434 = vmatprep.subr.mxu0 %v856
    %6435 = vmatpush1.msra.mxu0 %v855
    %6436 = vmatprep.subr.mxu0 %v860
    %6437 = vmatpush1.msra.mxu0 %v859
    %6438 = vmatprep.subr.mxu0 %v864
    %6439 = vmatpush1.msra.mxu0 %v863
    %6440 = vmatprep.subr.mxu0 %v868
    %6441 = vmatpush1.msra.mxu0 %v867
    %6442 = vmatprep.subr.mxu0 %v872
    %6443 = vmatpush1.msra.mxu0 %v871
    %6444 = vmatprep.subr.mxu0 %v876
    %6445 = vmatpush1.msra.mxu0 %v875
    %6446 = vmatprep.subr.mxu0 %v880
    %6447 = vmatpush1.msra.mxu0 %v879
    %6448 = vmatprep.subr.mxu0 %v884
    %6449 = vmatpush1.msra.mxu0 %v883
    %6450 = vmatprep.subr.mxu0 %v888
    %6451 = vmatpush1.msra.mxu0 %v887
    %6452 = vmatprep.subr.mxu0 %v892
    %6453 = vmatpush1.msra.mxu0 %v891
    %6454 = vmatprep.subr.mxu0 %v896
    %6455 = vmatpush1.msra.mxu0 %v895
    %6456 = vmatprep.subr.mxu0 %v900
    %6457 = vmatpush1.msra.mxu0 %v899
    %6458 = vmatprep.subr.mxu0 %v904
    %6459 = vmatpush1.msra.mxu0 %v903
    %6460 = vmatprep.subr.mxu0 0.0
    %6461 = vmatpush1.msra.mxu0 0.0
    %6462 = vmatprep.subr.mxu0 0.0
    %6463 = vmatpush1.msra.mxu0 0.0
    %6464 = vmatprep.subr.mxu0 0.0
    %6465 = vmatpush1.msra.mxu0 0.0
    %6466 = vmatprep.subr.mxu0 0.0
    %6467 = vmatpush1.msra.mxu0 0.0
    %6468 = vmatprep.subr.mxu0 0.0
    %6469 = vmatpush1.msra.mxu0 0.0
    %6470 = vmatprep.subr.mxu0 0.0
    %6471 = vmatpush1.msra.mxu0 0.0
    %6472 = vmatprep.subr.mxu0 0.0
    %6473 = vmatpush1.msra.mxu0 0.0
    %6474 = vmatprep.subr.mxu0 0.0
    %6475 = vmatpush1.msra.mxu0 0.0
    %6476 = vmatprep.subr.mxu0 0.0
    %6477 = vmatpush1.msra.mxu0 0.0
    %6478 = vmatprep.subr.mxu0 0.0
    %6479 = vmatpush1.msra.mxu0 0.0
    %6480 = vmatprep.subr.mxu0 0.0
    %6481 = vmatpush1.msra.mxu0 0.0
    %6482 = vmatprep.subr.mxu0 0.0
    %6483 = vmatpush1.msra.mxu0 0.0
    %6484 = vmatprep.subr.mxu0 0.0
    %6485 = vmatpush1.msra.mxu0 0.0
    %6486 = vmatprep.subr.mxu0 0.0
    %6487 = vmatpush1.msra.mxu0 0.0
    %6488 = vmatprep.subr.mxu0 0.0
    %6489 = vmatpush1.msra.mxu0 0.0
    %6490 = vmatprep.subr.mxu0 0.0
    %6491 = vmatpush1.msra.mxu0 0.0
    %6492 = vmatprep.mubr.f32.mxu0 0.0
    %6493 = vmatmul.mubr.f32.gmra.mrb[0].mxu0 %v5997
    %v6494 = vpop.f32.mrb[0].mxu0
    %v6495 = vadd.f32 0.0, %v6494
    %v6496 = vpop.f32.mrb[0].mxu0
    %v6497 = vadd.f32 0.0, %v6496
    %6498 = vdwg.mxu0
    %v6503 = vrot.slane %v6424, 2
    %v6504 = vrot.slane %v6426, 2
    %v6505 = vrot.slane %v6495, 2
    %v6506 = vrot.slane %v6497, 2
    %v6511 = vadd.f32 %v6353, %v6503
    %v6512 = vadd.f32 %v6354, %v6504
    %v6513 = vadd.f32 %v6355, %v6505
    %v6514 = vadd.f32 %v6356, %v6506
    %v6515 = vxor.u32 %v6349, 2147483648
    %v6516 = vmul.f32 %v6515, 1.442695
    %v6517 = vpow.pop %v6516
    %v6518 = vadd.f32 %v6517, 1.0
    %v6519 = vrcp.pop %v6518
    %v6520 = vmul.f32 1.0, %v6519
    %v6521 = vxor.u32 %v6350, 2147483648
    %v6522 = vmul.f32 %v6521, 1.442695
    %v6523 = vpow.pop %v6522
    %v6524 = vadd.f32 %v6523, 1.0
    %v6525 = vrcp.pop %v6524
    %v6526 = vmul.f32 1.0, %v6525
    %v6527 = vtanh.pop %v6351
    %v6528 = vxor.u32 %v6352, 2147483648
    %v6529 = vmul.f32 %v6528, 1.442695
    %v6530 = vpow.pop %v6529
    %v6531 = vadd.f32 %v6530, 1.0
    %v6532 = vrcp.pop %v6531
    %v6533 = vmul.f32 1.0, %v6532
    %v6535 = vrot.slane %v5815, 6
    %v6537 = vmul.f32 %v6526, %v6535
    %v6538 = vmul.f32 %v6520, %v6527
    %v6539 = vadd.f32 %v6537, %v6538
    %v6540 = vtanh.pop %v6539
    %v6541 = vmul.f32 %v6533, %v6540
    %v6542 = vxor.u32 %v6511, 2147483648
    %v6543 = vmul.f32 %v6542, 1.442695
    %v6544 = vpow.pop %v6543
    %v6545 = vadd.f32 %v6544, 1.0
    %v6546 = vrcp.pop %v6545
    %v6547 = vmul.f32 1.0, %v6546
    %v6548 = vxor.u32 %v6512, 2147483648
    %v6549 = vmul.f32 %v6548, 1.442695
    %v6550 = vpow.pop %v6549
    %v6551 = vadd.f32 %v6550, 1.0
    %v6552 = vrcp.pop %v6551
    %v6553 = vmul.f32 1.0, %v6552
    %v6554 = vtanh.pop %v6513
    %v6555 = vxor.u32 %v6514, 2147483648
    %v6556 = vmul.f32 %v6555, 1.442695
    %v6557 = vpow.pop %v6556
    %v6558 = vadd.f32 %v6557, 1.0
    %v6559 = vrcp.pop %v6558
    %v6560 = vmul.f32 1.0, %v6559
    %v6562 = vrot.slane %v5842, 6
    %v6564 = vmul.f32 %v6553, %v6562
    %v6565 = vmul.f32 %v6547, %v6554
    %v6566 = vadd.f32 %v6564, %v6565
    %v6567 = vtanh.pop %v6566
    %v6568 = vmul.f32 %v6560, %v6567
    %v6570 = vrot.slane %v6166, 2
    %v6572 = vrot.slane %v6541, 6
    %v6573 = vrot.slane %v6570, 6
    %6576 = vmatprep.subr.mxu0 %v906
    %6577 = vmatpush1.msra.mxu0 %v905
    %6578 = vmatprep.subr.mxu0 %v910
    %6579 = vmatpush1.msra.mxu0 %v909
    %6580 = vmatprep.subr.mxu0 %v914
    %6581 = vmatpush1.msra.mxu0 %v913
    %6582 = vmatprep.subr.mxu0 %v918
    %6583 = vmatpush1.msra.mxu0 %v917
    %6584 = vmatprep.subr.mxu0 %v922
    %6585 = vmatpush1.msra.mxu0 %v921
    %6586 = vmatprep.subr.mxu0 %v926
    %6587 = vmatpush1.msra.mxu0 %v925
    %6588 = vmatprep.subr.mxu0 %v930
    %6589 = vmatpush1.msra.mxu0 %v929
    %6590 = vmatprep.subr.mxu0 %v934
    %6591 = vmatpush1.msra.mxu0 %v933
    %6592 = vmatprep.subr.mxu0 %v938
    %6593 = vmatpush1.msra.mxu0 %v937
    %6594 = vmatprep.subr.mxu0 %v942
    %6595 = vmatpush1.msra.mxu0 %v941
    %6596 = vmatprep.subr.mxu0 %v946
    %6597 = vmatpush1.msra.mxu0 %v945
    %6598 = vmatprep.subr.mxu0 %v950
    %6599 = vmatpush1.msra.mxu0 %v949
    %6600 = vmatprep.subr.mxu0 %v954
    %6601 = vmatpush1.msra.mxu0 %v953
    %6602 = vmatprep.subr.mxu0 %v958
    %6603 = vmatpush1.msra.mxu0 %v957
    %6604 = vmatprep.subr.mxu0 %v962
    %6605 = vmatpush1.msra.mxu0 %v961
    %6606 = vmatprep.subr.mxu0 %v966
    %6607 = vmatpush1.msra.mxu0 %v965
    %6608 = vmatprep.subr.mxu0 %v970
    %6609 = vmatpush1.msra.mxu0 %v969
    %6610 = vmatprep.subr.mxu0 %v974
    %6611 = vmatpush1.msra.mxu0 %v973
    %6612 = vmatprep.subr.mxu0 %v978
    %6613 = vmatpush1.msra.mxu0 %v977
    %6614 = vmatprep.subr.mxu0 %v982
    %6615 = vmatpush1.msra.mxu0 %v981
    %6616 = vmatprep.subr.mxu0 %v986
    %6617 = vmatpush1.msra.mxu0 %v985
    %6618 = vmatprep.subr.mxu0 %v990
    %6619 = vmatpush1.msra.mxu0 %v989
    %6620 = vmatprep.subr.mxu0 %v994
    %6621 = vmatpush1.msra.mxu0 %v993
    %6622 = vmatprep.subr.mxu0 %v998
    %6623 = vmatpush1.msra.mxu0 %v997
    %6624 = vmatprep.subr.mxu0 %v1002
    %6625 = vmatpush1.msra.mxu0 %v1001
    %6626 = vmatprep.subr.mxu0 %v1006
    %6627 = vmatpush1.msra.mxu0 %v1005
    %6628 = vmatprep.subr.mxu0 %v1010
    %6629 = vmatpush1.msra.mxu0 %v1009
    %6630 = vmatprep.subr.mxu0 %v1014
    %6631 = vmatpush1.msra.mxu0 %v1013
    %6632 = vmatprep.subr.mxu0 %v1018
    %6633 = vmatpush1.msra.mxu0 %v1017
    %6634 = vmatprep.subr.mxu0 %v1022
    %6635 = vmatpush1.msra.mxu0 %v1021
    %6636 = vmatprep.subr.mxu0 %v1026
    %6637 = vmatpush1.msra.mxu0 %v1025
    %6638 = vmatprep.subr.mxu0 %v1030
    %6639 = vmatpush1.msra.mxu0 %v1029
    %6640 = vmatprep.mubr.f32.mxu0 %v6573
    %6641 = vmatmul.mubr.f32.gmra.mrb[0].mxu0 %v6572
    %v6642 = vpop.f32.mrb[0].mxu0
    %v6643 = vadd.f32 %v1166, %v6642
    %v6644 = vpop.f32.mrb[0].mxu0
    %v6645 = vadd.f32 %v1170, %v6644
    %6646 = vdwg.mxu0
    %6647 = vmatprep.subr.mxu0 %v908
    %6648 = vmatpush1.msra.mxu0 %v907
    %6649 = vmatprep.subr.mxu0 %v912
    %6650 = vmatpush1.msra.mxu0 %v911
    %6651 = vmatprep.subr.mxu0 %v916
    %6652 = vmatpush1.msra.mxu0 %v915
    %6653 = vmatprep.subr.mxu0 %v920
    %6654 = vmatpush1.msra.mxu0 %v919
    %6655 = vmatprep.subr.mxu0 %v924
    %6656 = vmatpush1.msra.mxu0 %v923
    %6657 = vmatprep.subr.mxu0 %v928
    %6658 = vmatpush1.msra.mxu0 %v927
    %6659 = vmatprep.subr.mxu0 %v932
    %6660 = vmatpush1.msra.mxu0 %v931
    %6661 = vmatprep.subr.mxu0 %v936
    %6662 = vmatpush1.msra.mxu0 %v935
    %6663 = vmatprep.subr.mxu0 %v940
    %6664 = vmatpush1.msra.mxu0 %v939
    %6665 = vmatprep.subr.mxu0 %v944
    %6666 = vmatpush1.msra.mxu0 %v943
    %6667 = vmatprep.subr.mxu0 %v948
    %6668 = vmatpush1.msra.mxu0 %v947
    %6669 = vmatprep.subr.mxu0 %v952
    %6670 = vmatpush1.msra.mxu0 %v951
    %6671 = vmatprep.subr.mxu0 %v956
    %6672 = vmatpush1.msra.mxu0 %v955
    %6673 = vmatprep.subr.mxu0 %v960
    %6674 = vmatpush1.msra.mxu0 %v959
    %6675 = vmatprep.subr.mxu0 %v964
    %6676 = vmatpush1.msra.mxu0 %v963
    %6677 = vmatprep.subr.mxu0 %v968
    %6678 = vmatpush1.msra.mxu0 %v967
    %6679 = vmatprep.subr.mxu0 %v972
    %6680 = vmatpush1.msra.mxu0 %v971
    %6681 = vmatprep.subr.mxu0 %v976
    %6682 = vmatpush1.msra.mxu0 %v975
    %6683 = vmatprep.subr.mxu0 %v980
    %6684 = vmatpush1.msra.mxu0 %v979
    %6685 = vmatprep.subr.mxu0 %v984
    %6686 = vmatpush1.msra.mxu0 %v983
    %6687 = vmatprep.subr.mxu0 %v988
    %6688 = vmatpush1.msra.mxu0 %v987
    %6689 = vmatprep.subr.mxu0 %v992
    %6690 = vmatpush1.msra.mxu0 %v991
    %6691 = vmatprep.subr.mxu0 %v996
    %6692 = vmatpush1.msra.mxu0 %v995
    %6693 = vmatprep.subr.mxu0 %v1000
    %6694 = vmatpush1.msra.mxu0 %v999
    %6695 = vmatprep.subr.mxu0 %v1004
    %6696 = vmatpush1.msra.mxu0 %v1003
    %6697 = vmatprep.subr.mxu0 %v1008
    %6698 = vmatpush1.msra.mxu0 %v1007
    %6699 = vmatprep.subr.mxu0 %v1012
    %6700 = vmatpush1.msra.mxu0 %v1011
    %6701 = vmatprep.subr.mxu0 %v1016
    %6702 = vmatpush1.msra.mxu0 %v1015
    %6703 = vmatprep.subr.mxu0 %v1020
    %6704 = vmatpush1.msra.mxu0 %v1019
    %6705 = vmatprep.subr.mxu0 %v1024
    %6706 = vmatpush1.msra.mxu0 %v1023
    %6707 = vmatprep.subr.mxu0 %v1028
    %6708 = vmatpush1.msra.mxu0 %v1027
    %6709 = vmatprep.subr.mxu0 %v1032
    %6710 = vmatpush1.msra.mxu0 %v1031
    %6711 = vmatprep.mubr.f32.mxu0 %v6573
    %6712 = vmatmul.mubr.f32.gmra.mrb[0].mxu0 %v6572
    %v6713 = vpop.f32.mrb[0].mxu0
    %v6714 = vadd.f32 %v1174, %v6713
    %v6715 = vpop.f32.mrb[0].mxu0
    %v6716 = vadd.f32 %v1178, %v6715
    %6717 = vdwg.mxu0
    %v6719 = vrot.slane %v6190, 2
    %v6721 = vrot.slane %v6568, 6
    %v6722 = vrot.slane %v6719, 6
    %6725 = vmatprep.subr.mxu0 %v1034
    %6726 = vmatpush1.msra.mxu0 %v1033
    %6727 = vmatprep.subr.mxu0 %v1038
    %6728 = vmatpush1.msra.mxu0 %v1037
    %6729 = vmatprep.subr.mxu0 %v1042
    %6730 = vmatpush1.msra.mxu0 %v1041
    %6731 = vmatprep.subr.mxu0 %v1046
    %6732 = vmatpush1.msra.mxu0 %v1045
    %6733 = vmatprep.subr.mxu0 %v1050
    %6734 = vmatpush1.msra.mxu0 %v1049
    %6735 = vmatprep.subr.mxu0 %v1054
    %6736 = vmatpush1.msra.mxu0 %v1053
    %6737 = vmatprep.subr.mxu0 %v1058
    %6738 = vmatpush1.msra.mxu0 %v1057
    %6739 = vmatprep.subr.mxu0 %v1062
    %6740 = vmatpush1.msra.mxu0 %v1061
    %6741 = vmatprep.subr.mxu0 %v1066
    %6742 = vmatpush1.msra.mxu0 %v1065
    %6743 = vmatprep.subr.mxu0 %v1070
    %6744 = vmatpush1.msra.mxu0 %v1069
    %6745 = vmatprep.subr.mxu0 %v1074
    %6746 = vmatpush1.msra.mxu0 %v1073
    %6747 = vmatprep.subr.mxu0 %v1078
    %6748 = vmatpush1.msra.mxu0 %v1077
    %6749 = vmatprep.subr.mxu0 %v1082
    %6750 = vmatpush1.msra.mxu0 %v1081
    %6751 = vmatprep.subr.mxu0 %v1086
    %6752 = vmatpush1.msra.mxu0 %v1085
    %6753 = vmatprep.subr.mxu0 %v1090
    %6754 = vmatpush1.msra.mxu0 %v1089
    %6755 = vmatprep.subr.mxu0 %v1094
    %6756 = vmatpush1.msra.mxu0 %v1093
    %6757 = vmatprep.subr.mxu0 %v1098
    %6758 = vmatpush1.msra.mxu0 %v1097
    %6759 = vmatprep.subr.mxu0 %v1102
    %6760 = vmatpush1.msra.mxu0 %v1101
    %6761 = vmatprep.subr.mxu0 %v1106
    %6762 = vmatpush1.msra.mxu0 %v1105
    %6763 = vmatprep.subr.mxu0 %v1110
    %6764 = vmatpush1.msra.mxu0 %v1109
    %6765 = vmatprep.subr.mxu0 %v1114
    %6766 = vmatpush1.msra.mxu0 %v1113
    %6767 = vmatprep.subr.mxu0 %v1118
    %6768 = vmatpush1.msra.mxu0 %v1117
    %6769 = vmatprep.subr.mxu0 %v1122
    %6770 = vmatpush1.msra.mxu0 %v1121
    %6771 = vmatprep.subr.mxu0 %v1126
    %6772 = vmatpush1.msra.mxu0 %v1125
    %6773 = vmatprep.subr.mxu0 %v1130
    %6774 = vmatpush1.msra.mxu0 %v1129
    %6775 = vmatprep.subr.mxu0 %v1134
    %6776 = vmatpush1.msra.mxu0 %v1133
    %6777 = vmatprep.subr.mxu0 %v1138
    %6778 = vmatpush1.msra.mxu0 %v1137
    %6779 = vmatprep.subr.mxu0 %v1142
    %6780 = vmatpush1.msra.mxu0 %v1141
    %6781 = vmatprep.subr.mxu0 %v1146
    %6782 = vmatpush1.msra.mxu0 %v1145
    %6783 = vmatprep.subr.mxu0 %v1150
    %6784 = vmatpush1.msra.mxu0 %v1149
    %6785 = vmatprep.subr.mxu0 %v1154
    %6786 = vmatpush1.msra.mxu0 %v1153
    %6787 = vmatprep.subr.mxu0 %v1158
    %6788 = vmatpush1.msra.mxu0 %v1157
    %6789 = vmatprep.mubr.f32.mxu0 %v6722
    %6790 = vmatmul.mubr.f32.gmra.mrb[0].mxu0 %v6721
    %v6791 = vpop.f32.mrb[0].mxu0
    %v6792 = vadd.f32 %v1188, %v6791
    %v6793 = vpop.f32.mrb[0].mxu0
    %v6794 = vadd.f32 %v1192, %v6793
    %6795 = vdwg.mxu0
    %6796 = vmatprep.subr.mxu0 %v1036
    %6797 = vmatpush1.msra.mxu0 %v1035
    %6798 = vmatprep.subr.mxu0 %v1040
    %6799 = vmatpush1.msra.mxu0 %v1039
    %6800 = vmatprep.subr.mxu0 %v1044
    %6801 = vmatpush1.msra.mxu0 %v1043
    %6802 = vmatprep.subr.mxu0 %v1048
    %6803 = vmatpush1.msra.mxu0 %v1047
    %6804 = vmatprep.subr.mxu0 %v1052
    %6805 = vmatpush1.msra.mxu0 %v1051
    %6806 = vmatprep.subr.mxu0 %v1056
    %6807 = vmatpush1.msra.mxu0 %v1055
    %6808 = vmatprep.subr.mxu0 %v1060
    %6809 = vmatpush1.msra.mxu0 %v1059
    %6810 = vmatprep.subr.mxu0 %v1064
    %6811 = vmatpush1.msra.mxu0 %v1063
    %6812 = vmatprep.subr.mxu0 %v1068
    %6813 = vmatpush1.msra.mxu0 %v1067
    %6814 = vmatprep.subr.mxu0 %v1072
    %6815 = vmatpush1.msra.mxu0 %v1071
    %6816 = vmatprep.subr.mxu0 %v1076
    %6817 = vmatpush1.msra.mxu0 %v1075
    %6818 = vmatprep.subr.mxu0 %v1080
    %6819 = vmatpush1.msra.mxu0 %v1079
    %6820 = vmatprep.subr.mxu0 %v1084
    %6821 = vmatpush1.msra.mxu0 %v1083
    %6822 = vmatprep.subr.mxu0 %v1088
    %6823 = vmatpush1.msra.mxu0 %v1087
    %6824 = vmatprep.subr.mxu0 %v1092
    %6825 = vmatpush1.msra.mxu0 %v1091
    %6826 = vmatprep.subr.mxu0 %v1096
    %6827 = vmatpush1.msra.mxu0 %v1095
    %6828 = vmatprep.subr.mxu0 %v1100
    %6829 = vmatpush1.msra.mxu0 %v1099
    %6830 = vmatprep.subr.mxu0 %v1104
    %6831 = vmatpush1.msra.mxu0 %v1103
    %6832 = vmatprep.subr.mxu0 %v1108
    %6833 = vmatpush1.msra.mxu0 %v1107
    %6834 = vmatprep.subr.mxu0 %v1112
    %6835 = vmatpush1.msra.mxu0 %v1111
    %6836 = vmatprep.subr.mxu0 %v1116
    %6837 = vmatpush1.msra.mxu0 %v1115
    %6838 = vmatprep.subr.mxu0 %v1120
    %6839 = vmatpush1.msra.mxu0 %v1119
    %6840 = vmatprep.subr.mxu0 %v1124
    %6841 = vmatpush1.msra.mxu0 %v1123
    %6842 = vmatprep.subr.mxu0 %v1128
    %6843 = vmatpush1.msra.mxu0 %v1127
    %6844 = vmatprep.subr.mxu0 %v1132
    %6845 = vmatpush1.msra.mxu0 %v1131
    %6846 = vmatprep.subr.mxu0 %v1136
    %6847 = vmatpush1.msra.mxu0 %v1135
    %6848 = vmatprep.subr.mxu0 %v1140
    %6849 = vmatpush1.msra.mxu0 %v1139
    %6850 = vmatprep.subr.mxu0 %v1144
    %6851 = vmatpush1.msra.mxu0 %v1143
    %6852 = vmatprep.subr.mxu0 %v1148
    %6853 = vmatpush1.msra.mxu0 %v1147
    %6854 = vmatprep.subr.mxu0 %v1152
    %6855 = vmatpush1.msra.mxu0 %v1151
    %6856 = vmatprep.subr.mxu0 %v1156
    %6857 = vmatpush1.msra.mxu0 %v1155
    %6858 = vmatprep.subr.mxu0 %v1160
    %6859 = vmatpush1.msra.mxu0 %v1159
    %6860 = vmatprep.mubr.f32.mxu0 %v6722
    %6861 = vmatmul.mubr.f32.gmra.mrb[0].mxu0 %v6721
    %v6862 = vpop.f32.mrb[0].mxu0
    %v6863 = vadd.f32 %v1196, %v6862
    %v6864 = vpop.f32.mrb[0].mxu0
    %v6865 = vadd.f32 %v1200, %v6864
    %6866 = vdwg.mxu0
    %v6867 = vxor.u32 %v6643, 2147483648
    %v6868 = vmul.f32 %v6867, 1.442695
    %v6869 = vpow.pop %v6868
    %v6870 = vadd.f32 %v6869, 1.0
    %v6871 = vrcp.pop %v6870
    %v6872 = vmul.f32 1.0, %v6871
    %v6873 = vxor.u32 %v6645, 2147483648
    %v6874 = vmul.f32 %v6873, 1.442695
    %v6875 = vpow.pop %v6874
    %v6876 = vadd.f32 %v6875, 1.0
    %v6877 = vrcp.pop %v6876
    %v6878 = vmul.f32 1.0, %v6877
    %v6879 = vtanh.pop %v6714
    %v6880 = vxor.u32 %v6716, 2147483648
    %v6881 = vmul.f32 %v6880, 1.442695
    %v6882 = vpow.pop %v6881
    %v6883 = vadd.f32 %v6882, 1.0
    %v6884 = vrcp.pop %v6883
    %v6885 = vmul.f32 1.0, %v6884
    %v6886 = vmul.f32 %v6878, %v6164
    %v6887 = vmul.f32 %v6872, %v6879
    %v6888 = vadd.f32 %v6886, %v6887
    %v6889 = vtanh.pop %v6888
    %v6890 = vmul.f32 %v6885, %v6889
    %v6891 = vxor.u32 %v6792, 2147483648
    %v6892 = vmul.f32 %v6891, 1.442695
    %v6893 = vpow.pop %v6892
    %v6894 = vadd.f32 %v6893, 1.0
    %v6895 = vrcp.pop %v6894
    %v6896 = vmul.f32 1.0, %v6895
    %v6897 = vxor.u32 %v6794, 2147483648
    %v6898 = vmul.f32 %v6897, 1.442695
    %v6899 = vpow.pop %v6898
    %v6900 = vadd.f32 %v6899, 1.0
    %v6901 = vrcp.pop %v6900
    %v6902 = vmul.f32 1.0, %v6901
    %v6903 = vtanh.pop %v6863
    %v6904 = vxor.u32 %v6865, 2147483648
    %v6905 = vmul.f32 %v6904, 1.442695
    %v6906 = vpow.pop %v6905
    %v6907 = vadd.f32 %v6906, 1.0
    %v6908 = vrcp.pop %v6907
    %v6909 = vmul.f32 1.0, %v6908
    %v6910 = vmul.f32 %v6902, %v6188
    %v6911 = vmul.f32 %v6896, %v6903
    %v6912 = vadd.f32 %v6910, %v6911
    %v6913 = vtanh.pop %v6912
    %v6914 = vmul.f32 %v6909, %v6913
    %v6915 = vld [vmem:[%s7] sm:$0xff]
    %v6916 = vld [vmem:[%s7 + $0x8] sm:$0xff]
    %v6917 = vld [vmem:[%s7 + $0x10] sm:$0xff]
    %v6918 = vld [vmem:[%s7 + $0x18] sm:$0xff]
    %v6919 = vld [vmem:[%s7 + $0x20] sm:$0xff]
    %v6920 = vld [vmem:[%s7 + $0x28] sm:$0xff]
    %v6921 = vld [vmem:[%s7 + $0x30] sm:$0xff]
    %v6922 = vld [vmem:[%s7 + $0x38] sm:$0xff]
    %v6923 = vld [vmem:[%s7 + $0x40] sm:$0xff]
    %v6924 = vld [vmem:[%s7 + $0x48] sm:$0xff]
    %v6925 = vld [vmem:[%s7 + $0x50] sm:$0xff]
    %v6926 = vld [vmem:[%s7 + $0x58] sm:$0xff]
    %v6927 = vld [vmem:[%s7 + $0x60] sm:$0xff]
    %v6928 = vld [vmem:[%s7 + $0x68] sm:$0xff]
    %v6929 = vld [vmem:[%s7 + $0x70] sm:$0xff]
    %v6930 = vld [vmem:[%s7 + $0x78] sm:$0xff]
    %v6931 = vld [vmem:[%s8] sm:$0x1]
    %v6933 = vlaneseq
    %v6934 = vshrl.u32 %v6933, 7
    %v6935 = vsub.s32 0, %v6934
    %v6936 = vrot.slane %v6931, %v6935
    %6938 = vmatprep.subr.mxu0 0.0
    %6939 = vmatpush1.msra.mxu0 %v6915
    %6940 = vmatprep.subr.mxu0 0.0
    %6941 = vmatpush1.msra.mxu0 %v6916
    %6942 = vmatprep.subr.mxu0 0.0
    %6943 = vmatpush1.msra.mxu0 %v6917
    %6944 = vmatprep.subr.mxu0 0.0
    %6945 = vmatpush1.msra.mxu0 %v6918
    %6946 = vmatprep.subr.mxu0 0.0
    %6947 = vmatpush1.msra.mxu0 %v6919
    %6948 = vmatprep.subr.mxu0 0.0
    %6949 = vmatpush1.msra.mxu0 %v6920
    %6950 = vmatprep.subr.mxu0 0.0
    %6951 = vmatpush1.msra.mxu0 %v6921
    %6952 = vmatprep.subr.mxu0 0.0
    %6953 = vmatpush1.msra.mxu0 %v6922
    %6954 = vmatprep.subr.mxu0 0.0
    %6955 = vmatpush1.msra.mxu0 %v6923
    %6956 = vmatprep.subr.mxu0 0.0
    %6957 = vmatpush1.msra.mxu0 %v6924
    %6958 = vmatprep.subr.mxu0 0.0
    %6959 = vmatpush1.msra.mxu0 %v6925
    %6960 = vmatprep.subr.mxu0 0.0
    %6961 = vmatpush1.msra.mxu0 %v6926
    %6962 = vmatprep.subr.mxu0 0.0
    %6963 = vmatpush1.msra.mxu0 %v6927
    %6964 = vmatprep.subr.mxu0 0.0
    %6965 = vmatpush1.msra.mxu0 %v6928
    %6966 = vmatprep.subr.mxu0 0.0
    %6967 = vmatpush1.msra.mxu0 %v6929
    %6968 = vmatprep.subr.mxu0 0.0
    %6969 = vmatpush1.msra.mxu0 %v6930
    %6970 = vmatprep.subr.mxu0 0.0
    %6971 = vmatpush1.msra.mxu0 0.0
    %6972 = vmatprep.subr.mxu0 0.0
    %6973 = vmatpush1.msra.mxu0 0.0
    %6974 = vmatprep.subr.mxu0 0.0
    %6975 = vmatpush1.msra.mxu0 0.0
    %6976 = vmatprep.subr.mxu0 0.0
    %6977 = vmatpush1.msra.mxu0 0.0
    %6978 = vmatprep.subr.mxu0 0.0
    %6979 = vmatpush1.msra.mxu0 0.0
    %6980 = vmatprep.subr.mxu0 0.0
    %6981 = vmatpush1.msra.mxu0 0.0
    %6982 = vmatprep.subr.mxu0 0.0
    %6983 = vmatpush1.msra.mxu0 0.0
    %6984 = vmatprep.subr.mxu0 0.0
    %6985 = vmatpush1.msra.mxu0 0.0
    %6986 = vmatprep.subr.mxu0 0.0
    %6987 = vmatpush1.msra.mxu0 0.0
    %6988 = vmatprep.subr.mxu0 0.0
    %6989 = vmatpush1.msra.mxu0 0.0
    %6990 = vmatprep.subr.mxu0 0.0
    %6991 = vmatpush1.msra.mxu0 0.0
    %6992 = vmatprep.subr.mxu0 0.0
    %6993 = vmatpush1.msra.mxu0 0.0
    %6994 = vmatprep.subr.mxu0 0.0
    %6995 = vmatpush1.msra.mxu0 0.0
    %6996 = vmatprep.subr.mxu0 0.0
    %6997 = vmatpush1.msra.mxu0 0.0
    %6998 = vmatprep.subr.mxu0 0.0
    %6999 = vmatpush1.msra.mxu0 0.0
    %7000 = vmatprep.subr.mxu0 0.0
    %7001 = vmatpush1.msra.mxu0 0.0
    %7002 = vmatprep.mubr.f32.mxu0 0.0
    %7003 = vmatmul.mubr.f32.gmra.mrb[0].mxu0 %v6890
    %v7004 = vpop.f32.mrb[0].mxu0
    %v7005 = vadd.f32 %v6936, %v7004
    %v7006 = vpop.f32.mrb[0].mxu0
    %7007 = vdwg.mxu0
    %v7008 = vmax.f32 %v7005, 0.0
    %v7009 = vld [vmem:[%s14] sm:$0xff]
    %v7010 = vld [vmem:[%s14 + $0x8] sm:$0xff]
    %v7011 = vld [vmem:[%s14 + $0x10] sm:$0xff]
    %v7012 = vld [vmem:[%s14 + $0x18] sm:$0xff]
    %v7013 = vld [vmem:[%s14 + $0x20] sm:$0xff]
    %v7014 = vld [vmem:[%s14 + $0x28] sm:$0xff]
    %v7015 = vld [vmem:[%s14 + $0x30] sm:$0xff]
    %v7016 = vld [vmem:[%s14 + $0x38] sm:$0xff]
    %v7017 = vld [vmem:[%s14 + $0x40] sm:$0xff]
    %v7018 = vld [vmem:[%s14 + $0x48] sm:$0xff]
    %v7019 = vld [vmem:[%s14 + $0x50] sm:$0xff]
    %v7020 = vld [vmem:[%s14 + $0x58] sm:$0xff]
    %v7021 = vld [vmem:[%s14 + $0x60] sm:$0xff]
    %v7022 = vld [vmem:[%s14 + $0x68] sm:$0xff]
    %v7023 = vld [vmem:[%s14 + $0x70] sm:$0xff]
    %v7024 = vld [vmem:[%s14 + $0x78] sm:$0xff]
    %v7025 = vld [vmem:[%s15] sm:$0x1]
    %v7027 = vlaneseq
    %v7028 = vshrl.u32 %v7027, 7
    %v7029 = vsub.s32 0, %v7028
    %v7030 = vrot.slane %v7025, %v7029
    %7032 = vmatprep.subr.mxu0 0.0
    %7033 = vmatpush1.msra.mxu0 %v7009
    %7034 = vmatprep.subr.mxu0 0.0
    %7035 = vmatpush1.msra.mxu0 %v7010
    %7036 = vmatprep.subr.mxu0 0.0
    %7037 = vmatpush1.msra.mxu0 %v7011
    %7038 = vmatprep.subr.mxu0 0.0
    %7039 = vmatpush1.msra.mxu0 %v7012
    %7040 = vmatprep.subr.mxu0 0.0
    %7041 = vmatpush1.msra.mxu0 %v7013
    %7042 = vmatprep.subr.mxu0 0.0
    %7043 = vmatpush1.msra.mxu0 %v7014
    %7044 = vmatprep.subr.mxu0 0.0
    %7045 = vmatpush1.msra.mxu0 %v7015
    %7046 = vmatprep.subr.mxu0 0.0
    %7047 = vmatpush1.msra.mxu0 %v7016
    %7048 = vmatprep.subr.mxu0 0.0
    %7049 = vmatpush1.msra.mxu0 %v7017
    %7050 = vmatprep.subr.mxu0 0.0
    %7051 = vmatpush1.msra.mxu0 %v7018
    %7052 = vmatprep.subr.mxu0 0.0
    %7053 = vmatpush1.msra.mxu0 %v7019
    %7054 = vmatprep.subr.mxu0 0.0
    %7055 = vmatpush1.msra.mxu0 %v7020
    %7056 = vmatprep.subr.mxu0 0.0
    %7057 = vmatpush1.msra.mxu0 %v7021
    %7058 = vmatprep.subr.mxu0 0.0
    %7059 = vmatpush1.msra.mxu0 %v7022
    %7060 = vmatprep.subr.mxu0 0.0
    %7061 = vmatpush1.msra.mxu0 %v7023
    %7062 = vmatprep.subr.mxu0 0.0
    %7063 = vmatpush1.msra.mxu0 %v7024
    %7064 = vmatprep.subr.mxu0 0.0
    %7065 = vmatpush1.msra.mxu0 0.0
    %7066 = vmatprep.subr.mxu0 0.0
    %7067 = vmatpush1.msra.mxu0 0.0
    %7068 = vmatprep.subr.mxu0 0.0
    %7069 = vmatpush1.msra.mxu0 0.0
    %7070 = vmatprep.subr.mxu0 0.0
    %7071 = vmatpush1.msra.mxu0 0.0
    %7072 = vmatprep.subr.mxu0 0.0
    %7073 = vmatpush1.msra.mxu0 0.0
    %7074 = vmatprep.subr.mxu0 0.0
    %7075 = vmatpush1.msra.mxu0 0.0
    %7076 = vmatprep.subr.mxu0 0.0
    %7077 = vmatpush1.msra.mxu0 0.0
    %7078 = vmatprep.subr.mxu0 0.0
    %7079 = vmatpush1.msra.mxu0 0.0
    %7080 = vmatprep.subr.mxu0 0.0
    %7081 = vmatpush1.msra.mxu0 0.0
    %7082 = vmatprep.subr.mxu0 0.0
    %7083 = vmatpush1.msra.mxu0 0.0
    %7084 = vmatprep.subr.mxu0 0.0
    %7085 = vmatpush1.msra.mxu0 0.0
    %7086 = vmatprep.subr.mxu0 0.0
    %7087 = vmatpush1.msra.mxu0 0.0
    %7088 = vmatprep.subr.mxu0 0.0
    %7089 = vmatpush1.msra.mxu0 0.0
    %7090 = vmatprep.subr.mxu0 0.0
    %7091 = vmatpush1.msra.mxu0 0.0
    %7092 = vmatprep.subr.mxu0 0.0
    %7093 = vmatpush1.msra.mxu0 0.0
    %7094 = vmatprep.subr.mxu0 0.0
    %7095 = vmatpush1.msra.mxu0 0.0
    %7096 = vmatprep.mubr.f32.mxu0 0.0
    %7097 = vmatmul.mubr.f32.gmra.mrb[0].mxu0 %v6914
    %v7098 = vpop.f32.mrb[0].mxu0
    %v7099 = vadd.f32 %v7030, %v7098
    %v7100 = vpop.f32.mrb[0].mxu0
    %7101 = vdwg.mxu0
    %v7102 = vmax.f32 %v7099, 0.0
    %v7103 = vld [vmem:[%s16] sm:$0xff]
    %v7104 = vld [vmem:[%s16 + $0x8] sm:$0xff]
    %v7105 = vld [vmem:[%s16 + $0x10] sm:$0xff]
    %v7106 = vld [vmem:[%s16 + $0x18] sm:$0xff]
    %v7107 = vld [vmem:[%s16 + $0x20] sm:$0xff]
    %v7108 = vld [vmem:[%s16 + $0x28] sm:$0xff]
    %v7109 = vld [vmem:[%s16 + $0x30] sm:$0xff]
    %v7110 = vld [vmem:[%s16 + $0x38] sm:$0xff]
    %v7111 = vld [vmem:[%s17] sm:$0xff]
    %v7112 = vld [vmem:[%s17 + $0x8] sm:$0xff]
    %v7113 = vld [vmem:[%s17 + $0x10] sm:$0xff]
    %v7114 = vld [vmem:[%s17 + $0x18] sm:$0xff]
    %v7115 = vld [vmem:[%s17 + $0x20] sm:$0xff]
    %v7116 = vld [vmem:[%s17 + $0x28] sm:$0xff]
    %v7117 = vld [vmem:[%s17 + $0x30] sm:$0xff]
    %v7118 = vld [vmem:[%s17 + $0x38] sm:$0xff]
    %vm7119 = vcmask 523264
    %v7121 = vsel %vm7119, %v7102, 0
    %7123 = vmatprep.subr.mxu0 0.0
    %7124 = vmatpush1.msra.mxu0 %v7111
    %7125 = vmatprep.subr.mxu0 0.0
    %7126 = vmatpush1.msra.mxu0 %v7112
    %7127 = vmatprep.subr.mxu0 0.0
    %7128 = vmatpush1.msra.mxu0 %v7113
    %7129 = vmatprep.subr.mxu0 0.0
    %7130 = vmatpush1.msra.mxu0 %v7114
    %7131 = vmatprep.subr.mxu0 0.0
    %7132 = vmatpush1.msra.mxu0 %v7115
    %7133 = vmatprep.subr.mxu0 0.0
    %7134 = vmatpush1.msra.mxu0 %v7116
    %7135 = vmatprep.subr.mxu0 0.0
    %7136 = vmatpush1.msra.mxu0 %v7117
    %7137 = vmatprep.subr.mxu0 0.0
    %7138 = vmatpush1.msra.mxu0 %v7118
    %7139 = vmatprep.subr.mxu0 0.0
    %7140 = vmatpush1.msra.mxu0 0.0
    %7141 = vmatprep.subr.mxu0 0.0
    %7142 = vmatpush1.msra.mxu0 0.0
    %7143 = vmatprep.subr.mxu0 0.0
    %7144 = vmatpush1.msra.mxu0 0.0
    %7145 = vmatprep.subr.mxu0 0.0
    %7146 = vmatpush1.msra.mxu0 0.0
    %7147 = vmatprep.subr.mxu0 0.0
    %7148 = vmatpush1.msra.mxu0 0.0
    %7149 = vmatprep.subr.mxu0 0.0
    %7150 = vmatpush1.msra.mxu0 0.0
    %7151 = vmatprep.subr.mxu0 0.0
    %7152 = vmatpush1.msra.mxu0 0.0
    %7153 = vmatprep.subr.mxu0 0.0
    %7154 = vmatpush1.msra.mxu0 0.0
    %7155 = vmatprep.subr.mxu0 0.0
    %7156 = vmatpush1.msra.mxu0 0.0
    %7157 = vmatprep.subr.mxu0 0.0
    %7158 = vmatpush1.msra.mxu0 0.0
    %7159 = vmatprep.subr.mxu0 0.0
    %7160 = vmatpush1.msra.mxu0 0.0
    %7161 = vmatprep.subr.mxu0 0.0
    %7162 = vmatpush1.msra.mxu0 0.0
    %7163 = vmatprep.subr.mxu0 0.0
    %7164 = vmatpush1.msra.mxu0 0.0
    %7165 = vmatprep.subr.mxu0 0.0
    %7166 = vmatpush1.msra.mxu0 0.0
    %7167 = vmatprep.subr.mxu0 0.0
    %7168 = vmatpush1.msra.mxu0 0.0
    %7169 = vmatprep.subr.mxu0 0.0
    %7170 = vmatpush1.msra.mxu0 0.0
    %7171 = vmatprep.subr.mxu0 0.0
    %7172 = vmatpush1.msra.mxu0 0.0
    %7173 = vmatprep.subr.mxu0 0.0
    %7174 = vmatpush1.msra.mxu0 0.0
    %7175 = vmatprep.subr.mxu0 0.0
    %7176 = vmatpush1.msra.mxu0 0.0
    %7177 = vmatprep.subr.mxu0 0.0
    %7178 = vmatpush1.msra.mxu0 0.0
    %7179 = vmatprep.subr.mxu0 0.0
    %7180 = vmatpush1.msra.mxu0 0.0
    %7181 = vmatprep.subr.mxu0 0.0
    %7182 = vmatpush1.msra.mxu0 0.0
    %7183 = vmatprep.subr.mxu0 0.0
    %7184 = vmatpush1.msra.mxu0 0.0
    %7185 = vmatprep.subr.mxu0 0.0
    %7186 = vmatpush1.msra.mxu0 0.0
    %7187 = vmatprep.mubr.f32.mxu0 0.0
    %7188 = vmatmul.mubr.f32.gmra.mrb[0].mxu0 %v7121
    %v7189 = vpop.f32.mrb[0].mxu0
    %v7190 = vadd.f32 0.0, %v7189
    %v7191 = vpop.f32.mrb[0].mxu0
    %7192 = vdwg.mxu0
    %v7194 = vsel %vm7119, %v7008, 0
    %7196 = vmatprep.subr.mxu0 0.0
    %7197 = vmatpush1.msra.mxu0 %v7103
    %7198 = vmatprep.subr.mxu0 0.0
    %7199 = vmatpush1.msra.mxu0 %v7104
    %7200 = vmatprep.subr.mxu0 0.0
    %7201 = vmatpush1.msra.mxu0 %v7105
    %7202 = vmatprep.subr.mxu0 0.0
    %7203 = vmatpush1.msra.mxu0 %v7106
    %7204 = vmatprep.subr.mxu0 0.0
    %7205 = vmatpush1.msra.mxu0 %v7107
    %7206 = vmatprep.subr.mxu0 0.0
    %7207 = vmatpush1.msra.mxu0 %v7108
    %7208 = vmatprep.subr.mxu0 0.0
    %7209 = vmatpush1.msra.mxu0 %v7109
    %7210 = vmatprep.subr.mxu0 0.0
    %7211 = vmatpush1.msra.mxu0 %v7110
    %7212 = vmatprep.subr.mxu0 0.0
    %7213 = vmatpush1.msra.mxu0 0.0
    %7214 = vmatprep.subr.mxu0 0.0
    %7215 = vmatpush1.msra.mxu0 0.0
    %7216 = vmatprep.subr.mxu0 0.0
    %7217 = vmatpush1.msra.mxu0 0.0
    %7218 = vmatprep.subr.mxu0 0.0
    %7219 = vmatpush1.msra.mxu0 0.0
    %7220 = vmatprep.subr.mxu0 0.0
    %7221 = vmatpush1.msra.mxu0 0.0
    %7222 = vmatprep.subr.mxu0 0.0
    %7223 = vmatpush1.msra.mxu0 0.0
    %7224 = vmatprep.subr.mxu0 0.0
    %7225 = vmatpush1.msra.mxu0 0.0
    %7226 = vmatprep.subr.mxu0 0.0
    %7227 = vmatpush1.msra.mxu0 0.0
    %7228 = vmatprep.subr.mxu0 0.0
    %7229 = vmatpush1.msra.mxu0 0.0
    %7230 = vmatprep.subr.mxu0 0.0
    %7231 = vmatpush1.msra.mxu0 0.0
    %7232 = vmatprep.subr.mxu0 0.0
    %7233 = vmatpush1.msra.mxu0 0.0
    %7234 = vmatprep.subr.mxu0 0.0
    %7235 = vmatpush1.msra.mxu0 0.0
    %7236 = vmatprep.subr.mxu0 0.0
    %7237 = vmatpush1.msra.mxu0 0.0
    %7238 = vmatprep.subr.mxu0 0.0
    %7239 = vmatpush1.msra.mxu0 0.0
    %7240 = vmatprep.subr.mxu0 0.0
    %7241 = vmatpush1.msra.mxu0 0.0
    %7242 = vmatprep.subr.mxu0 0.0
    %7243 = vmatpush1.msra.mxu0 0.0
    %7244 = vmatprep.subr.mxu0 0.0
    %7245 = vmatpush1.msra.mxu0 0.0
    %7246 = vmatprep.subr.mxu0 0.0
    %7247 = vmatpush1.msra.mxu0 0.0
    %7248 = vmatprep.subr.mxu0 0.0
    %7249 = vmatpush1.msra.mxu0 0.0
    %7250 = vmatprep.subr.mxu0 0.0
    %7251 = vmatpush1.msra.mxu0 0.0
    %7252 = vmatprep.subr.mxu0 0.0
    %7253 = vmatpush1.msra.mxu0 0.0
    %7254 = vmatprep.subr.mxu0 0.0
    %7255 = vmatpush1.msra.mxu0 0.0
    %7256 = vmatprep.subr.mxu0 0.0
    %7257 = vmatpush1.msra.mxu0 0.0
    %7258 = vmatprep.subr.mxu0 0.0
    %7259 = vmatpush1.msra.mxu0 0.0
    %7260 = vmatprep.mubr.f32.mxu0 0.0
    %7261 = vmatmul.mubr.f32.gmra.mrb[0].mxu0 %v7194
    %v7262 = vpop.f32.mrb[0].mxu0
    %v7263 = vadd.f32 %v7190, %v7262
    %v7264 = vpop.f32.mrb[0].mxu0
    %7265 = vdwg.mxu0
    %v7266 = vld [vmem:[%s18] sm:$0x1]
    %v7268 = vlaneseq
    %v7269 = vshrl.u32 %v7268, 7
    %v7270 = vsub.s32 0, %v7269
    %v7271 = vrot.slane %v7266, %v7270
    %v7273 = vadd.f32 %v7263, %v7271
    %7274 = vst [vmem:[#allocation15] sm:$0x3] %v7273
    // Predicated region
    $region102: #{tpu_custom_call.1} parent=1 // pred_check
      _
    $region103: #{tpu_custom_call.1} parent=1 // pred_check_branch
      %7276 = sbr.rel (0) target = $region105
    $region104: #{tpu_custom_call.1} parent=1 // pred_region
      %s7278 = ssub.s32 32, 32
      %7279 = vsyncadd [#allocation6], %s7278
      %s7281 = sshll.u32 [#allocation15], 4
      %s7282 = int_to_ptr.vmem [resolvable:$true] %s7281
      %7284 = dma.vmem_to_hbm [thread:$0]  %s7282, 32, %s19, [#allocation6]
    $region105: #{tpu_custom_call.1} parent=1 // pred_fallthru
      _
    // Predicated region
    $region106: #{tpu_custom_call.1} parent=1 // pred_check
      _
    $region107: #{tpu_custom_call.1} parent=1 // pred_check_branch
      %7286 = sbr.rel (0) target = $region109
    $region108: #{tpu_custom_call.1} parent=1 // pred_region
      %7287 = dma.done [#allocation6], 32
    $region109: #{tpu_custom_call.1} parent=1 // pred_fallthru
      _
    %7288 = vsyncpa [#allocation5], 1
    %7289 = vsyncpa [#allocation8], 1
    %7290 = vsyncpa [#allocation11], 1
    %7291 = vsyncpa [#allocation14], 1
    %7292 = vsyncpa [#allocation6], 1

</llo_original>
